<compile_context>
chip_gen: v7x
topology: tpu7x:2x2x1
jax: 0.10.0
libtpu: 0.0.40
codegen_flags: <defaults>
</compile_context>

<pallas_src>
import functools

import jax
import jax.numpy as jnp
from jax.experimental import pallas as pl
from jax.experimental.pallas import tpu as pltpu


# ---------------------------------------------------------------------------
# Fused kernel: conv3x3 (as 9 shifted-row GEMMs) + ReLU -> enc GEMM + ReLU ->
# dec GEMM.  x_ref holds the halo-padded image rows, flattened to (rows, C_in),
# with an extra +/- (W+2+1) zero-row margin so that the conv tap (di, dj) of
# EVERY output row is simply the contiguous row window starting at di*(W+2)+dj.
# Border rows of the output are garbage (they mix adjacent image rows / the
# zero margin) and are discarded by the wrapper.
# ---------------------------------------------------------------------------
def _fused_modu2_kernel(x_ref, bbw_ref, bbb_ref, encw_ref, encb_ref,
                        decw_ref, decb_ref, o_ref, *, m, w2):
    c_mid = bbw_ref.shape[-1]

    # Backbone: 3x3 conv as 9 shifted-row (m, C_in) x (C_in, c_mid) accumulations.
    acc = jnp.zeros((m, c_mid), jnp.float32)
    for di in range(3):
        for dj in range(3):
            s = di * w2 + dj                              # static row offset
            xs = x_ref[s:s + m, :].astype(jnp.bfloat16)   # (m, C_in)
            acc += jnp.dot(xs, bbw_ref[di * 3 + dj],      # (C_in, c_mid) bf16
                           preferred_element_type=jnp.float32)
    h = jnp.maximum(acc + bbb_ref[...], 0.0)              # f32 epilogue

    # Encoder: Linear(c_mid -> c_enc) + ReLU.
    h = jnp.dot(h.astype(jnp.bfloat16), encw_ref[...],
                preferred_element_type=jnp.float32)
    h = jnp.maximum(h + encb_ref[...], 0.0)

    # Decoder: Linear(c_enc -> n_cls); targets=None path of the module.
    out = jnp.dot(h.astype(jnp.bfloat16), decw_ref[...],
                  preferred_element_type=jnp.float32)
    o_ref[...] = (out + decb_ref[...]).astype(o_ref.dtype)


def fused_modu2_pipeline(xext, bb_w, bb_b, enc_w, enc_b, dec_w, dec_b, *, m, w2):
    """xext: (m + 2*(w2+1), C_in) f32 halo+margin rows -> (m, n_cls) f32."""
    n_cls = dec_w.shape[-1]
    kernel = functools.partial(_fused_modu2_kernel, m=m, w2=w2)

    return pl.pallas_call(
        kernel,
        out_shape=jax.ShapeDtypeStruct((m, n_cls), jnp.float32),
        grid_spec=pltpu.PrefetchScalarGridSpec(
            num_scalar_prefetch=0,
            grid=(1,),                                     # single step: best on 1-TC chips
            in_specs=[
                pl.BlockSpec(xext.shape, lambda i: (0, 0)),     # padded image rows
                pl.BlockSpec(bb_w.shape, lambda i: (0, 0, 0)),  # (9, C_in, c_mid)
                pl.BlockSpec(bb_b.shape, lambda i: (0, 0)),
                pl.BlockSpec(enc_w.shape, lambda i: (0, 0)),
                pl.BlockSpec(enc_b.shape, lambda i: (0, 0)),
                pl.BlockSpec(dec_w.shape, lambda i: (0, 0)),
                pl.BlockSpec(dec_b.shape, lambda i: (0, 0)),
            ],
            out_specs=pl.BlockSpec((m, n_cls), lambda i: (0, 0)),
        ),
        compiler_params=pltpu.CompilerParams(
            dimension_semantics=("arbitrary",)),
    )(xext, bb_w, bb_b, enc_w, enc_b, dec_w, dec_b)


# ---------------------------------------------------------------------------
# MODU2 forward (eval path): decoder(encoder(backbone(x))), targets=None.
# ---------------------------------------------------------------------------
def modu2_forward(x_nchw, params):
    N, C, H, W = x_nchw.shape
    H2, W2 = H + 2, W + 2
    M = N * H2 * W2                     # rows incl. halo border (discarded later)
    margin = W2 + 1

    # NCHW -> NHWC, halo-pad spatially, flatten to rows, add +/- margin zero
    # rows.  XLA fuses this into ~one copy pass; the im2col gather itself now
    # lives inside the kernel.
    xp = jnp.pad(jnp.transpose(x_nchw, (0, 2, 3, 1)),
                 ((0, 0), (1, 1), (1, 1), (0, 0)))
    xflat = xp.reshape(M, C)
    xext = jnp.pad(xflat, ((margin, margin), (0, 0)))      # (M + 2*margin, C) f32

    out_full = fused_modu2_pipeline(
        xext, params["bb_w"], params["bb_b"],
        params["enc_w"], params["enc_b"],
        params["dec_w"], params["dec_b"], m=M, w2=W2)       # (M, n_cls)

    n_cls = out_full.shape[-1]
    out = out_full.reshape(N, H2, W2, n_cls)[:, 1:H + 1, 1:W + 1, :]
    return out.reshape(N, H * W, n_cls)                     # (N, HW, n_cls)


# Pure-JAX reference (classic im2col, same bf16-operand / f32-accumulate
# rounding) for the correctness gate.
def modu2_reference(x_nchw, params):
    N, C, H, W = x_nchw.shape
    x_nhwc = jnp.transpose(x_nchw, (0, 2, 3, 1))
    xp = jnp.pad(x_nhwc, ((0, 0), (1, 1), (1, 1), (0, 0)))
    patches = jnp.concatenate(
        [xp[:, di:di + H, dj:dj + W, :] for di in range(3) for dj in range(3)],
        axis=-1).reshape(N * H * W, 9 * C).astype(jnp.bfloat16)
    bb_w = params["bb_w"].reshape(9 * C, -1)                # (tap, c) ordering matches
    h = jnp.dot(patches, bb_w, preferred_element_type=jnp.float32)
    h = jnp.maximum(h + params["bb_b"], 0.0)
    h = jnp.dot(h.astype(jnp.bfloat16), params["enc_w"],
                preferred_element_type=jnp.float32)
    h = jnp.maximum(h + params["enc_b"], 0.0)
    o = jnp.dot(h.astype(jnp.bfloat16), params["dec_w"],
                preferred_element_type=jnp.float32) + params["dec_b"]
    return o.reshape(N, H * W, -1)


def init_params(key, c_in=4, c_mid=32, c_enc=64, n_cls=8):
    k = jax.random.split(key, 6)
    s = lambda fan_in: 1.0 / jnp.sqrt(jnp.float32(fan_in))
    return {
        # (tap = kh*3 + kw, C_in, C_out); PyTorch Conv2d weight maps via
        # w.permute(2, 3, 1, 0).reshape(9, C_in, C_out).
        "bb_w": (jax.random.normal(k[0], (9, c_in, c_mid), jnp.float32)
                 * s(9 * c_in)).astype(jnp.bfloat16),
        "bb_b": jax.random.normal(k[1], (1, c_mid), jnp.float32) * 0.01,
        "enc_w": (jax.random.normal(k[2], (c_mid, c_enc), jnp.float32)
                  * s(c_mid)).astype(jnp.bfloat16),
        "enc_b": jax.random.normal(k[3], (1, c_enc), jnp.float32) * 0.01,
        "dec_w": (jax.random.normal(k[4], (c_enc, n_cls), jnp.float32)
                  * s(c_enc)).astype(jnp.bfloat16),
        "dec_b": jax.random.normal(k[5], (1, n_cls), jnp.float32) * 0.01,
    }


if __name__ == "__main__":
    key = jax.random.PRNGKey(0)
    kx, kp = jax.random.split(key)

    # Small deterministic NCHW input consistent with the module.
    x = jax.random.normal(kx, (2, 4, 16, 16), jnp.float32)
    params = init_params(kp)

    out = jax.block_until_ready(jax.jit(modu2_forward)(x, params))
    assert out.shape == (2, 256, 8) and out.dtype == jnp.float32

    ref = jax.block_until_ready(jax.jit(modu2_reference)(x, params))
    max_err = float(jnp.max(jnp.abs(out - ref)))
    assert max_err < 2e-2, f"mismatch vs reference: max_err={max_err}"

    print("KERNEL_OK")
</pallas_src>

<mosaic_0001>
module attributes {stable_mosaic.version = 11 : i64} {
  func.func @_fused_modu2_kernel(%arg0: i32, %arg1: memref<686x4xf32, #tpu.memory_space<vmem>>, %arg2: memref<9x4x32xbf16, #tpu.memory_space<vmem>>, %arg3: memref<1x32xf32, #tpu.memory_space<vmem>>, %arg4: memref<32x64xbf16, #tpu.memory_space<vmem>>, %arg5: memref<1x64xf32, #tpu.memory_space<vmem>>, %arg6: memref<64x8xbf16, #tpu.memory_space<vmem>>, %arg7: memref<1x8xf32, #tpu.memory_space<vmem>>, %arg8: memref<648x8xf32, #tpu.memory_space<vmem>>) attributes {dimension_semantics = [#tpu.dimension_semantics<arbitrary>], iteration_bounds = array<i64: 1>, scalar_prefetch = 0 : i64, scratch_operands = 0 : i64, tpu.core_type = #tpu.core_type<tc>, window_params = [{pipeline_mode = #tpu.pipeline_mode<synchronous>, transform_indices = @transform_0, window_bounds = array<i64: 686, 4>}, {pipeline_mode = #tpu.pipeline_mode<synchronous>, transform_indices = @transform_1, window_bounds = array<i64: 9, 4, 32>}, {pipeline_mode = #tpu.pipeline_mode<synchronous>, transform_indices = @transform_2, window_bounds = array<i64: 1, 32>}, {pipeline_mode = #tpu.pipeline_mode<synchronous>, transform_indices = @transform_3, window_bounds = array<i64: 32, 64>}, {pipeline_mode = #tpu.pipeline_mode<synchronous>, transform_indices = @transform_4, window_bounds = array<i64: 1, 64>}, {pipeline_mode = #tpu.pipeline_mode<synchronous>, transform_indices = @transform_5, window_bounds = array<i64: 64, 8>}, {pipeline_mode = #tpu.pipeline_mode<synchronous>, transform_indices = @transform_6, window_bounds = array<i64: 1, 8>}, {pipeline_mode = #tpu.pipeline_mode<synchronous>, transform_indices = @transform_7, window_bounds = array<i64: 648, 8>}]} {
    %cst = arith.constant 0.000000e+00 : f32
    %0 = vector.broadcast %cst : f32 to vector<648x32xf32>
    %c0 = arith.constant 0 : index
    %c0_0 = arith.constant 0 : index
    %1 = vector.load %arg1[%c0, %c0_0] : memref<686x4xf32, #tpu.memory_space<vmem>>, vector<648x4xf32>
    %2 = arith.truncf %1 : vector<648x4xf32> to vector<648x4xbf16>
    %c0_1 = arith.constant 0 : index
    %c0_2 = arith.constant 0 : index
    %c0_3 = arith.constant 0 : index
    %3 = vector.load %arg2[%c0_1, %c0_2, %c0_3] : memref<9x4x32xbf16, #tpu.memory_space<vmem>>, vector<1x4x32xbf16>
    %4 = vector.shape_cast %3 : vector<1x4x32xbf16> to vector<4x32xbf16>
    %cst_4 = arith.constant dense<0.000000e+00> : vector<648x32xf32>
    %5 = tpu.matmul %2, %4, %cst_4 {dimension_numbers = #tpu.dot_dimension_numbers<[1], [0], [0], [1], [0, 0, 1, 1], [], []>} : vector<648x4xbf16>, vector<4x32xbf16>, vector<648x32xf32> -> vector<648x32xf32>
    %6 = arith.addf %0, %5 : vector<648x32xf32>
    %c1 = arith.constant 1 : index
    %c0_5 = arith.constant 0 : index
    %7 = vector.load %arg1[%c1, %c0_5] : memref<686x4xf32, #tpu.memory_space<vmem>>, vector<648x4xf32>
    %8 = arith.truncf %7 : vector<648x4xf32> to vector<648x4xbf16>
    %c1_6 = arith.constant 1 : index
    %c0_7 = arith.constant 0 : index
    %c0_8 = arith.constant 0 : index
    %9 = vector.load %arg2[%c1_6, %c0_7, %c0_8] : memref<9x4x32xbf16, #tpu.memory_space<vmem>>, vector<1x4x32xbf16>
    %10 = vector.shape_cast %9 : vector<1x4x32xbf16> to vector<4x32xbf16>
    %cst_9 = arith.constant dense<0.000000e+00> : vector<648x32xf32>
    %11 = tpu.matmul %8, %10, %cst_9 {dimension_numbers = #tpu.dot_dimension_numbers<[1], [0], [0], [1], [0, 0, 1, 1], [], []>} : vector<648x4xbf16>, vector<4x32xbf16>, vector<648x32xf32> -> vector<648x32xf32>
    %12 = arith.addf %6, %11 : vector<648x32xf32>
    %c2 = arith.constant 2 : index
    %c0_10 = arith.constant 0 : index
    %13 = vector.load %arg1[%c2, %c0_10] : memref<686x4xf32, #tpu.memory_space<vmem>>, vector<648x4xf32>
    %14 = arith.truncf %13 : vector<648x4xf32> to vector<648x4xbf16>
    %c2_11 = arith.constant 2 : index
    %c0_12 = arith.constant 0 : index
    %c0_13 = arith.constant 0 : index
    %15 = vector.load %arg2[%c2_11, %c0_12, %c0_13] : memref<9x4x32xbf16, #tpu.memory_space<vmem>>, vector<1x4x32xbf16>
    %16 = vector.shape_cast %15 : vector<1x4x32xbf16> to vector<4x32xbf16>
    %cst_14 = arith.constant dense<0.000000e+00> : vector<648x32xf32>
    %17 = tpu.matmul %14, %16, %cst_14 {dimension_numbers = #tpu.dot_dimension_numbers<[1], [0], [0], [1], [0, 0, 1, 1], [], []>} : vector<648x4xbf16>, vector<4x32xbf16>, vector<648x32xf32> -> vector<648x32xf32>
    %18 = arith.addf %12, %17 : vector<648x32xf32>
    %c18 = arith.constant 18 : index
    %c0_15 = arith.constant 0 : index
    %19 = vector.load %arg1[%c18, %c0_15] : memref<686x4xf32, #tpu.memory_space<vmem>>, vector<648x4xf32>
    %20 = arith.truncf %19 : vector<648x4xf32> to vector<648x4xbf16>
    %c3 = arith.constant 3 : index
    %c0_16 = arith.constant 0 : index
    %c0_17 = arith.constant 0 : index
    %21 = vector.load %arg2[%c3, %c0_16, %c0_17] : memref<9x4x32xbf16, #tpu.memory_space<vmem>>, vector<1x4x32xbf16>
    %22 = vector.shape_cast %21 : vector<1x4x32xbf16> to vector<4x32xbf16>
    %cst_18 = arith.constant dense<0.000000e+00> : vector<648x32xf32>
    %23 = tpu.matmul %20, %22, %cst_18 {dimension_numbers = #tpu.dot_dimension_numbers<[1], [0], [0], [1], [0, 0, 1, 1], [], []>} : vector<648x4xbf16>, vector<4x32xbf16>, vector<648x32xf32> -> vector<648x32xf32>
    %24 = arith.addf %18, %23 : vector<648x32xf32>
    %c19 = arith.constant 19 : index
    %c0_19 = arith.constant 0 : index
    %25 = vector.load %arg1[%c19, %c0_19] : memref<686x4xf32, #tpu.memory_space<vmem>>, vector<648x4xf32>
    %26 = arith.truncf %25 : vector<648x4xf32> to vector<648x4xbf16>
    %c4 = arith.constant 4 : index
    %c0_20 = arith.constant 0 : index
    %c0_21 = arith.constant 0 : index
    %27 = vector.load %arg2[%c4, %c0_20, %c0_21] : memref<9x4x32xbf16, #tpu.memory_space<vmem>>, vector<1x4x32xbf16>
    %28 = vector.shape_cast %27 : vector<1x4x32xbf16> to vector<4x32xbf16>
    %cst_22 = arith.constant dense<0.000000e+00> : vector<648x32xf32>
    %29 = tpu.matmul %26, %28, %cst_22 {dimension_numbers = #tpu.dot_dimension_numbers<[1], [0], [0], [1], [0, 0, 1, 1], [], []>} : vector<648x4xbf16>, vector<4x32xbf16>, vector<648x32xf32> -> vector<648x32xf32>
    %30 = arith.addf %24, %29 : vector<648x32xf32>
    %c20 = arith.constant 20 : index
    %c0_23 = arith.constant 0 : index
    %31 = vector.load %arg1[%c20, %c0_23] : memref<686x4xf32, #tpu.memory_space<vmem>>, vector<648x4xf32>
    %32 = arith.truncf %31 : vector<648x4xf32> to vector<648x4xbf16>
    %c5 = arith.constant 5 : index
    %c0_24 = arith.constant 0 : index
    %c0_25 = arith.constant 0 : index
    %33 = vector.load %arg2[%c5, %c0_24, %c0_25] : memref<9x4x32xbf16, #tpu.memory_space<vmem>>, vector<1x4x32xbf16>
    %34 = vector.shape_cast %33 : vector<1x4x32xbf16> to vector<4x32xbf16>
    %cst_26 = arith.constant dense<0.000000e+00> : vector<648x32xf32>
    %35 = tpu.matmul %32, %34, %cst_26 {dimension_numbers = #tpu.dot_dimension_numbers<[1], [0], [0], [1], [0, 0, 1, 1], [], []>} : vector<648x4xbf16>, vector<4x32xbf16>, vector<648x32xf32> -> vector<648x32xf32>
    %36 = arith.addf %30, %35 : vector<648x32xf32>
    %c36 = arith.constant 36 : index
    %c0_27 = arith.constant 0 : index
    %37 = vector.load %arg1[%c36, %c0_27] : memref<686x4xf32, #tpu.memory_space<vmem>>, vector<648x4xf32>
    %38 = arith.truncf %37 : vector<648x4xf32> to vector<648x4xbf16>
    %c6 = arith.constant 6 : index
    %c0_28 = arith.constant 0 : index
    %c0_29 = arith.constant 0 : index
    %39 = vector.load %arg2[%c6, %c0_28, %c0_29] : memref<9x4x32xbf16, #tpu.memory_space<vmem>>, vector<1x4x32xbf16>
    %40 = vector.shape_cast %39 : vector<1x4x32xbf16> to vector<4x32xbf16>
    %cst_30 = arith.constant dense<0.000000e+00> : vector<648x32xf32>
    %41 = tpu.matmul %38, %40, %cst_30 {dimension_numbers = #tpu.dot_dimension_numbers<[1], [0], [0], [1], [0, 0, 1, 1], [], []>} : vector<648x4xbf16>, vector<4x32xbf16>, vector<648x32xf32> -> vector<648x32xf32>
    %42 = arith.addf %36, %41 : vector<648x32xf32>
    %c37 = arith.constant 37 : index
    %c0_31 = arith.constant 0 : index
    %43 = vector.load %arg1[%c37, %c0_31] : memref<686x4xf32, #tpu.memory_space<vmem>>, vector<648x4xf32>
    %44 = arith.truncf %43 : vector<648x4xf32> to vector<648x4xbf16>
    %c7 = arith.constant 7 : index
    %c0_32 = arith.constant 0 : index
    %c0_33 = arith.constant 0 : index
    %45 = vector.load %arg2[%c7, %c0_32, %c0_33] : memref<9x4x32xbf16, #tpu.memory_space<vmem>>, vector<1x4x32xbf16>
    %46 = vector.shape_cast %45 : vector<1x4x32xbf16> to vector<4x32xbf16>
    %cst_34 = arith.constant dense<0.000000e+00> : vector<648x32xf32>
    %47 = tpu.matmul %44, %46, %cst_34 {dimension_numbers = #tpu.dot_dimension_numbers<[1], [0], [0], [1], [0, 0, 1, 1], [], []>} : vector<648x4xbf16>, vector<4x32xbf16>, vector<648x32xf32> -> vector<648x32xf32>
    %48 = arith.addf %42, %47 : vector<648x32xf32>
    %c38 = arith.constant 38 : index
    %c0_35 = arith.constant 0 : index
    %49 = vector.load %arg1[%c38, %c0_35] : memref<686x4xf32, #tpu.memory_space<vmem>>, vector<648x4xf32>
    %50 = arith.truncf %49 : vector<648x4xf32> to vector<648x4xbf16>
    %c8 = arith.constant 8 : index
    %c0_36 = arith.constant 0 : index
    %c0_37 = arith.constant 0 : index
    %51 = vector.load %arg2[%c8, %c0_36, %c0_37] : memref<9x4x32xbf16, #tpu.memory_space<vmem>>, vector<1x4x32xbf16>
    %52 = vector.shape_cast %51 : vector<1x4x32xbf16> to vector<4x32xbf16>
    %cst_38 = arith.constant dense<0.000000e+00> : vector<648x32xf32>
    %53 = tpu.matmul %50, %52, %cst_38 {dimension_numbers = #tpu.dot_dimension_numbers<[1], [0], [0], [1], [0, 0, 1, 1], [], []>} : vector<648x4xbf16>, vector<4x32xbf16>, vector<648x32xf32> -> vector<648x32xf32>
    %54 = arith.addf %48, %53 : vector<648x32xf32>
    %c0_39 = arith.constant 0 : index
    %c0_40 = arith.constant 0 : index
    %55 = vector.load %arg3[%c0_39, %c0_40] : memref<1x32xf32, #tpu.memory_space<vmem>>, vector<1x32xf32>
    %56 = vector.broadcast %55 : vector<1x32xf32> to vector<648x32xf32>
    %57 = arith.addf %54, %56 : vector<648x32xf32>
    %cst_41 = arith.constant 0.000000e+00 : f32
    %58 = vector.broadcast %cst_41 : f32 to vector<648x32xf32>
    %59 = arith.maximumf %57, %58 : vector<648x32xf32>
    %60 = arith.truncf %59 : vector<648x32xf32> to vector<648x32xbf16>
    %c0_42 = arith.constant 0 : index
    %c0_43 = arith.constant 0 : index
    %61 = vector.load %arg4[%c0_42, %c0_43] : memref<32x64xbf16, #tpu.memory_space<vmem>>, vector<32x64xbf16>
    %cst_44 = arith.constant dense<0.000000e+00> : vector<648x64xf32>
    %62 = tpu.matmul %60, %61, %cst_44 {dimension_numbers = #tpu.dot_dimension_numbers<[1], [0], [0], [1], [0, 0, 1, 1], [], []>} : vector<648x32xbf16>, vector<32x64xbf16>, vector<648x64xf32> -> vector<648x64xf32>
    %c0_45 = arith.constant 0 : index
    %c0_46 = arith.constant 0 : index
    %63 = vector.load %arg5[%c0_45, %c0_46] : memref<1x64xf32, #tpu.memory_space<vmem>>, vector<1x64xf32>
    %64 = vector.broadcast %63 : vector<1x64xf32> to vector<648x64xf32>
    %65 = arith.addf %62, %64 : vector<648x64xf32>
    %cst_47 = arith.constant 0.000000e+00 : f32
    %66 = vector.broadcast %cst_47 : f32 to vector<648x64xf32>
    %67 = arith.maximumf %65, %66 : vector<648x64xf32>
    %68 = arith.truncf %67 : vector<648x64xf32> to vector<648x64xbf16>
    %c0_48 = arith.constant 0 : index
    %c0_49 = arith.constant 0 : index
    %69 = vector.load %arg6[%c0_48, %c0_49] : memref<64x8xbf16, #tpu.memory_space<vmem>>, vector<64x8xbf16>
    %cst_50 = arith.constant dense<0.000000e+00> : vector<648x8xf32>
    %70 = tpu.matmul %68, %69, %cst_50 {dimension_numbers = #tpu.dot_dimension_numbers<[1], [0], [0], [1], [0, 0, 1, 1], [], []>} : vector<648x64xbf16>, vector<64x8xbf16>, vector<648x8xf32> -> vector<648x8xf32>
    %c0_51 = arith.constant 0 : index
    %c0_52 = arith.constant 0 : index
    %71 = vector.load %arg7[%c0_51, %c0_52] : memref<1x8xf32, #tpu.memory_space<vmem>>, vector<1x8xf32>
    %72 = vector.broadcast %71 : vector<1x8xf32> to vector<648x8xf32>
    %73 = arith.addf %70, %72 : vector<648x8xf32>
    %c0_53 = arith.constant 0 : index
    %c0_54 = arith.constant 0 : index
    %74 = vector.load %arg8[%c0_53, %c0_54] : memref<648x8xf32, #tpu.memory_space<vmem>>, vector<648x8xf32>
    tpu.vector_store %arg8[%c0_53, %c0_54], %73 {strides = array<i32>} : memref<648x8xf32, #tpu.memory_space<vmem>>, vector<648x8xf32>,
    return
  }
  func.func @transform_0(%arg0: i32) -> (i32, i32) {
    %c0_i32 = arith.constant 0 : i32
    %c0_i32_0 = arith.constant 0 : i32
    %c0_i32_1 = arith.constant 0 : i32
    return %c0_i32, %c0_i32_0 : i32, i32
  }
  func.func @transform_1(%arg0: i32) -> (i32, i32, i32) {
    %c0_i32 = arith.constant 0 : i32
    %c0_i32_0 = arith.constant 0 : i32
    %c0_i32_1 = arith.constant 0 : i32
    %c0_i32_2 = arith.constant 0 : i32
    return %c0_i32, %c0_i32_0, %c0_i32_1 : i32, i32, i32
  }
  func.func @transform_2(%arg0: i32) -> (i32, i32) {
    %c0_i32 = arith.constant 0 : i32
    %c0_i32_0 = arith.constant 0 : i32
    %c0_i32_1 = arith.constant 0 : i32
    return %c0_i32, %c0_i32_0 : i32, i32
  }
  func.func @transform_3(%arg0: i32) -> (i32, i32) {
    %c0_i32 = arith.constant 0 : i32
    %c0_i32_0 = arith.constant 0 : i32
    %c0_i32_1 = arith.constant 0 : i32
    return %c0_i32, %c0_i32_0 : i32, i32
  }
  func.func @transform_4(%arg0: i32) -> (i32, i32) {
    %c0_i32 = arith.constant 0 : i32
    %c0_i32_0 = arith.constant 0 : i32
    %c0_i32_1 = arith.constant 0 : i32
    return %c0_i32, %c0_i32_0 : i32, i32
  }
  func.func @transform_5(%arg0: i32) -> (i32, i32) {
    %c0_i32 = arith.constant 0 : i32
    %c0_i32_0 = arith.constant 0 : i32
    %c0_i32_1 = arith.constant 0 : i32
    return %c0_i32, %c0_i32_0 : i32, i32
  }
  func.func @transform_6(%arg0: i32) -> (i32, i32) {
    %c0_i32 = arith.constant 0 : i32
    %c0_i32_0 = arith.constant 0 : i32
    %c0_i32_1 = arith.constant 0 : i32
    return %c0_i32, %c0_i32_0 : i32, i32
  }
  func.func @transform_7(%arg0: i32) -> (i32, i32) {
    %c0_i32 = arith.constant 0 : i32
    %c0_i32_0 = arith.constant 0 : i32
    %c0_i32_1 = arith.constant 0 : i32
    return %c0_i32, %c0_i32_0 : i32, i32
  }
}

</mosaic_0001>

<llo_original>
// kernel: modu2_forward.1
$region0: #{modu2_forward.1}
  #allocation0 [shape = 'u32[]', space=smem, size = 0x4, offset = 0x4, fixed_abs, tag = 'smem constant byte address 0x4 - core index']
  #allocation1 [shape = 'u32[144,128]{1,0:T(1,128)}', space=vmem, size = 0x12000, scoped, tag = 'internal scratch']
  %s0 = inlined_call_operand.vmem [shape: f32[686,4], index: 0, kind: input, shape index: {}]
  %s1 = inlined_call_operand.vmem [shape: bf16[9,4,32], index: 1, kind: input, shape index: {}]
  %s2 = inlined_call_operand.vmem [shape: f32[1,32], index: 2, kind: input, shape index: {}]
  %s3 = inlined_call_operand.vmem [shape: bf16[32,64], index: 3, kind: input, shape index: {}]
  %s4 = inlined_call_operand.vmem [shape: f32[1,64], index: 4, kind: input, shape index: {}]
  %s5 = inlined_call_operand.vmem [shape: bf16[64,8], index: 5, kind: input, shape index: {}]
  %s6 = inlined_call_operand.vmem [shape: f32[1,8], index: 6, kind: input, shape index: {}]
  %s7 = inlined_call_operand.vmem [shape: f32[648,8], index: 7, kind: output, shape index: {}]
  %s8 = sld [smem:[#allocation0]]
  $region38: #{modu2_forward.1} parent=0
    _
  %s10 = ssub.s32 1, %s8
  %s11 = scalar_select 0, %s10, %s8
  // Predicated region
  $region2: #{modu2_forward.1} parent=0 // pred_check
    _
  $region3: #{modu2_forward.1} parent=0 // pred_check_branch
    %13 = sbr.rel (0) target = $region5
  $region4: #{modu2_forward.1} parent=0 // pred_region
    _
  $region5: #{modu2_forward.1} parent=0 // pred_fallthru
    _
  // Predicated region
  $region6: #{modu2_forward.1} parent=0 // pred_check
    _
  $region7: #{modu2_forward.1} parent=0 // pred_check_branch
    %15 = sbr.rel (0) target = $region9
  $region8: #{modu2_forward.1} parent=0 // pred_region
    _
  $region9: #{modu2_forward.1} parent=0 // pred_fallthru
    _
  // Predicated region
  $region10: #{modu2_forward.1} parent=0 // pred_check
    _
  $region11: #{modu2_forward.1} parent=0 // pred_check_branch
    %17 = sbr.rel (0) target = $region13
  $region12: #{modu2_forward.1} parent=0 // pred_region
    _
  $region13: #{modu2_forward.1} parent=0 // pred_fallthru
    _
  // Predicated region
  $region14: #{modu2_forward.1} parent=0 // pred_check
    _
  $region15: #{modu2_forward.1} parent=0 // pred_check_branch
    %19 = sbr.rel (0) target = $region17
  $region16: #{modu2_forward.1} parent=0 // pred_region
    _
  $region17: #{modu2_forward.1} parent=0 // pred_fallthru
    _
  // Predicated region
  $region18: #{modu2_forward.1} parent=0 // pred_check
    _
  $region19: #{modu2_forward.1} parent=0 // pred_check_branch
    %21 = sbr.rel (0) target = $region21
  $region20: #{modu2_forward.1} parent=0 // pred_region
    _
  $region21: #{modu2_forward.1} parent=0 // pred_fallthru
    _
  // Predicated region
  $region22: #{modu2_forward.1} parent=0 // pred_check
    _
  $region23: #{modu2_forward.1} parent=0 // pred_check_branch
    %23 = sbr.rel (0) target = $region25
  $region24: #{modu2_forward.1} parent=0 // pred_region
    _
  $region25: #{modu2_forward.1} parent=0 // pred_fallthru
    _
  // Predicated region
  $region26: #{modu2_forward.1} parent=0 // pred_check
    _
  $region27: #{modu2_forward.1} parent=0 // pred_check_branch
    %25 = sbr.rel (0) target = $region29
  $region28: #{modu2_forward.1} parent=0 // pred_region
    _
  $region29: #{modu2_forward.1} parent=0 // pred_fallthru
    _
  %v27 = vld [vmem:[%s0] sm:$0xff]
  %v28 = vld [vmem:[%s0 + $0x8] sm:$0xff]
  %v29 = vld [vmem:[%s0 + $0x10] sm:$0xff]
  %v30 = vld [vmem:[%s0 + $0x18] sm:$0xff]
  %v31 = vld [vmem:[%s0 + $0x20] sm:$0xff]
  %v32 = vld [vmem:[%s0 + $0x28] sm:$0xff]
  %v33 = vld [vmem:[%s0 + $0x30] sm:$0xff]
  %v34 = vld [vmem:[%s0 + $0x38] sm:$0xff]
  %v35 = vld [vmem:[%s0 + $0x40] sm:$0xff]
  %v36 = vld [vmem:[%s0 + $0x48] sm:$0xff]
  %v37 = vld [vmem:[%s0 + $0x50] sm:$0xff]
  %v38 = vld [vmem:[%s0 + $0x58] sm:$0xff]
  %v39 = vld [vmem:[%s0 + $0x60] sm:$0xff]
  %v40 = vld [vmem:[%s0 + $0x68] sm:$0xff]
  %v41 = vld [vmem:[%s0 + $0x70] sm:$0xff]
  %v42 = vld [vmem:[%s0 + $0x78] sm:$0xff]
  %v43 = vld [vmem:[%s0 + $0x80] sm:$0xff]
  %v44 = vld [vmem:[%s0 + $0x88] sm:$0xff]
  %v45 = vld [vmem:[%s0 + $0x90] sm:$0xff]
  %v46 = vld [vmem:[%s0 + $0x98] sm:$0xff]
  %v47 = vld [vmem:[%s0 + $0xa0] sm:$0xff]
  %v48 = vld [vmem:[%s0 + $0xa8] sm:$0xff]
  %v49 = vld [vmem:[%s0 + $0xb0] sm:$0xff]
  %v50 = vld [vmem:[%s0 + $0xb8] sm:$0xff]
  %v51 = vld [vmem:[%s0 + $0xc0] sm:$0xff]
  %v52 = vld [vmem:[%s0 + $0xc8] sm:$0xff]
  %v53 = vld [vmem:[%s0 + $0xd0] sm:$0xff]
  %v54 = vld [vmem:[%s0 + $0xd8] sm:$0xff]
  %v55 = vld [vmem:[%s0 + $0xe0] sm:$0xff]
  %v56 = vld [vmem:[%s0 + $0xe8] sm:$0xff]
  %v57 = vld [vmem:[%s0 + $0xf0] sm:$0xff]
  %v58 = vld [vmem:[%s0 + $0xf8] sm:$0xff]
  %v59 = vld [vmem:[%s0 + $0x100] sm:$0xff]
  %v60 = vld [vmem:[%s0 + $0x108] sm:$0xff]
  %v61 = vld [vmem:[%s0 + $0x110] sm:$0xff]
  %v62 = vld [vmem:[%s0 + $0x118] sm:$0xff]
  %v63 = vld [vmem:[%s0 + $0x120] sm:$0xff]
  %v64 = vld [vmem:[%s0 + $0x128] sm:$0xff]
  %v65 = vld [vmem:[%s0 + $0x130] sm:$0xff]
  %v66 = vld [vmem:[%s0 + $0x138] sm:$0xff]
  %v67 = vld [vmem:[%s0 + $0x140] sm:$0xff]
  %v68 = vld [vmem:[%s0 + $0x148] sm:$0xff]
  %v69 = vld [vmem:[%s0 + $0x150] sm:$0xff]
  %v70 = vld [vmem:[%s0 + $0x158] sm:$0xff]
  %v71 = vld [vmem:[%s0 + $0x160] sm:$0xff]
  %v72 = vld [vmem:[%s0 + $0x168] sm:$0xff]
  %v73 = vld [vmem:[%s0 + $0x170] sm:$0xff]
  %v74 = vld [vmem:[%s0 + $0x178] sm:$0xff]
  %v75 = vld [vmem:[%s0 + $0x180] sm:$0xff]
  %v76 = vld [vmem:[%s0 + $0x188] sm:$0xff]
  %v77 = vld [vmem:[%s0 + $0x190] sm:$0xff]
  %v78 = vld [vmem:[%s0 + $0x198] sm:$0xff]
  %v79 = vld [vmem:[%s0 + $0x1a0] sm:$0xff]
  %v80 = vld [vmem:[%s0 + $0x1a8] sm:$0xff]
  %v81 = vld [vmem:[%s0 + $0x1b0] sm:$0xff]
  %v82 = vld [vmem:[%s0 + $0x1b8] sm:$0xff]
  %v83 = vld [vmem:[%s0 + $0x1c0] sm:$0xff]
  %v84 = vld [vmem:[%s0 + $0x1c8] sm:$0xff]
  %v85 = vld [vmem:[%s0 + $0x1d0] sm:$0xff]
  %v86 = vld [vmem:[%s0 + $0x1d8] sm:$0xff]
  %v87 = vld [vmem:[%s0 + $0x1e0] sm:$0xff]
  %v88 = vld [vmem:[%s0 + $0x1e8] sm:$0xff]
  %v89 = vld [vmem:[%s0 + $0x1f0] sm:$0xff]
  %v90 = vld [vmem:[%s0 + $0x1f8] sm:$0xff]
  %v91 = vld [vmem:[%s0 + $0x200] sm:$0xff]
  %v92 = vld [vmem:[%s0 + $0x208] sm:$0xff]
  %v93 = vld [vmem:[%s0 + $0x210] sm:$0xff]
  %v94 = vld [vmem:[%s0 + $0x218] sm:$0xff]
  %v95 = vld [vmem:[%s0 + $0x220] sm:$0xff]
  %v96 = vld [vmem:[%s0 + $0x228] sm:$0xff]
  %v97 = vld [vmem:[%s0 + $0x230] sm:$0xff]
  %v98 = vld [vmem:[%s0 + $0x238] sm:$0xff]
  %v99 = vld [vmem:[%s0 + $0x240] sm:$0xff]
  %v100 = vld [vmem:[%s0 + $0x248] sm:$0xff]
  %v101 = vld [vmem:[%s0 + $0x250] sm:$0xff]
  %v102 = vld [vmem:[%s0 + $0x258] sm:$0xff]
  %v103 = vld [vmem:[%s0 + $0x260] sm:$0xff]
  %v104 = vld [vmem:[%s0 + $0x268] sm:$0xff]
  %v105 = vld [vmem:[%s0 + $0x270] sm:$0xff]
  %v106 = vld [vmem:[%s0 + $0x278] sm:$0xff]
  %v107 = vld [vmem:[%s0 + $0x280] sm:$0xff]
  %v108 = vpack.c.bf16 %v28, %v27
  %v109 = vpack.c.bf16 %v30, %v29
  %v110 = vpack.c.bf16 %v32, %v31
  %v111 = vpack.c.bf16 %v34, %v33
  %v112 = vpack.c.bf16 %v36, %v35
  %v113 = vpack.c.bf16 %v38, %v37
  %v114 = vpack.c.bf16 %v40, %v39
  %v115 = vpack.c.bf16 %v42, %v41
  %v116 = vpack.c.bf16 %v44, %v43
  %v117 = vpack.c.bf16 %v46, %v45
  %v118 = vpack.c.bf16 %v48, %v47
  %v119 = vpack.c.bf16 %v50, %v49
  %v120 = vpack.c.bf16 %v52, %v51
  %v121 = vpack.c.bf16 %v54, %v53
  %v122 = vpack.c.bf16 %v56, %v55
  %v123 = vpack.c.bf16 %v58, %v57
  %v124 = vpack.c.bf16 %v60, %v59
  %v125 = vpack.c.bf16 %v62, %v61
  %v126 = vpack.c.bf16 %v64, %v63
  %v127 = vpack.c.bf16 %v66, %v65
  %v128 = vpack.c.bf16 %v68, %v67
  %v129 = vpack.c.bf16 %v70, %v69
  %v130 = vpack.c.bf16 %v72, %v71
  %v131 = vpack.c.bf16 %v74, %v73
  %v132 = vpack.c.bf16 %v76, %v75
  %v133 = vpack.c.bf16 %v78, %v77
  %v134 = vpack.c.bf16 %v80, %v79
  %v135 = vpack.c.bf16 %v82, %v81
  %v136 = vpack.c.bf16 %v84, %v83
  %v137 = vpack.c.bf16 %v86, %v85
  %v138 = vpack.c.bf16 %v88, %v87
  %v139 = vpack.c.bf16 %v90, %v89
  %v140 = vpack.c.bf16 %v92, %v91
  %v141 = vpack.c.bf16 %v94, %v93
  %v142 = vpack.c.bf16 %v96, %v95
  %v143 = vpack.c.bf16 %v98, %v97
  %v144 = vpack.c.bf16 %v100, %v99
  %v145 = vpack.c.bf16 %v102, %v101
  %v146 = vpack.c.bf16 %v104, %v103
  %v147 = vpack.c.bf16 %v106, %v105
  %v148 = vpack.c.bf16 %v107, %v107
  %v149 = vld [vmem:[%s1] sm:$0x3]
  %v150 = vld [vmem:[%s0 + $0x1] sm:$0xff]
  %v151 = vld [vmem:[%s0 + $0x9] sm:$0xff]
  %v152 = vld [vmem:[%s0 + $0x11] sm:$0xff]
  %v153 = vld [vmem:[%s0 + $0x19] sm:$0xff]
  %v154 = vld [vmem:[%s0 + $0x21] sm:$0xff]
  %v155 = vld [vmem:[%s0 + $0x29] sm:$0xff]
  %v156 = vld [vmem:[%s0 + $0x31] sm:$0xff]
  %v157 = vld [vmem:[%s0 + $0x39] sm:$0xff]
  %v158 = vld [vmem:[%s0 + $0x41] sm:$0xff]
  %v159 = vld [vmem:[%s0 + $0x49] sm:$0xff]
  %v160 = vld [vmem:[%s0 + $0x51] sm:$0xff]
  %v161 = vld [vmem:[%s0 + $0x59] sm:$0xff]
  %v162 = vld [vmem:[%s0 + $0x61] sm:$0xff]
  %v163 = vld [vmem:[%s0 + $0x69] sm:$0xff]
  %v164 = vld [vmem:[%s0 + $0x71] sm:$0xff]
  %v165 = vld [vmem:[%s0 + $0x79] sm:$0xff]
  %v166 = vld [vmem:[%s0 + $0x81] sm:$0xff]
  %v167 = vld [vmem:[%s0 + $0x89] sm:$0xff]
  %v168 = vld [vmem:[%s0 + $0x91] sm:$0xff]
  %v169 = vld [vmem:[%s0 + $0x99] sm:$0xff]
  %v170 = vld [vmem:[%s0 + $0xa1] sm:$0xff]
  %v171 = vld [vmem:[%s0 + $0xa9] sm:$0xff]
  %v172 = vld [vmem:[%s0 + $0xb1] sm:$0xff]
  %v173 = vld [vmem:[%s0 + $0xb9] sm:$0xff]
  %v174 = vld [vmem:[%s0 + $0xc1] sm:$0xff]
  %v175 = vld [vmem:[%s0 + $0xc9] sm:$0xff]
  %v176 = vld [vmem:[%s0 + $0xd1] sm:$0xff]
  %v177 = vld [vmem:[%s0 + $0xd9] sm:$0xff]
  %v178 = vld [vmem:[%s0 + $0xe1] sm:$0xff]
  %v179 = vld [vmem:[%s0 + $0xe9] sm:$0xff]
  %v180 = vld [vmem:[%s0 + $0xf1] sm:$0xff]
  %v181 = vld [vmem:[%s0 + $0xf9] sm:$0xff]
  %v182 = vld [vmem:[%s0 + $0x101] sm:$0xff]
  %v183 = vld [vmem:[%s0 + $0x109] sm:$0xff]
  %v184 = vld [vmem:[%s0 + $0x111] sm:$0xff]
  %v185 = vld [vmem:[%s0 + $0x119] sm:$0xff]
  %v186 = vld [vmem:[%s0 + $0x121] sm:$0xff]
  %v187 = vld [vmem:[%s0 + $0x129] sm:$0xff]
  %v188 = vld [vmem:[%s0 + $0x131] sm:$0xff]
  %v189 = vld [vmem:[%s0 + $0x139] sm:$0xff]
  %v190 = vld [vmem:[%s0 + $0x141] sm:$0xff]
  %v191 = vld [vmem:[%s0 + $0x149] sm:$0xff]
  %v192 = vld [vmem:[%s0 + $0x151] sm:$0xff]
  %v193 = vld [vmem:[%s0 + $0x159] sm:$0xff]
  %v194 = vld [vmem:[%s0 + $0x161] sm:$0xff]
  %v195 = vld [vmem:[%s0 + $0x169] sm:$0xff]
  %v196 = vld [vmem:[%s0 + $0x171] sm:$0xff]
  %v197 = vld [vmem:[%s0 + $0x179] sm:$0xff]
  %v198 = vld [vmem:[%s0 + $0x181] sm:$0xff]
  %v199 = vld [vmem:[%s0 + $0x189] sm:$0xff]
  %v200 = vld [vmem:[%s0 + $0x191] sm:$0xff]
  %v201 = vld [vmem:[%s0 + $0x199] sm:$0xff]
  %v202 = vld [vmem:[%s0 + $0x1a1] sm:$0xff]
  %v203 = vld [vmem:[%s0 + $0x1a9] sm:$0xff]
  %v204 = vld [vmem:[%s0 + $0x1b1] sm:$0xff]
  %v205 = vld [vmem:[%s0 + $0x1b9] sm:$0xff]
  %v206 = vld [vmem:[%s0 + $0x1c1] sm:$0xff]
  %v207 = vld [vmem:[%s0 + $0x1c9] sm:$0xff]
  %v208 = vld [vmem:[%s0 + $0x1d1] sm:$0xff]
  %v209 = vld [vmem:[%s0 + $0x1d9] sm:$0xff]
  %v210 = vld [vmem:[%s0 + $0x1e1] sm:$0xff]
  %v211 = vld [vmem:[%s0 + $0x1e9] sm:$0xff]
  %v212 = vld [vmem:[%s0 + $0x1f1] sm:$0xff]
  %v213 = vld [vmem:[%s0 + $0x1f9] sm:$0xff]
  %v214 = vld [vmem:[%s0 + $0x201] sm:$0xff]
  %v215 = vld [vmem:[%s0 + $0x209] sm:$0xff]
  %v216 = vld [vmem:[%s0 + $0x211] sm:$0xff]
  %v217 = vld [vmem:[%s0 + $0x219] sm:$0xff]
  %v218 = vld [vmem:[%s0 + $0x221] sm:$0xff]
  %v219 = vld [vmem:[%s0 + $0x229] sm:$0xff]
  %v220 = vld [vmem:[%s0 + $0x231] sm:$0xff]
  %v221 = vld [vmem:[%s0 + $0x239] sm:$0xff]
  %v222 = vld [vmem:[%s0 + $0x241] sm:$0xff]
  %v223 = vld [vmem:[%s0 + $0x249] sm:$0xff]
  %v224 = vld [vmem:[%s0 + $0x251] sm:$0xff]
  %v225 = vld [vmem:[%s0 + $0x259] sm:$0xff]
  %v226 = vld [vmem:[%s0 + $0x261] sm:$0xff]
  %v227 = vld [vmem:[%s0 + $0x269] sm:$0xff]
  %v228 = vld [vmem:[%s0 + $0x271] sm:$0xff]
  %v229 = vld [vmem:[%s0 + $0x279] sm:$0xff]
  %v230 = vld [vmem:[%s0 + $0x281] sm:$0xff]
  %v231 = vpack.c.bf16 %v151, %v150
  %v232 = vpack.c.bf16 %v153, %v152
  %v233 = vpack.c.bf16 %v155, %v154
  %v234 = vpack.c.bf16 %v157, %v156
  %v235 = vpack.c.bf16 %v159, %v158
  %v236 = vpack.c.bf16 %v161, %v160
  %v237 = vpack.c.bf16 %v163, %v162
  %v238 = vpack.c.bf16 %v165, %v164
  %v239 = vpack.c.bf16 %v167, %v166
  %v240 = vpack.c.bf16 %v169, %v168
  %v241 = vpack.c.bf16 %v171, %v170
  %v242 = vpack.c.bf16 %v173, %v172
  %v243 = vpack.c.bf16 %v175, %v174
  %v244 = vpack.c.bf16 %v177, %v176
  %v245 = vpack.c.bf16 %v179, %v178
  %v246 = vpack.c.bf16 %v181, %v180
  %v247 = vpack.c.bf16 %v183, %v182
  %v248 = vpack.c.bf16 %v185, %v184
  %v249 = vpack.c.bf16 %v187, %v186
  %v250 = vpack.c.bf16 %v189, %v188
  %v251 = vpack.c.bf16 %v191, %v190
  %v252 = vpack.c.bf16 %v193, %v192
  %v253 = vpack.c.bf16 %v195, %v194
  %v254 = vpack.c.bf16 %v197, %v196
  %v255 = vpack.c.bf16 %v199, %v198
  %v256 = vpack.c.bf16 %v201, %v200
  %v257 = vpack.c.bf16 %v203, %v202
  %v258 = vpack.c.bf16 %v205, %v204
  %v259 = vpack.c.bf16 %v207, %v206
  %v260 = vpack.c.bf16 %v209, %v208
  %v261 = vpack.c.bf16 %v211, %v210
  %v262 = vpack.c.bf16 %v213, %v212
  %v263 = vpack.c.bf16 %v215, %v214
  %v264 = vpack.c.bf16 %v217, %v216
  %v265 = vpack.c.bf16 %v219, %v218
  %v266 = vpack.c.bf16 %v221, %v220
  %v267 = vpack.c.bf16 %v223, %v222
  %v268 = vpack.c.bf16 %v225, %v224
  %v269 = vpack.c.bf16 %v227, %v226
  %v270 = vpack.c.bf16 %v229, %v228
  %v271 = vpack.c.bf16 %v230, %v230
  %s272 = scalar_lea.vmem %s1, 2
  %v273 = vld [vmem:[%s272] sm:$0x3]
  %vm274 = vcmask 31744
  %v276 = vsel %vm274, %v231, 0
  %v279 = vsel %vm274, %v232, 0
  %v282 = vsel %vm274, %v233, 0
  %v285 = vsel %vm274, %v234, 0
  %v288 = vsel %vm274, %v235, 0
  %v291 = vsel %vm274, %v236, 0
  %v294 = vsel %vm274, %v237, 0
  %v297 = vsel %vm274, %v238, 0
  %v300 = vsel %vm274, %v239, 0
  %v303 = vsel %vm274, %v240, 0
  %v306 = vsel %vm274, %v241, 0
  %v309 = vsel %vm274, %v242, 0
  %v312 = vsel %vm274, %v243, 0
  %v315 = vsel %vm274, %v244, 0
  %v318 = vsel %vm274, %v245, 0
  %v321 = vsel %vm274, %v246, 0
  %v324 = vsel %vm274, %v247, 0
  %v327 = vsel %vm274, %v248, 0
  %v330 = vsel %vm274, %v249, 0
  %v333 = vsel %vm274, %v250, 0
  %v336 = vsel %vm274, %v251, 0
  %v339 = vsel %vm274, %v252, 0
  %v342 = vsel %vm274, %v253, 0
  %v345 = vsel %vm274, %v254, 0
  %v348 = vsel %vm274, %v255, 0
  %v351 = vsel %vm274, %v256, 0
  %v354 = vsel %vm274, %v257, 0
  %v357 = vsel %vm274, %v258, 0
  %v360 = vsel %vm274, %v259, 0
  %v363 = vsel %vm274, %v260, 0
  %v366 = vsel %vm274, %v261, 0
  %v369 = vsel %vm274, %v262, 0
  %v372 = vsel %vm274, %v263, 0
  %v375 = vsel %vm274, %v264, 0
  %v378 = vsel %vm274, %v265, 0
  %v381 = vsel %vm274, %v266, 0
  %v384 = vsel %vm274, %v267, 0
  %v387 = vsel %vm274, %v268, 0
  %v390 = vsel %vm274, %v269, 0
  %v393 = vsel %vm274, %v270, 0
  %v396 = vsel %vm274, %v271, 0
  %vm398 = vcmask 1041408
  %v400 = vsel %vm398, %v273, 0
  %402 = vmatprep.subr.bf16.mxu0 0
  %403 = vmatpush1.bf16.msra.mxu0 %v400
  %404 = vmatprep.subr.bf16.mxu0 0
  %405 = vmatpush1.bf16.msra.mxu0 0
  %406 = vmatprep.subr.bf16.mxu0 0
  %407 = vmatpush1.bf16.msra.mxu0 0
  %408 = vmatprep.subr.bf16.mxu0 0
  %409 = vmatpush1.bf16.msra.mxu0 0
  %410 = vmatprep.subr.bf16.mxu0 0
  %411 = vmatpush1.bf16.msra.mxu0 0
  %412 = vmatprep.subr.bf16.mxu0 0
  %413 = vmatpush1.bf16.msra.mxu0 0
  %414 = vmatprep.subr.bf16.mxu0 0
  %415 = vmatpush1.bf16.msra.mxu0 0
  %416 = vmatprep.subr.bf16.mxu0 0
  %417 = vmatpush1.bf16.msra.mxu0 0
  %418 = vmatprep.subr.bf16.mxu0 0
  %419 = vmatpush1.bf16.msra.mxu0 0
  %420 = vmatprep.subr.bf16.mxu0 0
  %421 = vmatpush1.bf16.msra.mxu0 0
  %422 = vmatprep.subr.bf16.mxu0 0
  %423 = vmatpush1.bf16.msra.mxu0 0
  %424 = vmatprep.subr.bf16.mxu0 0
  %425 = vmatpush1.bf16.msra.mxu0 0
  %426 = vmatprep.subr.bf16.mxu0 0
  %427 = vmatpush1.bf16.msra.mxu0 0
  %428 = vmatprep.subr.bf16.mxu0 0
  %429 = vmatpush1.bf16.msra.mxu0 0
  %430 = vmatprep.subr.bf16.mxu0 0
  %431 = vmatpush1.bf16.msra.mxu0 0
  %432 = vmatprep.subr.bf16.mxu0 0
  %433 = vmatpush1.bf16.msra.mxu0 0
  %434 = vmatprep.mubr.bf16.mxu0 0
  %435 = vmatmul.mubr.bf16.gmra.mrb[0].mxu0 %v276
  %v436 = vpop.f32.mrb[0].mxu0
  %v437 = vadd.f32 0.0, %v436
  %v438 = vpop.f32.mrb[0].mxu0
  %v439 = vpop.f32.mrb[0].mxu0
  %v440 = vadd.f32 0.0, %v439
  %v441 = vpop.f32.mrb[0].mxu0
  %442 = vmatprep.mubr.bf16.mxu0 0
  %443 = vmatmul.mubr.bf16.gmra.mrb[0].mxu0 %v279
  %v444 = vpop.f32.mrb[0].mxu0
  %v445 = vadd.f32 0.0, %v444
  %v446 = vpop.f32.mrb[0].mxu0
  %v447 = vpop.f32.mrb[0].mxu0
  %v448 = vadd.f32 0.0, %v447
  %v449 = vpop.f32.mrb[0].mxu0
  %450 = vmatprep.mubr.bf16.mxu0 0
  %451 = vmatmul.mubr.bf16.gmra.mrb[0].mxu0 %v282
  %v452 = vpop.f32.mrb[0].mxu0
  %v453 = vadd.f32 0.0, %v452
  %v454 = vpop.f32.mrb[0].mxu0
  %v455 = vpop.f32.mrb[0].mxu0
  %v456 = vadd.f32 0.0, %v455
  %v457 = vpop.f32.mrb[0].mxu0
  %458 = vmatprep.mubr.bf16.mxu0 0
  %459 = vmatmul.mubr.bf16.gmra.mrb[0].mxu0 %v285
  %v460 = vpop.f32.mrb[0].mxu0
  %v461 = vadd.f32 0.0, %v460
  %v462 = vpop.f32.mrb[0].mxu0
  %v463 = vpop.f32.mrb[0].mxu0
  %v464 = vadd.f32 0.0, %v463
  %v465 = vpop.f32.mrb[0].mxu0
  %466 = vmatprep.mubr.bf16.mxu0 0
  %467 = vmatmul.mubr.bf16.gmra.mrb[0].mxu0 %v288
  %v468 = vpop.f32.mrb[0].mxu0
  %v469 = vadd.f32 0.0, %v468
  %v470 = vpop.f32.mrb[0].mxu0
  %v471 = vpop.f32.mrb[0].mxu0
  %v472 = vadd.f32 0.0, %v471
  %v473 = vpop.f32.mrb[0].mxu0
  %474 = vmatprep.mubr.bf16.mxu0 0
  %475 = vmatmul.mubr.bf16.gmra.mrb[0].mxu0 %v291
  %v476 = vpop.f32.mrb[0].mxu0
  %v477 = vadd.f32 0.0, %v476
  %v478 = vpop.f32.mrb[0].mxu0
  %v479 = vpop.f32.mrb[0].mxu0
  %v480 = vadd.f32 0.0, %v479
  %v481 = vpop.f32.mrb[0].mxu0
  %482 = vmatprep.mubr.bf16.mxu0 0
  %483 = vmatmul.mubr.bf16.gmra.mrb[0].mxu0 %v294
  %v484 = vpop.f32.mrb[0].mxu0
  %v485 = vadd.f32 0.0, %v484
  %v486 = vpop.f32.mrb[0].mxu0
  %v487 = vpop.f32.mrb[0].mxu0
  %v488 = vadd.f32 0.0, %v487
  %v489 = vpop.f32.mrb[0].mxu0
  %490 = vmatprep.mubr.bf16.mxu0 0
  %491 = vmatmul.mubr.bf16.gmra.mrb[0].mxu0 %v297
  %v492 = vpop.f32.mrb[0].mxu0
  %v493 = vadd.f32 0.0, %v492
  %v494 = vpop.f32.mrb[0].mxu0
  %v495 = vpop.f32.mrb[0].mxu0
  %v496 = vadd.f32 0.0, %v495
  %v497 = vpop.f32.mrb[0].mxu0
  %498 = vmatprep.mubr.bf16.mxu0 0
  %499 = vmatmul.mubr.bf16.gmra.mrb[0].mxu0 %v300
  %v500 = vpop.f32.mrb[0].mxu0
  %v501 = vadd.f32 0.0, %v500
  %v502 = vpop.f32.mrb[0].mxu0
  %v503 = vpop.f32.mrb[0].mxu0
  %v504 = vadd.f32 0.0, %v503
  %v505 = vpop.f32.mrb[0].mxu0
  %506 = vmatprep.mubr.bf16.mxu0 0
  %507 = vmatmul.mubr.bf16.gmra.mrb[0].mxu0 %v303
  %v508 = vpop.f32.mrb[0].mxu0
  %v509 = vadd.f32 0.0, %v508
  %v510 = vpop.f32.mrb[0].mxu0
  %v511 = vpop.f32.mrb[0].mxu0
  %v512 = vadd.f32 0.0, %v511
  %v513 = vpop.f32.mrb[0].mxu0
  %514 = vmatprep.mubr.bf16.mxu0 0
  %515 = vmatmul.mubr.bf16.gmra.mrb[0].mxu0 %v306
  %v516 = vpop.f32.mrb[0].mxu0
  %v517 = vadd.f32 0.0, %v516
  %v518 = vpop.f32.mrb[0].mxu0
  %v519 = vpop.f32.mrb[0].mxu0
  %v520 = vadd.f32 0.0, %v519
  %v521 = vpop.f32.mrb[0].mxu0
  %522 = vmatprep.mubr.bf16.mxu0 0
  %523 = vmatmul.mubr.bf16.gmra.mrb[0].mxu0 %v309
  %v524 = vpop.f32.mrb[0].mxu0
  %v525 = vadd.f32 0.0, %v524
  %v526 = vpop.f32.mrb[0].mxu0
  %v527 = vpop.f32.mrb[0].mxu0
  %v528 = vadd.f32 0.0, %v527
  %v529 = vpop.f32.mrb[0].mxu0
  %530 = vmatprep.mubr.bf16.mxu0 0
  %531 = vmatmul.mubr.bf16.gmra.mrb[0].mxu0 %v312
  %v532 = vpop.f32.mrb[0].mxu0
  %v533 = vadd.f32 0.0, %v532
  %v534 = vpop.f32.mrb[0].mxu0
  %v535 = vpop.f32.mrb[0].mxu0
  %v536 = vadd.f32 0.0, %v535
  %v537 = vpop.f32.mrb[0].mxu0
  %538 = vmatprep.mubr.bf16.mxu0 0
  %539 = vmatmul.mubr.bf16.gmra.mrb[0].mxu0 %v315
  %v540 = vpop.f32.mrb[0].mxu0
  %v541 = vadd.f32 0.0, %v540
  %v542 = vpop.f32.mrb[0].mxu0
  %v543 = vpop.f32.mrb[0].mxu0
  %v544 = vadd.f32 0.0, %v543
  %v545 = vpop.f32.mrb[0].mxu0
  %546 = vmatprep.mubr.bf16.mxu0 0
  %547 = vmatmul.mubr.bf16.gmra.mrb[0].mxu0 %v318
  %v548 = vpop.f32.mrb[0].mxu0
  %v549 = vadd.f32 0.0, %v548
  %v550 = vpop.f32.mrb[0].mxu0
  %v551 = vpop.f32.mrb[0].mxu0
  %v552 = vadd.f32 0.0, %v551
  %v553 = vpop.f32.mrb[0].mxu0
  %554 = vmatprep.mubr.bf16.mxu0 0
  %555 = vmatmul.mubr.bf16.gmra.mrb[0].mxu0 %v321
  %v556 = vpop.f32.mrb[0].mxu0
  %v557 = vadd.f32 0.0, %v556
  %v558 = vpop.f32.mrb[0].mxu0
  %v559 = vpop.f32.mrb[0].mxu0
  %v560 = vadd.f32 0.0, %v559
  %v561 = vpop.f32.mrb[0].mxu0
  %562 = vmatprep.mubr.bf16.mxu0 0
  %563 = vmatmul.mubr.bf16.gmra.mrb[0].mxu0 %v324
  %v564 = vpop.f32.mrb[0].mxu0
  %v565 = vadd.f32 0.0, %v564
  %v566 = vpop.f32.mrb[0].mxu0
  %v567 = vpop.f32.mrb[0].mxu0
  %v568 = vadd.f32 0.0, %v567
  %v569 = vpop.f32.mrb[0].mxu0
  %570 = vmatprep.mubr.bf16.mxu0 0
  %571 = vmatmul.mubr.bf16.gmra.mrb[0].mxu0 %v327
  %v572 = vpop.f32.mrb[0].mxu0
  %v573 = vadd.f32 0.0, %v572
  %v574 = vpop.f32.mrb[0].mxu0
  %v575 = vpop.f32.mrb[0].mxu0
  %v576 = vadd.f32 0.0, %v575
  %v577 = vpop.f32.mrb[0].mxu0
  %578 = vmatprep.mubr.bf16.mxu0 0
  %579 = vmatmul.mubr.bf16.gmra.mrb[0].mxu0 %v330
  %v580 = vpop.f32.mrb[0].mxu0
  %v581 = vadd.f32 0.0, %v580
  %v582 = vpop.f32.mrb[0].mxu0
  %v583 = vpop.f32.mrb[0].mxu0
  %v584 = vadd.f32 0.0, %v583
  %v585 = vpop.f32.mrb[0].mxu0
  %586 = vmatprep.mubr.bf16.mxu0 0
  %587 = vmatmul.mubr.bf16.gmra.mrb[0].mxu0 %v333
  %v588 = vpop.f32.mrb[0].mxu0
  %v589 = vadd.f32 0.0, %v588
  %v590 = vpop.f32.mrb[0].mxu0
  %v591 = vpop.f32.mrb[0].mxu0
  %v592 = vadd.f32 0.0, %v591
  %v593 = vpop.f32.mrb[0].mxu0
  %594 = vmatprep.mubr.bf16.mxu0 0
  %595 = vmatmul.mubr.bf16.gmra.mrb[0].mxu0 %v336
  %v596 = vpop.f32.mrb[0].mxu0
  %v597 = vadd.f32 0.0, %v596
  %v598 = vpop.f32.mrb[0].mxu0
  %v599 = vpop.f32.mrb[0].mxu0
  %v600 = vadd.f32 0.0, %v599
  %v601 = vpop.f32.mrb[0].mxu0
  %602 = vmatprep.mubr.bf16.mxu0 0
  %603 = vmatmul.mubr.bf16.gmra.mrb[0].mxu0 %v339
  %v604 = vpop.f32.mrb[0].mxu0
  %v605 = vadd.f32 0.0, %v604
  %v606 = vpop.f32.mrb[0].mxu0
  %v607 = vpop.f32.mrb[0].mxu0
  %v608 = vadd.f32 0.0, %v607
  %v609 = vpop.f32.mrb[0].mxu0
  %610 = vmatprep.mubr.bf16.mxu0 0
  %611 = vmatmul.mubr.bf16.gmra.mrb[0].mxu0 %v342
  %v612 = vpop.f32.mrb[0].mxu0
  %v613 = vadd.f32 0.0, %v612
  %v614 = vpop.f32.mrb[0].mxu0
  %v615 = vpop.f32.mrb[0].mxu0
  %v616 = vadd.f32 0.0, %v615
  %v617 = vpop.f32.mrb[0].mxu0
  %618 = vmatprep.mubr.bf16.mxu0 0
  %619 = vmatmul.mubr.bf16.gmra.mrb[0].mxu0 %v345
  %v620 = vpop.f32.mrb[0].mxu0
  %v621 = vadd.f32 0.0, %v620
  %v622 = vpop.f32.mrb[0].mxu0
  %v623 = vpop.f32.mrb[0].mxu0
  %v624 = vadd.f32 0.0, %v623
  %v625 = vpop.f32.mrb[0].mxu0
  %626 = vmatprep.mubr.bf16.mxu0 0
  %627 = vmatmul.mubr.bf16.gmra.mrb[0].mxu0 %v348
  %v628 = vpop.f32.mrb[0].mxu0
  %v629 = vadd.f32 0.0, %v628
  %v630 = vpop.f32.mrb[0].mxu0
  %v631 = vpop.f32.mrb[0].mxu0
  %v632 = vadd.f32 0.0, %v631
  %v633 = vpop.f32.mrb[0].mxu0
  %634 = vmatprep.mubr.bf16.mxu0 0
  %635 = vmatmul.mubr.bf16.gmra.mrb[0].mxu0 %v351
  %v636 = vpop.f32.mrb[0].mxu0
  %v637 = vadd.f32 0.0, %v636
  %v638 = vpop.f32.mrb[0].mxu0
  %v639 = vpop.f32.mrb[0].mxu0
  %v640 = vadd.f32 0.0, %v639
  %v641 = vpop.f32.mrb[0].mxu0
  %642 = vmatprep.mubr.bf16.mxu0 0
  %643 = vmatmul.mubr.bf16.gmra.mrb[0].mxu0 %v354
  %v644 = vpop.f32.mrb[0].mxu0
  %v645 = vadd.f32 0.0, %v644
  %v646 = vpop.f32.mrb[0].mxu0
  %v647 = vpop.f32.mrb[0].mxu0
  %v648 = vadd.f32 0.0, %v647
  %v649 = vpop.f32.mrb[0].mxu0
  %650 = vmatprep.mubr.bf16.mxu0 0
  %651 = vmatmul.mubr.bf16.gmra.mrb[0].mxu0 %v357
  %v652 = vpop.f32.mrb[0].mxu0
  %v653 = vadd.f32 0.0, %v652
  %v654 = vpop.f32.mrb[0].mxu0
  %v655 = vpop.f32.mrb[0].mxu0
  %v656 = vadd.f32 0.0, %v655
  %v657 = vpop.f32.mrb[0].mxu0
  %658 = vmatprep.mubr.bf16.mxu0 0
  %659 = vmatmul.mubr.bf16.gmra.mrb[0].mxu0 %v360
  %v660 = vpop.f32.mrb[0].mxu0
  %v661 = vadd.f32 0.0, %v660
  %v662 = vpop.f32.mrb[0].mxu0
  %v663 = vpop.f32.mrb[0].mxu0
  %v664 = vadd.f32 0.0, %v663
  %v665 = vpop.f32.mrb[0].mxu0
  %666 = vmatprep.mubr.bf16.mxu0 0
  %667 = vmatmul.mubr.bf16.gmra.mrb[0].mxu0 %v363
  %v668 = vpop.f32.mrb[0].mxu0
  %v669 = vadd.f32 0.0, %v668
  %v670 = vpop.f32.mrb[0].mxu0
  %v671 = vpop.f32.mrb[0].mxu0
  %v672 = vadd.f32 0.0, %v671
  %v673 = vpop.f32.mrb[0].mxu0
  %674 = vmatprep.mubr.bf16.mxu0 0
  %675 = vmatmul.mubr.bf16.gmra.mrb[0].mxu0 %v366
  %v676 = vpop.f32.mrb[0].mxu0
  %v677 = vadd.f32 0.0, %v676
  %v678 = vpop.f32.mrb[0].mxu0
  %v679 = vpop.f32.mrb[0].mxu0
  %v680 = vadd.f32 0.0, %v679
  %v681 = vpop.f32.mrb[0].mxu0
  %682 = vmatprep.mubr.bf16.mxu0 0
  %683 = vmatmul.mubr.bf16.gmra.mrb[0].mxu0 %v369
  %v684 = vpop.f32.mrb[0].mxu0
  %v685 = vadd.f32 0.0, %v684
  %v686 = vpop.f32.mrb[0].mxu0
  %v687 = vpop.f32.mrb[0].mxu0
  %v688 = vadd.f32 0.0, %v687
  %v689 = vpop.f32.mrb[0].mxu0
  %690 = vmatprep.mubr.bf16.mxu0 0
  %691 = vmatmul.mubr.bf16.gmra.mrb[0].mxu0 %v372
  %v692 = vpop.f32.mrb[0].mxu0
  %v693 = vadd.f32 0.0, %v692
  %v694 = vpop.f32.mrb[0].mxu0
  %v695 = vpop.f32.mrb[0].mxu0
  %v696 = vadd.f32 0.0, %v695
  %v697 = vpop.f32.mrb[0].mxu0
  %698 = vmatprep.mubr.bf16.mxu0 0
  %699 = vmatmul.mubr.bf16.gmra.mrb[0].mxu0 %v375
  %v700 = vpop.f32.mrb[0].mxu0
  %v701 = vadd.f32 0.0, %v700
  %v702 = vpop.f32.mrb[0].mxu0
  %v703 = vpop.f32.mrb[0].mxu0
  %v704 = vadd.f32 0.0, %v703
  %v705 = vpop.f32.mrb[0].mxu0
  %706 = vmatprep.mubr.bf16.mxu0 0
  %707 = vmatmul.mubr.bf16.gmra.mrb[0].mxu0 %v378
  %v708 = vpop.f32.mrb[0].mxu0
  %v709 = vadd.f32 0.0, %v708
  %v710 = vpop.f32.mrb[0].mxu0
  %v711 = vpop.f32.mrb[0].mxu0
  %v712 = vadd.f32 0.0, %v711
  %v713 = vpop.f32.mrb[0].mxu0
  %714 = vmatprep.mubr.bf16.mxu0 0
  %715 = vmatmul.mubr.bf16.gmra.mrb[0].mxu0 %v381
  %v716 = vpop.f32.mrb[0].mxu0
  %v717 = vadd.f32 0.0, %v716
  %v718 = vpop.f32.mrb[0].mxu0
  %v719 = vpop.f32.mrb[0].mxu0
  %v720 = vadd.f32 0.0, %v719
  %v721 = vpop.f32.mrb[0].mxu0
  %722 = vmatprep.mubr.bf16.mxu0 0
  %723 = vmatmul.mubr.bf16.gmra.mrb[0].mxu0 %v384
  %v724 = vpop.f32.mrb[0].mxu0
  %v725 = vadd.f32 0.0, %v724
  %v726 = vpop.f32.mrb[0].mxu0
  %v727 = vpop.f32.mrb[0].mxu0
  %v728 = vadd.f32 0.0, %v727
  %v729 = vpop.f32.mrb[0].mxu0
  %730 = vmatprep.mubr.bf16.mxu0 0
  %731 = vmatmul.mubr.bf16.gmra.mrb[0].mxu0 %v387
  %v732 = vpop.f32.mrb[0].mxu0
  %v733 = vadd.f32 0.0, %v732
  %v734 = vpop.f32.mrb[0].mxu0
  %v735 = vpop.f32.mrb[0].mxu0
  %v736 = vadd.f32 0.0, %v735
  %v737 = vpop.f32.mrb[0].mxu0
  %738 = vmatprep.mubr.bf16.mxu0 0
  %739 = vmatmul.mubr.bf16.gmra.mrb[0].mxu0 %v390
  %v740 = vpop.f32.mrb[0].mxu0
  %v741 = vadd.f32 0.0, %v740
  %v742 = vpop.f32.mrb[0].mxu0
  %v743 = vpop.f32.mrb[0].mxu0
  %v744 = vadd.f32 0.0, %v743
  %v745 = vpop.f32.mrb[0].mxu0
  %746 = vmatprep.mubr.bf16.mxu0 0
  %747 = vmatmul.mubr.bf16.gmra.mrb[0].mxu0 %v393
  %v748 = vpop.f32.mrb[0].mxu0
  %v749 = vadd.f32 0.0, %v748
  %v750 = vpop.f32.mrb[0].mxu0
  %v751 = vpop.f32.mrb[0].mxu0
  %v752 = vadd.f32 0.0, %v751
  %v753 = vpop.f32.mrb[0].mxu0
  %754 = vmatprep.mubr.bf16.mxu0 0
  %755 = vmatmul.mubr.bf16.gmra.mrb[0].mxu0 %v396
  %v756 = vpop.f32.mrb[0].mxu0
  %v757 = vadd.f32 0.0, %v756
  %v758 = vpop.f32.mrb[0].mxu0
  %v759 = vpop.f32.mrb[0].mxu0
  %v760 = vpop.f32.mrb[0].mxu0
  %761 = vdwg.mxu0
  %v763 = vsel %vm274, %v108, 0
  %v766 = vsel %vm274, %v109, 0
  %v769 = vsel %vm274, %v110, 0
  %v772 = vsel %vm274, %v111, 0
  %v775 = vsel %vm274, %v112, 0
  %v778 = vsel %vm274, %v113, 0
  %v781 = vsel %vm274, %v114, 0
  %v784 = vsel %vm274, %v115, 0
  %v787 = vsel %vm274, %v116, 0
  %v790 = vsel %vm274, %v117, 0
  %v793 = vsel %vm274, %v118, 0
  %v796 = vsel %vm274, %v119, 0
  %v799 = vsel %vm274, %v120, 0
  %v802 = vsel %vm274, %v121, 0
  %v805 = vsel %vm274, %v122, 0
  %v808 = vsel %vm274, %v123, 0
  %v811 = vsel %vm274, %v124, 0
  %v814 = vsel %vm274, %v125, 0
  %v817 = vsel %vm274, %v126, 0
  %v820 = vsel %vm274, %v127, 0
  %v823 = vsel %vm274, %v128, 0
  %v826 = vsel %vm274, %v129, 0
  %v829 = vsel %vm274, %v130, 0
  %v832 = vsel %vm274, %v131, 0
  %v835 = vsel %vm274, %v132, 0
  %v838 = vsel %vm274, %v133, 0
  %v841 = vsel %vm274, %v134, 0
  %v844 = vsel %vm274, %v135, 0
  %v847 = vsel %vm274, %v136, 0
  %v850 = vsel %vm274, %v137, 0
  %v853 = vsel %vm274, %v138, 0
  %v856 = vsel %vm274, %v139, 0
  %v859 = vsel %vm274, %v140, 0
  %v862 = vsel %vm274, %v141, 0
  %v865 = vsel %vm274, %v142, 0
  %v868 = vsel %vm274, %v143, 0
  %v871 = vsel %vm274, %v144, 0
  %v874 = vsel %vm274, %v145, 0
  %v877 = vsel %vm274, %v146, 0
  %v880 = vsel %vm274, %v147, 0
  %v883 = vsel %vm274, %v148, 0
  %v886 = vsel %vm398, %v149, 0
  %888 = vmatprep.subr.bf16.mxu0 0
  %889 = vmatpush1.bf16.msra.mxu0 %v886
  %890 = vmatprep.subr.bf16.mxu0 0
  %891 = vmatpush1.bf16.msra.mxu0 0
  %892 = vmatprep.subr.bf16.mxu0 0
  %893 = vmatpush1.bf16.msra.mxu0 0
  %894 = vmatprep.subr.bf16.mxu0 0
  %895 = vmatpush1.bf16.msra.mxu0 0
  %896 = vmatprep.subr.bf16.mxu0 0
  %897 = vmatpush1.bf16.msra.mxu0 0
  %898 = vmatprep.subr.bf16.mxu0 0
  %899 = vmatpush1.bf16.msra.mxu0 0
  %900 = vmatprep.subr.bf16.mxu0 0
  %901 = vmatpush1.bf16.msra.mxu0 0
  %902 = vmatprep.subr.bf16.mxu0 0
  %903 = vmatpush1.bf16.msra.mxu0 0
  %904 = vmatprep.subr.bf16.mxu0 0
  %905 = vmatpush1.bf16.msra.mxu0 0
  %906 = vmatprep.subr.bf16.mxu0 0
  %907 = vmatpush1.bf16.msra.mxu0 0
  %908 = vmatprep.subr.bf16.mxu0 0
  %909 = vmatpush1.bf16.msra.mxu0 0
  %910 = vmatprep.subr.bf16.mxu0 0
  %911 = vmatpush1.bf16.msra.mxu0 0
  %912 = vmatprep.subr.bf16.mxu0 0
  %913 = vmatpush1.bf16.msra.mxu0 0
  %914 = vmatprep.subr.bf16.mxu0 0
  %915 = vmatpush1.bf16.msra.mxu0 0
  %916 = vmatprep.subr.bf16.mxu0 0
  %917 = vmatpush1.bf16.msra.mxu0 0
  %918 = vmatprep.subr.bf16.mxu0 0
  %919 = vmatpush1.bf16.msra.mxu0 0
  %920 = vmatprep.mubr.bf16.mxu0 0
  %921 = vmatmul.mubr.bf16.gmra.mrb[0].mxu0 %v763
  %v922 = vpop.f32.mrb[0].mxu0
  %v923 = vadd.f32 %v437, %v922
  %v924 = vpop.f32.mrb[0].mxu0
  %v925 = vpop.f32.mrb[0].mxu0
  %v926 = vadd.f32 %v440, %v925
  %v927 = vpop.f32.mrb[0].mxu0
  %928 = vmatprep.mubr.bf16.mxu0 0
  %929 = vmatmul.mubr.bf16.gmra.mrb[0].mxu0 %v766
  %v930 = vpop.f32.mrb[0].mxu0
  %v931 = vadd.f32 %v445, %v930
  %v932 = vpop.f32.mrb[0].mxu0
  %v933 = vpop.f32.mrb[0].mxu0
  %v934 = vadd.f32 %v448, %v933
  %v935 = vpop.f32.mrb[0].mxu0
  %936 = vmatprep.mubr.bf16.mxu0 0
  %937 = vmatmul.mubr.bf16.gmra.mrb[0].mxu0 %v769
  %v938 = vpop.f32.mrb[0].mxu0
  %v939 = vadd.f32 %v453, %v938
  %v940 = vpop.f32.mrb[0].mxu0
  %v941 = vpop.f32.mrb[0].mxu0
  %v942 = vadd.f32 %v456, %v941
  %v943 = vpop.f32.mrb[0].mxu0
  %944 = vmatprep.mubr.bf16.mxu0 0
  %945 = vmatmul.mubr.bf16.gmra.mrb[0].mxu0 %v772
  %v946 = vpop.f32.mrb[0].mxu0
  %v947 = vadd.f32 %v461, %v946
  %v948 = vpop.f32.mrb[0].mxu0
  %v949 = vpop.f32.mrb[0].mxu0
  %v950 = vadd.f32 %v464, %v949
  %v951 = vpop.f32.mrb[0].mxu0
  %952 = vmatprep.mubr.bf16.mxu0 0
  %953 = vmatmul.mubr.bf16.gmra.mrb[0].mxu0 %v775
  %v954 = vpop.f32.mrb[0].mxu0
  %v955 = vadd.f32 %v469, %v954
  %v956 = vpop.f32.mrb[0].mxu0
  %v957 = vpop.f32.mrb[0].mxu0
  %v958 = vadd.f32 %v472, %v957
  %v959 = vpop.f32.mrb[0].mxu0
  %960 = vmatprep.mubr.bf16.mxu0 0
  %961 = vmatmul.mubr.bf16.gmra.mrb[0].mxu0 %v778
  %v962 = vpop.f32.mrb[0].mxu0
  %v963 = vadd.f32 %v477, %v962
  %v964 = vpop.f32.mrb[0].mxu0
  %v965 = vpop.f32.mrb[0].mxu0
  %v966 = vadd.f32 %v480, %v965
  %v967 = vpop.f32.mrb[0].mxu0
  %968 = vmatprep.mubr.bf16.mxu0 0
  %969 = vmatmul.mubr.bf16.gmra.mrb[0].mxu0 %v781
  %v970 = vpop.f32.mrb[0].mxu0
  %v971 = vadd.f32 %v485, %v970
  %v972 = vpop.f32.mrb[0].mxu0
  %v973 = vpop.f32.mrb[0].mxu0
  %v974 = vadd.f32 %v488, %v973
  %v975 = vpop.f32.mrb[0].mxu0
  %976 = vmatprep.mubr.bf16.mxu0 0
  %977 = vmatmul.mubr.bf16.gmra.mrb[0].mxu0 %v784
  %v978 = vpop.f32.mrb[0].mxu0
  %v979 = vadd.f32 %v493, %v978
  %v980 = vpop.f32.mrb[0].mxu0
  %v981 = vpop.f32.mrb[0].mxu0
  %v982 = vadd.f32 %v496, %v981
  %v983 = vpop.f32.mrb[0].mxu0
  %984 = vmatprep.mubr.bf16.mxu0 0
  %985 = vmatmul.mubr.bf16.gmra.mrb[0].mxu0 %v787
  %v986 = vpop.f32.mrb[0].mxu0
  %v987 = vadd.f32 %v501, %v986
  %v988 = vpop.f32.mrb[0].mxu0
  %v989 = vpop.f32.mrb[0].mxu0
  %v990 = vadd.f32 %v504, %v989
  %v991 = vpop.f32.mrb[0].mxu0
  %992 = vmatprep.mubr.bf16.mxu0 0
  %993 = vmatmul.mubr.bf16.gmra.mrb[0].mxu0 %v790
  %v994 = vpop.f32.mrb[0].mxu0
  %v995 = vadd.f32 %v509, %v994
  %v996 = vpop.f32.mrb[0].mxu0
  %v997 = vpop.f32.mrb[0].mxu0
  %v998 = vadd.f32 %v512, %v997
  %v999 = vpop.f32.mrb[0].mxu0
  %1000 = vmatprep.mubr.bf16.mxu0 0
  %1001 = vmatmul.mubr.bf16.gmra.mrb[0].mxu0 %v793
  %v1002 = vpop.f32.mrb[0].mxu0
  %v1003 = vadd.f32 %v517, %v1002
  %v1004 = vpop.f32.mrb[0].mxu0
  %v1005 = vpop.f32.mrb[0].mxu0
  %v1006 = vadd.f32 %v520, %v1005
  %v1007 = vpop.f32.mrb[0].mxu0
  %1008 = vmatprep.mubr.bf16.mxu0 0
  %1009 = vmatmul.mubr.bf16.gmra.mrb[0].mxu0 %v796
  %v1010 = vpop.f32.mrb[0].mxu0
  %v1011 = vadd.f32 %v525, %v1010
  %v1012 = vpop.f32.mrb[0].mxu0
  %v1013 = vpop.f32.mrb[0].mxu0
  %v1014 = vadd.f32 %v528, %v1013
  %v1015 = vpop.f32.mrb[0].mxu0
  %1016 = vmatprep.mubr.bf16.mxu0 0
  %1017 = vmatmul.mubr.bf16.gmra.mrb[0].mxu0 %v799
  %v1018 = vpop.f32.mrb[0].mxu0
  %v1019 = vadd.f32 %v533, %v1018
  %v1020 = vpop.f32.mrb[0].mxu0
  %v1021 = vpop.f32.mrb[0].mxu0
  %v1022 = vadd.f32 %v536, %v1021
  %v1023 = vpop.f32.mrb[0].mxu0
  %1024 = vmatprep.mubr.bf16.mxu0 0
  %1025 = vmatmul.mubr.bf16.gmra.mrb[0].mxu0 %v802
  %v1026 = vpop.f32.mrb[0].mxu0
  %v1027 = vadd.f32 %v541, %v1026
  %v1028 = vpop.f32.mrb[0].mxu0
  %v1029 = vpop.f32.mrb[0].mxu0
  %v1030 = vadd.f32 %v544, %v1029
  %v1031 = vpop.f32.mrb[0].mxu0
  %1032 = vmatprep.mubr.bf16.mxu0 0
  %1033 = vmatmul.mubr.bf16.gmra.mrb[0].mxu0 %v805
  %v1034 = vpop.f32.mrb[0].mxu0
  %v1035 = vadd.f32 %v549, %v1034
  %v1036 = vpop.f32.mrb[0].mxu0
  %v1037 = vpop.f32.mrb[0].mxu0
  %v1038 = vadd.f32 %v552, %v1037
  %v1039 = vpop.f32.mrb[0].mxu0
  %1040 = vmatprep.mubr.bf16.mxu0 0
  %1041 = vmatmul.mubr.bf16.gmra.mrb[0].mxu0 %v808
  %v1042 = vpop.f32.mrb[0].mxu0
  %v1043 = vadd.f32 %v557, %v1042
  %v1044 = vpop.f32.mrb[0].mxu0
  %v1045 = vpop.f32.mrb[0].mxu0
  %v1046 = vadd.f32 %v560, %v1045
  %v1047 = vpop.f32.mrb[0].mxu0
  %1048 = vmatprep.mubr.bf16.mxu0 0
  %1049 = vmatmul.mubr.bf16.gmra.mrb[0].mxu0 %v811
  %v1050 = vpop.f32.mrb[0].mxu0
  %v1051 = vadd.f32 %v565, %v1050
  %v1052 = vpop.f32.mrb[0].mxu0
  %v1053 = vpop.f32.mrb[0].mxu0
  %v1054 = vadd.f32 %v568, %v1053
  %v1055 = vpop.f32.mrb[0].mxu0
  %1056 = vmatprep.mubr.bf16.mxu0 0
  %1057 = vmatmul.mubr.bf16.gmra.mrb[0].mxu0 %v814
  %v1058 = vpop.f32.mrb[0].mxu0
  %v1059 = vadd.f32 %v573, %v1058
  %v1060 = vpop.f32.mrb[0].mxu0
  %v1061 = vpop.f32.mrb[0].mxu0
  %v1062 = vadd.f32 %v576, %v1061
  %v1063 = vpop.f32.mrb[0].mxu0
  %1064 = vmatprep.mubr.bf16.mxu0 0
  %1065 = vmatmul.mubr.bf16.gmra.mrb[0].mxu0 %v817
  %v1066 = vpop.f32.mrb[0].mxu0
  %v1067 = vadd.f32 %v581, %v1066
  %v1068 = vpop.f32.mrb[0].mxu0
  %v1069 = vpop.f32.mrb[0].mxu0
  %v1070 = vadd.f32 %v584, %v1069
  %v1071 = vpop.f32.mrb[0].mxu0
  %1072 = vmatprep.mubr.bf16.mxu0 0
  %1073 = vmatmul.mubr.bf16.gmra.mrb[0].mxu0 %v820
  %v1074 = vpop.f32.mrb[0].mxu0
  %v1075 = vadd.f32 %v589, %v1074
  %v1076 = vpop.f32.mrb[0].mxu0
  %v1077 = vpop.f32.mrb[0].mxu0
  %v1078 = vadd.f32 %v592, %v1077
  %v1079 = vpop.f32.mrb[0].mxu0
  %1080 = vmatprep.mubr.bf16.mxu0 0
  %1081 = vmatmul.mubr.bf16.gmra.mrb[0].mxu0 %v823
  %v1082 = vpop.f32.mrb[0].mxu0
  %v1083 = vadd.f32 %v597, %v1082
  %v1084 = vpop.f32.mrb[0].mxu0
  %v1085 = vpop.f32.mrb[0].mxu0
  %v1086 = vadd.f32 %v600, %v1085
  %v1087 = vpop.f32.mrb[0].mxu0
  %1088 = vmatprep.mubr.bf16.mxu0 0
  %1089 = vmatmul.mubr.bf16.gmra.mrb[0].mxu0 %v826
  %v1090 = vpop.f32.mrb[0].mxu0
  %v1091 = vadd.f32 %v605, %v1090
  %v1092 = vpop.f32.mrb[0].mxu0
  %v1093 = vpop.f32.mrb[0].mxu0
  %v1094 = vadd.f32 %v608, %v1093
  %v1095 = vpop.f32.mrb[0].mxu0
  %1096 = vmatprep.mubr.bf16.mxu0 0
  %1097 = vmatmul.mubr.bf16.gmra.mrb[0].mxu0 %v829
  %v1098 = vpop.f32.mrb[0].mxu0
  %v1099 = vadd.f32 %v613, %v1098
  %v1100 = vpop.f32.mrb[0].mxu0
  %v1101 = vpop.f32.mrb[0].mxu0
  %v1102 = vadd.f32 %v616, %v1101
  %v1103 = vpop.f32.mrb[0].mxu0
  %1104 = vmatprep.mubr.bf16.mxu0 0
  %1105 = vmatmul.mubr.bf16.gmra.mrb[0].mxu0 %v832
  %v1106 = vpop.f32.mrb[0].mxu0
  %v1107 = vadd.f32 %v621, %v1106
  %v1108 = vpop.f32.mrb[0].mxu0
  %v1109 = vpop.f32.mrb[0].mxu0
  %v1110 = vadd.f32 %v624, %v1109
  %v1111 = vpop.f32.mrb[0].mxu0
  %1112 = vmatprep.mubr.bf16.mxu0 0
  %1113 = vmatmul.mubr.bf16.gmra.mrb[0].mxu0 %v835
  %v1114 = vpop.f32.mrb[0].mxu0
  %v1115 = vadd.f32 %v629, %v1114
  %v1116 = vpop.f32.mrb[0].mxu0
  %v1117 = vpop.f32.mrb[0].mxu0
  %v1118 = vadd.f32 %v632, %v1117
  %v1119 = vpop.f32.mrb[0].mxu0
  %1120 = vmatprep.mubr.bf16.mxu0 0
  %1121 = vmatmul.mubr.bf16.gmra.mrb[0].mxu0 %v838
  %v1122 = vpop.f32.mrb[0].mxu0
  %v1123 = vadd.f32 %v637, %v1122
  %v1124 = vpop.f32.mrb[0].mxu0
  %v1125 = vpop.f32.mrb[0].mxu0
  %v1126 = vadd.f32 %v640, %v1125
  %v1127 = vpop.f32.mrb[0].mxu0
  %1128 = vmatprep.mubr.bf16.mxu0 0
  %1129 = vmatmul.mubr.bf16.gmra.mrb[0].mxu0 %v841
  %v1130 = vpop.f32.mrb[0].mxu0
  %v1131 = vadd.f32 %v645, %v1130
  %v1132 = vpop.f32.mrb[0].mxu0
  %v1133 = vpop.f32.mrb[0].mxu0
  %v1134 = vadd.f32 %v648, %v1133
  %v1135 = vpop.f32.mrb[0].mxu0
  %1136 = vmatprep.mubr.bf16.mxu0 0
  %1137 = vmatmul.mubr.bf16.gmra.mrb[0].mxu0 %v844
  %v1138 = vpop.f32.mrb[0].mxu0
  %v1139 = vadd.f32 %v653, %v1138
  %v1140 = vpop.f32.mrb[0].mxu0
  %v1141 = vpop.f32.mrb[0].mxu0
  %v1142 = vadd.f32 %v656, %v1141
  %v1143 = vpop.f32.mrb[0].mxu0
  %1144 = vmatprep.mubr.bf16.mxu0 0
  %1145 = vmatmul.mubr.bf16.gmra.mrb[0].mxu0 %v847
  %v1146 = vpop.f32.mrb[0].mxu0
  %v1147 = vadd.f32 %v661, %v1146
  %v1148 = vpop.f32.mrb[0].mxu0
  %v1149 = vpop.f32.mrb[0].mxu0
  %v1150 = vadd.f32 %v664, %v1149
  %v1151 = vpop.f32.mrb[0].mxu0
  %1152 = vmatprep.mubr.bf16.mxu0 0
  %1153 = vmatmul.mubr.bf16.gmra.mrb[0].mxu0 %v850
  %v1154 = vpop.f32.mrb[0].mxu0
  %v1155 = vadd.f32 %v669, %v1154
  %v1156 = vpop.f32.mrb[0].mxu0
  %v1157 = vpop.f32.mrb[0].mxu0
  %v1158 = vadd.f32 %v672, %v1157
  %v1159 = vpop.f32.mrb[0].mxu0
  %1160 = vmatprep.mubr.bf16.mxu0 0
  %1161 = vmatmul.mubr.bf16.gmra.mrb[0].mxu0 %v853
  %v1162 = vpop.f32.mrb[0].mxu0
  %v1163 = vadd.f32 %v677, %v1162
  %v1164 = vpop.f32.mrb[0].mxu0
  %v1165 = vpop.f32.mrb[0].mxu0
  %v1166 = vadd.f32 %v680, %v1165
  %v1167 = vpop.f32.mrb[0].mxu0
  %1168 = vmatprep.mubr.bf16.mxu0 0
  %1169 = vmatmul.mubr.bf16.gmra.mrb[0].mxu0 %v856
  %v1170 = vpop.f32.mrb[0].mxu0
  %v1171 = vadd.f32 %v685, %v1170
  %v1172 = vpop.f32.mrb[0].mxu0
  %v1173 = vpop.f32.mrb[0].mxu0
  %v1174 = vadd.f32 %v688, %v1173
  %v1175 = vpop.f32.mrb[0].mxu0
  %1176 = vmatprep.mubr.bf16.mxu0 0
  %1177 = vmatmul.mubr.bf16.gmra.mrb[0].mxu0 %v859
  %v1178 = vpop.f32.mrb[0].mxu0
  %v1179 = vadd.f32 %v693, %v1178
  %v1180 = vpop.f32.mrb[0].mxu0
  %v1181 = vpop.f32.mrb[0].mxu0
  %v1182 = vadd.f32 %v696, %v1181
  %v1183 = vpop.f32.mrb[0].mxu0
  %1184 = vmatprep.mubr.bf16.mxu0 0
  %1185 = vmatmul.mubr.bf16.gmra.mrb[0].mxu0 %v862
  %v1186 = vpop.f32.mrb[0].mxu0
  %v1187 = vadd.f32 %v701, %v1186
  %v1188 = vpop.f32.mrb[0].mxu0
  %v1189 = vpop.f32.mrb[0].mxu0
  %v1190 = vadd.f32 %v704, %v1189
  %v1191 = vpop.f32.mrb[0].mxu0
  %1192 = vmatprep.mubr.bf16.mxu0 0
  %1193 = vmatmul.mubr.bf16.gmra.mrb[0].mxu0 %v865
  %v1194 = vpop.f32.mrb[0].mxu0
  %v1195 = vadd.f32 %v709, %v1194
  %v1196 = vpop.f32.mrb[0].mxu0
  %v1197 = vpop.f32.mrb[0].mxu0
  %v1198 = vadd.f32 %v712, %v1197
  %v1199 = vpop.f32.mrb[0].mxu0
  %1200 = vmatprep.mubr.bf16.mxu0 0
  %1201 = vmatmul.mubr.bf16.gmra.mrb[0].mxu0 %v868
  %v1202 = vpop.f32.mrb[0].mxu0
  %v1203 = vadd.f32 %v717, %v1202
  %v1204 = vpop.f32.mrb[0].mxu0
  %v1205 = vpop.f32.mrb[0].mxu0
  %v1206 = vadd.f32 %v720, %v1205
  %v1207 = vpop.f32.mrb[0].mxu0
  %1208 = vmatprep.mubr.bf16.mxu0 0
  %1209 = vmatmul.mubr.bf16.gmra.mrb[0].mxu0 %v871
  %v1210 = vpop.f32.mrb[0].mxu0
  %v1211 = vadd.f32 %v725, %v1210
  %v1212 = vpop.f32.mrb[0].mxu0
  %v1213 = vpop.f32.mrb[0].mxu0
  %v1214 = vadd.f32 %v728, %v1213
  %v1215 = vpop.f32.mrb[0].mxu0
  %1216 = vmatprep.mubr.bf16.mxu0 0
  %1217 = vmatmul.mubr.bf16.gmra.mrb[0].mxu0 %v874
  %v1218 = vpop.f32.mrb[0].mxu0
  %v1219 = vadd.f32 %v733, %v1218
  %v1220 = vpop.f32.mrb[0].mxu0
  %v1221 = vpop.f32.mrb[0].mxu0
  %v1222 = vadd.f32 %v736, %v1221
  %v1223 = vpop.f32.mrb[0].mxu0
  %1224 = vmatprep.mubr.bf16.mxu0 0
  %1225 = vmatmul.mubr.bf16.gmra.mrb[0].mxu0 %v877
  %v1226 = vpop.f32.mrb[0].mxu0
  %v1227 = vadd.f32 %v741, %v1226
  %v1228 = vpop.f32.mrb[0].mxu0
  %v1229 = vpop.f32.mrb[0].mxu0
  %v1230 = vadd.f32 %v744, %v1229
  %v1231 = vpop.f32.mrb[0].mxu0
  %1232 = vmatprep.mubr.bf16.mxu0 0
  %1233 = vmatmul.mubr.bf16.gmra.mrb[0].mxu0 %v880
  %v1234 = vpop.f32.mrb[0].mxu0
  %v1235 = vadd.f32 %v749, %v1234
  %v1236 = vpop.f32.mrb[0].mxu0
  %v1237 = vpop.f32.mrb[0].mxu0
  %v1238 = vadd.f32 %v752, %v1237
  %v1239 = vpop.f32.mrb[0].mxu0
  %1240 = vmatprep.mubr.bf16.mxu0 0
  %1241 = vmatmul.mubr.bf16.gmra.mrb[0].mxu0 %v883
  %v1242 = vpop.f32.mrb[0].mxu0
  %v1243 = vadd.f32 %v757, %v1242
  %v1244 = vpop.f32.mrb[0].mxu0
  %v1245 = vpop.f32.mrb[0].mxu0
  %v1246 = vpop.f32.mrb[0].mxu0
  %1247 = vdwg.mxu0
  %v1248 = vld [vmem:[%s0 + $0x2] sm:$0xff]
  %v1249 = vld [vmem:[%s0 + $0xa] sm:$0xff]
  %v1250 = vld [vmem:[%s0 + $0x12] sm:$0xff]
  %v1251 = vld [vmem:[%s0 + $0x1a] sm:$0xff]
  %v1252 = vld [vmem:[%s0 + $0x22] sm:$0xff]
  %v1253 = vld [vmem:[%s0 + $0x2a] sm:$0xff]
  %v1254 = vld [vmem:[%s0 + $0x32] sm:$0xff]
  %v1255 = vld [vmem:[%s0 + $0x3a] sm:$0xff]
  %v1256 = vld [vmem:[%s0 + $0x42] sm:$0xff]
  %v1257 = vld [vmem:[%s0 + $0x4a] sm:$0xff]
  %v1258 = vld [vmem:[%s0 + $0x52] sm:$0xff]
  %v1259 = vld [vmem:[%s0 + $0x5a] sm:$0xff]
  %v1260 = vld [vmem:[%s0 + $0x62] sm:$0xff]
  %v1261 = vld [vmem:[%s0 + $0x6a] sm:$0xff]
  %v1262 = vld [vmem:[%s0 + $0x72] sm:$0xff]
  %v1263 = vld [vmem:[%s0 + $0x7a] sm:$0xff]
  %v1264 = vld [vmem:[%s0 + $0x82] sm:$0xff]
  %v1265 = vld [vmem:[%s0 + $0x8a] sm:$0xff]
  %v1266 = vld [vmem:[%s0 + $0x92] sm:$0xff]
  %v1267 = vld [vmem:[%s0 + $0x9a] sm:$0xff]
  %v1268 = vld [vmem:[%s0 + $0xa2] sm:$0xff]
  %v1269 = vld [vmem:[%s0 + $0xaa] sm:$0xff]
  %v1270 = vld [vmem:[%s0 + $0xb2] sm:$0xff]
  %v1271 = vld [vmem:[%s0 + $0xba] sm:$0xff]
  %v1272 = vld [vmem:[%s0 + $0xc2] sm:$0xff]
  %v1273 = vld [vmem:[%s0 + $0xca] sm:$0xff]
  %v1274 = vld [vmem:[%s0 + $0xd2] sm:$0xff]
  %v1275 = vld [vmem:[%s0 + $0xda] sm:$0xff]
  %v1276 = vld [vmem:[%s0 + $0xe2] sm:$0xff]
  %v1277 = vld [vmem:[%s0 + $0xea] sm:$0xff]
  %v1278 = vld [vmem:[%s0 + $0xf2] sm:$0xff]
  %v1279 = vld [vmem:[%s0 + $0xfa] sm:$0xff]
  %v1280 = vld [vmem:[%s0 + $0x102] sm:$0xff]
  %v1281 = vld [vmem:[%s0 + $0x10a] sm:$0xff]
  %v1282 = vld [vmem:[%s0 + $0x112] sm:$0xff]
  %v1283 = vld [vmem:[%s0 + $0x11a] sm:$0xff]
  %v1284 = vld [vmem:[%s0 + $0x122] sm:$0xff]
  %v1285 = vld [vmem:[%s0 + $0x12a] sm:$0xff]
  %v1286 = vld [vmem:[%s0 + $0x132] sm:$0xff]
  %v1287 = vld [vmem:[%s0 + $0x13a] sm:$0xff]
  %v1288 = vld [vmem:[%s0 + $0x142] sm:$0xff]
  %v1289 = vld [vmem:[%s0 + $0x14a] sm:$0xff]
  %v1290 = vld [vmem:[%s0 + $0x152] sm:$0xff]
  %v1291 = vld [vmem:[%s0 + $0x15a] sm:$0xff]
  %v1292 = vld [vmem:[%s0 + $0x162] sm:$0xff]
  %v1293 = vld [vmem:[%s0 + $0x16a] sm:$0xff]
  %v1294 = vld [vmem:[%s0 + $0x172] sm:$0xff]
  %v1295 = vld [vmem:[%s0 + $0x17a] sm:$0xff]
  %v1296 = vld [vmem:[%s0 + $0x182] sm:$0xff]
  %v1297 = vld [vmem:[%s0 + $0x18a] sm:$0xff]
  %v1298 = vld [vmem:[%s0 + $0x192] sm:$0xff]
  %v1299 = vld [vmem:[%s0 + $0x19a] sm:$0xff]
  %v1300 = vld [vmem:[%s0 + $0x1a2] sm:$0xff]
  %v1301 = vld [vmem:[%s0 + $0x1aa] sm:$0xff]
  %v1302 = vld [vmem:[%s0 + $0x1b2] sm:$0xff]
  %v1303 = vld [vmem:[%s0 + $0x1ba] sm:$0xff]
  %v1304 = vld [vmem:[%s0 + $0x1c2] sm:$0xff]
  %v1305 = vld [vmem:[%s0 + $0x1ca] sm:$0xff]
  %v1306 = vld [vmem:[%s0 + $0x1d2] sm:$0xff]
  %v1307 = vld [vmem:[%s0 + $0x1da] sm:$0xff]
  %v1308 = vld [vmem:[%s0 + $0x1e2] sm:$0xff]
  %v1309 = vld [vmem:[%s0 + $0x1ea] sm:$0xff]
  %v1310 = vld [vmem:[%s0 + $0x1f2] sm:$0xff]
  %v1311 = vld [vmem:[%s0 + $0x1fa] sm:$0xff]
  %v1312 = vld [vmem:[%s0 + $0x202] sm:$0xff]
  %v1313 = vld [vmem:[%s0 + $0x20a] sm:$0xff]
  %v1314 = vld [vmem:[%s0 + $0x212] sm:$0xff]
  %v1315 = vld [vmem:[%s0 + $0x21a] sm:$0xff]
  %v1316 = vld [vmem:[%s0 + $0x222] sm:$0xff]
  %v1317 = vld [vmem:[%s0 + $0x22a] sm:$0xff]
  %v1318 = vld [vmem:[%s0 + $0x232] sm:$0xff]
  %v1319 = vld [vmem:[%s0 + $0x23a] sm:$0xff]
  %v1320 = vld [vmem:[%s0 + $0x242] sm:$0xff]
  %v1321 = vld [vmem:[%s0 + $0x24a] sm:$0xff]
  %v1322 = vld [vmem:[%s0 + $0x252] sm:$0xff]
  %v1323 = vld [vmem:[%s0 + $0x25a] sm:$0xff]
  %v1324 = vld [vmem:[%s0 + $0x262] sm:$0xff]
  %v1325 = vld [vmem:[%s0 + $0x26a] sm:$0xff]
  %v1326 = vld [vmem:[%s0 + $0x272] sm:$0xff]
  %v1327 = vld [vmem:[%s0 + $0x27a] sm:$0xff]
  %v1328 = vld [vmem:[%s0 + $0x282] sm:$0xff]
  %v1329 = vpack.c.bf16 %v1249, %v1248
  %v1330 = vpack.c.bf16 %v1251, %v1250
  %v1331 = vpack.c.bf16 %v1253, %v1252
  %v1332 = vpack.c.bf16 %v1255, %v1254
  %v1333 = vpack.c.bf16 %v1257, %v1256
  %v1334 = vpack.c.bf16 %v1259, %v1258
  %v1335 = vpack.c.bf16 %v1261, %v1260
  %v1336 = vpack.c.bf16 %v1263, %v1262
  %v1337 = vpack.c.bf16 %v1265, %v1264
  %v1338 = vpack.c.bf16 %v1267, %v1266
  %v1339 = vpack.c.bf16 %v1269, %v1268
  %v1340 = vpack.c.bf16 %v1271, %v1270
  %v1341 = vpack.c.bf16 %v1273, %v1272
  %v1342 = vpack.c.bf16 %v1275, %v1274
  %v1343 = vpack.c.bf16 %v1277, %v1276
  %v1344 = vpack.c.bf16 %v1279, %v1278
  %v1345 = vpack.c.bf16 %v1281, %v1280
  %v1346 = vpack.c.bf16 %v1283, %v1282
  %v1347 = vpack.c.bf16 %v1285, %v1284
  %v1348 = vpack.c.bf16 %v1287, %v1286
  %v1349 = vpack.c.bf16 %v1289, %v1288
  %v1350 = vpack.c.bf16 %v1291, %v1290
  %v1351 = vpack.c.bf16 %v1293, %v1292
  %v1352 = vpack.c.bf16 %v1295, %v1294
  %v1353 = vpack.c.bf16 %v1297, %v1296
  %v1354 = vpack.c.bf16 %v1299, %v1298
  %v1355 = vpack.c.bf16 %v1301, %v1300
  %v1356 = vpack.c.bf16 %v1303, %v1302
  %v1357 = vpack.c.bf16 %v1305, %v1304
  %v1358 = vpack.c.bf16 %v1307, %v1306
  %v1359 = vpack.c.bf16 %v1309, %v1308
  %v1360 = vpack.c.bf16 %v1311, %v1310
  %v1361 = vpack.c.bf16 %v1313, %v1312
  %v1362 = vpack.c.bf16 %v1315, %v1314
  %v1363 = vpack.c.bf16 %v1317, %v1316
  %v1364 = vpack.c.bf16 %v1319, %v1318
  %v1365 = vpack.c.bf16 %v1321, %v1320
  %v1366 = vpack.c.bf16 %v1323, %v1322
  %v1367 = vpack.c.bf16 %v1325, %v1324
  %v1368 = vpack.c.bf16 %v1327, %v1326
  %v1369 = vpack.c.bf16 %v1328, %v1328
  %s1370 = scalar_lea.vmem %s1, 4
  %v1371 = vld [vmem:[%s1370] sm:$0x3]
  %v1373 = vsel %vm274, %v1329, 0
  %v1376 = vsel %vm274, %v1330, 0
  %v1379 = vsel %vm274, %v1331, 0
  %v1382 = vsel %vm274, %v1332, 0
  %v1385 = vsel %vm274, %v1333, 0
  %v1388 = vsel %vm274, %v1334, 0
  %v1391 = vsel %vm274, %v1335, 0
  %v1394 = vsel %vm274, %v1336, 0
  %v1397 = vsel %vm274, %v1337, 0
  %v1400 = vsel %vm274, %v1338, 0
  %v1403 = vsel %vm274, %v1339, 0
  %v1406 = vsel %vm274, %v1340, 0
  %v1409 = vsel %vm274, %v1341, 0
  %v1412 = vsel %vm274, %v1342, 0
  %v1415 = vsel %vm274, %v1343, 0
  %v1418 = vsel %vm274, %v1344, 0
  %v1421 = vsel %vm274, %v1345, 0
  %v1424 = vsel %vm274, %v1346, 0
  %v1427 = vsel %vm274, %v1347, 0
  %v1430 = vsel %vm274, %v1348, 0
  %v1433 = vsel %vm274, %v1349, 0
  %v1436 = vsel %vm274, %v1350, 0
  %v1439 = vsel %vm274, %v1351, 0
  %v1442 = vsel %vm274, %v1352, 0
  %v1445 = vsel %vm274, %v1353, 0
  %v1448 = vsel %vm274, %v1354, 0
  %v1451 = vsel %vm274, %v1355, 0
  %v1454 = vsel %vm274, %v1356, 0
  %v1457 = vsel %vm274, %v1357, 0
  %v1460 = vsel %vm274, %v1358, 0
  %v1463 = vsel %vm274, %v1359, 0
  %v1466 = vsel %vm274, %v1360, 0
  %v1469 = vsel %vm274, %v1361, 0
  %v1472 = vsel %vm274, %v1362, 0
  %v1475 = vsel %vm274, %v1363, 0
  %v1478 = vsel %vm274, %v1364, 0
  %v1481 = vsel %vm274, %v1365, 0
  %v1484 = vsel %vm274, %v1366, 0
  %v1487 = vsel %vm274, %v1367, 0
  %v1490 = vsel %vm274, %v1368, 0
  %v1493 = vsel %vm274, %v1369, 0
  %v1496 = vsel %vm398, %v1371, 0
  %1498 = vmatprep.subr.bf16.mxu0 0
  %1499 = vmatpush1.bf16.msra.mxu0 %v1496
  %1500 = vmatprep.subr.bf16.mxu0 0
  %1501 = vmatpush1.bf16.msra.mxu0 0
  %1502 = vmatprep.subr.bf16.mxu0 0
  %1503 = vmatpush1.bf16.msra.mxu0 0
  %1504 = vmatprep.subr.bf16.mxu0 0
  %1505 = vmatpush1.bf16.msra.mxu0 0
  %1506 = vmatprep.subr.bf16.mxu0 0
  %1507 = vmatpush1.bf16.msra.mxu0 0
  %1508 = vmatprep.subr.bf16.mxu0 0
  %1509 = vmatpush1.bf16.msra.mxu0 0
  %1510 = vmatprep.subr.bf16.mxu0 0
  %1511 = vmatpush1.bf16.msra.mxu0 0
  %1512 = vmatprep.subr.bf16.mxu0 0
  %1513 = vmatpush1.bf16.msra.mxu0 0
  %1514 = vmatprep.subr.bf16.mxu0 0
  %1515 = vmatpush1.bf16.msra.mxu0 0
  %1516 = vmatprep.subr.bf16.mxu0 0
  %1517 = vmatpush1.bf16.msra.mxu0 0
  %1518 = vmatprep.subr.bf16.mxu0 0
  %1519 = vmatpush1.bf16.msra.mxu0 0
  %1520 = vmatprep.subr.bf16.mxu0 0
  %1521 = vmatpush1.bf16.msra.mxu0 0
  %1522 = vmatprep.subr.bf16.mxu0 0
  %1523 = vmatpush1.bf16.msra.mxu0 0
  %1524 = vmatprep.subr.bf16.mxu0 0
  %1525 = vmatpush1.bf16.msra.mxu0 0
  %1526 = vmatprep.subr.bf16.mxu0 0
  %1527 = vmatpush1.bf16.msra.mxu0 0
  %1528 = vmatprep.subr.bf16.mxu0 0
  %1529 = vmatpush1.bf16.msra.mxu0 0
  %1530 = vmatprep.mubr.bf16.mxu0 0
  %1531 = vmatmul.mubr.bf16.gmra.mrb[0].mxu0 %v1373
  %v1532 = vpop.f32.mrb[0].mxu0
  %v1533 = vadd.f32 0.0, %v1532
  %v1534 = vpop.f32.mrb[0].mxu0
  %v1535 = vpop.f32.mrb[0].mxu0
  %v1536 = vadd.f32 0.0, %v1535
  %v1537 = vpop.f32.mrb[0].mxu0
  %1538 = vmatprep.mubr.bf16.mxu0 0
  %1539 = vmatmul.mubr.bf16.gmra.mrb[0].mxu0 %v1376
  %v1540 = vpop.f32.mrb[0].mxu0
  %v1541 = vadd.f32 0.0, %v1540
  %v1542 = vpop.f32.mrb[0].mxu0
  %v1543 = vpop.f32.mrb[0].mxu0
  %v1544 = vadd.f32 0.0, %v1543
  %v1545 = vpop.f32.mrb[0].mxu0
  %1546 = vmatprep.mubr.bf16.mxu0 0
  %1547 = vmatmul.mubr.bf16.gmra.mrb[0].mxu0 %v1379
  %v1548 = vpop.f32.mrb[0].mxu0
  %v1549 = vadd.f32 0.0, %v1548
  %v1550 = vpop.f32.mrb[0].mxu0
  %v1551 = vpop.f32.mrb[0].mxu0
  %v1552 = vadd.f32 0.0, %v1551
  %v1553 = vpop.f32.mrb[0].mxu0
  %1554 = vmatprep.mubr.bf16.mxu0 0
  %1555 = vmatmul.mubr.bf16.gmra.mrb[0].mxu0 %v1382
  %v1556 = vpop.f32.mrb[0].mxu0
  %v1557 = vadd.f32 0.0, %v1556
  %v1558 = vpop.f32.mrb[0].mxu0
  %v1559 = vpop.f32.mrb[0].mxu0
  %v1560 = vadd.f32 0.0, %v1559
  %v1561 = vpop.f32.mrb[0].mxu0
  %1562 = vmatprep.mubr.bf16.mxu0 0
  %1563 = vmatmul.mubr.bf16.gmra.mrb[0].mxu0 %v1385
  %v1564 = vpop.f32.mrb[0].mxu0
  %v1565 = vadd.f32 0.0, %v1564
  %v1566 = vpop.f32.mrb[0].mxu0
  %v1567 = vpop.f32.mrb[0].mxu0
  %v1568 = vadd.f32 0.0, %v1567
  %v1569 = vpop.f32.mrb[0].mxu0
  %1570 = vmatprep.mubr.bf16.mxu0 0
  %1571 = vmatmul.mubr.bf16.gmra.mrb[0].mxu0 %v1388
  %v1572 = vpop.f32.mrb[0].mxu0
  %v1573 = vadd.f32 0.0, %v1572
  %v1574 = vpop.f32.mrb[0].mxu0
  %v1575 = vpop.f32.mrb[0].mxu0
  %v1576 = vadd.f32 0.0, %v1575
  %v1577 = vpop.f32.mrb[0].mxu0
  %1578 = vmatprep.mubr.bf16.mxu0 0
  %1579 = vmatmul.mubr.bf16.gmra.mrb[0].mxu0 %v1391
  %v1580 = vpop.f32.mrb[0].mxu0
  %v1581 = vadd.f32 0.0, %v1580
  %v1582 = vpop.f32.mrb[0].mxu0
  %v1583 = vpop.f32.mrb[0].mxu0
  %v1584 = vadd.f32 0.0, %v1583
  %v1585 = vpop.f32.mrb[0].mxu0
  %1586 = vmatprep.mubr.bf16.mxu0 0
  %1587 = vmatmul.mubr.bf16.gmra.mrb[0].mxu0 %v1394
  %v1588 = vpop.f32.mrb[0].mxu0
  %v1589 = vadd.f32 0.0, %v1588
  %v1590 = vpop.f32.mrb[0].mxu0
  %v1591 = vpop.f32.mrb[0].mxu0
  %v1592 = vadd.f32 0.0, %v1591
  %v1593 = vpop.f32.mrb[0].mxu0
  %1594 = vmatprep.mubr.bf16.mxu0 0
  %1595 = vmatmul.mubr.bf16.gmra.mrb[0].mxu0 %v1397
  %v1596 = vpop.f32.mrb[0].mxu0
  %v1597 = vadd.f32 0.0, %v1596
  %v1598 = vpop.f32.mrb[0].mxu0
  %v1599 = vpop.f32.mrb[0].mxu0
  %v1600 = vadd.f32 0.0, %v1599
  %v1601 = vpop.f32.mrb[0].mxu0
  %1602 = vmatprep.mubr.bf16.mxu0 0
  %1603 = vmatmul.mubr.bf16.gmra.mrb[0].mxu0 %v1400
  %v1604 = vpop.f32.mrb[0].mxu0
  %v1605 = vadd.f32 0.0, %v1604
  %v1606 = vpop.f32.mrb[0].mxu0
  %v1607 = vpop.f32.mrb[0].mxu0
  %v1608 = vadd.f32 0.0, %v1607
  %v1609 = vpop.f32.mrb[0].mxu0
  %1610 = vmatprep.mubr.bf16.mxu0 0
  %1611 = vmatmul.mubr.bf16.gmra.mrb[0].mxu0 %v1403
  %v1612 = vpop.f32.mrb[0].mxu0
  %v1613 = vadd.f32 0.0, %v1612
  %v1614 = vpop.f32.mrb[0].mxu0
  %v1615 = vpop.f32.mrb[0].mxu0
  %v1616 = vadd.f32 0.0, %v1615
  %v1617 = vpop.f32.mrb[0].mxu0
  %1618 = vmatprep.mubr.bf16.mxu0 0
  %1619 = vmatmul.mubr.bf16.gmra.mrb[0].mxu0 %v1406
  %v1620 = vpop.f32.mrb[0].mxu0
  %v1621 = vadd.f32 0.0, %v1620
  %v1622 = vpop.f32.mrb[0].mxu0
  %v1623 = vpop.f32.mrb[0].mxu0
  %v1624 = vadd.f32 0.0, %v1623
  %v1625 = vpop.f32.mrb[0].mxu0
  %1626 = vmatprep.mubr.bf16.mxu0 0
  %1627 = vmatmul.mubr.bf16.gmra.mrb[0].mxu0 %v1409
  %v1628 = vpop.f32.mrb[0].mxu0
  %v1629 = vadd.f32 0.0, %v1628
  %v1630 = vpop.f32.mrb[0].mxu0
  %v1631 = vpop.f32.mrb[0].mxu0
  %v1632 = vadd.f32 0.0, %v1631
  %v1633 = vpop.f32.mrb[0].mxu0
  %1634 = vmatprep.mubr.bf16.mxu0 0
  %1635 = vmatmul.mubr.bf16.gmra.mrb[0].mxu0 %v1412
  %v1636 = vpop.f32.mrb[0].mxu0
  %v1637 = vadd.f32 0.0, %v1636
  %v1638 = vpop.f32.mrb[0].mxu0
  %v1639 = vpop.f32.mrb[0].mxu0
  %v1640 = vadd.f32 0.0, %v1639
  %v1641 = vpop.f32.mrb[0].mxu0
  %1642 = vmatprep.mubr.bf16.mxu0 0
  %1643 = vmatmul.mubr.bf16.gmra.mrb[0].mxu0 %v1415
  %v1644 = vpop.f32.mrb[0].mxu0
  %v1645 = vadd.f32 0.0, %v1644
  %v1646 = vpop.f32.mrb[0].mxu0
  %v1647 = vpop.f32.mrb[0].mxu0
  %v1648 = vadd.f32 0.0, %v1647
  %v1649 = vpop.f32.mrb[0].mxu0
  %1650 = vmatprep.mubr.bf16.mxu0 0
  %1651 = vmatmul.mubr.bf16.gmra.mrb[0].mxu0 %v1418
  %v1652 = vpop.f32.mrb[0].mxu0
  %v1653 = vadd.f32 0.0, %v1652
  %v1654 = vpop.f32.mrb[0].mxu0
  %v1655 = vpop.f32.mrb[0].mxu0
  %v1656 = vadd.f32 0.0, %v1655
  %v1657 = vpop.f32.mrb[0].mxu0
  %1658 = vmatprep.mubr.bf16.mxu0 0
  %1659 = vmatmul.mubr.bf16.gmra.mrb[0].mxu0 %v1421
  %v1660 = vpop.f32.mrb[0].mxu0
  %v1661 = vadd.f32 0.0, %v1660
  %v1662 = vpop.f32.mrb[0].mxu0
  %v1663 = vpop.f32.mrb[0].mxu0
  %v1664 = vadd.f32 0.0, %v1663
  %v1665 = vpop.f32.mrb[0].mxu0
  %1666 = vmatprep.mubr.bf16.mxu0 0
  %1667 = vmatmul.mubr.bf16.gmra.mrb[0].mxu0 %v1424
  %v1668 = vpop.f32.mrb[0].mxu0
  %v1669 = vadd.f32 0.0, %v1668
  %v1670 = vpop.f32.mrb[0].mxu0
  %v1671 = vpop.f32.mrb[0].mxu0
  %v1672 = vadd.f32 0.0, %v1671
  %v1673 = vpop.f32.mrb[0].mxu0
  %1674 = vmatprep.mubr.bf16.mxu0 0
  %1675 = vmatmul.mubr.bf16.gmra.mrb[0].mxu0 %v1427
  %v1676 = vpop.f32.mrb[0].mxu0
  %v1677 = vadd.f32 0.0, %v1676
  %v1678 = vpop.f32.mrb[0].mxu0
  %v1679 = vpop.f32.mrb[0].mxu0
  %v1680 = vadd.f32 0.0, %v1679
  %v1681 = vpop.f32.mrb[0].mxu0
  %1682 = vmatprep.mubr.bf16.mxu0 0
  %1683 = vmatmul.mubr.bf16.gmra.mrb[0].mxu0 %v1430
  %v1684 = vpop.f32.mrb[0].mxu0
  %v1685 = vadd.f32 0.0, %v1684
  %v1686 = vpop.f32.mrb[0].mxu0
  %v1687 = vpop.f32.mrb[0].mxu0
  %v1688 = vadd.f32 0.0, %v1687
  %v1689 = vpop.f32.mrb[0].mxu0
  %1690 = vmatprep.mubr.bf16.mxu0 0
  %1691 = vmatmul.mubr.bf16.gmra.mrb[0].mxu0 %v1433
  %v1692 = vpop.f32.mrb[0].mxu0
  %v1693 = vadd.f32 0.0, %v1692
  %v1694 = vpop.f32.mrb[0].mxu0
  %v1695 = vpop.f32.mrb[0].mxu0
  %v1696 = vadd.f32 0.0, %v1695
  %v1697 = vpop.f32.mrb[0].mxu0
  %1698 = vmatprep.mubr.bf16.mxu0 0
  %1699 = vmatmul.mubr.bf16.gmra.mrb[0].mxu0 %v1436
  %v1700 = vpop.f32.mrb[0].mxu0
  %v1701 = vadd.f32 0.0, %v1700
  %v1702 = vpop.f32.mrb[0].mxu0
  %v1703 = vpop.f32.mrb[0].mxu0
  %v1704 = vadd.f32 0.0, %v1703
  %v1705 = vpop.f32.mrb[0].mxu0
  %1706 = vmatprep.mubr.bf16.mxu0 0
  %1707 = vmatmul.mubr.bf16.gmra.mrb[0].mxu0 %v1439
  %v1708 = vpop.f32.mrb[0].mxu0
  %v1709 = vadd.f32 0.0, %v1708
  %v1710 = vpop.f32.mrb[0].mxu0
  %v1711 = vpop.f32.mrb[0].mxu0
  %v1712 = vadd.f32 0.0, %v1711
  %v1713 = vpop.f32.mrb[0].mxu0
  %1714 = vmatprep.mubr.bf16.mxu0 0
  %1715 = vmatmul.mubr.bf16.gmra.mrb[0].mxu0 %v1442
  %v1716 = vpop.f32.mrb[0].mxu0
  %v1717 = vadd.f32 0.0, %v1716
  %v1718 = vpop.f32.mrb[0].mxu0
  %v1719 = vpop.f32.mrb[0].mxu0
  %v1720 = vadd.f32 0.0, %v1719
  %v1721 = vpop.f32.mrb[0].mxu0
  %1722 = vmatprep.mubr.bf16.mxu0 0
  %1723 = vmatmul.mubr.bf16.gmra.mrb[0].mxu0 %v1445
  %v1724 = vpop.f32.mrb[0].mxu0
  %v1725 = vadd.f32 0.0, %v1724
  %v1726 = vpop.f32.mrb[0].mxu0
  %v1727 = vpop.f32.mrb[0].mxu0
  %v1728 = vadd.f32 0.0, %v1727
  %v1729 = vpop.f32.mrb[0].mxu0
  %1730 = vmatprep.mubr.bf16.mxu0 0
  %1731 = vmatmul.mubr.bf16.gmra.mrb[0].mxu0 %v1448
  %v1732 = vpop.f32.mrb[0].mxu0
  %v1733 = vadd.f32 0.0, %v1732
  %v1734 = vpop.f32.mrb[0].mxu0
  %v1735 = vpop.f32.mrb[0].mxu0
  %v1736 = vadd.f32 0.0, %v1735
  %v1737 = vpop.f32.mrb[0].mxu0
  %1738 = vmatprep.mubr.bf16.mxu0 0
  %1739 = vmatmul.mubr.bf16.gmra.mrb[0].mxu0 %v1451
  %v1740 = vpop.f32.mrb[0].mxu0
  %v1741 = vadd.f32 0.0, %v1740
  %v1742 = vpop.f32.mrb[0].mxu0
  %v1743 = vpop.f32.mrb[0].mxu0
  %v1744 = vadd.f32 0.0, %v1743
  %v1745 = vpop.f32.mrb[0].mxu0
  %1746 = vmatprep.mubr.bf16.mxu0 0
  %1747 = vmatmul.mubr.bf16.gmra.mrb[0].mxu0 %v1454
  %v1748 = vpop.f32.mrb[0].mxu0
  %v1749 = vadd.f32 0.0, %v1748
  %v1750 = vpop.f32.mrb[0].mxu0
  %v1751 = vpop.f32.mrb[0].mxu0
  %v1752 = vadd.f32 0.0, %v1751
  %v1753 = vpop.f32.mrb[0].mxu0
  %1754 = vmatprep.mubr.bf16.mxu0 0
  %1755 = vmatmul.mubr.bf16.gmra.mrb[0].mxu0 %v1457
  %v1756 = vpop.f32.mrb[0].mxu0
  %v1757 = vadd.f32 0.0, %v1756
  %v1758 = vpop.f32.mrb[0].mxu0
  %v1759 = vpop.f32.mrb[0].mxu0
  %v1760 = vadd.f32 0.0, %v1759
  %v1761 = vpop.f32.mrb[0].mxu0
  %1762 = vmatprep.mubr.bf16.mxu0 0
  %1763 = vmatmul.mubr.bf16.gmra.mrb[0].mxu0 %v1460
  %v1764 = vpop.f32.mrb[0].mxu0
  %v1765 = vadd.f32 0.0, %v1764
  %v1766 = vpop.f32.mrb[0].mxu0
  %v1767 = vpop.f32.mrb[0].mxu0
  %v1768 = vadd.f32 0.0, %v1767
  %v1769 = vpop.f32.mrb[0].mxu0
  %1770 = vmatprep.mubr.bf16.mxu0 0
  %1771 = vmatmul.mubr.bf16.gmra.mrb[0].mxu0 %v1463
  %v1772 = vpop.f32.mrb[0].mxu0
  %v1773 = vadd.f32 0.0, %v1772
  %v1774 = vpop.f32.mrb[0].mxu0
  %v1775 = vpop.f32.mrb[0].mxu0
  %v1776 = vadd.f32 0.0, %v1775
  %v1777 = vpop.f32.mrb[0].mxu0
  %1778 = vmatprep.mubr.bf16.mxu0 0
  %1779 = vmatmul.mubr.bf16.gmra.mrb[0].mxu0 %v1466
  %v1780 = vpop.f32.mrb[0].mxu0
  %v1781 = vadd.f32 0.0, %v1780
  %v1782 = vpop.f32.mrb[0].mxu0
  %v1783 = vpop.f32.mrb[0].mxu0
  %v1784 = vadd.f32 0.0, %v1783
  %v1785 = vpop.f32.mrb[0].mxu0
  %1786 = vmatprep.mubr.bf16.mxu0 0
  %1787 = vmatmul.mubr.bf16.gmra.mrb[0].mxu0 %v1469
  %v1788 = vpop.f32.mrb[0].mxu0
  %v1789 = vadd.f32 0.0, %v1788
  %v1790 = vpop.f32.mrb[0].mxu0
  %v1791 = vpop.f32.mrb[0].mxu0
  %v1792 = vadd.f32 0.0, %v1791
  %v1793 = vpop.f32.mrb[0].mxu0
  %1794 = vmatprep.mubr.bf16.mxu0 0
  %1795 = vmatmul.mubr.bf16.gmra.mrb[0].mxu0 %v1472
  %v1796 = vpop.f32.mrb[0].mxu0
  %v1797 = vadd.f32 0.0, %v1796
  %v1798 = vpop.f32.mrb[0].mxu0
  %v1799 = vpop.f32.mrb[0].mxu0
  %v1800 = vadd.f32 0.0, %v1799
  %v1801 = vpop.f32.mrb[0].mxu0
  %1802 = vmatprep.mubr.bf16.mxu0 0
  %1803 = vmatmul.mubr.bf16.gmra.mrb[0].mxu0 %v1475
  %v1804 = vpop.f32.mrb[0].mxu0
  %v1805 = vadd.f32 0.0, %v1804
  %v1806 = vpop.f32.mrb[0].mxu0
  %v1807 = vpop.f32.mrb[0].mxu0
  %v1808 = vadd.f32 0.0, %v1807
  %v1809 = vpop.f32.mrb[0].mxu0
  %1810 = vmatprep.mubr.bf16.mxu0 0
  %1811 = vmatmul.mubr.bf16.gmra.mrb[0].mxu0 %v1478
  %v1812 = vpop.f32.mrb[0].mxu0
  %v1813 = vadd.f32 0.0, %v1812
  %v1814 = vpop.f32.mrb[0].mxu0
  %v1815 = vpop.f32.mrb[0].mxu0
  %v1816 = vadd.f32 0.0, %v1815
  %v1817 = vpop.f32.mrb[0].mxu0
  %1818 = vmatprep.mubr.bf16.mxu0 0
  %1819 = vmatmul.mubr.bf16.gmra.mrb[0].mxu0 %v1481
  %v1820 = vpop.f32.mrb[0].mxu0
  %v1821 = vadd.f32 0.0, %v1820
  %v1822 = vpop.f32.mrb[0].mxu0
  %v1823 = vpop.f32.mrb[0].mxu0
  %v1824 = vadd.f32 0.0, %v1823
  %v1825 = vpop.f32.mrb[0].mxu0
  %1826 = vmatprep.mubr.bf16.mxu0 0
  %1827 = vmatmul.mubr.bf16.gmra.mrb[0].mxu0 %v1484
  %v1828 = vpop.f32.mrb[0].mxu0
  %v1829 = vadd.f32 0.0, %v1828
  %v1830 = vpop.f32.mrb[0].mxu0
  %v1831 = vpop.f32.mrb[0].mxu0
  %v1832 = vadd.f32 0.0, %v1831
  %v1833 = vpop.f32.mrb[0].mxu0
  %1834 = vmatprep.mubr.bf16.mxu0 0
  %1835 = vmatmul.mubr.bf16.gmra.mrb[0].mxu0 %v1487
  %v1836 = vpop.f32.mrb[0].mxu0
  %v1837 = vadd.f32 0.0, %v1836
  %v1838 = vpop.f32.mrb[0].mxu0
  %v1839 = vpop.f32.mrb[0].mxu0
  %v1840 = vadd.f32 0.0, %v1839
  %v1841 = vpop.f32.mrb[0].mxu0
  %1842 = vmatprep.mubr.bf16.mxu0 0
  %1843 = vmatmul.mubr.bf16.gmra.mrb[0].mxu0 %v1490
  %v1844 = vpop.f32.mrb[0].mxu0
  %v1845 = vadd.f32 0.0, %v1844
  %v1846 = vpop.f32.mrb[0].mxu0
  %v1847 = vpop.f32.mrb[0].mxu0
  %v1848 = vadd.f32 0.0, %v1847
  %v1849 = vpop.f32.mrb[0].mxu0
  %1850 = vmatprep.mubr.bf16.mxu0 0
  %1851 = vmatmul.mubr.bf16.gmra.mrb[0].mxu0 %v1493
  %v1852 = vpop.f32.mrb[0].mxu0
  %v1853 = vadd.f32 0.0, %v1852
  %v1854 = vpop.f32.mrb[0].mxu0
  %v1855 = vpop.f32.mrb[0].mxu0
  %v1856 = vpop.f32.mrb[0].mxu0
  %1857 = vdwg.mxu0
  %v1858 = vadd.f32 %v923, %v1533
  %v1859 = vadd.f32 %v926, %v1536
  %v1860 = vadd.f32 %v931, %v1541
  %v1861 = vadd.f32 %v934, %v1544
  %v1862 = vadd.f32 %v939, %v1549
  %v1863 = vadd.f32 %v942, %v1552
  %v1864 = vadd.f32 %v947, %v1557
  %v1865 = vadd.f32 %v950, %v1560
  %v1866 = vadd.f32 %v955, %v1565
  %v1867 = vadd.f32 %v958, %v1568
  %v1868 = vadd.f32 %v963, %v1573
  %v1869 = vadd.f32 %v966, %v1576
  %v1870 = vadd.f32 %v971, %v1581
  %v1871 = vadd.f32 %v974, %v1584
  %v1872 = vadd.f32 %v979, %v1589
  %v1873 = vadd.f32 %v982, %v1592
  %v1874 = vadd.f32 %v987, %v1597
  %v1875 = vadd.f32 %v990, %v1600
  %v1876 = vadd.f32 %v995, %v1605
  %v1877 = vadd.f32 %v998, %v1608
  %v1878 = vadd.f32 %v1003, %v1613
  %v1879 = vadd.f32 %v1006, %v1616
  %v1880 = vadd.f32 %v1011, %v1621
  %v1881 = vadd.f32 %v1014, %v1624
  %v1882 = vadd.f32 %v1019, %v1629
  %v1883 = vadd.f32 %v1022, %v1632
  %v1884 = vadd.f32 %v1027, %v1637
  %v1885 = vadd.f32 %v1030, %v1640
  %v1886 = vadd.f32 %v1035, %v1645
  %v1887 = vadd.f32 %v1038, %v1648
  %v1888 = vadd.f32 %v1043, %v1653
  %v1889 = vadd.f32 %v1046, %v1656
  %v1890 = vadd.f32 %v1051, %v1661
  %v1891 = vadd.f32 %v1054, %v1664
  %v1892 = vadd.f32 %v1059, %v1669
  %v1893 = vadd.f32 %v1062, %v1672
  %v1894 = vadd.f32 %v1067, %v1677
  %v1895 = vadd.f32 %v1070, %v1680
  %v1896 = vadd.f32 %v1075, %v1685
  %v1897 = vadd.f32 %v1078, %v1688
  %v1898 = vadd.f32 %v1083, %v1693
  %v1899 = vadd.f32 %v1086, %v1696
  %v1900 = vadd.f32 %v1091, %v1701
  %v1901 = vadd.f32 %v1094, %v1704
  %v1902 = vadd.f32 %v1099, %v1709
  %v1903 = vadd.f32 %v1102, %v1712
  %v1904 = vadd.f32 %v1107, %v1717
  %v1905 = vadd.f32 %v1110, %v1720
  %v1906 = vadd.f32 %v1115, %v1725
  %v1907 = vadd.f32 %v1118, %v1728
  %v1908 = vadd.f32 %v1123, %v1733
  %v1909 = vadd.f32 %v1126, %v1736
  %v1910 = vadd.f32 %v1131, %v1741
  %v1911 = vadd.f32 %v1134, %v1744
  %v1912 = vadd.f32 %v1139, %v1749
  %v1913 = vadd.f32 %v1142, %v1752
  %v1914 = vadd.f32 %v1147, %v1757
  %v1915 = vadd.f32 %v1150, %v1760
  %v1916 = vadd.f32 %v1155, %v1765
  %v1917 = vadd.f32 %v1158, %v1768
  %v1918 = vadd.f32 %v1163, %v1773
  %v1919 = vadd.f32 %v1166, %v1776
  %v1920 = vadd.f32 %v1171, %v1781
  %v1921 = vadd.f32 %v1174, %v1784
  %v1922 = vadd.f32 %v1179, %v1789
  %v1923 = vadd.f32 %v1182, %v1792
  %v1924 = vadd.f32 %v1187, %v1797
  %v1925 = vadd.f32 %v1190, %v1800
  %v1926 = vadd.f32 %v1195, %v1805
  %v1927 = vadd.f32 %v1198, %v1808
  %v1928 = vadd.f32 %v1203, %v1813
  %v1929 = vadd.f32 %v1206, %v1816
  %v1930 = vadd.f32 %v1211, %v1821
  %v1931 = vadd.f32 %v1214, %v1824
  %v1932 = vadd.f32 %v1219, %v1829
  %v1933 = vadd.f32 %v1222, %v1832
  %v1934 = vadd.f32 %v1227, %v1837
  %v1935 = vadd.f32 %v1230, %v1840
  %v1936 = vadd.f32 %v1235, %v1845
  %v1937 = vadd.f32 %v1238, %v1848
  %v1938 = vadd.f32 %v1243, %v1853
  %v1939 = vld [vmem:[%s0 + $0x12] sm:$0xff]
  %v1940 = vld [vmem:[%s0 + $0x1a] sm:$0xff]
  %v1941 = vld [vmem:[%s0 + $0x22] sm:$0xff]
  %v1942 = vld [vmem:[%s0 + $0x2a] sm:$0xff]
  %v1943 = vld [vmem:[%s0 + $0x32] sm:$0xff]
  %v1944 = vld [vmem:[%s0 + $0x3a] sm:$0xff]
  %v1945 = vld [vmem:[%s0 + $0x42] sm:$0xff]
  %v1946 = vld [vmem:[%s0 + $0x4a] sm:$0xff]
  %v1947 = vld [vmem:[%s0 + $0x52] sm:$0xff]
  %v1948 = vld [vmem:[%s0 + $0x5a] sm:$0xff]
  %v1949 = vld [vmem:[%s0 + $0x62] sm:$0xff]
  %v1950 = vld [vmem:[%s0 + $0x6a] sm:$0xff]
  %v1951 = vld [vmem:[%s0 + $0x72] sm:$0xff]
  %v1952 = vld [vmem:[%s0 + $0x7a] sm:$0xff]
  %v1953 = vld [vmem:[%s0 + $0x82] sm:$0xff]
  %v1954 = vld [vmem:[%s0 + $0x8a] sm:$0xff]
  %v1955 = vld [vmem:[%s0 + $0x92] sm:$0xff]
  %v1956 = vld [vmem:[%s0 + $0x9a] sm:$0xff]
  %v1957 = vld [vmem:[%s0 + $0xa2] sm:$0xff]
  %v1958 = vld [vmem:[%s0 + $0xaa] sm:$0xff]
  %v1959 = vld [vmem:[%s0 + $0xb2] sm:$0xff]
  %v1960 = vld [vmem:[%s0 + $0xba] sm:$0xff]
  %v1961 = vld [vmem:[%s0 + $0xc2] sm:$0xff]
  %v1962 = vld [vmem:[%s0 + $0xca] sm:$0xff]
  %v1963 = vld [vmem:[%s0 + $0xd2] sm:$0xff]
  %v1964 = vld [vmem:[%s0 + $0xda] sm:$0xff]
  %v1965 = vld [vmem:[%s0 + $0xe2] sm:$0xff]
  %v1966 = vld [vmem:[%s0 + $0xea] sm:$0xff]
  %v1967 = vld [vmem:[%s0 + $0xf2] sm:$0xff]
  %v1968 = vld [vmem:[%s0 + $0xfa] sm:$0xff]
  %v1969 = vld [vmem:[%s0 + $0x102] sm:$0xff]
  %v1970 = vld [vmem:[%s0 + $0x10a] sm:$0xff]
  %v1971 = vld [vmem:[%s0 + $0x112] sm:$0xff]
  %v1972 = vld [vmem:[%s0 + $0x11a] sm:$0xff]
  %v1973 = vld [vmem:[%s0 + $0x122] sm:$0xff]
  %v1974 = vld [vmem:[%s0 + $0x12a] sm:$0xff]
  %v1975 = vld [vmem:[%s0 + $0x132] sm:$0xff]
  %v1976 = vld [vmem:[%s0 + $0x13a] sm:$0xff]
  %v1977 = vld [vmem:[%s0 + $0x142] sm:$0xff]
  %v1978 = vld [vmem:[%s0 + $0x14a] sm:$0xff]
  %v1979 = vld [vmem:[%s0 + $0x152] sm:$0xff]
  %v1980 = vld [vmem:[%s0 + $0x15a] sm:$0xff]
  %v1981 = vld [vmem:[%s0 + $0x162] sm:$0xff]
  %v1982 = vld [vmem:[%s0 + $0x16a] sm:$0xff]
  %v1983 = vld [vmem:[%s0 + $0x172] sm:$0xff]
  %v1984 = vld [vmem:[%s0 + $0x17a] sm:$0xff]
  %v1985 = vld [vmem:[%s0 + $0x182] sm:$0xff]
  %v1986 = vld [vmem:[%s0 + $0x18a] sm:$0xff]
  %v1987 = vld [vmem:[%s0 + $0x192] sm:$0xff]
  %v1988 = vld [vmem:[%s0 + $0x19a] sm:$0xff]
  %v1989 = vld [vmem:[%s0 + $0x1a2] sm:$0xff]
  %v1990 = vld [vmem:[%s0 + $0x1aa] sm:$0xff]
  %v1991 = vld [vmem:[%s0 + $0x1b2] sm:$0xff]
  %v1992 = vld [vmem:[%s0 + $0x1ba] sm:$0xff]
  %v1993 = vld [vmem:[%s0 + $0x1c2] sm:$0xff]
  %v1994 = vld [vmem:[%s0 + $0x1ca] sm:$0xff]
  %v1995 = vld [vmem:[%s0 + $0x1d2] sm:$0xff]
  %v1996 = vld [vmem:[%s0 + $0x1da] sm:$0xff]
  %v1997 = vld [vmem:[%s0 + $0x1e2] sm:$0xff]
  %v1998 = vld [vmem:[%s0 + $0x1ea] sm:$0xff]
  %v1999 = vld [vmem:[%s0 + $0x1f2] sm:$0xff]
  %v2000 = vld [vmem:[%s0 + $0x1fa] sm:$0xff]
  %v2001 = vld [vmem:[%s0 + $0x202] sm:$0xff]
  %v2002 = vld [vmem:[%s0 + $0x20a] sm:$0xff]
  %v2003 = vld [vmem:[%s0 + $0x212] sm:$0xff]
  %v2004 = vld [vmem:[%s0 + $0x21a] sm:$0xff]
  %v2005 = vld [vmem:[%s0 + $0x222] sm:$0xff]
  %v2006 = vld [vmem:[%s0 + $0x22a] sm:$0xff]
  %v2007 = vld [vmem:[%s0 + $0x232] sm:$0xff]
  %v2008 = vld [vmem:[%s0 + $0x23a] sm:$0xff]
  %v2009 = vld [vmem:[%s0 + $0x242] sm:$0xff]
  %v2010 = vld [vmem:[%s0 + $0x24a] sm:$0xff]
  %v2011 = vld [vmem:[%s0 + $0x252] sm:$0xff]
  %v2012 = vld [vmem:[%s0 + $0x25a] sm:$0xff]
  %v2013 = vld [vmem:[%s0 + $0x262] sm:$0xff]
  %v2014 = vld [vmem:[%s0 + $0x26a] sm:$0xff]
  %v2015 = vld [vmem:[%s0 + $0x272] sm:$0xff]
  %v2016 = vld [vmem:[%s0 + $0x27a] sm:$0xff]
  %v2017 = vld [vmem:[%s0 + $0x282] sm:$0xff]
  %v2018 = vld [vmem:[%s0 + $0x28a] sm:$0xff]
  %v2019 = vld [vmem:[%s0 + $0x292] sm:$0xff]
  %v2020 = vpack.c.bf16 %v1940, %v1939
  %v2021 = vpack.c.bf16 %v1942, %v1941
  %v2022 = vpack.c.bf16 %v1944, %v1943
  %v2023 = vpack.c.bf16 %v1946, %v1945
  %v2024 = vpack.c.bf16 %v1948, %v1947
  %v2025 = vpack.c.bf16 %v1950, %v1949
  %v2026 = vpack.c.bf16 %v1952, %v1951
  %v2027 = vpack.c.bf16 %v1954, %v1953
  %v2028 = vpack.c.bf16 %v1956, %v1955
  %v2029 = vpack.c.bf16 %v1958, %v1957
  %v2030 = vpack.c.bf16 %v1960, %v1959
  %v2031 = vpack.c.bf16 %v1962, %v1961
  %v2032 = vpack.c.bf16 %v1964, %v1963
  %v2033 = vpack.c.bf16 %v1966, %v1965
  %v2034 = vpack.c.bf16 %v1968, %v1967
  %v2035 = vpack.c.bf16 %v1970, %v1969
  %v2036 = vpack.c.bf16 %v1972, %v1971
  %v2037 = vpack.c.bf16 %v1974, %v1973
  %v2038 = vpack.c.bf16 %v1976, %v1975
  %v2039 = vpack.c.bf16 %v1978, %v1977
  %v2040 = vpack.c.bf16 %v1980, %v1979
  %v2041 = vpack.c.bf16 %v1982, %v1981
  %v2042 = vpack.c.bf16 %v1984, %v1983
  %v2043 = vpack.c.bf16 %v1986, %v1985
  %v2044 = vpack.c.bf16 %v1988, %v1987
  %v2045 = vpack.c.bf16 %v1990, %v1989
  %v2046 = vpack.c.bf16 %v1992, %v1991
  %v2047 = vpack.c.bf16 %v1994, %v1993
  %v2048 = vpack.c.bf16 %v1996, %v1995
  %v2049 = vpack.c.bf16 %v1998, %v1997
  %v2050 = vpack.c.bf16 %v2000, %v1999
  %v2051 = vpack.c.bf16 %v2002, %v2001
  %v2052 = vpack.c.bf16 %v2004, %v2003
  %v2053 = vpack.c.bf16 %v2006, %v2005
  %v2054 = vpack.c.bf16 %v2008, %v2007
  %v2055 = vpack.c.bf16 %v2010, %v2009
  %v2056 = vpack.c.bf16 %v2012, %v2011
  %v2057 = vpack.c.bf16 %v2014, %v2013
  %v2058 = vpack.c.bf16 %v2016, %v2015
  %v2059 = vpack.c.bf16 %v2018, %v2017
  %v2060 = vpack.c.bf16 %v2019, %v2019
  %s2061 = scalar_lea.vmem %s1, 6
  %v2062 = vld [vmem:[%s2061] sm:$0x3]
  %v2064 = vsel %vm274, %v2020, 0
  %v2067 = vsel %vm274, %v2021, 0
  %v2070 = vsel %vm274, %v2022, 0
  %v2073 = vsel %vm274, %v2023, 0
  %v2076 = vsel %vm274, %v2024, 0
  %v2079 = vsel %vm274, %v2025, 0
  %v2082 = vsel %vm274, %v2026, 0
  %v2085 = vsel %vm274, %v2027, 0
  %v2088 = vsel %vm274, %v2028, 0
  %v2091 = vsel %vm274, %v2029, 0
  %v2094 = vsel %vm274, %v2030, 0
  %v2097 = vsel %vm274, %v2031, 0
  %v2100 = vsel %vm274, %v2032, 0
  %v2103 = vsel %vm274, %v2033, 0
  %v2106 = vsel %vm274, %v2034, 0
  %v2109 = vsel %vm274, %v2035, 0
  %v2112 = vsel %vm274, %v2036, 0
  %v2115 = vsel %vm274, %v2037, 0
  %v2118 = vsel %vm274, %v2038, 0
  %v2121 = vsel %vm274, %v2039, 0
  %v2124 = vsel %vm274, %v2040, 0
  %v2127 = vsel %vm274, %v2041, 0
  %v2130 = vsel %vm274, %v2042, 0
  %v2133 = vsel %vm274, %v2043, 0
  %v2136 = vsel %vm274, %v2044, 0
  %v2139 = vsel %vm274, %v2045, 0
  %v2142 = vsel %vm274, %v2046, 0
  %v2145 = vsel %vm274, %v2047, 0
  %v2148 = vsel %vm274, %v2048, 0
  %v2151 = vsel %vm274, %v2049, 0
  %v2154 = vsel %vm274, %v2050, 0
  %v2157 = vsel %vm274, %v2051, 0
  %v2160 = vsel %vm274, %v2052, 0
  %v2163 = vsel %vm274, %v2053, 0
  %v2166 = vsel %vm274, %v2054, 0
  %v2169 = vsel %vm274, %v2055, 0
  %v2172 = vsel %vm274, %v2056, 0
  %v2175 = vsel %vm274, %v2057, 0
  %v2178 = vsel %vm274, %v2058, 0
  %v2181 = vsel %vm274, %v2059, 0
  %v2184 = vsel %vm274, %v2060, 0
  %v2187 = vsel %vm398, %v2062, 0
  %2189 = vmatprep.subr.bf16.mxu0 0
  %2190 = vmatpush1.bf16.msra.mxu0 %v2187
  %2191 = vmatprep.subr.bf16.mxu0 0
  %2192 = vmatpush1.bf16.msra.mxu0 0
  %2193 = vmatprep.subr.bf16.mxu0 0
  %2194 = vmatpush1.bf16.msra.mxu0 0
  %2195 = vmatprep.subr.bf16.mxu0 0
  %2196 = vmatpush1.bf16.msra.mxu0 0
  %2197 = vmatprep.subr.bf16.mxu0 0
  %2198 = vmatpush1.bf16.msra.mxu0 0
  %2199 = vmatprep.subr.bf16.mxu0 0
  %2200 = vmatpush1.bf16.msra.mxu0 0
  %2201 = vmatprep.subr.bf16.mxu0 0
  %2202 = vmatpush1.bf16.msra.mxu0 0
  %2203 = vmatprep.subr.bf16.mxu0 0
  %2204 = vmatpush1.bf16.msra.mxu0 0
  %2205 = vmatprep.subr.bf16.mxu0 0
  %2206 = vmatpush1.bf16.msra.mxu0 0
  %2207 = vmatprep.subr.bf16.mxu0 0
  %2208 = vmatpush1.bf16.msra.mxu0 0
  %2209 = vmatprep.subr.bf16.mxu0 0
  %2210 = vmatpush1.bf16.msra.mxu0 0
  %2211 = vmatprep.subr.bf16.mxu0 0
  %2212 = vmatpush1.bf16.msra.mxu0 0
  %2213 = vmatprep.subr.bf16.mxu0 0
  %2214 = vmatpush1.bf16.msra.mxu0 0
  %2215 = vmatprep.subr.bf16.mxu0 0
  %2216 = vmatpush1.bf16.msra.mxu0 0
  %2217 = vmatprep.subr.bf16.mxu0 0
  %2218 = vmatpush1.bf16.msra.mxu0 0
  %2219 = vmatprep.subr.bf16.mxu0 0
  %2220 = vmatpush1.bf16.msra.mxu0 0
  %2221 = vmatprep.mubr.bf16.mxu0 0
  %2222 = vmatmul.mubr.bf16.gmra.mrb[0].mxu0 %v2064
  %v2223 = vpop.f32.mrb[0].mxu0
  %v2224 = vadd.f32 0.0, %v2223
  %v2225 = vpop.f32.mrb[0].mxu0
  %v2226 = vpop.f32.mrb[0].mxu0
  %v2227 = vadd.f32 0.0, %v2226
  %v2228 = vpop.f32.mrb[0].mxu0
  %2229 = vmatprep.mubr.bf16.mxu0 0
  %2230 = vmatmul.mubr.bf16.gmra.mrb[0].mxu0 %v2067
  %v2231 = vpop.f32.mrb[0].mxu0
  %v2232 = vadd.f32 0.0, %v2231
  %v2233 = vpop.f32.mrb[0].mxu0
  %v2234 = vpop.f32.mrb[0].mxu0
  %v2235 = vadd.f32 0.0, %v2234
  %v2236 = vpop.f32.mrb[0].mxu0
  %2237 = vmatprep.mubr.bf16.mxu0 0
  %2238 = vmatmul.mubr.bf16.gmra.mrb[0].mxu0 %v2070
  %v2239 = vpop.f32.mrb[0].mxu0
  %v2240 = vadd.f32 0.0, %v2239
  %v2241 = vpop.f32.mrb[0].mxu0
  %v2242 = vpop.f32.mrb[0].mxu0
  %v2243 = vadd.f32 0.0, %v2242
  %v2244 = vpop.f32.mrb[0].mxu0
  %2245 = vmatprep.mubr.bf16.mxu0 0
  %2246 = vmatmul.mubr.bf16.gmra.mrb[0].mxu0 %v2073
  %v2247 = vpop.f32.mrb[0].mxu0
  %v2248 = vadd.f32 0.0, %v2247
  %v2249 = vpop.f32.mrb[0].mxu0
  %v2250 = vpop.f32.mrb[0].mxu0
  %v2251 = vadd.f32 0.0, %v2250
  %v2252 = vpop.f32.mrb[0].mxu0
  %2253 = vmatprep.mubr.bf16.mxu0 0
  %2254 = vmatmul.mubr.bf16.gmra.mrb[0].mxu0 %v2076
  %v2255 = vpop.f32.mrb[0].mxu0
  %v2256 = vadd.f32 0.0, %v2255
  %v2257 = vpop.f32.mrb[0].mxu0
  %v2258 = vpop.f32.mrb[0].mxu0
  %v2259 = vadd.f32 0.0, %v2258
  %v2260 = vpop.f32.mrb[0].mxu0
  %2261 = vmatprep.mubr.bf16.mxu0 0
  %2262 = vmatmul.mubr.bf16.gmra.mrb[0].mxu0 %v2079
  %v2263 = vpop.f32.mrb[0].mxu0
  %v2264 = vadd.f32 0.0, %v2263
  %v2265 = vpop.f32.mrb[0].mxu0
  %v2266 = vpop.f32.mrb[0].mxu0
  %v2267 = vadd.f32 0.0, %v2266
  %v2268 = vpop.f32.mrb[0].mxu0
  %2269 = vmatprep.mubr.bf16.mxu0 0
  %2270 = vmatmul.mubr.bf16.gmra.mrb[0].mxu0 %v2082
  %v2271 = vpop.f32.mrb[0].mxu0
  %v2272 = vadd.f32 0.0, %v2271
  %v2273 = vpop.f32.mrb[0].mxu0
  %v2274 = vpop.f32.mrb[0].mxu0
  %v2275 = vadd.f32 0.0, %v2274
  %v2276 = vpop.f32.mrb[0].mxu0
  %2277 = vmatprep.mubr.bf16.mxu0 0
  %2278 = vmatmul.mubr.bf16.gmra.mrb[0].mxu0 %v2085
  %v2279 = vpop.f32.mrb[0].mxu0
  %v2280 = vadd.f32 0.0, %v2279
  %v2281 = vpop.f32.mrb[0].mxu0
  %v2282 = vpop.f32.mrb[0].mxu0
  %v2283 = vadd.f32 0.0, %v2282
  %v2284 = vpop.f32.mrb[0].mxu0
  %2285 = vmatprep.mubr.bf16.mxu0 0
  %2286 = vmatmul.mubr.bf16.gmra.mrb[0].mxu0 %v2088
  %v2287 = vpop.f32.mrb[0].mxu0
  %v2288 = vadd.f32 0.0, %v2287
  %v2289 = vpop.f32.mrb[0].mxu0
  %v2290 = vpop.f32.mrb[0].mxu0
  %v2291 = vadd.f32 0.0, %v2290
  %v2292 = vpop.f32.mrb[0].mxu0
  %2293 = vmatprep.mubr.bf16.mxu0 0
  %2294 = vmatmul.mubr.bf16.gmra.mrb[0].mxu0 %v2091
  %v2295 = vpop.f32.mrb[0].mxu0
  %v2296 = vadd.f32 0.0, %v2295
  %v2297 = vpop.f32.mrb[0].mxu0
  %v2298 = vpop.f32.mrb[0].mxu0
  %v2299 = vadd.f32 0.0, %v2298
  %v2300 = vpop.f32.mrb[0].mxu0
  %2301 = vmatprep.mubr.bf16.mxu0 0
  %2302 = vmatmul.mubr.bf16.gmra.mrb[0].mxu0 %v2094
  %v2303 = vpop.f32.mrb[0].mxu0
  %v2304 = vadd.f32 0.0, %v2303
  %v2305 = vpop.f32.mrb[0].mxu0
  %v2306 = vpop.f32.mrb[0].mxu0
  %v2307 = vadd.f32 0.0, %v2306
  %v2308 = vpop.f32.mrb[0].mxu0
  %2309 = vmatprep.mubr.bf16.mxu0 0
  %2310 = vmatmul.mubr.bf16.gmra.mrb[0].mxu0 %v2097
  %v2311 = vpop.f32.mrb[0].mxu0
  %v2312 = vadd.f32 0.0, %v2311
  %v2313 = vpop.f32.mrb[0].mxu0
  %v2314 = vpop.f32.mrb[0].mxu0
  %v2315 = vadd.f32 0.0, %v2314
  %v2316 = vpop.f32.mrb[0].mxu0
  %2317 = vmatprep.mubr.bf16.mxu0 0
  %2318 = vmatmul.mubr.bf16.gmra.mrb[0].mxu0 %v2100
  %v2319 = vpop.f32.mrb[0].mxu0
  %v2320 = vadd.f32 0.0, %v2319
  %v2321 = vpop.f32.mrb[0].mxu0
  %v2322 = vpop.f32.mrb[0].mxu0
  %v2323 = vadd.f32 0.0, %v2322
  %v2324 = vpop.f32.mrb[0].mxu0
  %2325 = vmatprep.mubr.bf16.mxu0 0
  %2326 = vmatmul.mubr.bf16.gmra.mrb[0].mxu0 %v2103
  %v2327 = vpop.f32.mrb[0].mxu0
  %v2328 = vadd.f32 0.0, %v2327
  %v2329 = vpop.f32.mrb[0].mxu0
  %v2330 = vpop.f32.mrb[0].mxu0
  %v2331 = vadd.f32 0.0, %v2330
  %v2332 = vpop.f32.mrb[0].mxu0
  %2333 = vmatprep.mubr.bf16.mxu0 0
  %2334 = vmatmul.mubr.bf16.gmra.mrb[0].mxu0 %v2106
  %v2335 = vpop.f32.mrb[0].mxu0
  %v2336 = vadd.f32 0.0, %v2335
  %v2337 = vpop.f32.mrb[0].mxu0
  %v2338 = vpop.f32.mrb[0].mxu0
  %v2339 = vadd.f32 0.0, %v2338
  %v2340 = vpop.f32.mrb[0].mxu0
  %2341 = vmatprep.mubr.bf16.mxu0 0
  %2342 = vmatmul.mubr.bf16.gmra.mrb[0].mxu0 %v2109
  %v2343 = vpop.f32.mrb[0].mxu0
  %v2344 = vadd.f32 0.0, %v2343
  %v2345 = vpop.f32.mrb[0].mxu0
  %v2346 = vpop.f32.mrb[0].mxu0
  %v2347 = vadd.f32 0.0, %v2346
  %v2348 = vpop.f32.mrb[0].mxu0
  %2349 = vmatprep.mubr.bf16.mxu0 0
  %2350 = vmatmul.mubr.bf16.gmra.mrb[0].mxu0 %v2112
  %v2351 = vpop.f32.mrb[0].mxu0
  %v2352 = vadd.f32 0.0, %v2351
  %v2353 = vpop.f32.mrb[0].mxu0
  %v2354 = vpop.f32.mrb[0].mxu0
  %v2355 = vadd.f32 0.0, %v2354
  %v2356 = vpop.f32.mrb[0].mxu0
  %2357 = vmatprep.mubr.bf16.mxu0 0
  %2358 = vmatmul.mubr.bf16.gmra.mrb[0].mxu0 %v2115
  %v2359 = vpop.f32.mrb[0].mxu0
  %v2360 = vadd.f32 0.0, %v2359
  %v2361 = vpop.f32.mrb[0].mxu0
  %v2362 = vpop.f32.mrb[0].mxu0
  %v2363 = vadd.f32 0.0, %v2362
  %v2364 = vpop.f32.mrb[0].mxu0
  %2365 = vmatprep.mubr.bf16.mxu0 0
  %2366 = vmatmul.mubr.bf16.gmra.mrb[0].mxu0 %v2118
  %v2367 = vpop.f32.mrb[0].mxu0
  %v2368 = vadd.f32 0.0, %v2367
  %v2369 = vpop.f32.mrb[0].mxu0
  %v2370 = vpop.f32.mrb[0].mxu0
  %v2371 = vadd.f32 0.0, %v2370
  %v2372 = vpop.f32.mrb[0].mxu0
  %2373 = vmatprep.mubr.bf16.mxu0 0
  %2374 = vmatmul.mubr.bf16.gmra.mrb[0].mxu0 %v2121
  %v2375 = vpop.f32.mrb[0].mxu0
  %v2376 = vadd.f32 0.0, %v2375
  %v2377 = vpop.f32.mrb[0].mxu0
  %v2378 = vpop.f32.mrb[0].mxu0
  %v2379 = vadd.f32 0.0, %v2378
  %v2380 = vpop.f32.mrb[0].mxu0
  %2381 = vmatprep.mubr.bf16.mxu0 0
  %2382 = vmatmul.mubr.bf16.gmra.mrb[0].mxu0 %v2124
  %v2383 = vpop.f32.mrb[0].mxu0
  %v2384 = vadd.f32 0.0, %v2383
  %v2385 = vpop.f32.mrb[0].mxu0
  %v2386 = vpop.f32.mrb[0].mxu0
  %v2387 = vadd.f32 0.0, %v2386
  %v2388 = vpop.f32.mrb[0].mxu0
  %2389 = vmatprep.mubr.bf16.mxu0 0
  %2390 = vmatmul.mubr.bf16.gmra.mrb[0].mxu0 %v2127
  %v2391 = vpop.f32.mrb[0].mxu0
  %v2392 = vadd.f32 0.0, %v2391
  %v2393 = vpop.f32.mrb[0].mxu0
  %v2394 = vpop.f32.mrb[0].mxu0
  %v2395 = vadd.f32 0.0, %v2394
  %v2396 = vpop.f32.mrb[0].mxu0
  %2397 = vmatprep.mubr.bf16.mxu0 0
  %2398 = vmatmul.mubr.bf16.gmra.mrb[0].mxu0 %v2130
  %v2399 = vpop.f32.mrb[0].mxu0
  %v2400 = vadd.f32 0.0, %v2399
  %v2401 = vpop.f32.mrb[0].mxu0
  %v2402 = vpop.f32.mrb[0].mxu0
  %v2403 = vadd.f32 0.0, %v2402
  %v2404 = vpop.f32.mrb[0].mxu0
  %2405 = vmatprep.mubr.bf16.mxu0 0
  %2406 = vmatmul.mubr.bf16.gmra.mrb[0].mxu0 %v2133
  %v2407 = vpop.f32.mrb[0].mxu0
  %v2408 = vadd.f32 0.0, %v2407
  %v2409 = vpop.f32.mrb[0].mxu0
  %v2410 = vpop.f32.mrb[0].mxu0
  %v2411 = vadd.f32 0.0, %v2410
  %v2412 = vpop.f32.mrb[0].mxu0
  %2413 = vmatprep.mubr.bf16.mxu0 0
  %2414 = vmatmul.mubr.bf16.gmra.mrb[0].mxu0 %v2136
  %v2415 = vpop.f32.mrb[0].mxu0
  %v2416 = vadd.f32 0.0, %v2415
  %v2417 = vpop.f32.mrb[0].mxu0
  %v2418 = vpop.f32.mrb[0].mxu0
  %v2419 = vadd.f32 0.0, %v2418
  %v2420 = vpop.f32.mrb[0].mxu0
  %2421 = vmatprep.mubr.bf16.mxu0 0
  %2422 = vmatmul.mubr.bf16.gmra.mrb[0].mxu0 %v2139
  %v2423 = vpop.f32.mrb[0].mxu0
  %v2424 = vadd.f32 0.0, %v2423
  %v2425 = vpop.f32.mrb[0].mxu0
  %v2426 = vpop.f32.mrb[0].mxu0
  %v2427 = vadd.f32 0.0, %v2426
  %v2428 = vpop.f32.mrb[0].mxu0
  %2429 = vmatprep.mubr.bf16.mxu0 0
  %2430 = vmatmul.mubr.bf16.gmra.mrb[0].mxu0 %v2142
  %v2431 = vpop.f32.mrb[0].mxu0
  %v2432 = vadd.f32 0.0, %v2431
  %v2433 = vpop.f32.mrb[0].mxu0
  %v2434 = vpop.f32.mrb[0].mxu0
  %v2435 = vadd.f32 0.0, %v2434
  %v2436 = vpop.f32.mrb[0].mxu0
  %2437 = vmatprep.mubr.bf16.mxu0 0
  %2438 = vmatmul.mubr.bf16.gmra.mrb[0].mxu0 %v2145
  %v2439 = vpop.f32.mrb[0].mxu0
  %v2440 = vadd.f32 0.0, %v2439
  %v2441 = vpop.f32.mrb[0].mxu0
  %v2442 = vpop.f32.mrb[0].mxu0
  %v2443 = vadd.f32 0.0, %v2442
  %v2444 = vpop.f32.mrb[0].mxu0
  %2445 = vmatprep.mubr.bf16.mxu0 0
  %2446 = vmatmul.mubr.bf16.gmra.mrb[0].mxu0 %v2148
  %v2447 = vpop.f32.mrb[0].mxu0
  %v2448 = vadd.f32 0.0, %v2447
  %v2449 = vpop.f32.mrb[0].mxu0
  %v2450 = vpop.f32.mrb[0].mxu0
  %v2451 = vadd.f32 0.0, %v2450
  %v2452 = vpop.f32.mrb[0].mxu0
  %2453 = vmatprep.mubr.bf16.mxu0 0
  %2454 = vmatmul.mubr.bf16.gmra.mrb[0].mxu0 %v2151
  %v2455 = vpop.f32.mrb[0].mxu0
  %v2456 = vadd.f32 0.0, %v2455
  %v2457 = vpop.f32.mrb[0].mxu0
  %v2458 = vpop.f32.mrb[0].mxu0
  %v2459 = vadd.f32 0.0, %v2458
  %v2460 = vpop.f32.mrb[0].mxu0
  %2461 = vmatprep.mubr.bf16.mxu0 0
  %2462 = vmatmul.mubr.bf16.gmra.mrb[0].mxu0 %v2154
  %v2463 = vpop.f32.mrb[0].mxu0
  %v2464 = vadd.f32 0.0, %v2463
  %v2465 = vpop.f32.mrb[0].mxu0
  %v2466 = vpop.f32.mrb[0].mxu0
  %v2467 = vadd.f32 0.0, %v2466
  %v2468 = vpop.f32.mrb[0].mxu0
  %2469 = vmatprep.mubr.bf16.mxu0 0
  %2470 = vmatmul.mubr.bf16.gmra.mrb[0].mxu0 %v2157
  %v2471 = vpop.f32.mrb[0].mxu0
  %v2472 = vadd.f32 0.0, %v2471
  %v2473 = vpop.f32.mrb[0].mxu0
  %v2474 = vpop.f32.mrb[0].mxu0
  %v2475 = vadd.f32 0.0, %v2474
  %v2476 = vpop.f32.mrb[0].mxu0
  %2477 = vmatprep.mubr.bf16.mxu0 0
  %2478 = vmatmul.mubr.bf16.gmra.mrb[0].mxu0 %v2160
  %v2479 = vpop.f32.mrb[0].mxu0
  %v2480 = vadd.f32 0.0, %v2479
  %v2481 = vpop.f32.mrb[0].mxu0
  %v2482 = vpop.f32.mrb[0].mxu0
  %v2483 = vadd.f32 0.0, %v2482
  %v2484 = vpop.f32.mrb[0].mxu0
  %2485 = vmatprep.mubr.bf16.mxu0 0
  %2486 = vmatmul.mubr.bf16.gmra.mrb[0].mxu0 %v2163
  %v2487 = vpop.f32.mrb[0].mxu0
  %v2488 = vadd.f32 0.0, %v2487
  %v2489 = vpop.f32.mrb[0].mxu0
  %v2490 = vpop.f32.mrb[0].mxu0
  %v2491 = vadd.f32 0.0, %v2490
  %v2492 = vpop.f32.mrb[0].mxu0
  %2493 = vmatprep.mubr.bf16.mxu0 0
  %2494 = vmatmul.mubr.bf16.gmra.mrb[0].mxu0 %v2166
  %v2495 = vpop.f32.mrb[0].mxu0
  %v2496 = vadd.f32 0.0, %v2495
  %v2497 = vpop.f32.mrb[0].mxu0
  %v2498 = vpop.f32.mrb[0].mxu0
  %v2499 = vadd.f32 0.0, %v2498
  %v2500 = vpop.f32.mrb[0].mxu0
  %2501 = vmatprep.mubr.bf16.mxu0 0
  %2502 = vmatmul.mubr.bf16.gmra.mrb[0].mxu0 %v2169
  %v2503 = vpop.f32.mrb[0].mxu0
  %v2504 = vadd.f32 0.0, %v2503
  %v2505 = vpop.f32.mrb[0].mxu0
  %v2506 = vpop.f32.mrb[0].mxu0
  %v2507 = vadd.f32 0.0, %v2506
  %v2508 = vpop.f32.mrb[0].mxu0
  %2509 = vmatprep.mubr.bf16.mxu0 0
  %2510 = vmatmul.mubr.bf16.gmra.mrb[0].mxu0 %v2172
  %v2511 = vpop.f32.mrb[0].mxu0
  %v2512 = vadd.f32 0.0, %v2511
  %v2513 = vpop.f32.mrb[0].mxu0
  %v2514 = vpop.f32.mrb[0].mxu0
  %v2515 = vadd.f32 0.0, %v2514
  %v2516 = vpop.f32.mrb[0].mxu0
  %2517 = vmatprep.mubr.bf16.mxu0 0
  %2518 = vmatmul.mubr.bf16.gmra.mrb[0].mxu0 %v2175
  %v2519 = vpop.f32.mrb[0].mxu0
  %v2520 = vadd.f32 0.0, %v2519
  %v2521 = vpop.f32.mrb[0].mxu0
  %v2522 = vpop.f32.mrb[0].mxu0
  %v2523 = vadd.f32 0.0, %v2522
  %v2524 = vpop.f32.mrb[0].mxu0
  %2525 = vmatprep.mubr.bf16.mxu0 0
  %2526 = vmatmul.mubr.bf16.gmra.mrb[0].mxu0 %v2178
  %v2527 = vpop.f32.mrb[0].mxu0
  %v2528 = vadd.f32 0.0, %v2527
  %v2529 = vpop.f32.mrb[0].mxu0
  %v2530 = vpop.f32.mrb[0].mxu0
  %v2531 = vadd.f32 0.0, %v2530
  %v2532 = vpop.f32.mrb[0].mxu0
  %2533 = vmatprep.mubr.bf16.mxu0 0
  %2534 = vmatmul.mubr.bf16.gmra.mrb[0].mxu0 %v2181
  %v2535 = vpop.f32.mrb[0].mxu0
  %v2536 = vadd.f32 0.0, %v2535
  %v2537 = vpop.f32.mrb[0].mxu0
  %v2538 = vpop.f32.mrb[0].mxu0
  %v2539 = vadd.f32 0.0, %v2538
  %v2540 = vpop.f32.mrb[0].mxu0
  %2541 = vmatprep.mubr.bf16.mxu0 0
  %2542 = vmatmul.mubr.bf16.gmra.mrb[0].mxu0 %v2184
  %v2543 = vpop.f32.mrb[0].mxu0
  %v2544 = vadd.f32 0.0, %v2543
  %v2545 = vpop.f32.mrb[0].mxu0
  %v2546 = vpop.f32.mrb[0].mxu0
  %v2547 = vpop.f32.mrb[0].mxu0
  %2548 = vdwg.mxu0
  %v2549 = vadd.f32 %v1858, %v2224
  %v2550 = vadd.f32 %v1859, %v2227
  %v2551 = vadd.f32 %v1860, %v2232
  %v2552 = vadd.f32 %v1861, %v2235
  %v2553 = vadd.f32 %v1862, %v2240
  %v2554 = vadd.f32 %v1863, %v2243
  %v2555 = vadd.f32 %v1864, %v2248
  %v2556 = vadd.f32 %v1865, %v2251
  %v2557 = vadd.f32 %v1866, %v2256
  %v2558 = vadd.f32 %v1867, %v2259
  %v2559 = vadd.f32 %v1868, %v2264
  %v2560 = vadd.f32 %v1869, %v2267
  %v2561 = vadd.f32 %v1870, %v2272
  %v2562 = vadd.f32 %v1871, %v2275
  %v2563 = vadd.f32 %v1872, %v2280
  %v2564 = vadd.f32 %v1873, %v2283
  %v2565 = vadd.f32 %v1874, %v2288
  %v2566 = vadd.f32 %v1875, %v2291
  %v2567 = vadd.f32 %v1876, %v2296
  %v2568 = vadd.f32 %v1877, %v2299
  %v2569 = vadd.f32 %v1878, %v2304
  %v2570 = vadd.f32 %v1879, %v2307
  %v2571 = vadd.f32 %v1880, %v2312
  %v2572 = vadd.f32 %v1881, %v2315
  %v2573 = vadd.f32 %v1882, %v2320
  %v2574 = vadd.f32 %v1883, %v2323
  %v2575 = vadd.f32 %v1884, %v2328
  %v2576 = vadd.f32 %v1885, %v2331
  %v2577 = vadd.f32 %v1886, %v2336
  %v2578 = vadd.f32 %v1887, %v2339
  %v2579 = vadd.f32 %v1888, %v2344
  %v2580 = vadd.f32 %v1889, %v2347
  %v2581 = vadd.f32 %v1890, %v2352
  %v2582 = vadd.f32 %v1891, %v2355
  %v2583 = vadd.f32 %v1892, %v2360
  %v2584 = vadd.f32 %v1893, %v2363
  %v2585 = vadd.f32 %v1894, %v2368
  %v2586 = vadd.f32 %v1895, %v2371
  %v2587 = vadd.f32 %v1896, %v2376
  %v2588 = vadd.f32 %v1897, %v2379
  %v2589 = vadd.f32 %v1898, %v2384
  %v2590 = vadd.f32 %v1899, %v2387
  %v2591 = vadd.f32 %v1900, %v2392
  %v2592 = vadd.f32 %v1901, %v2395
  %v2593 = vadd.f32 %v1902, %v2400
  %v2594 = vadd.f32 %v1903, %v2403
  %v2595 = vadd.f32 %v1904, %v2408
  %v2596 = vadd.f32 %v1905, %v2411
  %v2597 = vadd.f32 %v1906, %v2416
  %v2598 = vadd.f32 %v1907, %v2419
  %v2599 = vadd.f32 %v1908, %v2424
  %v2600 = vadd.f32 %v1909, %v2427
  %v2601 = vadd.f32 %v1910, %v2432
  %v2602 = vadd.f32 %v1911, %v2435
  %v2603 = vadd.f32 %v1912, %v2440
  %v2604 = vadd.f32 %v1913, %v2443
  %v2605 = vadd.f32 %v1914, %v2448
  %v2606 = vadd.f32 %v1915, %v2451
  %v2607 = vadd.f32 %v1916, %v2456
  %v2608 = vadd.f32 %v1917, %v2459
  %v2609 = vadd.f32 %v1918, %v2464
  %v2610 = vadd.f32 %v1919, %v2467
  %v2611 = vadd.f32 %v1920, %v2472
  %v2612 = vadd.f32 %v1921, %v2475
  %v2613 = vadd.f32 %v1922, %v2480
  %v2614 = vadd.f32 %v1923, %v2483
  %v2615 = vadd.f32 %v1924, %v2488
  %v2616 = vadd.f32 %v1925, %v2491
  %v2617 = vadd.f32 %v1926, %v2496
  %v2618 = vadd.f32 %v1927, %v2499
  %v2619 = vadd.f32 %v1928, %v2504
  %v2620 = vadd.f32 %v1929, %v2507
  %v2621 = vadd.f32 %v1930, %v2512
  %v2622 = vadd.f32 %v1931, %v2515
  %v2623 = vadd.f32 %v1932, %v2520
  %v2624 = vadd.f32 %v1933, %v2523
  %v2625 = vadd.f32 %v1934, %v2528
  %v2626 = vadd.f32 %v1935, %v2531
  %v2627 = vadd.f32 %v1936, %v2536
  %v2628 = vadd.f32 %v1937, %v2539
  %v2629 = vadd.f32 %v1938, %v2544
  %v2630 = vld [vmem:[%s0 + $0x13] sm:$0xff]
  %v2631 = vld [vmem:[%s0 + $0x1b] sm:$0xff]
  %v2632 = vld [vmem:[%s0 + $0x23] sm:$0xff]
  %v2633 = vld [vmem:[%s0 + $0x2b] sm:$0xff]
  %v2634 = vld [vmem:[%s0 + $0x33] sm:$0xff]
  %v2635 = vld [vmem:[%s0 + $0x3b] sm:$0xff]
  %v2636 = vld [vmem:[%s0 + $0x43] sm:$0xff]
  %v2637 = vld [vmem:[%s0 + $0x4b] sm:$0xff]
  %v2638 = vld [vmem:[%s0 + $0x53] sm:$0xff]
  %v2639 = vld [vmem:[%s0 + $0x5b] sm:$0xff]
  %v2640 = vld [vmem:[%s0 + $0x63] sm:$0xff]
  %v2641 = vld [vmem:[%s0 + $0x6b] sm:$0xff]
  %v2642 = vld [vmem:[%s0 + $0x73] sm:$0xff]
  %v2643 = vld [vmem:[%s0 + $0x7b] sm:$0xff]
  %v2644 = vld [vmem:[%s0 + $0x83] sm:$0xff]
  %v2645 = vld [vmem:[%s0 + $0x8b] sm:$0xff]
  %v2646 = vld [vmem:[%s0 + $0x93] sm:$0xff]
  %v2647 = vld [vmem:[%s0 + $0x9b] sm:$0xff]
  %v2648 = vld [vmem:[%s0 + $0xa3] sm:$0xff]
  %v2649 = vld [vmem:[%s0 + $0xab] sm:$0xff]
  %v2650 = vld [vmem:[%s0 + $0xb3] sm:$0xff]
  %v2651 = vld [vmem:[%s0 + $0xbb] sm:$0xff]
  %v2652 = vld [vmem:[%s0 + $0xc3] sm:$0xff]
  %v2653 = vld [vmem:[%s0 + $0xcb] sm:$0xff]
  %v2654 = vld [vmem:[%s0 + $0xd3] sm:$0xff]
  %v2655 = vld [vmem:[%s0 + $0xdb] sm:$0xff]
  %v2656 = vld [vmem:[%s0 + $0xe3] sm:$0xff]
  %v2657 = vld [vmem:[%s0 + $0xeb] sm:$0xff]
  %v2658 = vld [vmem:[%s0 + $0xf3] sm:$0xff]
  %v2659 = vld [vmem:[%s0 + $0xfb] sm:$0xff]
  %v2660 = vld [vmem:[%s0 + $0x103] sm:$0xff]
  %v2661 = vld [vmem:[%s0 + $0x10b] sm:$0xff]
  %v2662 = vld [vmem:[%s0 + $0x113] sm:$0xff]
  %v2663 = vld [vmem:[%s0 + $0x11b] sm:$0xff]
  %v2664 = vld [vmem:[%s0 + $0x123] sm:$0xff]
  %v2665 = vld [vmem:[%s0 + $0x12b] sm:$0xff]
  %v2666 = vld [vmem:[%s0 + $0x133] sm:$0xff]
  %v2667 = vld [vmem:[%s0 + $0x13b] sm:$0xff]
  %v2668 = vld [vmem:[%s0 + $0x143] sm:$0xff]
  %v2669 = vld [vmem:[%s0 + $0x14b] sm:$0xff]
  %v2670 = vld [vmem:[%s0 + $0x153] sm:$0xff]
  %v2671 = vld [vmem:[%s0 + $0x15b] sm:$0xff]
  %v2672 = vld [vmem:[%s0 + $0x163] sm:$0xff]
  %v2673 = vld [vmem:[%s0 + $0x16b] sm:$0xff]
  %v2674 = vld [vmem:[%s0 + $0x173] sm:$0xff]
  %v2675 = vld [vmem:[%s0 + $0x17b] sm:$0xff]
  %v2676 = vld [vmem:[%s0 + $0x183] sm:$0xff]
  %v2677 = vld [vmem:[%s0 + $0x18b] sm:$0xff]
  %v2678 = vld [vmem:[%s0 + $0x193] sm:$0xff]
  %v2679 = vld [vmem:[%s0 + $0x19b] sm:$0xff]
  %v2680 = vld [vmem:[%s0 + $0x1a3] sm:$0xff]
  %v2681 = vld [vmem:[%s0 + $0x1ab] sm:$0xff]
  %v2682 = vld [vmem:[%s0 + $0x1b3] sm:$0xff]
  %v2683 = vld [vmem:[%s0 + $0x1bb] sm:$0xff]
  %v2684 = vld [vmem:[%s0 + $0x1c3] sm:$0xff]
  %v2685 = vld [vmem:[%s0 + $0x1cb] sm:$0xff]
  %v2686 = vld [vmem:[%s0 + $0x1d3] sm:$0xff]
  %v2687 = vld [vmem:[%s0 + $0x1db] sm:$0xff]
  %v2688 = vld [vmem:[%s0 + $0x1e3] sm:$0xff]
  %v2689 = vld [vmem:[%s0 + $0x1eb] sm:$0xff]
  %v2690 = vld [vmem:[%s0 + $0x1f3] sm:$0xff]
  %v2691 = vld [vmem:[%s0 + $0x1fb] sm:$0xff]
  %v2692 = vld [vmem:[%s0 + $0x203] sm:$0xff]
  %v2693 = vld [vmem:[%s0 + $0x20b] sm:$0xff]
  %v2694 = vld [vmem:[%s0 + $0x213] sm:$0xff]
  %v2695 = vld [vmem:[%s0 + $0x21b] sm:$0xff]
  %v2696 = vld [vmem:[%s0 + $0x223] sm:$0xff]
  %v2697 = vld [vmem:[%s0 + $0x22b] sm:$0xff]
  %v2698 = vld [vmem:[%s0 + $0x233] sm:$0xff]
  %v2699 = vld [vmem:[%s0 + $0x23b] sm:$0xff]
  %v2700 = vld [vmem:[%s0 + $0x243] sm:$0xff]
  %v2701 = vld [vmem:[%s0 + $0x24b] sm:$0xff]
  %v2702 = vld [vmem:[%s0 + $0x253] sm:$0xff]
  %v2703 = vld [vmem:[%s0 + $0x25b] sm:$0xff]
  %v2704 = vld [vmem:[%s0 + $0x263] sm:$0xff]
  %v2705 = vld [vmem:[%s0 + $0x26b] sm:$0xff]
  %v2706 = vld [vmem:[%s0 + $0x273] sm:$0xff]
  %v2707 = vld [vmem:[%s0 + $0x27b] sm:$0xff]
  %v2708 = vld [vmem:[%s0 + $0x283] sm:$0xff]
  %v2709 = vld [vmem:[%s0 + $0x28b] sm:$0xff]
  %v2710 = vld [vmem:[%s0 + $0x293] sm:$0xff]
  %v2711 = vpack.c.bf16 %v2631, %v2630
  %v2712 = vpack.c.bf16 %v2633, %v2632
  %v2713 = vpack.c.bf16 %v2635, %v2634
  %v2714 = vpack.c.bf16 %v2637, %v2636
  %v2715 = vpack.c.bf16 %v2639, %v2638
  %v2716 = vpack.c.bf16 %v2641, %v2640
  %v2717 = vpack.c.bf16 %v2643, %v2642
  %v2718 = vpack.c.bf16 %v2645, %v2644
  %v2719 = vpack.c.bf16 %v2647, %v2646
  %v2720 = vpack.c.bf16 %v2649, %v2648
  %v2721 = vpack.c.bf16 %v2651, %v2650
  %v2722 = vpack.c.bf16 %v2653, %v2652
  %v2723 = vpack.c.bf16 %v2655, %v2654
  %v2724 = vpack.c.bf16 %v2657, %v2656
  %v2725 = vpack.c.bf16 %v2659, %v2658
  %v2726 = vpack.c.bf16 %v2661, %v2660
  %v2727 = vpack.c.bf16 %v2663, %v2662
  %v2728 = vpack.c.bf16 %v2665, %v2664
  %v2729 = vpack.c.bf16 %v2667, %v2666
  %v2730 = vpack.c.bf16 %v2669, %v2668
  %v2731 = vpack.c.bf16 %v2671, %v2670
  %v2732 = vpack.c.bf16 %v2673, %v2672
  %v2733 = vpack.c.bf16 %v2675, %v2674
  %v2734 = vpack.c.bf16 %v2677, %v2676
  %v2735 = vpack.c.bf16 %v2679, %v2678
  %v2736 = vpack.c.bf16 %v2681, %v2680
  %v2737 = vpack.c.bf16 %v2683, %v2682
  %v2738 = vpack.c.bf16 %v2685, %v2684
  %v2739 = vpack.c.bf16 %v2687, %v2686
  %v2740 = vpack.c.bf16 %v2689, %v2688
  %v2741 = vpack.c.bf16 %v2691, %v2690
  %v2742 = vpack.c.bf16 %v2693, %v2692
  %v2743 = vpack.c.bf16 %v2695, %v2694
  %v2744 = vpack.c.bf16 %v2697, %v2696
  %v2745 = vpack.c.bf16 %v2699, %v2698
  %v2746 = vpack.c.bf16 %v2701, %v2700
  %v2747 = vpack.c.bf16 %v2703, %v2702
  %v2748 = vpack.c.bf16 %v2705, %v2704
  %v2749 = vpack.c.bf16 %v2707, %v2706
  %v2750 = vpack.c.bf16 %v2709, %v2708
  %v2751 = vpack.c.bf16 %v2710, %v2710
  %s2752 = scalar_lea.vmem %s1, 8
  %v2753 = vld [vmem:[%s2752] sm:$0x3]
  %v2755 = vsel %vm274, %v2711, 0
  %v2758 = vsel %vm274, %v2712, 0
  %v2761 = vsel %vm274, %v2713, 0
  %v2764 = vsel %vm274, %v2714, 0
  %v2767 = vsel %vm274, %v2715, 0
  %v2770 = vsel %vm274, %v2716, 0
  %v2773 = vsel %vm274, %v2717, 0
  %v2776 = vsel %vm274, %v2718, 0
  %v2779 = vsel %vm274, %v2719, 0
  %v2782 = vsel %vm274, %v2720, 0
  %v2785 = vsel %vm274, %v2721, 0
  %v2788 = vsel %vm274, %v2722, 0
  %v2791 = vsel %vm274, %v2723, 0
  %v2794 = vsel %vm274, %v2724, 0
  %v2797 = vsel %vm274, %v2725, 0
  %v2800 = vsel %vm274, %v2726, 0
  %v2803 = vsel %vm274, %v2727, 0
  %v2806 = vsel %vm274, %v2728, 0
  %v2809 = vsel %vm274, %v2729, 0
  %v2812 = vsel %vm274, %v2730, 0
  %v2815 = vsel %vm274, %v2731, 0
  %v2818 = vsel %vm274, %v2732, 0
  %v2821 = vsel %vm274, %v2733, 0
  %v2824 = vsel %vm274, %v2734, 0
  %v2827 = vsel %vm274, %v2735, 0
  %v2830 = vsel %vm274, %v2736, 0
  %v2833 = vsel %vm274, %v2737, 0
  %v2836 = vsel %vm274, %v2738, 0
  %v2839 = vsel %vm274, %v2739, 0
  %v2842 = vsel %vm274, %v2740, 0
  %v2845 = vsel %vm274, %v2741, 0
  %v2848 = vsel %vm274, %v2742, 0
  %v2851 = vsel %vm274, %v2743, 0
  %v2854 = vsel %vm274, %v2744, 0
  %v2857 = vsel %vm274, %v2745, 0
  %v2860 = vsel %vm274, %v2746, 0
  %v2863 = vsel %vm274, %v2747, 0
  %v2866 = vsel %vm274, %v2748, 0
  %v2869 = vsel %vm274, %v2749, 0
  %v2872 = vsel %vm274, %v2750, 0
  %v2875 = vsel %vm274, %v2751, 0
  %v2878 = vsel %vm398, %v2753, 0
  %2880 = vmatprep.subr.bf16.mxu0 0
  %2881 = vmatpush1.bf16.msra.mxu0 %v2878
  %2882 = vmatprep.subr.bf16.mxu0 0
  %2883 = vmatpush1.bf16.msra.mxu0 0
  %2884 = vmatprep.subr.bf16.mxu0 0
  %2885 = vmatpush1.bf16.msra.mxu0 0
  %2886 = vmatprep.subr.bf16.mxu0 0
  %2887 = vmatpush1.bf16.msra.mxu0 0
  %2888 = vmatprep.subr.bf16.mxu0 0
  %2889 = vmatpush1.bf16.msra.mxu0 0
  %2890 = vmatprep.subr.bf16.mxu0 0
  %2891 = vmatpush1.bf16.msra.mxu0 0
  %2892 = vmatprep.subr.bf16.mxu0 0
  %2893 = vmatpush1.bf16.msra.mxu0 0
  %2894 = vmatprep.subr.bf16.mxu0 0
  %2895 = vmatpush1.bf16.msra.mxu0 0
  %2896 = vmatprep.subr.bf16.mxu0 0
  %2897 = vmatpush1.bf16.msra.mxu0 0
  %2898 = vmatprep.subr.bf16.mxu0 0
  %2899 = vmatpush1.bf16.msra.mxu0 0
  %2900 = vmatprep.subr.bf16.mxu0 0
  %2901 = vmatpush1.bf16.msra.mxu0 0
  %2902 = vmatprep.subr.bf16.mxu0 0
  %2903 = vmatpush1.bf16.msra.mxu0 0
  %2904 = vmatprep.subr.bf16.mxu0 0
  %2905 = vmatpush1.bf16.msra.mxu0 0
  %2906 = vmatprep.subr.bf16.mxu0 0
  %2907 = vmatpush1.bf16.msra.mxu0 0
  %2908 = vmatprep.subr.bf16.mxu0 0
  %2909 = vmatpush1.bf16.msra.mxu0 0
  %2910 = vmatprep.subr.bf16.mxu0 0
  %2911 = vmatpush1.bf16.msra.mxu0 0
  %2912 = vmatprep.mubr.bf16.mxu0 0
  %2913 = vmatmul.mubr.bf16.gmra.mrb[0].mxu0 %v2755
  %v2914 = vpop.f32.mrb[0].mxu0
  %v2915 = vadd.f32 0.0, %v2914
  %v2916 = vpop.f32.mrb[0].mxu0
  %v2917 = vpop.f32.mrb[0].mxu0
  %v2918 = vadd.f32 0.0, %v2917
  %v2919 = vpop.f32.mrb[0].mxu0
  %2920 = vmatprep.mubr.bf16.mxu0 0
  %2921 = vmatmul.mubr.bf16.gmra.mrb[0].mxu0 %v2758
  %v2922 = vpop.f32.mrb[0].mxu0
  %v2923 = vadd.f32 0.0, %v2922
  %v2924 = vpop.f32.mrb[0].mxu0
  %v2925 = vpop.f32.mrb[0].mxu0
  %v2926 = vadd.f32 0.0, %v2925
  %v2927 = vpop.f32.mrb[0].mxu0
  %2928 = vmatprep.mubr.bf16.mxu0 0
  %2929 = vmatmul.mubr.bf16.gmra.mrb[0].mxu0 %v2761
  %v2930 = vpop.f32.mrb[0].mxu0
  %v2931 = vadd.f32 0.0, %v2930
  %v2932 = vpop.f32.mrb[0].mxu0
  %v2933 = vpop.f32.mrb[0].mxu0
  %v2934 = vadd.f32 0.0, %v2933
  %v2935 = vpop.f32.mrb[0].mxu0
  %2936 = vmatprep.mubr.bf16.mxu0 0
  %2937 = vmatmul.mubr.bf16.gmra.mrb[0].mxu0 %v2764
  %v2938 = vpop.f32.mrb[0].mxu0
  %v2939 = vadd.f32 0.0, %v2938
  %v2940 = vpop.f32.mrb[0].mxu0
  %v2941 = vpop.f32.mrb[0].mxu0
  %v2942 = vadd.f32 0.0, %v2941
  %v2943 = vpop.f32.mrb[0].mxu0
  %2944 = vmatprep.mubr.bf16.mxu0 0
  %2945 = vmatmul.mubr.bf16.gmra.mrb[0].mxu0 %v2767
  %v2946 = vpop.f32.mrb[0].mxu0
  %v2947 = vadd.f32 0.0, %v2946
  %v2948 = vpop.f32.mrb[0].mxu0
  %v2949 = vpop.f32.mrb[0].mxu0
  %v2950 = vadd.f32 0.0, %v2949
  %v2951 = vpop.f32.mrb[0].mxu0
  %2952 = vmatprep.mubr.bf16.mxu0 0
  %2953 = vmatmul.mubr.bf16.gmra.mrb[0].mxu0 %v2770
  %v2954 = vpop.f32.mrb[0].mxu0
  %v2955 = vadd.f32 0.0, %v2954
  %v2956 = vpop.f32.mrb[0].mxu0
  %v2957 = vpop.f32.mrb[0].mxu0
  %v2958 = vadd.f32 0.0, %v2957
  %v2959 = vpop.f32.mrb[0].mxu0
  %2960 = vmatprep.mubr.bf16.mxu0 0
  %2961 = vmatmul.mubr.bf16.gmra.mrb[0].mxu0 %v2773
  %v2962 = vpop.f32.mrb[0].mxu0
  %v2963 = vadd.f32 0.0, %v2962
  %v2964 = vpop.f32.mrb[0].mxu0
  %v2965 = vpop.f32.mrb[0].mxu0
  %v2966 = vadd.f32 0.0, %v2965
  %v2967 = vpop.f32.mrb[0].mxu0
  %2968 = vmatprep.mubr.bf16.mxu0 0
  %2969 = vmatmul.mubr.bf16.gmra.mrb[0].mxu0 %v2776
  %v2970 = vpop.f32.mrb[0].mxu0
  %v2971 = vadd.f32 0.0, %v2970
  %v2972 = vpop.f32.mrb[0].mxu0
  %v2973 = vpop.f32.mrb[0].mxu0
  %v2974 = vadd.f32 0.0, %v2973
  %v2975 = vpop.f32.mrb[0].mxu0
  %2976 = vmatprep.mubr.bf16.mxu0 0
  %2977 = vmatmul.mubr.bf16.gmra.mrb[0].mxu0 %v2779
  %v2978 = vpop.f32.mrb[0].mxu0
  %v2979 = vadd.f32 0.0, %v2978
  %v2980 = vpop.f32.mrb[0].mxu0
  %v2981 = vpop.f32.mrb[0].mxu0
  %v2982 = vadd.f32 0.0, %v2981
  %v2983 = vpop.f32.mrb[0].mxu0
  %2984 = vmatprep.mubr.bf16.mxu0 0
  %2985 = vmatmul.mubr.bf16.gmra.mrb[0].mxu0 %v2782
  %v2986 = vpop.f32.mrb[0].mxu0
  %v2987 = vadd.f32 0.0, %v2986
  %v2988 = vpop.f32.mrb[0].mxu0
  %v2989 = vpop.f32.mrb[0].mxu0
  %v2990 = vadd.f32 0.0, %v2989
  %v2991 = vpop.f32.mrb[0].mxu0
  %2992 = vmatprep.mubr.bf16.mxu0 0
  %2993 = vmatmul.mubr.bf16.gmra.mrb[0].mxu0 %v2785
  %v2994 = vpop.f32.mrb[0].mxu0
  %v2995 = vadd.f32 0.0, %v2994
  %v2996 = vpop.f32.mrb[0].mxu0
  %v2997 = vpop.f32.mrb[0].mxu0
  %v2998 = vadd.f32 0.0, %v2997
  %v2999 = vpop.f32.mrb[0].mxu0
  %3000 = vmatprep.mubr.bf16.mxu0 0
  %3001 = vmatmul.mubr.bf16.gmra.mrb[0].mxu0 %v2788
  %v3002 = vpop.f32.mrb[0].mxu0
  %v3003 = vadd.f32 0.0, %v3002
  %v3004 = vpop.f32.mrb[0].mxu0
  %v3005 = vpop.f32.mrb[0].mxu0
  %v3006 = vadd.f32 0.0, %v3005
  %v3007 = vpop.f32.mrb[0].mxu0
  %3008 = vmatprep.mubr.bf16.mxu0 0
  %3009 = vmatmul.mubr.bf16.gmra.mrb[0].mxu0 %v2791
  %v3010 = vpop.f32.mrb[0].mxu0
  %v3011 = vadd.f32 0.0, %v3010
  %v3012 = vpop.f32.mrb[0].mxu0
  %v3013 = vpop.f32.mrb[0].mxu0
  %v3014 = vadd.f32 0.0, %v3013
  %v3015 = vpop.f32.mrb[0].mxu0
  %3016 = vmatprep.mubr.bf16.mxu0 0
  %3017 = vmatmul.mubr.bf16.gmra.mrb[0].mxu0 %v2794
  %v3018 = vpop.f32.mrb[0].mxu0
  %v3019 = vadd.f32 0.0, %v3018
  %v3020 = vpop.f32.mrb[0].mxu0
  %v3021 = vpop.f32.mrb[0].mxu0
  %v3022 = vadd.f32 0.0, %v3021
  %v3023 = vpop.f32.mrb[0].mxu0
  %3024 = vmatprep.mubr.bf16.mxu0 0
  %3025 = vmatmul.mubr.bf16.gmra.mrb[0].mxu0 %v2797
  %v3026 = vpop.f32.mrb[0].mxu0
  %v3027 = vadd.f32 0.0, %v3026
  %v3028 = vpop.f32.mrb[0].mxu0
  %v3029 = vpop.f32.mrb[0].mxu0
  %v3030 = vadd.f32 0.0, %v3029
  %v3031 = vpop.f32.mrb[0].mxu0
  %3032 = vmatprep.mubr.bf16.mxu0 0
  %3033 = vmatmul.mubr.bf16.gmra.mrb[0].mxu0 %v2800
  %v3034 = vpop.f32.mrb[0].mxu0
  %v3035 = vadd.f32 0.0, %v3034
  %v3036 = vpop.f32.mrb[0].mxu0
  %v3037 = vpop.f32.mrb[0].mxu0
  %v3038 = vadd.f32 0.0, %v3037
  %v3039 = vpop.f32.mrb[0].mxu0
  %3040 = vmatprep.mubr.bf16.mxu0 0
  %3041 = vmatmul.mubr.bf16.gmra.mrb[0].mxu0 %v2803
  %v3042 = vpop.f32.mrb[0].mxu0
  %v3043 = vadd.f32 0.0, %v3042
  %v3044 = vpop.f32.mrb[0].mxu0
  %v3045 = vpop.f32.mrb[0].mxu0
  %v3046 = vadd.f32 0.0, %v3045
  %v3047 = vpop.f32.mrb[0].mxu0
  %3048 = vmatprep.mubr.bf16.mxu0 0
  %3049 = vmatmul.mubr.bf16.gmra.mrb[0].mxu0 %v2806
  %v3050 = vpop.f32.mrb[0].mxu0
  %v3051 = vadd.f32 0.0, %v3050
  %v3052 = vpop.f32.mrb[0].mxu0
  %v3053 = vpop.f32.mrb[0].mxu0
  %v3054 = vadd.f32 0.0, %v3053
  %v3055 = vpop.f32.mrb[0].mxu0
  %3056 = vmatprep.mubr.bf16.mxu0 0
  %3057 = vmatmul.mubr.bf16.gmra.mrb[0].mxu0 %v2809
  %v3058 = vpop.f32.mrb[0].mxu0
  %v3059 = vadd.f32 0.0, %v3058
  %v3060 = vpop.f32.mrb[0].mxu0
  %v3061 = vpop.f32.mrb[0].mxu0
  %v3062 = vadd.f32 0.0, %v3061
  %v3063 = vpop.f32.mrb[0].mxu0
  %3064 = vmatprep.mubr.bf16.mxu0 0
  %3065 = vmatmul.mubr.bf16.gmra.mrb[0].mxu0 %v2812
  %v3066 = vpop.f32.mrb[0].mxu0
  %v3067 = vadd.f32 0.0, %v3066
  %v3068 = vpop.f32.mrb[0].mxu0
  %v3069 = vpop.f32.mrb[0].mxu0
  %v3070 = vadd.f32 0.0, %v3069
  %v3071 = vpop.f32.mrb[0].mxu0
  %3072 = vmatprep.mubr.bf16.mxu0 0
  %3073 = vmatmul.mubr.bf16.gmra.mrb[0].mxu0 %v2815
  %v3074 = vpop.f32.mrb[0].mxu0
  %v3075 = vadd.f32 0.0, %v3074
  %v3076 = vpop.f32.mrb[0].mxu0
  %v3077 = vpop.f32.mrb[0].mxu0
  %v3078 = vadd.f32 0.0, %v3077
  %v3079 = vpop.f32.mrb[0].mxu0
  %3080 = vmatprep.mubr.bf16.mxu0 0
  %3081 = vmatmul.mubr.bf16.gmra.mrb[0].mxu0 %v2818
  %v3082 = vpop.f32.mrb[0].mxu0
  %v3083 = vadd.f32 0.0, %v3082
  %v3084 = vpop.f32.mrb[0].mxu0
  %v3085 = vpop.f32.mrb[0].mxu0
  %v3086 = vadd.f32 0.0, %v3085
  %v3087 = vpop.f32.mrb[0].mxu0
  %3088 = vmatprep.mubr.bf16.mxu0 0
  %3089 = vmatmul.mubr.bf16.gmra.mrb[0].mxu0 %v2821
  %v3090 = vpop.f32.mrb[0].mxu0
  %v3091 = vadd.f32 0.0, %v3090
  %v3092 = vpop.f32.mrb[0].mxu0
  %v3093 = vpop.f32.mrb[0].mxu0
  %v3094 = vadd.f32 0.0, %v3093
  %v3095 = vpop.f32.mrb[0].mxu0
  %3096 = vmatprep.mubr.bf16.mxu0 0
  %3097 = vmatmul.mubr.bf16.gmra.mrb[0].mxu0 %v2824
  %v3098 = vpop.f32.mrb[0].mxu0
  %v3099 = vadd.f32 0.0, %v3098
  %v3100 = vpop.f32.mrb[0].mxu0
  %v3101 = vpop.f32.mrb[0].mxu0
  %v3102 = vadd.f32 0.0, %v3101
  %v3103 = vpop.f32.mrb[0].mxu0
  %3104 = vmatprep.mubr.bf16.mxu0 0
  %3105 = vmatmul.mubr.bf16.gmra.mrb[0].mxu0 %v2827
  %v3106 = vpop.f32.mrb[0].mxu0
  %v3107 = vadd.f32 0.0, %v3106
  %v3108 = vpop.f32.mrb[0].mxu0
  %v3109 = vpop.f32.mrb[0].mxu0
  %v3110 = vadd.f32 0.0, %v3109
  %v3111 = vpop.f32.mrb[0].mxu0
  %3112 = vmatprep.mubr.bf16.mxu0 0
  %3113 = vmatmul.mubr.bf16.gmra.mrb[0].mxu0 %v2830
  %v3114 = vpop.f32.mrb[0].mxu0
  %v3115 = vadd.f32 0.0, %v3114
  %v3116 = vpop.f32.mrb[0].mxu0
  %v3117 = vpop.f32.mrb[0].mxu0
  %v3118 = vadd.f32 0.0, %v3117
  %v3119 = vpop.f32.mrb[0].mxu0
  %3120 = vmatprep.mubr.bf16.mxu0 0
  %3121 = vmatmul.mubr.bf16.gmra.mrb[0].mxu0 %v2833
  %v3122 = vpop.f32.mrb[0].mxu0
  %v3123 = vadd.f32 0.0, %v3122
  %v3124 = vpop.f32.mrb[0].mxu0
  %v3125 = vpop.f32.mrb[0].mxu0
  %v3126 = vadd.f32 0.0, %v3125
  %v3127 = vpop.f32.mrb[0].mxu0
  %3128 = vmatprep.mubr.bf16.mxu0 0
  %3129 = vmatmul.mubr.bf16.gmra.mrb[0].mxu0 %v2836
  %v3130 = vpop.f32.mrb[0].mxu0
  %v3131 = vadd.f32 0.0, %v3130
  %v3132 = vpop.f32.mrb[0].mxu0
  %v3133 = vpop.f32.mrb[0].mxu0
  %v3134 = vadd.f32 0.0, %v3133
  %v3135 = vpop.f32.mrb[0].mxu0
  %3136 = vmatprep.mubr.bf16.mxu0 0
  %3137 = vmatmul.mubr.bf16.gmra.mrb[0].mxu0 %v2839
  %v3138 = vpop.f32.mrb[0].mxu0
  %v3139 = vadd.f32 0.0, %v3138
  %v3140 = vpop.f32.mrb[0].mxu0
  %v3141 = vpop.f32.mrb[0].mxu0
  %v3142 = vadd.f32 0.0, %v3141
  %v3143 = vpop.f32.mrb[0].mxu0
  %3144 = vmatprep.mubr.bf16.mxu0 0
  %3145 = vmatmul.mubr.bf16.gmra.mrb[0].mxu0 %v2842
  %v3146 = vpop.f32.mrb[0].mxu0
  %v3147 = vadd.f32 0.0, %v3146
  %v3148 = vpop.f32.mrb[0].mxu0
  %v3149 = vpop.f32.mrb[0].mxu0
  %v3150 = vadd.f32 0.0, %v3149
  %v3151 = vpop.f32.mrb[0].mxu0
  %3152 = vmatprep.mubr.bf16.mxu0 0
  %3153 = vmatmul.mubr.bf16.gmra.mrb[0].mxu0 %v2845
  %v3154 = vpop.f32.mrb[0].mxu0
  %v3155 = vadd.f32 0.0, %v3154
  %v3156 = vpop.f32.mrb[0].mxu0
  %v3157 = vpop.f32.mrb[0].mxu0
  %v3158 = vadd.f32 0.0, %v3157
  %v3159 = vpop.f32.mrb[0].mxu0
  %3160 = vmatprep.mubr.bf16.mxu0 0
  %3161 = vmatmul.mubr.bf16.gmra.mrb[0].mxu0 %v2848
  %v3162 = vpop.f32.mrb[0].mxu0
  %v3163 = vadd.f32 0.0, %v3162
  %v3164 = vpop.f32.mrb[0].mxu0
  %v3165 = vpop.f32.mrb[0].mxu0
  %v3166 = vadd.f32 0.0, %v3165
  %v3167 = vpop.f32.mrb[0].mxu0
  %3168 = vmatprep.mubr.bf16.mxu0 0
  %3169 = vmatmul.mubr.bf16.gmra.mrb[0].mxu0 %v2851
  %v3170 = vpop.f32.mrb[0].mxu0
  %v3171 = vadd.f32 0.0, %v3170
  %v3172 = vpop.f32.mrb[0].mxu0
  %v3173 = vpop.f32.mrb[0].mxu0
  %v3174 = vadd.f32 0.0, %v3173
  %v3175 = vpop.f32.mrb[0].mxu0
  %3176 = vmatprep.mubr.bf16.mxu0 0
  %3177 = vmatmul.mubr.bf16.gmra.mrb[0].mxu0 %v2854
  %v3178 = vpop.f32.mrb[0].mxu0
  %v3179 = vadd.f32 0.0, %v3178
  %v3180 = vpop.f32.mrb[0].mxu0
  %v3181 = vpop.f32.mrb[0].mxu0
  %v3182 = vadd.f32 0.0, %v3181
  %v3183 = vpop.f32.mrb[0].mxu0
  %3184 = vmatprep.mubr.bf16.mxu0 0
  %3185 = vmatmul.mubr.bf16.gmra.mrb[0].mxu0 %v2857
  %v3186 = vpop.f32.mrb[0].mxu0
  %v3187 = vadd.f32 0.0, %v3186
  %v3188 = vpop.f32.mrb[0].mxu0
  %v3189 = vpop.f32.mrb[0].mxu0
  %v3190 = vadd.f32 0.0, %v3189
  %v3191 = vpop.f32.mrb[0].mxu0
  %3192 = vmatprep.mubr.bf16.mxu0 0
  %3193 = vmatmul.mubr.bf16.gmra.mrb[0].mxu0 %v2860
  %v3194 = vpop.f32.mrb[0].mxu0
  %v3195 = vadd.f32 0.0, %v3194
  %v3196 = vpop.f32.mrb[0].mxu0
  %v3197 = vpop.f32.mrb[0].mxu0
  %v3198 = vadd.f32 0.0, %v3197
  %v3199 = vpop.f32.mrb[0].mxu0
  %3200 = vmatprep.mubr.bf16.mxu0 0
  %3201 = vmatmul.mubr.bf16.gmra.mrb[0].mxu0 %v2863
  %v3202 = vpop.f32.mrb[0].mxu0
  %v3203 = vadd.f32 0.0, %v3202
  %v3204 = vpop.f32.mrb[0].mxu0
  %v3205 = vpop.f32.mrb[0].mxu0
  %v3206 = vadd.f32 0.0, %v3205
  %v3207 = vpop.f32.mrb[0].mxu0
  %3208 = vmatprep.mubr.bf16.mxu0 0
  %3209 = vmatmul.mubr.bf16.gmra.mrb[0].mxu0 %v2866
  %v3210 = vpop.f32.mrb[0].mxu0
  %v3211 = vadd.f32 0.0, %v3210
  %v3212 = vpop.f32.mrb[0].mxu0
  %v3213 = vpop.f32.mrb[0].mxu0
  %v3214 = vadd.f32 0.0, %v3213
  %v3215 = vpop.f32.mrb[0].mxu0
  %3216 = vmatprep.mubr.bf16.mxu0 0
  %3217 = vmatmul.mubr.bf16.gmra.mrb[0].mxu0 %v2869
  %v3218 = vpop.f32.mrb[0].mxu0
  %v3219 = vadd.f32 0.0, %v3218
  %v3220 = vpop.f32.mrb[0].mxu0
  %v3221 = vpop.f32.mrb[0].mxu0
  %v3222 = vadd.f32 0.0, %v3221
  %v3223 = vpop.f32.mrb[0].mxu0
  %3224 = vmatprep.mubr.bf16.mxu0 0
  %3225 = vmatmul.mubr.bf16.gmra.mrb[0].mxu0 %v2872
  %v3226 = vpop.f32.mrb[0].mxu0
  %v3227 = vadd.f32 0.0, %v3226
  %v3228 = vpop.f32.mrb[0].mxu0
  %v3229 = vpop.f32.mrb[0].mxu0
  %v3230 = vadd.f32 0.0, %v3229
  %v3231 = vpop.f32.mrb[0].mxu0
  %3232 = vmatprep.mubr.bf16.mxu0 0
  %3233 = vmatmul.mubr.bf16.gmra.mrb[0].mxu0 %v2875
  %v3234 = vpop.f32.mrb[0].mxu0
  %v3235 = vadd.f32 0.0, %v3234
  %v3236 = vpop.f32.mrb[0].mxu0
  %v3237 = vpop.f32.mrb[0].mxu0
  %v3238 = vpop.f32.mrb[0].mxu0
  %3239 = vdwg.mxu0
  %v3240 = vadd.f32 %v2549, %v2915
  %v3241 = vadd.f32 %v2550, %v2918
  %v3242 = vadd.f32 %v2551, %v2923
  %v3243 = vadd.f32 %v2552, %v2926
  %v3244 = vadd.f32 %v2553, %v2931
  %v3245 = vadd.f32 %v2554, %v2934
  %v3246 = vadd.f32 %v2555, %v2939
  %v3247 = vadd.f32 %v2556, %v2942
  %v3248 = vadd.f32 %v2557, %v2947
  %v3249 = vadd.f32 %v2558, %v2950
  %v3250 = vadd.f32 %v2559, %v2955
  %v3251 = vadd.f32 %v2560, %v2958
  %v3252 = vadd.f32 %v2561, %v2963
  %v3253 = vadd.f32 %v2562, %v2966
  %v3254 = vadd.f32 %v2563, %v2971
  %v3255 = vadd.f32 %v2564, %v2974
  %v3256 = vadd.f32 %v2565, %v2979
  %v3257 = vadd.f32 %v2566, %v2982
  %v3258 = vadd.f32 %v2567, %v2987
  %v3259 = vadd.f32 %v2568, %v2990
  %v3260 = vadd.f32 %v2569, %v2995
  %v3261 = vadd.f32 %v2570, %v2998
  %v3262 = vadd.f32 %v2571, %v3003
  %v3263 = vadd.f32 %v2572, %v3006
  %v3264 = vadd.f32 %v2573, %v3011
  %v3265 = vadd.f32 %v2574, %v3014
  %v3266 = vadd.f32 %v2575, %v3019
  %v3267 = vadd.f32 %v2576, %v3022
  %v3268 = vadd.f32 %v2577, %v3027
  %v3269 = vadd.f32 %v2578, %v3030
  %v3270 = vadd.f32 %v2579, %v3035
  %v3271 = vadd.f32 %v2580, %v3038
  %v3272 = vadd.f32 %v2581, %v3043
  %v3273 = vadd.f32 %v2582, %v3046
  %v3274 = vadd.f32 %v2583, %v3051
  %v3275 = vadd.f32 %v2584, %v3054
  %v3276 = vadd.f32 %v2585, %v3059
  %v3277 = vadd.f32 %v2586, %v3062
  %v3278 = vadd.f32 %v2587, %v3067
  %v3279 = vadd.f32 %v2588, %v3070
  %v3280 = vadd.f32 %v2589, %v3075
  %v3281 = vadd.f32 %v2590, %v3078
  %v3282 = vadd.f32 %v2591, %v3083
  %v3283 = vadd.f32 %v2592, %v3086
  %v3284 = vadd.f32 %v2593, %v3091
  %v3285 = vadd.f32 %v2594, %v3094
  %v3286 = vadd.f32 %v2595, %v3099
  %v3287 = vadd.f32 %v2596, %v3102
  %v3288 = vadd.f32 %v2597, %v3107
  %v3289 = vadd.f32 %v2598, %v3110
  %v3290 = vadd.f32 %v2599, %v3115
  %v3291 = vadd.f32 %v2600, %v3118
  %v3292 = vadd.f32 %v2601, %v3123
  %v3293 = vadd.f32 %v2602, %v3126
  %v3294 = vadd.f32 %v2603, %v3131
  %v3295 = vadd.f32 %v2604, %v3134
  %v3296 = vadd.f32 %v2605, %v3139
  %v3297 = vadd.f32 %v2606, %v3142
  %v3298 = vadd.f32 %v2607, %v3147
  %v3299 = vadd.f32 %v2608, %v3150
  %v3300 = vadd.f32 %v2609, %v3155
  %v3301 = vadd.f32 %v2610, %v3158
  %v3302 = vadd.f32 %v2611, %v3163
  %v3303 = vadd.f32 %v2612, %v3166
  %v3304 = vadd.f32 %v2613, %v3171
  %v3305 = vadd.f32 %v2614, %v3174
  %v3306 = vadd.f32 %v2615, %v3179
  %v3307 = vadd.f32 %v2616, %v3182
  %v3308 = vadd.f32 %v2617, %v3187
  %v3309 = vadd.f32 %v2618, %v3190
  %v3310 = vadd.f32 %v2619, %v3195
  %v3311 = vadd.f32 %v2620, %v3198
  %v3312 = vadd.f32 %v2621, %v3203
  %v3313 = vadd.f32 %v2622, %v3206
  %v3314 = vadd.f32 %v2623, %v3211
  %v3315 = vadd.f32 %v2624, %v3214
  %v3316 = vadd.f32 %v2625, %v3219
  %v3317 = vadd.f32 %v2626, %v3222
  %v3318 = vadd.f32 %v2627, %v3227
  %v3319 = vadd.f32 %v2628, %v3230
  %v3320 = vadd.f32 %v2629, %v3235
  %v3321 = vld [vmem:[%s0 + $0x14] sm:$0xff]
  %v3322 = vld [vmem:[%s0 + $0x1c] sm:$0xff]
  %v3323 = vld [vmem:[%s0 + $0x24] sm:$0xff]
  %v3324 = vld [vmem:[%s0 + $0x2c] sm:$0xff]
  %v3325 = vld [vmem:[%s0 + $0x34] sm:$0xff]
  %v3326 = vld [vmem:[%s0 + $0x3c] sm:$0xff]
  %v3327 = vld [vmem:[%s0 + $0x44] sm:$0xff]
  %v3328 = vld [vmem:[%s0 + $0x4c] sm:$0xff]
  %v3329 = vld [vmem:[%s0 + $0x54] sm:$0xff]
  %v3330 = vld [vmem:[%s0 + $0x5c] sm:$0xff]
  %v3331 = vld [vmem:[%s0 + $0x64] sm:$0xff]
  %v3332 = vld [vmem:[%s0 + $0x6c] sm:$0xff]
  %v3333 = vld [vmem:[%s0 + $0x74] sm:$0xff]
  %v3334 = vld [vmem:[%s0 + $0x7c] sm:$0xff]
  %v3335 = vld [vmem:[%s0 + $0x84] sm:$0xff]
  %v3336 = vld [vmem:[%s0 + $0x8c] sm:$0xff]
  %v3337 = vld [vmem:[%s0 + $0x94] sm:$0xff]
  %v3338 = vld [vmem:[%s0 + $0x9c] sm:$0xff]
  %v3339 = vld [vmem:[%s0 + $0xa4] sm:$0xff]
  %v3340 = vld [vmem:[%s0 + $0xac] sm:$0xff]
  %v3341 = vld [vmem:[%s0 + $0xb4] sm:$0xff]
  %v3342 = vld [vmem:[%s0 + $0xbc] sm:$0xff]
  %v3343 = vld [vmem:[%s0 + $0xc4] sm:$0xff]
  %v3344 = vld [vmem:[%s0 + $0xcc] sm:$0xff]
  %v3345 = vld [vmem:[%s0 + $0xd4] sm:$0xff]
  %v3346 = vld [vmem:[%s0 + $0xdc] sm:$0xff]
  %v3347 = vld [vmem:[%s0 + $0xe4] sm:$0xff]
  %v3348 = vld [vmem:[%s0 + $0xec] sm:$0xff]
  %v3349 = vld [vmem:[%s0 + $0xf4] sm:$0xff]
  %v3350 = vld [vmem:[%s0 + $0xfc] sm:$0xff]
  %v3351 = vld [vmem:[%s0 + $0x104] sm:$0xff]
  %v3352 = vld [vmem:[%s0 + $0x10c] sm:$0xff]
  %v3353 = vld [vmem:[%s0 + $0x114] sm:$0xff]
  %v3354 = vld [vmem:[%s0 + $0x11c] sm:$0xff]
  %v3355 = vld [vmem:[%s0 + $0x124] sm:$0xff]
  %v3356 = vld [vmem:[%s0 + $0x12c] sm:$0xff]
  %v3357 = vld [vmem:[%s0 + $0x134] sm:$0xff]
  %v3358 = vld [vmem:[%s0 + $0x13c] sm:$0xff]
  %v3359 = vld [vmem:[%s0 + $0x144] sm:$0xff]
  %v3360 = vld [vmem:[%s0 + $0x14c] sm:$0xff]
  %v3361 = vld [vmem:[%s0 + $0x154] sm:$0xff]
  %v3362 = vld [vmem:[%s0 + $0x15c] sm:$0xff]
  %v3363 = vld [vmem:[%s0 + $0x164] sm:$0xff]
  %v3364 = vld [vmem:[%s0 + $0x16c] sm:$0xff]
  %v3365 = vld [vmem:[%s0 + $0x174] sm:$0xff]
  %v3366 = vld [vmem:[%s0 + $0x17c] sm:$0xff]
  %v3367 = vld [vmem:[%s0 + $0x184] sm:$0xff]
  %v3368 = vld [vmem:[%s0 + $0x18c] sm:$0xff]
  %v3369 = vld [vmem:[%s0 + $0x194] sm:$0xff]
  %v3370 = vld [vmem:[%s0 + $0x19c] sm:$0xff]
  %v3371 = vld [vmem:[%s0 + $0x1a4] sm:$0xff]
  %v3372 = vld [vmem:[%s0 + $0x1ac] sm:$0xff]
  %v3373 = vld [vmem:[%s0 + $0x1b4] sm:$0xff]
  %v3374 = vld [vmem:[%s0 + $0x1bc] sm:$0xff]
  %v3375 = vld [vmem:[%s0 + $0x1c4] sm:$0xff]
  %v3376 = vld [vmem:[%s0 + $0x1cc] sm:$0xff]
  %v3377 = vld [vmem:[%s0 + $0x1d4] sm:$0xff]
  %v3378 = vld [vmem:[%s0 + $0x1dc] sm:$0xff]
  %v3379 = vld [vmem:[%s0 + $0x1e4] sm:$0xff]
  %v3380 = vld [vmem:[%s0 + $0x1ec] sm:$0xff]
  %v3381 = vld [vmem:[%s0 + $0x1f4] sm:$0xff]
  %v3382 = vld [vmem:[%s0 + $0x1fc] sm:$0xff]
  %v3383 = vld [vmem:[%s0 + $0x204] sm:$0xff]
  %v3384 = vld [vmem:[%s0 + $0x20c] sm:$0xff]
  %v3385 = vld [vmem:[%s0 + $0x214] sm:$0xff]
  %v3386 = vld [vmem:[%s0 + $0x21c] sm:$0xff]
  %v3387 = vld [vmem:[%s0 + $0x224] sm:$0xff]
  %v3388 = vld [vmem:[%s0 + $0x22c] sm:$0xff]
  %v3389 = vld [vmem:[%s0 + $0x234] sm:$0xff]
  %v3390 = vld [vmem:[%s0 + $0x23c] sm:$0xff]
  %v3391 = vld [vmem:[%s0 + $0x244] sm:$0xff]
  %v3392 = vld [vmem:[%s0 + $0x24c] sm:$0xff]
  %v3393 = vld [vmem:[%s0 + $0x254] sm:$0xff]
  %v3394 = vld [vmem:[%s0 + $0x25c] sm:$0xff]
  %v3395 = vld [vmem:[%s0 + $0x264] sm:$0xff]
  %v3396 = vld [vmem:[%s0 + $0x26c] sm:$0xff]
  %v3397 = vld [vmem:[%s0 + $0x274] sm:$0xff]
  %v3398 = vld [vmem:[%s0 + $0x27c] sm:$0xff]
  %v3399 = vld [vmem:[%s0 + $0x284] sm:$0xff]
  %v3400 = vld [vmem:[%s0 + $0x28c] sm:$0xff]
  %v3401 = vld [vmem:[%s0 + $0x294] sm:$0xff]
  %v3402 = vpack.c.bf16 %v3322, %v3321
  %v3403 = vpack.c.bf16 %v3324, %v3323
  %v3404 = vpack.c.bf16 %v3326, %v3325
  %v3405 = vpack.c.bf16 %v3328, %v3327
  %v3406 = vpack.c.bf16 %v3330, %v3329
  %v3407 = vpack.c.bf16 %v3332, %v3331
  %v3408 = vpack.c.bf16 %v3334, %v3333
  %v3409 = vpack.c.bf16 %v3336, %v3335
  %v3410 = vpack.c.bf16 %v3338, %v3337
  %v3411 = vpack.c.bf16 %v3340, %v3339
  %v3412 = vpack.c.bf16 %v3342, %v3341
  %v3413 = vpack.c.bf16 %v3344, %v3343
  %v3414 = vpack.c.bf16 %v3346, %v3345
  %v3415 = vpack.c.bf16 %v3348, %v3347
  %v3416 = vpack.c.bf16 %v3350, %v3349
  %v3417 = vpack.c.bf16 %v3352, %v3351
  %v3418 = vpack.c.bf16 %v3354, %v3353
  %v3419 = vpack.c.bf16 %v3356, %v3355
  %v3420 = vpack.c.bf16 %v3358, %v3357
  %v3421 = vpack.c.bf16 %v3360, %v3359
  %v3422 = vpack.c.bf16 %v3362, %v3361
  %v3423 = vpack.c.bf16 %v3364, %v3363
  %v3424 = vpack.c.bf16 %v3366, %v3365
  %v3425 = vpack.c.bf16 %v3368, %v3367
  %v3426 = vpack.c.bf16 %v3370, %v3369
  %v3427 = vpack.c.bf16 %v3372, %v3371
  %v3428 = vpack.c.bf16 %v3374, %v3373
  %v3429 = vpack.c.bf16 %v3376, %v3375
  %v3430 = vpack.c.bf16 %v3378, %v3377
  %v3431 = vpack.c.bf16 %v3380, %v3379
  %v3432 = vpack.c.bf16 %v3382, %v3381
  %v3433 = vpack.c.bf16 %v3384, %v3383
  %v3434 = vpack.c.bf16 %v3386, %v3385
  %v3435 = vpack.c.bf16 %v3388, %v3387
  %v3436 = vpack.c.bf16 %v3390, %v3389
  %v3437 = vpack.c.bf16 %v3392, %v3391
  %v3438 = vpack.c.bf16 %v3394, %v3393
  %v3439 = vpack.c.bf16 %v3396, %v3395
  %v3440 = vpack.c.bf16 %v3398, %v3397
  %v3441 = vpack.c.bf16 %v3400, %v3399
  %v3442 = vpack.c.bf16 %v3401, %v3401
  %s3443 = scalar_lea.vmem %s1, 10
  %v3444 = vld [vmem:[%s3443] sm:$0x3]
  %v3446 = vsel %vm274, %v3402, 0
  %v3449 = vsel %vm274, %v3403, 0
  %v3452 = vsel %vm274, %v3404, 0
  %v3455 = vsel %vm274, %v3405, 0
  %v3458 = vsel %vm274, %v3406, 0
  %v3461 = vsel %vm274, %v3407, 0
  %v3464 = vsel %vm274, %v3408, 0
  %v3467 = vsel %vm274, %v3409, 0
  %v3470 = vsel %vm274, %v3410, 0
  %v3473 = vsel %vm274, %v3411, 0
  %v3476 = vsel %vm274, %v3412, 0
  %v3479 = vsel %vm274, %v3413, 0
  %v3482 = vsel %vm274, %v3414, 0
  %v3485 = vsel %vm274, %v3415, 0
  %v3488 = vsel %vm274, %v3416, 0
  %v3491 = vsel %vm274, %v3417, 0
  %v3494 = vsel %vm274, %v3418, 0
  %v3497 = vsel %vm274, %v3419, 0
  %v3500 = vsel %vm274, %v3420, 0
  %v3503 = vsel %vm274, %v3421, 0
  %v3506 = vsel %vm274, %v3422, 0
  %v3509 = vsel %vm274, %v3423, 0
  %v3512 = vsel %vm274, %v3424, 0
  %v3515 = vsel %vm274, %v3425, 0
  %v3518 = vsel %vm274, %v3426, 0
  %v3521 = vsel %vm274, %v3427, 0
  %v3524 = vsel %vm274, %v3428, 0
  %v3527 = vsel %vm274, %v3429, 0
  %v3530 = vsel %vm274, %v3430, 0
  %v3533 = vsel %vm274, %v3431, 0
  %v3536 = vsel %vm274, %v3432, 0
  %v3539 = vsel %vm274, %v3433, 0
  %v3542 = vsel %vm274, %v3434, 0
  %v3545 = vsel %vm274, %v3435, 0
  %v3548 = vsel %vm274, %v3436, 0
  %v3551 = vsel %vm274, %v3437, 0
  %v3554 = vsel %vm274, %v3438, 0
  %v3557 = vsel %vm274, %v3439, 0
  %v3560 = vsel %vm274, %v3440, 0
  %v3563 = vsel %vm274, %v3441, 0
  %v3566 = vsel %vm274, %v3442, 0
  %v3569 = vsel %vm398, %v3444, 0
  %3571 = vmatprep.subr.bf16.mxu0 0
  %3572 = vmatpush1.bf16.msra.mxu0 %v3569
  %3573 = vmatprep.subr.bf16.mxu0 0
  %3574 = vmatpush1.bf16.msra.mxu0 0
  %3575 = vmatprep.subr.bf16.mxu0 0
  %3576 = vmatpush1.bf16.msra.mxu0 0
  %3577 = vmatprep.subr.bf16.mxu0 0
  %3578 = vmatpush1.bf16.msra.mxu0 0
  %3579 = vmatprep.subr.bf16.mxu0 0
  %3580 = vmatpush1.bf16.msra.mxu0 0
  %3581 = vmatprep.subr.bf16.mxu0 0
  %3582 = vmatpush1.bf16.msra.mxu0 0
  %3583 = vmatprep.subr.bf16.mxu0 0
  %3584 = vmatpush1.bf16.msra.mxu0 0
  %3585 = vmatprep.subr.bf16.mxu0 0
  %3586 = vmatpush1.bf16.msra.mxu0 0
  %3587 = vmatprep.subr.bf16.mxu0 0
  %3588 = vmatpush1.bf16.msra.mxu0 0
  %3589 = vmatprep.subr.bf16.mxu0 0
  %3590 = vmatpush1.bf16.msra.mxu0 0
  %3591 = vmatprep.subr.bf16.mxu0 0
  %3592 = vmatpush1.bf16.msra.mxu0 0
  %3593 = vmatprep.subr.bf16.mxu0 0
  %3594 = vmatpush1.bf16.msra.mxu0 0
  %3595 = vmatprep.subr.bf16.mxu0 0
  %3596 = vmatpush1.bf16.msra.mxu0 0
  %3597 = vmatprep.subr.bf16.mxu0 0
  %3598 = vmatpush1.bf16.msra.mxu0 0
  %3599 = vmatprep.subr.bf16.mxu0 0
  %3600 = vmatpush1.bf16.msra.mxu0 0
  %3601 = vmatprep.subr.bf16.mxu0 0
  %3602 = vmatpush1.bf16.msra.mxu0 0
  %3603 = vmatprep.mubr.bf16.mxu0 0
  %3604 = vmatmul.mubr.bf16.gmra.mrb[0].mxu0 %v3446
  %v3605 = vpop.f32.mrb[0].mxu0
  %v3606 = vadd.f32 0.0, %v3605
  %v3607 = vpop.f32.mrb[0].mxu0
  %v3608 = vpop.f32.mrb[0].mxu0
  %v3609 = vadd.f32 0.0, %v3608
  %v3610 = vpop.f32.mrb[0].mxu0
  %3611 = vmatprep.mubr.bf16.mxu0 0
  %3612 = vmatmul.mubr.bf16.gmra.mrb[0].mxu0 %v3449
  %v3613 = vpop.f32.mrb[0].mxu0
  %v3614 = vadd.f32 0.0, %v3613
  %v3615 = vpop.f32.mrb[0].mxu0
  %v3616 = vpop.f32.mrb[0].mxu0
  %v3617 = vadd.f32 0.0, %v3616
  %v3618 = vpop.f32.mrb[0].mxu0
  %3619 = vmatprep.mubr.bf16.mxu0 0
  %3620 = vmatmul.mubr.bf16.gmra.mrb[0].mxu0 %v3452
  %v3621 = vpop.f32.mrb[0].mxu0
  %v3622 = vadd.f32 0.0, %v3621
  %v3623 = vpop.f32.mrb[0].mxu0
  %v3624 = vpop.f32.mrb[0].mxu0
  %v3625 = vadd.f32 0.0, %v3624
  %v3626 = vpop.f32.mrb[0].mxu0
  %3627 = vmatprep.mubr.bf16.mxu0 0
  %3628 = vmatmul.mubr.bf16.gmra.mrb[0].mxu0 %v3455
  %v3629 = vpop.f32.mrb[0].mxu0
  %v3630 = vadd.f32 0.0, %v3629
  %v3631 = vpop.f32.mrb[0].mxu0
  %v3632 = vpop.f32.mrb[0].mxu0
  %v3633 = vadd.f32 0.0, %v3632
  %v3634 = vpop.f32.mrb[0].mxu0
  %3635 = vmatprep.mubr.bf16.mxu0 0
  %3636 = vmatmul.mubr.bf16.gmra.mrb[0].mxu0 %v3458
  %v3637 = vpop.f32.mrb[0].mxu0
  %v3638 = vadd.f32 0.0, %v3637
  %v3639 = vpop.f32.mrb[0].mxu0
  %v3640 = vpop.f32.mrb[0].mxu0
  %v3641 = vadd.f32 0.0, %v3640
  %v3642 = vpop.f32.mrb[0].mxu0
  %3643 = vmatprep.mubr.bf16.mxu0 0
  %3644 = vmatmul.mubr.bf16.gmra.mrb[0].mxu0 %v3461
  %v3645 = vpop.f32.mrb[0].mxu0
  %v3646 = vadd.f32 0.0, %v3645
  %v3647 = vpop.f32.mrb[0].mxu0
  %v3648 = vpop.f32.mrb[0].mxu0
  %v3649 = vadd.f32 0.0, %v3648
  %v3650 = vpop.f32.mrb[0].mxu0
  %3651 = vmatprep.mubr.bf16.mxu0 0
  %3652 = vmatmul.mubr.bf16.gmra.mrb[0].mxu0 %v3464
  %v3653 = vpop.f32.mrb[0].mxu0
  %v3654 = vadd.f32 0.0, %v3653
  %v3655 = vpop.f32.mrb[0].mxu0
  %v3656 = vpop.f32.mrb[0].mxu0
  %v3657 = vadd.f32 0.0, %v3656
  %v3658 = vpop.f32.mrb[0].mxu0
  %3659 = vmatprep.mubr.bf16.mxu0 0
  %3660 = vmatmul.mubr.bf16.gmra.mrb[0].mxu0 %v3467
  %v3661 = vpop.f32.mrb[0].mxu0
  %v3662 = vadd.f32 0.0, %v3661
  %v3663 = vpop.f32.mrb[0].mxu0
  %v3664 = vpop.f32.mrb[0].mxu0
  %v3665 = vadd.f32 0.0, %v3664
  %v3666 = vpop.f32.mrb[0].mxu0
  %3667 = vmatprep.mubr.bf16.mxu0 0
  %3668 = vmatmul.mubr.bf16.gmra.mrb[0].mxu0 %v3470
  %v3669 = vpop.f32.mrb[0].mxu0
  %v3670 = vadd.f32 0.0, %v3669
  %v3671 = vpop.f32.mrb[0].mxu0
  %v3672 = vpop.f32.mrb[0].mxu0
  %v3673 = vadd.f32 0.0, %v3672
  %v3674 = vpop.f32.mrb[0].mxu0
  %3675 = vmatprep.mubr.bf16.mxu0 0
  %3676 = vmatmul.mubr.bf16.gmra.mrb[0].mxu0 %v3473
  %v3677 = vpop.f32.mrb[0].mxu0
  %v3678 = vadd.f32 0.0, %v3677
  %v3679 = vpop.f32.mrb[0].mxu0
  %v3680 = vpop.f32.mrb[0].mxu0
  %v3681 = vadd.f32 0.0, %v3680
  %v3682 = vpop.f32.mrb[0].mxu0
  %3683 = vmatprep.mubr.bf16.mxu0 0
  %3684 = vmatmul.mubr.bf16.gmra.mrb[0].mxu0 %v3476
  %v3685 = vpop.f32.mrb[0].mxu0
  %v3686 = vadd.f32 0.0, %v3685
  %v3687 = vpop.f32.mrb[0].mxu0
  %v3688 = vpop.f32.mrb[0].mxu0
  %v3689 = vadd.f32 0.0, %v3688
  %v3690 = vpop.f32.mrb[0].mxu0
  %3691 = vmatprep.mubr.bf16.mxu0 0
  %3692 = vmatmul.mubr.bf16.gmra.mrb[0].mxu0 %v3479
  %v3693 = vpop.f32.mrb[0].mxu0
  %v3694 = vadd.f32 0.0, %v3693
  %v3695 = vpop.f32.mrb[0].mxu0
  %v3696 = vpop.f32.mrb[0].mxu0
  %v3697 = vadd.f32 0.0, %v3696
  %v3698 = vpop.f32.mrb[0].mxu0
  %3699 = vmatprep.mubr.bf16.mxu0 0
  %3700 = vmatmul.mubr.bf16.gmra.mrb[0].mxu0 %v3482
  %v3701 = vpop.f32.mrb[0].mxu0
  %v3702 = vadd.f32 0.0, %v3701
  %v3703 = vpop.f32.mrb[0].mxu0
  %v3704 = vpop.f32.mrb[0].mxu0
  %v3705 = vadd.f32 0.0, %v3704
  %v3706 = vpop.f32.mrb[0].mxu0
  %3707 = vmatprep.mubr.bf16.mxu0 0
  %3708 = vmatmul.mubr.bf16.gmra.mrb[0].mxu0 %v3485
  %v3709 = vpop.f32.mrb[0].mxu0
  %v3710 = vadd.f32 0.0, %v3709
  %v3711 = vpop.f32.mrb[0].mxu0
  %v3712 = vpop.f32.mrb[0].mxu0
  %v3713 = vadd.f32 0.0, %v3712
  %v3714 = vpop.f32.mrb[0].mxu0
  %3715 = vmatprep.mubr.bf16.mxu0 0
  %3716 = vmatmul.mubr.bf16.gmra.mrb[0].mxu0 %v3488
  %v3717 = vpop.f32.mrb[0].mxu0
  %v3718 = vadd.f32 0.0, %v3717
  %v3719 = vpop.f32.mrb[0].mxu0
  %v3720 = vpop.f32.mrb[0].mxu0
  %v3721 = vadd.f32 0.0, %v3720
  %v3722 = vpop.f32.mrb[0].mxu0
  %3723 = vmatprep.mubr.bf16.mxu0 0
  %3724 = vmatmul.mubr.bf16.gmra.mrb[0].mxu0 %v3491
  %v3725 = vpop.f32.mrb[0].mxu0
  %v3726 = vadd.f32 0.0, %v3725
  %v3727 = vpop.f32.mrb[0].mxu0
  %v3728 = vpop.f32.mrb[0].mxu0
  %v3729 = vadd.f32 0.0, %v3728
  %v3730 = vpop.f32.mrb[0].mxu0
  %3731 = vmatprep.mubr.bf16.mxu0 0
  %3732 = vmatmul.mubr.bf16.gmra.mrb[0].mxu0 %v3494
  %v3733 = vpop.f32.mrb[0].mxu0
  %v3734 = vadd.f32 0.0, %v3733
  %v3735 = vpop.f32.mrb[0].mxu0
  %v3736 = vpop.f32.mrb[0].mxu0
  %v3737 = vadd.f32 0.0, %v3736
  %v3738 = vpop.f32.mrb[0].mxu0
  %3739 = vmatprep.mubr.bf16.mxu0 0
  %3740 = vmatmul.mubr.bf16.gmra.mrb[0].mxu0 %v3497
  %v3741 = vpop.f32.mrb[0].mxu0
  %v3742 = vadd.f32 0.0, %v3741
  %v3743 = vpop.f32.mrb[0].mxu0
  %v3744 = vpop.f32.mrb[0].mxu0
  %v3745 = vadd.f32 0.0, %v3744
  %v3746 = vpop.f32.mrb[0].mxu0
  %3747 = vmatprep.mubr.bf16.mxu0 0
  %3748 = vmatmul.mubr.bf16.gmra.mrb[0].mxu0 %v3500
  %v3749 = vpop.f32.mrb[0].mxu0
  %v3750 = vadd.f32 0.0, %v3749
  %v3751 = vpop.f32.mrb[0].mxu0
  %v3752 = vpop.f32.mrb[0].mxu0
  %v3753 = vadd.f32 0.0, %v3752
  %v3754 = vpop.f32.mrb[0].mxu0
  %3755 = vmatprep.mubr.bf16.mxu0 0
  %3756 = vmatmul.mubr.bf16.gmra.mrb[0].mxu0 %v3503
  %v3757 = vpop.f32.mrb[0].mxu0
  %v3758 = vadd.f32 0.0, %v3757
  %v3759 = vpop.f32.mrb[0].mxu0
  %v3760 = vpop.f32.mrb[0].mxu0
  %v3761 = vadd.f32 0.0, %v3760
  %v3762 = vpop.f32.mrb[0].mxu0
  %3763 = vmatprep.mubr.bf16.mxu0 0
  %3764 = vmatmul.mubr.bf16.gmra.mrb[0].mxu0 %v3506
  %v3765 = vpop.f32.mrb[0].mxu0
  %v3766 = vadd.f32 0.0, %v3765
  %v3767 = vpop.f32.mrb[0].mxu0
  %v3768 = vpop.f32.mrb[0].mxu0
  %v3769 = vadd.f32 0.0, %v3768
  %v3770 = vpop.f32.mrb[0].mxu0
  %3771 = vmatprep.mubr.bf16.mxu0 0
  %3772 = vmatmul.mubr.bf16.gmra.mrb[0].mxu0 %v3509
  %v3773 = vpop.f32.mrb[0].mxu0
  %v3774 = vadd.f32 0.0, %v3773
  %v3775 = vpop.f32.mrb[0].mxu0
  %v3776 = vpop.f32.mrb[0].mxu0
  %v3777 = vadd.f32 0.0, %v3776
  %v3778 = vpop.f32.mrb[0].mxu0
  %3779 = vmatprep.mubr.bf16.mxu0 0
  %3780 = vmatmul.mubr.bf16.gmra.mrb[0].mxu0 %v3512
  %v3781 = vpop.f32.mrb[0].mxu0
  %v3782 = vadd.f32 0.0, %v3781
  %v3783 = vpop.f32.mrb[0].mxu0
  %v3784 = vpop.f32.mrb[0].mxu0
  %v3785 = vadd.f32 0.0, %v3784
  %v3786 = vpop.f32.mrb[0].mxu0
  %3787 = vmatprep.mubr.bf16.mxu0 0
  %3788 = vmatmul.mubr.bf16.gmra.mrb[0].mxu0 %v3515
  %v3789 = vpop.f32.mrb[0].mxu0
  %v3790 = vadd.f32 0.0, %v3789
  %v3791 = vpop.f32.mrb[0].mxu0
  %v3792 = vpop.f32.mrb[0].mxu0
  %v3793 = vadd.f32 0.0, %v3792
  %v3794 = vpop.f32.mrb[0].mxu0
  %3795 = vmatprep.mubr.bf16.mxu0 0
  %3796 = vmatmul.mubr.bf16.gmra.mrb[0].mxu0 %v3518
  %v3797 = vpop.f32.mrb[0].mxu0
  %v3798 = vadd.f32 0.0, %v3797
  %v3799 = vpop.f32.mrb[0].mxu0
  %v3800 = vpop.f32.mrb[0].mxu0
  %v3801 = vadd.f32 0.0, %v3800
  %v3802 = vpop.f32.mrb[0].mxu0
  %3803 = vmatprep.mubr.bf16.mxu0 0
  %3804 = vmatmul.mubr.bf16.gmra.mrb[0].mxu0 %v3521
  %v3805 = vpop.f32.mrb[0].mxu0
  %v3806 = vadd.f32 0.0, %v3805
  %v3807 = vpop.f32.mrb[0].mxu0
  %v3808 = vpop.f32.mrb[0].mxu0
  %v3809 = vadd.f32 0.0, %v3808
  %v3810 = vpop.f32.mrb[0].mxu0
  %3811 = vmatprep.mubr.bf16.mxu0 0
  %3812 = vmatmul.mubr.bf16.gmra.mrb[0].mxu0 %v3524
  %v3813 = vpop.f32.mrb[0].mxu0
  %v3814 = vadd.f32 0.0, %v3813
  %v3815 = vpop.f32.mrb[0].mxu0
  %v3816 = vpop.f32.mrb[0].mxu0
  %v3817 = vadd.f32 0.0, %v3816
  %v3818 = vpop.f32.mrb[0].mxu0
  %3819 = vmatprep.mubr.bf16.mxu0 0
  %3820 = vmatmul.mubr.bf16.gmra.mrb[0].mxu0 %v3527
  %v3821 = vpop.f32.mrb[0].mxu0
  %v3822 = vadd.f32 0.0, %v3821
  %v3823 = vpop.f32.mrb[0].mxu0
  %v3824 = vpop.f32.mrb[0].mxu0
  %v3825 = vadd.f32 0.0, %v3824
  %v3826 = vpop.f32.mrb[0].mxu0
  %3827 = vmatprep.mubr.bf16.mxu0 0
  %3828 = vmatmul.mubr.bf16.gmra.mrb[0].mxu0 %v3530
  %v3829 = vpop.f32.mrb[0].mxu0
  %v3830 = vadd.f32 0.0, %v3829
  %v3831 = vpop.f32.mrb[0].mxu0
  %v3832 = vpop.f32.mrb[0].mxu0
  %v3833 = vadd.f32 0.0, %v3832
  %v3834 = vpop.f32.mrb[0].mxu0
  %3835 = vmatprep.mubr.bf16.mxu0 0
  %3836 = vmatmul.mubr.bf16.gmra.mrb[0].mxu0 %v3533
  %v3837 = vpop.f32.mrb[0].mxu0
  %v3838 = vadd.f32 0.0, %v3837
  %v3839 = vpop.f32.mrb[0].mxu0
  %v3840 = vpop.f32.mrb[0].mxu0
  %v3841 = vadd.f32 0.0, %v3840
  %v3842 = vpop.f32.mrb[0].mxu0
  %3843 = vmatprep.mubr.bf16.mxu0 0
  %3844 = vmatmul.mubr.bf16.gmra.mrb[0].mxu0 %v3536
  %v3845 = vpop.f32.mrb[0].mxu0
  %v3846 = vadd.f32 0.0, %v3845
  %v3847 = vpop.f32.mrb[0].mxu0
  %v3848 = vpop.f32.mrb[0].mxu0
  %v3849 = vadd.f32 0.0, %v3848
  %v3850 = vpop.f32.mrb[0].mxu0
  %3851 = vmatprep.mubr.bf16.mxu0 0
  %3852 = vmatmul.mubr.bf16.gmra.mrb[0].mxu0 %v3539
  %v3853 = vpop.f32.mrb[0].mxu0
  %v3854 = vadd.f32 0.0, %v3853
  %v3855 = vpop.f32.mrb[0].mxu0
  %v3856 = vpop.f32.mrb[0].mxu0
  %v3857 = vadd.f32 0.0, %v3856
  %v3858 = vpop.f32.mrb[0].mxu0
  %3859 = vmatprep.mubr.bf16.mxu0 0
  %3860 = vmatmul.mubr.bf16.gmra.mrb[0].mxu0 %v3542
  %v3861 = vpop.f32.mrb[0].mxu0
  %v3862 = vadd.f32 0.0, %v3861
  %v3863 = vpop.f32.mrb[0].mxu0
  %v3864 = vpop.f32.mrb[0].mxu0
  %v3865 = vadd.f32 0.0, %v3864
  %v3866 = vpop.f32.mrb[0].mxu0
  %3867 = vmatprep.mubr.bf16.mxu0 0
  %3868 = vmatmul.mubr.bf16.gmra.mrb[0].mxu0 %v3545
  %v3869 = vpop.f32.mrb[0].mxu0
  %v3870 = vadd.f32 0.0, %v3869
  %v3871 = vpop.f32.mrb[0].mxu0
  %v3872 = vpop.f32.mrb[0].mxu0
  %v3873 = vadd.f32 0.0, %v3872
  %v3874 = vpop.f32.mrb[0].mxu0
  %3875 = vmatprep.mubr.bf16.mxu0 0
  %3876 = vmatmul.mubr.bf16.gmra.mrb[0].mxu0 %v3548
  %v3877 = vpop.f32.mrb[0].mxu0
  %v3878 = vadd.f32 0.0, %v3877
  %v3879 = vpop.f32.mrb[0].mxu0
  %v3880 = vpop.f32.mrb[0].mxu0
  %v3881 = vadd.f32 0.0, %v3880
  %v3882 = vpop.f32.mrb[0].mxu0
  %3883 = vmatprep.mubr.bf16.mxu0 0
  %3884 = vmatmul.mubr.bf16.gmra.mrb[0].mxu0 %v3551
  %v3885 = vpop.f32.mrb[0].mxu0
  %v3886 = vadd.f32 0.0, %v3885
  %v3887 = vpop.f32.mrb[0].mxu0
  %v3888 = vpop.f32.mrb[0].mxu0
  %v3889 = vadd.f32 0.0, %v3888
  %v3890 = vpop.f32.mrb[0].mxu0
  %3891 = vmatprep.mubr.bf16.mxu0 0
  %3892 = vmatmul.mubr.bf16.gmra.mrb[0].mxu0 %v3554
  %v3893 = vpop.f32.mrb[0].mxu0
  %v3894 = vadd.f32 0.0, %v3893
  %v3895 = vpop.f32.mrb[0].mxu0
  %v3896 = vpop.f32.mrb[0].mxu0
  %v3897 = vadd.f32 0.0, %v3896
  %v3898 = vpop.f32.mrb[0].mxu0
  %3899 = vmatprep.mubr.bf16.mxu0 0
  %3900 = vmatmul.mubr.bf16.gmra.mrb[0].mxu0 %v3557
  %v3901 = vpop.f32.mrb[0].mxu0
  %v3902 = vadd.f32 0.0, %v3901
  %v3903 = vpop.f32.mrb[0].mxu0
  %v3904 = vpop.f32.mrb[0].mxu0
  %v3905 = vadd.f32 0.0, %v3904
  %v3906 = vpop.f32.mrb[0].mxu0
  %3907 = vmatprep.mubr.bf16.mxu0 0
  %3908 = vmatmul.mubr.bf16.gmra.mrb[0].mxu0 %v3560
  %v3909 = vpop.f32.mrb[0].mxu0
  %v3910 = vadd.f32 0.0, %v3909
  %v3911 = vpop.f32.mrb[0].mxu0
  %v3912 = vpop.f32.mrb[0].mxu0
  %v3913 = vadd.f32 0.0, %v3912
  %v3914 = vpop.f32.mrb[0].mxu0
  %3915 = vmatprep.mubr.bf16.mxu0 0
  %3916 = vmatmul.mubr.bf16.gmra.mrb[0].mxu0 %v3563
  %v3917 = vpop.f32.mrb[0].mxu0
  %v3918 = vadd.f32 0.0, %v3917
  %v3919 = vpop.f32.mrb[0].mxu0
  %v3920 = vpop.f32.mrb[0].mxu0
  %v3921 = vadd.f32 0.0, %v3920
  %v3922 = vpop.f32.mrb[0].mxu0
  %3923 = vmatprep.mubr.bf16.mxu0 0
  %3924 = vmatmul.mubr.bf16.gmra.mrb[0].mxu0 %v3566
  %v3925 = vpop.f32.mrb[0].mxu0
  %v3926 = vadd.f32 0.0, %v3925
  %v3927 = vpop.f32.mrb[0].mxu0
  %v3928 = vpop.f32.mrb[0].mxu0
  %v3929 = vpop.f32.mrb[0].mxu0
  %3930 = vdwg.mxu0
  %v3931 = vadd.f32 %v3240, %v3606
  %v3932 = vadd.f32 %v3241, %v3609
  %v3933 = vadd.f32 %v3242, %v3614
  %v3934 = vadd.f32 %v3243, %v3617
  %v3935 = vadd.f32 %v3244, %v3622
  %v3936 = vadd.f32 %v3245, %v3625
  %v3937 = vadd.f32 %v3246, %v3630
  %v3938 = vadd.f32 %v3247, %v3633
  %v3939 = vadd.f32 %v3248, %v3638
  %v3940 = vadd.f32 %v3249, %v3641
  %v3941 = vadd.f32 %v3250, %v3646
  %v3942 = vadd.f32 %v3251, %v3649
  %v3943 = vadd.f32 %v3252, %v3654
  %v3944 = vadd.f32 %v3253, %v3657
  %v3945 = vadd.f32 %v3254, %v3662
  %v3946 = vadd.f32 %v3255, %v3665
  %v3947 = vadd.f32 %v3256, %v3670
  %v3948 = vadd.f32 %v3257, %v3673
  %v3949 = vadd.f32 %v3258, %v3678
  %v3950 = vadd.f32 %v3259, %v3681
  %v3951 = vadd.f32 %v3260, %v3686
  %v3952 = vadd.f32 %v3261, %v3689
  %v3953 = vadd.f32 %v3262, %v3694
  %v3954 = vadd.f32 %v3263, %v3697
  %v3955 = vadd.f32 %v3264, %v3702
  %v3956 = vadd.f32 %v3265, %v3705
  %v3957 = vadd.f32 %v3266, %v3710
  %v3958 = vadd.f32 %v3267, %v3713
  %v3959 = vadd.f32 %v3268, %v3718
  %v3960 = vadd.f32 %v3269, %v3721
  %v3961 = vadd.f32 %v3270, %v3726
  %v3962 = vadd.f32 %v3271, %v3729
  %v3963 = vadd.f32 %v3272, %v3734
  %v3964 = vadd.f32 %v3273, %v3737
  %v3965 = vadd.f32 %v3274, %v3742
  %v3966 = vadd.f32 %v3275, %v3745
  %v3967 = vadd.f32 %v3276, %v3750
  %v3968 = vadd.f32 %v3277, %v3753
  %v3969 = vadd.f32 %v3278, %v3758
  %v3970 = vadd.f32 %v3279, %v3761
  %v3971 = vadd.f32 %v3280, %v3766
  %v3972 = vadd.f32 %v3281, %v3769
  %v3973 = vadd.f32 %v3282, %v3774
  %v3974 = vadd.f32 %v3283, %v3777
  %v3975 = vadd.f32 %v3284, %v3782
  %v3976 = vadd.f32 %v3285, %v3785
  %v3977 = vadd.f32 %v3286, %v3790
  %v3978 = vadd.f32 %v3287, %v3793
  %v3979 = vadd.f32 %v3288, %v3798
  %v3980 = vadd.f32 %v3289, %v3801
  %v3981 = vadd.f32 %v3290, %v3806
  %v3982 = vadd.f32 %v3291, %v3809
  %v3983 = vadd.f32 %v3292, %v3814
  %v3984 = vadd.f32 %v3293, %v3817
  %v3985 = vadd.f32 %v3294, %v3822
  %v3986 = vadd.f32 %v3295, %v3825
  %v3987 = vadd.f32 %v3296, %v3830
  %v3988 = vadd.f32 %v3297, %v3833
  %v3989 = vadd.f32 %v3298, %v3838
  %v3990 = vadd.f32 %v3299, %v3841
  %v3991 = vadd.f32 %v3300, %v3846
  %v3992 = vadd.f32 %v3301, %v3849
  %v3993 = vadd.f32 %v3302, %v3854
  %v3994 = vadd.f32 %v3303, %v3857
  %v3995 = vadd.f32 %v3304, %v3862
  %v3996 = vadd.f32 %v3305, %v3865
  %v3997 = vadd.f32 %v3306, %v3870
  %v3998 = vadd.f32 %v3307, %v3873
  %v3999 = vadd.f32 %v3308, %v3878
  %v4000 = vadd.f32 %v3309, %v3881
  %v4001 = vadd.f32 %v3310, %v3886
  %v4002 = vadd.f32 %v3311, %v3889
  %v4003 = vadd.f32 %v3312, %v3894
  %v4004 = vadd.f32 %v3313, %v3897
  %v4005 = vadd.f32 %v3314, %v3902
  %v4006 = vadd.f32 %v3315, %v3905
  %v4007 = vadd.f32 %v3316, %v3910
  %v4008 = vadd.f32 %v3317, %v3913
  %v4009 = vadd.f32 %v3318, %v3918
  %v4010 = vadd.f32 %v3319, %v3921
  %v4011 = vadd.f32 %v3320, %v3926
  %v4012 = vld [vmem:[%s0 + $0x24] sm:$0xff]
  %v4013 = vld [vmem:[%s0 + $0x2c] sm:$0xff]
  %v4014 = vld [vmem:[%s0 + $0x34] sm:$0xff]
  %v4015 = vld [vmem:[%s0 + $0x3c] sm:$0xff]
  %v4016 = vld [vmem:[%s0 + $0x44] sm:$0xff]
  %v4017 = vld [vmem:[%s0 + $0x4c] sm:$0xff]
  %v4018 = vld [vmem:[%s0 + $0x54] sm:$0xff]
  %v4019 = vld [vmem:[%s0 + $0x5c] sm:$0xff]
  %v4020 = vld [vmem:[%s0 + $0x64] sm:$0xff]
  %v4021 = vld [vmem:[%s0 + $0x6c] sm:$0xff]
  %v4022 = vld [vmem:[%s0 + $0x74] sm:$0xff]
  %v4023 = vld [vmem:[%s0 + $0x7c] sm:$0xff]
  %v4024 = vld [vmem:[%s0 + $0x84] sm:$0xff]
  %v4025 = vld [vmem:[%s0 + $0x8c] sm:$0xff]
  %v4026 = vld [vmem:[%s0 + $0x94] sm:$0xff]
  %v4027 = vld [vmem:[%s0 + $0x9c] sm:$0xff]
  %v4028 = vld [vmem:[%s0 + $0xa4] sm:$0xff]
  %v4029 = vld [vmem:[%s0 + $0xac] sm:$0xff]
  %v4030 = vld [vmem:[%s0 + $0xb4] sm:$0xff]
  %v4031 = vld [vmem:[%s0 + $0xbc] sm:$0xff]
  %v4032 = vld [vmem:[%s0 + $0xc4] sm:$0xff]
  %v4033 = vld [vmem:[%s0 + $0xcc] sm:$0xff]
  %v4034 = vld [vmem:[%s0 + $0xd4] sm:$0xff]
  %v4035 = vld [vmem:[%s0 + $0xdc] sm:$0xff]
  %v4036 = vld [vmem:[%s0 + $0xe4] sm:$0xff]
  %v4037 = vld [vmem:[%s0 + $0xec] sm:$0xff]
  %v4038 = vld [vmem:[%s0 + $0xf4] sm:$0xff]
  %v4039 = vld [vmem:[%s0 + $0xfc] sm:$0xff]
  %v4040 = vld [vmem:[%s0 + $0x104] sm:$0xff]
  %v4041 = vld [vmem:[%s0 + $0x10c] sm:$0xff]
  %v4042 = vld [vmem:[%s0 + $0x114] sm:$0xff]
  %v4043 = vld [vmem:[%s0 + $0x11c] sm:$0xff]
  %v4044 = vld [vmem:[%s0 + $0x124] sm:$0xff]
  %v4045 = vld [vmem:[%s0 + $0x12c] sm:$0xff]
  %v4046 = vld [vmem:[%s0 + $0x134] sm:$0xff]
  %v4047 = vld [vmem:[%s0 + $0x13c] sm:$0xff]
  %v4048 = vld [vmem:[%s0 + $0x144] sm:$0xff]
  %v4049 = vld [vmem:[%s0 + $0x14c] sm:$0xff]
  %v4050 = vld [vmem:[%s0 + $0x154] sm:$0xff]
  %v4051 = vld [vmem:[%s0 + $0x15c] sm:$0xff]
  %v4052 = vld [vmem:[%s0 + $0x164] sm:$0xff]
  %v4053 = vld [vmem:[%s0 + $0x16c] sm:$0xff]
  %v4054 = vld [vmem:[%s0 + $0x174] sm:$0xff]
  %v4055 = vld [vmem:[%s0 + $0x17c] sm:$0xff]
  %v4056 = vld [vmem:[%s0 + $0x184] sm:$0xff]
  %v4057 = vld [vmem:[%s0 + $0x18c] sm:$0xff]
  %v4058 = vld [vmem:[%s0 + $0x194] sm:$0xff]
  %v4059 = vld [vmem:[%s0 + $0x19c] sm:$0xff]
  %v4060 = vld [vmem:[%s0 + $0x1a4] sm:$0xff]
  %v4061 = vld [vmem:[%s0 + $0x1ac] sm:$0xff]
  %v4062 = vld [vmem:[%s0 + $0x1b4] sm:$0xff]
  %v4063 = vld [vmem:[%s0 + $0x1bc] sm:$0xff]
  %v4064 = vld [vmem:[%s0 + $0x1c4] sm:$0xff]
  %v4065 = vld [vmem:[%s0 + $0x1cc] sm:$0xff]
  %v4066 = vld [vmem:[%s0 + $0x1d4] sm:$0xff]
  %v4067 = vld [vmem:[%s0 + $0x1dc] sm:$0xff]
  %v4068 = vld [vmem:[%s0 + $0x1e4] sm:$0xff]
  %v4069 = vld [vmem:[%s0 + $0x1ec] sm:$0xff]
  %v4070 = vld [vmem:[%s0 + $0x1f4] sm:$0xff]
  %v4071 = vld [vmem:[%s0 + $0x1fc] sm:$0xff]
  %v4072 = vld [vmem:[%s0 + $0x204] sm:$0xff]
  %v4073 = vld [vmem:[%s0 + $0x20c] sm:$0xff]
  %v4074 = vld [vmem:[%s0 + $0x214] sm:$0xff]
  %v4075 = vld [vmem:[%s0 + $0x21c] sm:$0xff]
  %v4076 = vld [vmem:[%s0 + $0x224] sm:$0xff]
  %v4077 = vld [vmem:[%s0 + $0x22c] sm:$0xff]
  %v4078 = vld [vmem:[%s0 + $0x234] sm:$0xff]
  %v4079 = vld [vmem:[%s0 + $0x23c] sm:$0xff]
  %v4080 = vld [vmem:[%s0 + $0x244] sm:$0xff]
  %v4081 = vld [vmem:[%s0 + $0x24c] sm:$0xff]
  %v4082 = vld [vmem:[%s0 + $0x254] sm:$0xff]
  %v4083 = vld [vmem:[%s0 + $0x25c] sm:$0xff]
  %v4084 = vld [vmem:[%s0 + $0x264] sm:$0xff]
  %v4085 = vld [vmem:[%s0 + $0x26c] sm:$0xff]
  %v4086 = vld [vmem:[%s0 + $0x274] sm:$0xff]
  %v4087 = vld [vmem:[%s0 + $0x27c] sm:$0xff]
  %v4088 = vld [vmem:[%s0 + $0x284] sm:$0xff]
  %v4089 = vld [vmem:[%s0 + $0x28c] sm:$0xff]
  %v4090 = vld [vmem:[%s0 + $0x294] sm:$0xff]
  %v4091 = vld [vmem:[%s0 + $0x29c] sm:$0xff]
  %v4092 = vld [vmem:[%s0 + $0x2a4] sm:$0xff]
  %v4093 = vpack.c.bf16 %v4013, %v4012
  %v4094 = vpack.c.bf16 %v4015, %v4014
  %v4095 = vpack.c.bf16 %v4017, %v4016
  %v4096 = vpack.c.bf16 %v4019, %v4018
  %v4097 = vpack.c.bf16 %v4021, %v4020
  %v4098 = vpack.c.bf16 %v4023, %v4022
  %v4099 = vpack.c.bf16 %v4025, %v4024
  %v4100 = vpack.c.bf16 %v4027, %v4026
  %v4101 = vpack.c.bf16 %v4029, %v4028
  %v4102 = vpack.c.bf16 %v4031, %v4030
  %v4103 = vpack.c.bf16 %v4033, %v4032
  %v4104 = vpack.c.bf16 %v4035, %v4034
  %v4105 = vpack.c.bf16 %v4037, %v4036
  %v4106 = vpack.c.bf16 %v4039, %v4038
  %v4107 = vpack.c.bf16 %v4041, %v4040
  %v4108 = vpack.c.bf16 %v4043, %v4042
  %v4109 = vpack.c.bf16 %v4045, %v4044
  %v4110 = vpack.c.bf16 %v4047, %v4046
  %v4111 = vpack.c.bf16 %v4049, %v4048
  %v4112 = vpack.c.bf16 %v4051, %v4050
  %v4113 = vpack.c.bf16 %v4053, %v4052
  %v4114 = vpack.c.bf16 %v4055, %v4054
  %v4115 = vpack.c.bf16 %v4057, %v4056
  %v4116 = vpack.c.bf16 %v4059, %v4058
  %v4117 = vpack.c.bf16 %v4061, %v4060
  %v4118 = vpack.c.bf16 %v4063, %v4062
  %v4119 = vpack.c.bf16 %v4065, %v4064
  %v4120 = vpack.c.bf16 %v4067, %v4066
  %v4121 = vpack.c.bf16 %v4069, %v4068
  %v4122 = vpack.c.bf16 %v4071, %v4070
  %v4123 = vpack.c.bf16 %v4073, %v4072
  %v4124 = vpack.c.bf16 %v4075, %v4074
  %v4125 = vpack.c.bf16 %v4077, %v4076
  %v4126 = vpack.c.bf16 %v4079, %v4078
  %v4127 = vpack.c.bf16 %v4081, %v4080
  %v4128 = vpack.c.bf16 %v4083, %v4082
  %v4129 = vpack.c.bf16 %v4085, %v4084
  %v4130 = vpack.c.bf16 %v4087, %v4086
  %v4131 = vpack.c.bf16 %v4089, %v4088
  %v4132 = vpack.c.bf16 %v4091, %v4090
  %v4133 = vpack.c.bf16 %v4092, %v4092
  %s4134 = scalar_lea.vmem %s1, 12
  %v4135 = vld [vmem:[%s4134] sm:$0x3]
  %v4137 = vsel %vm274, %v4093, 0
  %v4140 = vsel %vm274, %v4094, 0
  %v4143 = vsel %vm274, %v4095, 0
  %v4146 = vsel %vm274, %v4096, 0
  %v4149 = vsel %vm274, %v4097, 0
  %v4152 = vsel %vm274, %v4098, 0
  %v4155 = vsel %vm274, %v4099, 0
  %v4158 = vsel %vm274, %v4100, 0
  %v4161 = vsel %vm274, %v4101, 0
  %v4164 = vsel %vm274, %v4102, 0
  %v4167 = vsel %vm274, %v4103, 0
  %v4170 = vsel %vm274, %v4104, 0
  %v4173 = vsel %vm274, %v4105, 0
  %v4176 = vsel %vm274, %v4106, 0
  %v4179 = vsel %vm274, %v4107, 0
  %v4182 = vsel %vm274, %v4108, 0
  %v4185 = vsel %vm274, %v4109, 0
  %v4188 = vsel %vm274, %v4110, 0
  %v4191 = vsel %vm274, %v4111, 0
  %v4194 = vsel %vm274, %v4112, 0
  %v4197 = vsel %vm274, %v4113, 0
  %v4200 = vsel %vm274, %v4114, 0
  %v4203 = vsel %vm274, %v4115, 0
  %v4206 = vsel %vm274, %v4116, 0
  %v4209 = vsel %vm274, %v4117, 0
  %v4212 = vsel %vm274, %v4118, 0
  %v4215 = vsel %vm274, %v4119, 0
  %v4218 = vsel %vm274, %v4120, 0
  %v4221 = vsel %vm274, %v4121, 0
  %v4224 = vsel %vm274, %v4122, 0
  %v4227 = vsel %vm274, %v4123, 0
  %v4230 = vsel %vm274, %v4124, 0
  %v4233 = vsel %vm274, %v4125, 0
  %v4236 = vsel %vm274, %v4126, 0
  %v4239 = vsel %vm274, %v4127, 0
  %v4242 = vsel %vm274, %v4128, 0
  %v4245 = vsel %vm274, %v4129, 0
  %v4248 = vsel %vm274, %v4130, 0
  %v4251 = vsel %vm274, %v4131, 0
  %v4254 = vsel %vm274, %v4132, 0
  %v4257 = vsel %vm274, %v4133, 0
  %v4260 = vsel %vm398, %v4135, 0
  %4262 = vmatprep.subr.bf16.mxu0 0
  %4263 = vmatpush1.bf16.msra.mxu0 %v4260
  %4264 = vmatprep.subr.bf16.mxu0 0
  %4265 = vmatpush1.bf16.msra.mxu0 0
  %4266 = vmatprep.subr.bf16.mxu0 0
  %4267 = vmatpush1.bf16.msra.mxu0 0
  %4268 = vmatprep.subr.bf16.mxu0 0
  %4269 = vmatpush1.bf16.msra.mxu0 0
  %4270 = vmatprep.subr.bf16.mxu0 0
  %4271 = vmatpush1.bf16.msra.mxu0 0
  %4272 = vmatprep.subr.bf16.mxu0 0
  %4273 = vmatpush1.bf16.msra.mxu0 0
  %4274 = vmatprep.subr.bf16.mxu0 0
  %4275 = vmatpush1.bf16.msra.mxu0 0
  %4276 = vmatprep.subr.bf16.mxu0 0
  %4277 = vmatpush1.bf16.msra.mxu0 0
  %4278 = vmatprep.subr.bf16.mxu0 0
  %4279 = vmatpush1.bf16.msra.mxu0 0
  %4280 = vmatprep.subr.bf16.mxu0 0
  %4281 = vmatpush1.bf16.msra.mxu0 0
  %4282 = vmatprep.subr.bf16.mxu0 0
  %4283 = vmatpush1.bf16.msra.mxu0 0
  %4284 = vmatprep.subr.bf16.mxu0 0
  %4285 = vmatpush1.bf16.msra.mxu0 0
  %4286 = vmatprep.subr.bf16.mxu0 0
  %4287 = vmatpush1.bf16.msra.mxu0 0
  %4288 = vmatprep.subr.bf16.mxu0 0
  %4289 = vmatpush1.bf16.msra.mxu0 0
  %4290 = vmatprep.subr.bf16.mxu0 0
  %4291 = vmatpush1.bf16.msra.mxu0 0
  %4292 = vmatprep.subr.bf16.mxu0 0
  %4293 = vmatpush1.bf16.msra.mxu0 0
  %4294 = vmatprep.mubr.bf16.mxu0 0
  %4295 = vmatmul.mubr.bf16.gmra.mrb[0].mxu0 %v4137
  %v4296 = vpop.f32.mrb[0].mxu0
  %v4297 = vadd.f32 0.0, %v4296
  %v4298 = vpop.f32.mrb[0].mxu0
  %v4299 = vpop.f32.mrb[0].mxu0
  %v4300 = vadd.f32 0.0, %v4299
  %v4301 = vpop.f32.mrb[0].mxu0
  %4302 = vmatprep.mubr.bf16.mxu0 0
  %4303 = vmatmul.mubr.bf16.gmra.mrb[0].mxu0 %v4140
  %v4304 = vpop.f32.mrb[0].mxu0
  %v4305 = vadd.f32 0.0, %v4304
  %v4306 = vpop.f32.mrb[0].mxu0
  %v4307 = vpop.f32.mrb[0].mxu0
  %v4308 = vadd.f32 0.0, %v4307
  %v4309 = vpop.f32.mrb[0].mxu0
  %4310 = vmatprep.mubr.bf16.mxu0 0
  %4311 = vmatmul.mubr.bf16.gmra.mrb[0].mxu0 %v4143
  %v4312 = vpop.f32.mrb[0].mxu0
  %v4313 = vadd.f32 0.0, %v4312
  %v4314 = vpop.f32.mrb[0].mxu0
  %v4315 = vpop.f32.mrb[0].mxu0
  %v4316 = vadd.f32 0.0, %v4315
  %v4317 = vpop.f32.mrb[0].mxu0
  %4318 = vmatprep.mubr.bf16.mxu0 0
  %4319 = vmatmul.mubr.bf16.gmra.mrb[0].mxu0 %v4146
  %v4320 = vpop.f32.mrb[0].mxu0
  %v4321 = vadd.f32 0.0, %v4320
  %v4322 = vpop.f32.mrb[0].mxu0
  %v4323 = vpop.f32.mrb[0].mxu0
  %v4324 = vadd.f32 0.0, %v4323
  %v4325 = vpop.f32.mrb[0].mxu0
  %4326 = vmatprep.mubr.bf16.mxu0 0
  %4327 = vmatmul.mubr.bf16.gmra.mrb[0].mxu0 %v4149
  %v4328 = vpop.f32.mrb[0].mxu0
  %v4329 = vadd.f32 0.0, %v4328
  %v4330 = vpop.f32.mrb[0].mxu0
  %v4331 = vpop.f32.mrb[0].mxu0
  %v4332 = vadd.f32 0.0, %v4331
  %v4333 = vpop.f32.mrb[0].mxu0
  %4334 = vmatprep.mubr.bf16.mxu0 0
  %4335 = vmatmul.mubr.bf16.gmra.mrb[0].mxu0 %v4152
  %v4336 = vpop.f32.mrb[0].mxu0
  %v4337 = vadd.f32 0.0, %v4336
  %v4338 = vpop.f32.mrb[0].mxu0
  %v4339 = vpop.f32.mrb[0].mxu0
  %v4340 = vadd.f32 0.0, %v4339
  %v4341 = vpop.f32.mrb[0].mxu0
  %4342 = vmatprep.mubr.bf16.mxu0 0
  %4343 = vmatmul.mubr.bf16.gmra.mrb[0].mxu0 %v4155
  %v4344 = vpop.f32.mrb[0].mxu0
  %v4345 = vadd.f32 0.0, %v4344
  %v4346 = vpop.f32.mrb[0].mxu0
  %v4347 = vpop.f32.mrb[0].mxu0
  %v4348 = vadd.f32 0.0, %v4347
  %v4349 = vpop.f32.mrb[0].mxu0
  %4350 = vmatprep.mubr.bf16.mxu0 0
  %4351 = vmatmul.mubr.bf16.gmra.mrb[0].mxu0 %v4158
  %v4352 = vpop.f32.mrb[0].mxu0
  %v4353 = vadd.f32 0.0, %v4352
  %v4354 = vpop.f32.mrb[0].mxu0
  %v4355 = vpop.f32.mrb[0].mxu0
  %v4356 = vadd.f32 0.0, %v4355
  %v4357 = vpop.f32.mrb[0].mxu0
  %4358 = vmatprep.mubr.bf16.mxu0 0
  %4359 = vmatmul.mubr.bf16.gmra.mrb[0].mxu0 %v4161
  %v4360 = vpop.f32.mrb[0].mxu0
  %v4361 = vadd.f32 0.0, %v4360
  %v4362 = vpop.f32.mrb[0].mxu0
  %v4363 = vpop.f32.mrb[0].mxu0
  %v4364 = vadd.f32 0.0, %v4363
  %v4365 = vpop.f32.mrb[0].mxu0
  %4366 = vmatprep.mubr.bf16.mxu0 0
  %4367 = vmatmul.mubr.bf16.gmra.mrb[0].mxu0 %v4164
  %v4368 = vpop.f32.mrb[0].mxu0
  %v4369 = vadd.f32 0.0, %v4368
  %v4370 = vpop.f32.mrb[0].mxu0
  %v4371 = vpop.f32.mrb[0].mxu0
  %v4372 = vadd.f32 0.0, %v4371
  %v4373 = vpop.f32.mrb[0].mxu0
  %4374 = vmatprep.mubr.bf16.mxu0 0
  %4375 = vmatmul.mubr.bf16.gmra.mrb[0].mxu0 %v4167
  %v4376 = vpop.f32.mrb[0].mxu0
  %v4377 = vadd.f32 0.0, %v4376
  %v4378 = vpop.f32.mrb[0].mxu0
  %v4379 = vpop.f32.mrb[0].mxu0
  %v4380 = vadd.f32 0.0, %v4379
  %v4381 = vpop.f32.mrb[0].mxu0
  %4382 = vmatprep.mubr.bf16.mxu0 0
  %4383 = vmatmul.mubr.bf16.gmra.mrb[0].mxu0 %v4170
  %v4384 = vpop.f32.mrb[0].mxu0
  %v4385 = vadd.f32 0.0, %v4384
  %v4386 = vpop.f32.mrb[0].mxu0
  %v4387 = vpop.f32.mrb[0].mxu0
  %v4388 = vadd.f32 0.0, %v4387
  %v4389 = vpop.f32.mrb[0].mxu0
  %4390 = vmatprep.mubr.bf16.mxu0 0
  %4391 = vmatmul.mubr.bf16.gmra.mrb[0].mxu0 %v4173
  %v4392 = vpop.f32.mrb[0].mxu0
  %v4393 = vadd.f32 0.0, %v4392
  %v4394 = vpop.f32.mrb[0].mxu0
  %v4395 = vpop.f32.mrb[0].mxu0
  %v4396 = vadd.f32 0.0, %v4395
  %v4397 = vpop.f32.mrb[0].mxu0
  %4398 = vmatprep.mubr.bf16.mxu0 0
  %4399 = vmatmul.mubr.bf16.gmra.mrb[0].mxu0 %v4176
  %v4400 = vpop.f32.mrb[0].mxu0
  %v4401 = vadd.f32 0.0, %v4400
  %v4402 = vpop.f32.mrb[0].mxu0
  %v4403 = vpop.f32.mrb[0].mxu0
  %v4404 = vadd.f32 0.0, %v4403
  %v4405 = vpop.f32.mrb[0].mxu0
  %4406 = vmatprep.mubr.bf16.mxu0 0
  %4407 = vmatmul.mubr.bf16.gmra.mrb[0].mxu0 %v4179
  %v4408 = vpop.f32.mrb[0].mxu0
  %v4409 = vadd.f32 0.0, %v4408
  %v4410 = vpop.f32.mrb[0].mxu0
  %v4411 = vpop.f32.mrb[0].mxu0
  %v4412 = vadd.f32 0.0, %v4411
  %v4413 = vpop.f32.mrb[0].mxu0
  %4414 = vmatprep.mubr.bf16.mxu0 0
  %4415 = vmatmul.mubr.bf16.gmra.mrb[0].mxu0 %v4182
  %v4416 = vpop.f32.mrb[0].mxu0
  %v4417 = vadd.f32 0.0, %v4416
  %v4418 = vpop.f32.mrb[0].mxu0
  %v4419 = vpop.f32.mrb[0].mxu0
  %v4420 = vadd.f32 0.0, %v4419
  %v4421 = vpop.f32.mrb[0].mxu0
  %4422 = vmatprep.mubr.bf16.mxu0 0
  %4423 = vmatmul.mubr.bf16.gmra.mrb[0].mxu0 %v4185
  %v4424 = vpop.f32.mrb[0].mxu0
  %v4425 = vadd.f32 0.0, %v4424
  %v4426 = vpop.f32.mrb[0].mxu0
  %v4427 = vpop.f32.mrb[0].mxu0
  %v4428 = vadd.f32 0.0, %v4427
  %v4429 = vpop.f32.mrb[0].mxu0
  %4430 = vmatprep.mubr.bf16.mxu0 0
  %4431 = vmatmul.mubr.bf16.gmra.mrb[0].mxu0 %v4188
  %v4432 = vpop.f32.mrb[0].mxu0
  %v4433 = vadd.f32 0.0, %v4432
  %v4434 = vpop.f32.mrb[0].mxu0
  %v4435 = vpop.f32.mrb[0].mxu0
  %v4436 = vadd.f32 0.0, %v4435
  %v4437 = vpop.f32.mrb[0].mxu0
  %4438 = vmatprep.mubr.bf16.mxu0 0
  %4439 = vmatmul.mubr.bf16.gmra.mrb[0].mxu0 %v4191
  %v4440 = vpop.f32.mrb[0].mxu0
  %v4441 = vadd.f32 0.0, %v4440
  %v4442 = vpop.f32.mrb[0].mxu0
  %v4443 = vpop.f32.mrb[0].mxu0
  %v4444 = vadd.f32 0.0, %v4443
  %v4445 = vpop.f32.mrb[0].mxu0
  %4446 = vmatprep.mubr.bf16.mxu0 0
  %4447 = vmatmul.mubr.bf16.gmra.mrb[0].mxu0 %v4194
  %v4448 = vpop.f32.mrb[0].mxu0
  %v4449 = vadd.f32 0.0, %v4448
  %v4450 = vpop.f32.mrb[0].mxu0
  %v4451 = vpop.f32.mrb[0].mxu0
  %v4452 = vadd.f32 0.0, %v4451
  %v4453 = vpop.f32.mrb[0].mxu0
  %4454 = vmatprep.mubr.bf16.mxu0 0
  %4455 = vmatmul.mubr.bf16.gmra.mrb[0].mxu0 %v4197
  %v4456 = vpop.f32.mrb[0].mxu0
  %v4457 = vadd.f32 0.0, %v4456
  %v4458 = vpop.f32.mrb[0].mxu0
  %v4459 = vpop.f32.mrb[0].mxu0
  %v4460 = vadd.f32 0.0, %v4459
  %v4461 = vpop.f32.mrb[0].mxu0
  %4462 = vmatprep.mubr.bf16.mxu0 0
  %4463 = vmatmul.mubr.bf16.gmra.mrb[0].mxu0 %v4200
  %v4464 = vpop.f32.mrb[0].mxu0
  %v4465 = vadd.f32 0.0, %v4464
  %v4466 = vpop.f32.mrb[0].mxu0
  %v4467 = vpop.f32.mrb[0].mxu0
  %v4468 = vadd.f32 0.0, %v4467
  %v4469 = vpop.f32.mrb[0].mxu0
  %4470 = vmatprep.mubr.bf16.mxu0 0
  %4471 = vmatmul.mubr.bf16.gmra.mrb[0].mxu0 %v4203
  %v4472 = vpop.f32.mrb[0].mxu0
  %v4473 = vadd.f32 0.0, %v4472
  %v4474 = vpop.f32.mrb[0].mxu0
  %v4475 = vpop.f32.mrb[0].mxu0
  %v4476 = vadd.f32 0.0, %v4475
  %v4477 = vpop.f32.mrb[0].mxu0
  %4478 = vmatprep.mubr.bf16.mxu0 0
  %4479 = vmatmul.mubr.bf16.gmra.mrb[0].mxu0 %v4206
  %v4480 = vpop.f32.mrb[0].mxu0
  %v4481 = vadd.f32 0.0, %v4480
  %v4482 = vpop.f32.mrb[0].mxu0
  %v4483 = vpop.f32.mrb[0].mxu0
  %v4484 = vadd.f32 0.0, %v4483
  %v4485 = vpop.f32.mrb[0].mxu0
  %4486 = vmatprep.mubr.bf16.mxu0 0
  %4487 = vmatmul.mubr.bf16.gmra.mrb[0].mxu0 %v4209
  %v4488 = vpop.f32.mrb[0].mxu0
  %v4489 = vadd.f32 0.0, %v4488
  %v4490 = vpop.f32.mrb[0].mxu0
  %v4491 = vpop.f32.mrb[0].mxu0
  %v4492 = vadd.f32 0.0, %v4491
  %v4493 = vpop.f32.mrb[0].mxu0
  %4494 = vmatprep.mubr.bf16.mxu0 0
  %4495 = vmatmul.mubr.bf16.gmra.mrb[0].mxu0 %v4212
  %v4496 = vpop.f32.mrb[0].mxu0
  %v4497 = vadd.f32 0.0, %v4496
  %v4498 = vpop.f32.mrb[0].mxu0
  %v4499 = vpop.f32.mrb[0].mxu0
  %v4500 = vadd.f32 0.0, %v4499
  %v4501 = vpop.f32.mrb[0].mxu0
  %4502 = vmatprep.mubr.bf16.mxu0 0
  %4503 = vmatmul.mubr.bf16.gmra.mrb[0].mxu0 %v4215
  %v4504 = vpop.f32.mrb[0].mxu0
  %v4505 = vadd.f32 0.0, %v4504
  %v4506 = vpop.f32.mrb[0].mxu0
  %v4507 = vpop.f32.mrb[0].mxu0
  %v4508 = vadd.f32 0.0, %v4507
  %v4509 = vpop.f32.mrb[0].mxu0
  %4510 = vmatprep.mubr.bf16.mxu0 0
  %4511 = vmatmul.mubr.bf16.gmra.mrb[0].mxu0 %v4218
  %v4512 = vpop.f32.mrb[0].mxu0
  %v4513 = vadd.f32 0.0, %v4512
  %v4514 = vpop.f32.mrb[0].mxu0
  %v4515 = vpop.f32.mrb[0].mxu0
  %v4516 = vadd.f32 0.0, %v4515
  %v4517 = vpop.f32.mrb[0].mxu0
  %4518 = vmatprep.mubr.bf16.mxu0 0
  %4519 = vmatmul.mubr.bf16.gmra.mrb[0].mxu0 %v4221
  %v4520 = vpop.f32.mrb[0].mxu0
  %v4521 = vadd.f32 0.0, %v4520
  %v4522 = vpop.f32.mrb[0].mxu0
  %v4523 = vpop.f32.mrb[0].mxu0
  %v4524 = vadd.f32 0.0, %v4523
  %v4525 = vpop.f32.mrb[0].mxu0
  %4526 = vmatprep.mubr.bf16.mxu0 0
  %4527 = vmatmul.mubr.bf16.gmra.mrb[0].mxu0 %v4224
  %v4528 = vpop.f32.mrb[0].mxu0
  %v4529 = vadd.f32 0.0, %v4528
  %v4530 = vpop.f32.mrb[0].mxu0
  %v4531 = vpop.f32.mrb[0].mxu0
  %v4532 = vadd.f32 0.0, %v4531
  %v4533 = vpop.f32.mrb[0].mxu0
  %4534 = vmatprep.mubr.bf16.mxu0 0
  %4535 = vmatmul.mubr.bf16.gmra.mrb[0].mxu0 %v4227
  %v4536 = vpop.f32.mrb[0].mxu0
  %v4537 = vadd.f32 0.0, %v4536
  %v4538 = vpop.f32.mrb[0].mxu0
  %v4539 = vpop.f32.mrb[0].mxu0
  %v4540 = vadd.f32 0.0, %v4539
  %v4541 = vpop.f32.mrb[0].mxu0
  %4542 = vmatprep.mubr.bf16.mxu0 0
  %4543 = vmatmul.mubr.bf16.gmra.mrb[0].mxu0 %v4230
  %v4544 = vpop.f32.mrb[0].mxu0
  %v4545 = vadd.f32 0.0, %v4544
  %v4546 = vpop.f32.mrb[0].mxu0
  %v4547 = vpop.f32.mrb[0].mxu0
  %v4548 = vadd.f32 0.0, %v4547
  %v4549 = vpop.f32.mrb[0].mxu0
  %4550 = vmatprep.mubr.bf16.mxu0 0
  %4551 = vmatmul.mubr.bf16.gmra.mrb[0].mxu0 %v4233
  %v4552 = vpop.f32.mrb[0].mxu0
  %v4553 = vadd.f32 0.0, %v4552
  %v4554 = vpop.f32.mrb[0].mxu0
  %v4555 = vpop.f32.mrb[0].mxu0
  %v4556 = vadd.f32 0.0, %v4555
  %v4557 = vpop.f32.mrb[0].mxu0
  %4558 = vmatprep.mubr.bf16.mxu0 0
  %4559 = vmatmul.mubr.bf16.gmra.mrb[0].mxu0 %v4236
  %v4560 = vpop.f32.mrb[0].mxu0
  %v4561 = vadd.f32 0.0, %v4560
  %v4562 = vpop.f32.mrb[0].mxu0
  %v4563 = vpop.f32.mrb[0].mxu0
  %v4564 = vadd.f32 0.0, %v4563
  %v4565 = vpop.f32.mrb[0].mxu0
  %4566 = vmatprep.mubr.bf16.mxu0 0
  %4567 = vmatmul.mubr.bf16.gmra.mrb[0].mxu0 %v4239
  %v4568 = vpop.f32.mrb[0].mxu0
  %v4569 = vadd.f32 0.0, %v4568
  %v4570 = vpop.f32.mrb[0].mxu0
  %v4571 = vpop.f32.mrb[0].mxu0
  %v4572 = vadd.f32 0.0, %v4571
  %v4573 = vpop.f32.mrb[0].mxu0
  %4574 = vmatprep.mubr.bf16.mxu0 0
  %4575 = vmatmul.mubr.bf16.gmra.mrb[0].mxu0 %v4242
  %v4576 = vpop.f32.mrb[0].mxu0
  %v4577 = vadd.f32 0.0, %v4576
  %v4578 = vpop.f32.mrb[0].mxu0
  %v4579 = vpop.f32.mrb[0].mxu0
  %v4580 = vadd.f32 0.0, %v4579
  %v4581 = vpop.f32.mrb[0].mxu0
  %4582 = vmatprep.mubr.bf16.mxu0 0
  %4583 = vmatmul.mubr.bf16.gmra.mrb[0].mxu0 %v4245
  %v4584 = vpop.f32.mrb[0].mxu0
  %v4585 = vadd.f32 0.0, %v4584
  %v4586 = vpop.f32.mrb[0].mxu0
  %v4587 = vpop.f32.mrb[0].mxu0
  %v4588 = vadd.f32 0.0, %v4587
  %v4589 = vpop.f32.mrb[0].mxu0
  %4590 = vmatprep.mubr.bf16.mxu0 0
  %4591 = vmatmul.mubr.bf16.gmra.mrb[0].mxu0 %v4248
  %v4592 = vpop.f32.mrb[0].mxu0
  %v4593 = vadd.f32 0.0, %v4592
  %v4594 = vpop.f32.mrb[0].mxu0
  %v4595 = vpop.f32.mrb[0].mxu0
  %v4596 = vadd.f32 0.0, %v4595
  %v4597 = vpop.f32.mrb[0].mxu0
  %4598 = vmatprep.mubr.bf16.mxu0 0
  %4599 = vmatmul.mubr.bf16.gmra.mrb[0].mxu0 %v4251
  %v4600 = vpop.f32.mrb[0].mxu0
  %v4601 = vadd.f32 0.0, %v4600
  %v4602 = vpop.f32.mrb[0].mxu0
  %v4603 = vpop.f32.mrb[0].mxu0
  %v4604 = vadd.f32 0.0, %v4603
  %v4605 = vpop.f32.mrb[0].mxu0
  %4606 = vmatprep.mubr.bf16.mxu0 0
  %4607 = vmatmul.mubr.bf16.gmra.mrb[0].mxu0 %v4254
  %v4608 = vpop.f32.mrb[0].mxu0
  %v4609 = vadd.f32 0.0, %v4608
  %v4610 = vpop.f32.mrb[0].mxu0
  %v4611 = vpop.f32.mrb[0].mxu0
  %v4612 = vadd.f32 0.0, %v4611
  %v4613 = vpop.f32.mrb[0].mxu0
  %4614 = vmatprep.mubr.bf16.mxu0 0
  %4615 = vmatmul.mubr.bf16.gmra.mrb[0].mxu0 %v4257
  %v4616 = vpop.f32.mrb[0].mxu0
  %v4617 = vadd.f32 0.0, %v4616
  %v4618 = vpop.f32.mrb[0].mxu0
  %v4619 = vpop.f32.mrb[0].mxu0
  %v4620 = vpop.f32.mrb[0].mxu0
  %4621 = vdwg.mxu0
  %v4622 = vadd.f32 %v3931, %v4297
  %v4623 = vadd.f32 %v3932, %v4300
  %v4624 = vadd.f32 %v3933, %v4305
  %v4625 = vadd.f32 %v3934, %v4308
  %v4626 = vadd.f32 %v3935, %v4313
  %v4627 = vadd.f32 %v3936, %v4316
  %v4628 = vadd.f32 %v3937, %v4321
  %v4629 = vadd.f32 %v3938, %v4324
  %v4630 = vadd.f32 %v3939, %v4329
  %v4631 = vadd.f32 %v3940, %v4332
  %v4632 = vadd.f32 %v3941, %v4337
  %v4633 = vadd.f32 %v3942, %v4340
  %v4634 = vadd.f32 %v3943, %v4345
  %v4635 = vadd.f32 %v3944, %v4348
  %v4636 = vadd.f32 %v3945, %v4353
  %v4637 = vadd.f32 %v3946, %v4356
  %v4638 = vadd.f32 %v3947, %v4361
  %v4639 = vadd.f32 %v3948, %v4364
  %v4640 = vadd.f32 %v3949, %v4369
  %v4641 = vadd.f32 %v3950, %v4372
  %v4642 = vadd.f32 %v3951, %v4377
  %v4643 = vadd.f32 %v3952, %v4380
  %v4644 = vadd.f32 %v3953, %v4385
  %v4645 = vadd.f32 %v3954, %v4388
  %v4646 = vadd.f32 %v3955, %v4393
  %v4647 = vadd.f32 %v3956, %v4396
  %v4648 = vadd.f32 %v3957, %v4401
  %v4649 = vadd.f32 %v3958, %v4404
  %v4650 = vadd.f32 %v3959, %v4409
  %v4651 = vadd.f32 %v3960, %v4412
  %v4652 = vadd.f32 %v3961, %v4417
  %v4653 = vadd.f32 %v3962, %v4420
  %v4654 = vadd.f32 %v3963, %v4425
  %v4655 = vadd.f32 %v3964, %v4428
  %v4656 = vadd.f32 %v3965, %v4433
  %v4657 = vadd.f32 %v3966, %v4436
  %v4658 = vadd.f32 %v3967, %v4441
  %v4659 = vadd.f32 %v3968, %v4444
  %v4660 = vadd.f32 %v3969, %v4449
  %v4661 = vadd.f32 %v3970, %v4452
  %v4662 = vadd.f32 %v3971, %v4457
  %v4663 = vadd.f32 %v3972, %v4460
  %v4664 = vadd.f32 %v3973, %v4465
  %v4665 = vadd.f32 %v3974, %v4468
  %v4666 = vadd.f32 %v3975, %v4473
  %v4667 = vadd.f32 %v3976, %v4476
  %v4668 = vadd.f32 %v3977, %v4481
  %v4669 = vadd.f32 %v3978, %v4484
  %v4670 = vadd.f32 %v3979, %v4489
  %v4671 = vadd.f32 %v3980, %v4492
  %v4672 = vadd.f32 %v3981, %v4497
  %v4673 = vadd.f32 %v3982, %v4500
  %v4674 = vadd.f32 %v3983, %v4505
  %v4675 = vadd.f32 %v3984, %v4508
  %v4676 = vadd.f32 %v3985, %v4513
  %v4677 = vadd.f32 %v3986, %v4516
  %v4678 = vadd.f32 %v3987, %v4521
  %v4679 = vadd.f32 %v3988, %v4524
  %v4680 = vadd.f32 %v3989, %v4529
  %v4681 = vadd.f32 %v3990, %v4532
  %v4682 = vadd.f32 %v3991, %v4537
  %v4683 = vadd.f32 %v3992, %v4540
  %v4684 = vadd.f32 %v3993, %v4545
  %v4685 = vadd.f32 %v3994, %v4548
  %v4686 = vadd.f32 %v3995, %v4553
  %v4687 = vadd.f32 %v3996, %v4556
  %v4688 = vadd.f32 %v3997, %v4561
  %v4689 = vadd.f32 %v3998, %v4564
  %v4690 = vadd.f32 %v3999, %v4569
  %v4691 = vadd.f32 %v4000, %v4572
  %v4692 = vadd.f32 %v4001, %v4577
  %v4693 = vadd.f32 %v4002, %v4580
  %v4694 = vadd.f32 %v4003, %v4585
  %v4695 = vadd.f32 %v4004, %v4588
  %v4696 = vadd.f32 %v4005, %v4593
  %v4697 = vadd.f32 %v4006, %v4596
  %v4698 = vadd.f32 %v4007, %v4601
  %v4699 = vadd.f32 %v4008, %v4604
  %v4700 = vadd.f32 %v4009, %v4609
  %v4701 = vadd.f32 %v4010, %v4612
  %v4702 = vadd.f32 %v4011, %v4617
  %v4703 = vld [vmem:[%s0 + $0x25] sm:$0xff]
  %v4704 = vld [vmem:[%s0 + $0x2d] sm:$0xff]
  %v4705 = vld [vmem:[%s0 + $0x35] sm:$0xff]
  %v4706 = vld [vmem:[%s0 + $0x3d] sm:$0xff]
  %v4707 = vld [vmem:[%s0 + $0x45] sm:$0xff]
  %v4708 = vld [vmem:[%s0 + $0x4d] sm:$0xff]
  %v4709 = vld [vmem:[%s0 + $0x55] sm:$0xff]
  %v4710 = vld [vmem:[%s0 + $0x5d] sm:$0xff]
  %v4711 = vld [vmem:[%s0 + $0x65] sm:$0xff]
  %v4712 = vld [vmem:[%s0 + $0x6d] sm:$0xff]
  %v4713 = vld [vmem:[%s0 + $0x75] sm:$0xff]
  %v4714 = vld [vmem:[%s0 + $0x7d] sm:$0xff]
  %v4715 = vld [vmem:[%s0 + $0x85] sm:$0xff]
  %v4716 = vld [vmem:[%s0 + $0x8d] sm:$0xff]
  %v4717 = vld [vmem:[%s0 + $0x95] sm:$0xff]
  %v4718 = vld [vmem:[%s0 + $0x9d] sm:$0xff]
  %v4719 = vld [vmem:[%s0 + $0xa5] sm:$0xff]
  %v4720 = vld [vmem:[%s0 + $0xad] sm:$0xff]
  %v4721 = vld [vmem:[%s0 + $0xb5] sm:$0xff]
  %v4722 = vld [vmem:[%s0 + $0xbd] sm:$0xff]
  %v4723 = vld [vmem:[%s0 + $0xc5] sm:$0xff]
  %v4724 = vld [vmem:[%s0 + $0xcd] sm:$0xff]
  %v4725 = vld [vmem:[%s0 + $0xd5] sm:$0xff]
  %v4726 = vld [vmem:[%s0 + $0xdd] sm:$0xff]
  %v4727 = vld [vmem:[%s0 + $0xe5] sm:$0xff]
  %v4728 = vld [vmem:[%s0 + $0xed] sm:$0xff]
  %v4729 = vld [vmem:[%s0 + $0xf5] sm:$0xff]
  %v4730 = vld [vmem:[%s0 + $0xfd] sm:$0xff]
  %v4731 = vld [vmem:[%s0 + $0x105] sm:$0xff]
  %v4732 = vld [vmem:[%s0 + $0x10d] sm:$0xff]
  %v4733 = vld [vmem:[%s0 + $0x115] sm:$0xff]
  %v4734 = vld [vmem:[%s0 + $0x11d] sm:$0xff]
  %v4735 = vld [vmem:[%s0 + $0x125] sm:$0xff]
  %v4736 = vld [vmem:[%s0 + $0x12d] sm:$0xff]
  %v4737 = vld [vmem:[%s0 + $0x135] sm:$0xff]
  %v4738 = vld [vmem:[%s0 + $0x13d] sm:$0xff]
  %v4739 = vld [vmem:[%s0 + $0x145] sm:$0xff]
  %v4740 = vld [vmem:[%s0 + $0x14d] sm:$0xff]
  %v4741 = vld [vmem:[%s0 + $0x155] sm:$0xff]
  %v4742 = vld [vmem:[%s0 + $0x15d] sm:$0xff]
  %v4743 = vld [vmem:[%s0 + $0x165] sm:$0xff]
  %v4744 = vld [vmem:[%s0 + $0x16d] sm:$0xff]
  %v4745 = vld [vmem:[%s0 + $0x175] sm:$0xff]
  %v4746 = vld [vmem:[%s0 + $0x17d] sm:$0xff]
  %v4747 = vld [vmem:[%s0 + $0x185] sm:$0xff]
  %v4748 = vld [vmem:[%s0 + $0x18d] sm:$0xff]
  %v4749 = vld [vmem:[%s0 + $0x195] sm:$0xff]
  %v4750 = vld [vmem:[%s0 + $0x19d] sm:$0xff]
  %v4751 = vld [vmem:[%s0 + $0x1a5] sm:$0xff]
  %v4752 = vld [vmem:[%s0 + $0x1ad] sm:$0xff]
  %v4753 = vld [vmem:[%s0 + $0x1b5] sm:$0xff]
  %v4754 = vld [vmem:[%s0 + $0x1bd] sm:$0xff]
  %v4755 = vld [vmem:[%s0 + $0x1c5] sm:$0xff]
  %v4756 = vld [vmem:[%s0 + $0x1cd] sm:$0xff]
  %v4757 = vld [vmem:[%s0 + $0x1d5] sm:$0xff]
  %v4758 = vld [vmem:[%s0 + $0x1dd] sm:$0xff]
  %v4759 = vld [vmem:[%s0 + $0x1e5] sm:$0xff]
  %v4760 = vld [vmem:[%s0 + $0x1ed] sm:$0xff]
  %v4761 = vld [vmem:[%s0 + $0x1f5] sm:$0xff]
  %v4762 = vld [vmem:[%s0 + $0x1fd] sm:$0xff]
  %v4763 = vld [vmem:[%s0 + $0x205] sm:$0xff]
  %v4764 = vld [vmem:[%s0 + $0x20d] sm:$0xff]
  %v4765 = vld [vmem:[%s0 + $0x215] sm:$0xff]
  %v4766 = vld [vmem:[%s0 + $0x21d] sm:$0xff]
  %v4767 = vld [vmem:[%s0 + $0x225] sm:$0xff]
  %v4768 = vld [vmem:[%s0 + $0x22d] sm:$0xff]
  %v4769 = vld [vmem:[%s0 + $0x235] sm:$0xff]
  %v4770 = vld [vmem:[%s0 + $0x23d] sm:$0xff]
  %v4771 = vld [vmem:[%s0 + $0x245] sm:$0xff]
  %v4772 = vld [vmem:[%s0 + $0x24d] sm:$0xff]
  %v4773 = vld [vmem:[%s0 + $0x255] sm:$0xff]
  %v4774 = vld [vmem:[%s0 + $0x25d] sm:$0xff]
  %v4775 = vld [vmem:[%s0 + $0x265] sm:$0xff]
  %v4776 = vld [vmem:[%s0 + $0x26d] sm:$0xff]
  %v4777 = vld [vmem:[%s0 + $0x275] sm:$0xff]
  %v4778 = vld [vmem:[%s0 + $0x27d] sm:$0xff]
  %v4779 = vld [vmem:[%s0 + $0x285] sm:$0xff]
  %v4780 = vld [vmem:[%s0 + $0x28d] sm:$0xff]
  %v4781 = vld [vmem:[%s0 + $0x295] sm:$0xff]
  %v4782 = vld [vmem:[%s0 + $0x29d] sm:$0xff]
  %v4783 = vld [vmem:[%s0 + $0x2a5] sm:$0xff]
  %v4784 = vpack.c.bf16 %v4704, %v4703
  %v4785 = vpack.c.bf16 %v4706, %v4705
  %v4786 = vpack.c.bf16 %v4708, %v4707
  %v4787 = vpack.c.bf16 %v4710, %v4709
  %v4788 = vpack.c.bf16 %v4712, %v4711
  %v4789 = vpack.c.bf16 %v4714, %v4713
  %v4790 = vpack.c.bf16 %v4716, %v4715
  %v4791 = vpack.c.bf16 %v4718, %v4717
  %v4792 = vpack.c.bf16 %v4720, %v4719
  %v4793 = vpack.c.bf16 %v4722, %v4721
  %v4794 = vpack.c.bf16 %v4724, %v4723
  %v4795 = vpack.c.bf16 %v4726, %v4725
  %v4796 = vpack.c.bf16 %v4728, %v4727
  %v4797 = vpack.c.bf16 %v4730, %v4729
  %v4798 = vpack.c.bf16 %v4732, %v4731
  %v4799 = vpack.c.bf16 %v4734, %v4733
  %v4800 = vpack.c.bf16 %v4736, %v4735
  %v4801 = vpack.c.bf16 %v4738, %v4737
  %v4802 = vpack.c.bf16 %v4740, %v4739
  %v4803 = vpack.c.bf16 %v4742, %v4741
  %v4804 = vpack.c.bf16 %v4744, %v4743
  %v4805 = vpack.c.bf16 %v4746, %v4745
  %v4806 = vpack.c.bf16 %v4748, %v4747
  %v4807 = vpack.c.bf16 %v4750, %v4749
  %v4808 = vpack.c.bf16 %v4752, %v4751
  %v4809 = vpack.c.bf16 %v4754, %v4753
  %v4810 = vpack.c.bf16 %v4756, %v4755
  %v4811 = vpack.c.bf16 %v4758, %v4757
  %v4812 = vpack.c.bf16 %v4760, %v4759
  %v4813 = vpack.c.bf16 %v4762, %v4761
  %v4814 = vpack.c.bf16 %v4764, %v4763
  %v4815 = vpack.c.bf16 %v4766, %v4765
  %v4816 = vpack.c.bf16 %v4768, %v4767
  %v4817 = vpack.c.bf16 %v4770, %v4769
  %v4818 = vpack.c.bf16 %v4772, %v4771
  %v4819 = vpack.c.bf16 %v4774, %v4773
  %v4820 = vpack.c.bf16 %v4776, %v4775
  %v4821 = vpack.c.bf16 %v4778, %v4777
  %v4822 = vpack.c.bf16 %v4780, %v4779
  %v4823 = vpack.c.bf16 %v4782, %v4781
  %v4824 = vpack.c.bf16 %v4783, %v4783
  %s4825 = scalar_lea.vmem %s1, 14
  %v4826 = vld [vmem:[%s4825] sm:$0x3]
  %v4828 = vsel %vm274, %v4784, 0
  %v4831 = vsel %vm274, %v4785, 0
  %v4834 = vsel %vm274, %v4786, 0
  %v4837 = vsel %vm274, %v4787, 0
  %v4840 = vsel %vm274, %v4788, 0
  %v4843 = vsel %vm274, %v4789, 0
  %v4846 = vsel %vm274, %v4790, 0
  %v4849 = vsel %vm274, %v4791, 0
  %v4852 = vsel %vm274, %v4792, 0
  %v4855 = vsel %vm274, %v4793, 0
  %v4858 = vsel %vm274, %v4794, 0
  %v4861 = vsel %vm274, %v4795, 0
  %v4864 = vsel %vm274, %v4796, 0
  %v4867 = vsel %vm274, %v4797, 0
  %v4870 = vsel %vm274, %v4798, 0
  %v4873 = vsel %vm274, %v4799, 0
  %v4876 = vsel %vm274, %v4800, 0
  %v4879 = vsel %vm274, %v4801, 0
  %v4882 = vsel %vm274, %v4802, 0
  %v4885 = vsel %vm274, %v4803, 0
  %v4888 = vsel %vm274, %v4804, 0
  %v4891 = vsel %vm274, %v4805, 0
  %v4894 = vsel %vm274, %v4806, 0
  %v4897 = vsel %vm274, %v4807, 0
  %v4900 = vsel %vm274, %v4808, 0
  %v4903 = vsel %vm274, %v4809, 0
  %v4906 = vsel %vm274, %v4810, 0
  %v4909 = vsel %vm274, %v4811, 0
  %v4912 = vsel %vm274, %v4812, 0
  %v4915 = vsel %vm274, %v4813, 0
  %v4918 = vsel %vm274, %v4814, 0
  %v4921 = vsel %vm274, %v4815, 0
  %v4924 = vsel %vm274, %v4816, 0
  %v4927 = vsel %vm274, %v4817, 0
  %v4930 = vsel %vm274, %v4818, 0
  %v4933 = vsel %vm274, %v4819, 0
  %v4936 = vsel %vm274, %v4820, 0
  %v4939 = vsel %vm274, %v4821, 0
  %v4942 = vsel %vm274, %v4822, 0
  %v4945 = vsel %vm274, %v4823, 0
  %v4948 = vsel %vm274, %v4824, 0
  %v4951 = vsel %vm398, %v4826, 0
  %4953 = vmatprep.subr.bf16.mxu0 0
  %4954 = vmatpush1.bf16.msra.mxu0 %v4951
  %4955 = vmatprep.subr.bf16.mxu0 0
  %4956 = vmatpush1.bf16.msra.mxu0 0
  %4957 = vmatprep.subr.bf16.mxu0 0
  %4958 = vmatpush1.bf16.msra.mxu0 0
  %4959 = vmatprep.subr.bf16.mxu0 0
  %4960 = vmatpush1.bf16.msra.mxu0 0
  %4961 = vmatprep.subr.bf16.mxu0 0
  %4962 = vmatpush1.bf16.msra.mxu0 0
  %4963 = vmatprep.subr.bf16.mxu0 0
  %4964 = vmatpush1.bf16.msra.mxu0 0
  %4965 = vmatprep.subr.bf16.mxu0 0
  %4966 = vmatpush1.bf16.msra.mxu0 0
  %4967 = vmatprep.subr.bf16.mxu0 0
  %4968 = vmatpush1.bf16.msra.mxu0 0
  %4969 = vmatprep.subr.bf16.mxu0 0
  %4970 = vmatpush1.bf16.msra.mxu0 0
  %4971 = vmatprep.subr.bf16.mxu0 0
  %4972 = vmatpush1.bf16.msra.mxu0 0
  %4973 = vmatprep.subr.bf16.mxu0 0
  %4974 = vmatpush1.bf16.msra.mxu0 0
  %4975 = vmatprep.subr.bf16.mxu0 0
  %4976 = vmatpush1.bf16.msra.mxu0 0
  %4977 = vmatprep.subr.bf16.mxu0 0
  %4978 = vmatpush1.bf16.msra.mxu0 0
  %4979 = vmatprep.subr.bf16.mxu0 0
  %4980 = vmatpush1.bf16.msra.mxu0 0
  %4981 = vmatprep.subr.bf16.mxu0 0
  %4982 = vmatpush1.bf16.msra.mxu0 0
  %4983 = vmatprep.subr.bf16.mxu0 0
  %4984 = vmatpush1.bf16.msra.mxu0 0
  %4985 = vmatprep.mubr.bf16.mxu0 0
  %4986 = vmatmul.mubr.bf16.gmra.mrb[0].mxu0 %v4828
  %v4987 = vpop.f32.mrb[0].mxu0
  %v4988 = vadd.f32 0.0, %v4987
  %v4989 = vpop.f32.mrb[0].mxu0
  %v4990 = vpop.f32.mrb[0].mxu0
  %v4991 = vadd.f32 0.0, %v4990
  %v4992 = vpop.f32.mrb[0].mxu0
  %4993 = vmatprep.mubr.bf16.mxu0 0
  %4994 = vmatmul.mubr.bf16.gmra.mrb[0].mxu0 %v4831
  %v4995 = vpop.f32.mrb[0].mxu0
  %v4996 = vadd.f32 0.0, %v4995
  %v4997 = vpop.f32.mrb[0].mxu0
  %v4998 = vpop.f32.mrb[0].mxu0
  %v4999 = vadd.f32 0.0, %v4998
  %v5000 = vpop.f32.mrb[0].mxu0
  %5001 = vmatprep.mubr.bf16.mxu0 0
  %5002 = vmatmul.mubr.bf16.gmra.mrb[0].mxu0 %v4834
  %v5003 = vpop.f32.mrb[0].mxu0
  %v5004 = vadd.f32 0.0, %v5003
  %v5005 = vpop.f32.mrb[0].mxu0
  %v5006 = vpop.f32.mrb[0].mxu0
  %v5007 = vadd.f32 0.0, %v5006
  %v5008 = vpop.f32.mrb[0].mxu0
  %5009 = vmatprep.mubr.bf16.mxu0 0
  %5010 = vmatmul.mubr.bf16.gmra.mrb[0].mxu0 %v4837
  %v5011 = vpop.f32.mrb[0].mxu0
  %v5012 = vadd.f32 0.0, %v5011
  %v5013 = vpop.f32.mrb[0].mxu0
  %v5014 = vpop.f32.mrb[0].mxu0
  %v5015 = vadd.f32 0.0, %v5014
  %v5016 = vpop.f32.mrb[0].mxu0
  %5017 = vmatprep.mubr.bf16.mxu0 0
  %5018 = vmatmul.mubr.bf16.gmra.mrb[0].mxu0 %v4840
  %v5019 = vpop.f32.mrb[0].mxu0
  %v5020 = vadd.f32 0.0, %v5019
  %v5021 = vpop.f32.mrb[0].mxu0
  %v5022 = vpop.f32.mrb[0].mxu0
  %v5023 = vadd.f32 0.0, %v5022
  %v5024 = vpop.f32.mrb[0].mxu0
  %5025 = vmatprep.mubr.bf16.mxu0 0
  %5026 = vmatmul.mubr.bf16.gmra.mrb[0].mxu0 %v4843
  %v5027 = vpop.f32.mrb[0].mxu0
  %v5028 = vadd.f32 0.0, %v5027
  %v5029 = vpop.f32.mrb[0].mxu0
  %v5030 = vpop.f32.mrb[0].mxu0
  %v5031 = vadd.f32 0.0, %v5030
  %v5032 = vpop.f32.mrb[0].mxu0
  %5033 = vmatprep.mubr.bf16.mxu0 0
  %5034 = vmatmul.mubr.bf16.gmra.mrb[0].mxu0 %v4846
  %v5035 = vpop.f32.mrb[0].mxu0
  %v5036 = vadd.f32 0.0, %v5035
  %v5037 = vpop.f32.mrb[0].mxu0
  %v5038 = vpop.f32.mrb[0].mxu0
  %v5039 = vadd.f32 0.0, %v5038
  %v5040 = vpop.f32.mrb[0].mxu0
  %5041 = vmatprep.mubr.bf16.mxu0 0
  %5042 = vmatmul.mubr.bf16.gmra.mrb[0].mxu0 %v4849
  %v5043 = vpop.f32.mrb[0].mxu0
  %v5044 = vadd.f32 0.0, %v5043
  %v5045 = vpop.f32.mrb[0].mxu0
  %v5046 = vpop.f32.mrb[0].mxu0
  %v5047 = vadd.f32 0.0, %v5046
  %v5048 = vpop.f32.mrb[0].mxu0
  %5049 = vmatprep.mubr.bf16.mxu0 0
  %5050 = vmatmul.mubr.bf16.gmra.mrb[0].mxu0 %v4852
  %v5051 = vpop.f32.mrb[0].mxu0
  %v5052 = vadd.f32 0.0, %v5051
  %v5053 = vpop.f32.mrb[0].mxu0
  %v5054 = vpop.f32.mrb[0].mxu0
  %v5055 = vadd.f32 0.0, %v5054
  %v5056 = vpop.f32.mrb[0].mxu0
  %5057 = vmatprep.mubr.bf16.mxu0 0
  %5058 = vmatmul.mubr.bf16.gmra.mrb[0].mxu0 %v4855
  %v5059 = vpop.f32.mrb[0].mxu0
  %v5060 = vadd.f32 0.0, %v5059
  %v5061 = vpop.f32.mrb[0].mxu0
  %v5062 = vpop.f32.mrb[0].mxu0
  %v5063 = vadd.f32 0.0, %v5062
  %v5064 = vpop.f32.mrb[0].mxu0
  %5065 = vmatprep.mubr.bf16.mxu0 0
  %5066 = vmatmul.mubr.bf16.gmra.mrb[0].mxu0 %v4858
  %v5067 = vpop.f32.mrb[0].mxu0
  %v5068 = vadd.f32 0.0, %v5067
  %v5069 = vpop.f32.mrb[0].mxu0
  %v5070 = vpop.f32.mrb[0].mxu0
  %v5071 = vadd.f32 0.0, %v5070
  %v5072 = vpop.f32.mrb[0].mxu0
  %5073 = vmatprep.mubr.bf16.mxu0 0
  %5074 = vmatmul.mubr.bf16.gmra.mrb[0].mxu0 %v4861
  %v5075 = vpop.f32.mrb[0].mxu0
  %v5076 = vadd.f32 0.0, %v5075
  %v5077 = vpop.f32.mrb[0].mxu0
  %v5078 = vpop.f32.mrb[0].mxu0
  %v5079 = vadd.f32 0.0, %v5078
  %v5080 = vpop.f32.mrb[0].mxu0
  %5081 = vmatprep.mubr.bf16.mxu0 0
  %5082 = vmatmul.mubr.bf16.gmra.mrb[0].mxu0 %v4864
  %v5083 = vpop.f32.mrb[0].mxu0
  %v5084 = vadd.f32 0.0, %v5083
  %v5085 = vpop.f32.mrb[0].mxu0
  %v5086 = vpop.f32.mrb[0].mxu0
  %v5087 = vadd.f32 0.0, %v5086
  %v5088 = vpop.f32.mrb[0].mxu0
  %5089 = vmatprep.mubr.bf16.mxu0 0
  %5090 = vmatmul.mubr.bf16.gmra.mrb[0].mxu0 %v4867
  %v5091 = vpop.f32.mrb[0].mxu0
  %v5092 = vadd.f32 0.0, %v5091
  %v5093 = vpop.f32.mrb[0].mxu0
  %v5094 = vpop.f32.mrb[0].mxu0
  %v5095 = vadd.f32 0.0, %v5094
  %v5096 = vpop.f32.mrb[0].mxu0
  %5097 = vmatprep.mubr.bf16.mxu0 0
  %5098 = vmatmul.mubr.bf16.gmra.mrb[0].mxu0 %v4870
  %v5099 = vpop.f32.mrb[0].mxu0
  %v5100 = vadd.f32 0.0, %v5099
  %v5101 = vpop.f32.mrb[0].mxu0
  %v5102 = vpop.f32.mrb[0].mxu0
  %v5103 = vadd.f32 0.0, %v5102
  %v5104 = vpop.f32.mrb[0].mxu0
  %5105 = vmatprep.mubr.bf16.mxu0 0
  %5106 = vmatmul.mubr.bf16.gmra.mrb[0].mxu0 %v4873
  %v5107 = vpop.f32.mrb[0].mxu0
  %v5108 = vadd.f32 0.0, %v5107
  %v5109 = vpop.f32.mrb[0].mxu0
  %v5110 = vpop.f32.mrb[0].mxu0
  %v5111 = vadd.f32 0.0, %v5110
  %v5112 = vpop.f32.mrb[0].mxu0
  %5113 = vmatprep.mubr.bf16.mxu0 0
  %5114 = vmatmul.mubr.bf16.gmra.mrb[0].mxu0 %v4876
  %v5115 = vpop.f32.mrb[0].mxu0
  %v5116 = vadd.f32 0.0, %v5115
  %v5117 = vpop.f32.mrb[0].mxu0
  %v5118 = vpop.f32.mrb[0].mxu0
  %v5119 = vadd.f32 0.0, %v5118
  %v5120 = vpop.f32.mrb[0].mxu0
  %5121 = vmatprep.mubr.bf16.mxu0 0
  %5122 = vmatmul.mubr.bf16.gmra.mrb[0].mxu0 %v4879
  %v5123 = vpop.f32.mrb[0].mxu0
  %v5124 = vadd.f32 0.0, %v5123
  %v5125 = vpop.f32.mrb[0].mxu0
  %v5126 = vpop.f32.mrb[0].mxu0
  %v5127 = vadd.f32 0.0, %v5126
  %v5128 = vpop.f32.mrb[0].mxu0
  %5129 = vmatprep.mubr.bf16.mxu0 0
  %5130 = vmatmul.mubr.bf16.gmra.mrb[0].mxu0 %v4882
  %v5131 = vpop.f32.mrb[0].mxu0
  %v5132 = vadd.f32 0.0, %v5131
  %v5133 = vpop.f32.mrb[0].mxu0
  %v5134 = vpop.f32.mrb[0].mxu0
  %v5135 = vadd.f32 0.0, %v5134
  %v5136 = vpop.f32.mrb[0].mxu0
  %5137 = vmatprep.mubr.bf16.mxu0 0
  %5138 = vmatmul.mubr.bf16.gmra.mrb[0].mxu0 %v4885
  %v5139 = vpop.f32.mrb[0].mxu0
  %v5140 = vadd.f32 0.0, %v5139
  %v5141 = vpop.f32.mrb[0].mxu0
  %v5142 = vpop.f32.mrb[0].mxu0
  %v5143 = vadd.f32 0.0, %v5142
  %v5144 = vpop.f32.mrb[0].mxu0
  %5145 = vmatprep.mubr.bf16.mxu0 0
  %5146 = vmatmul.mubr.bf16.gmra.mrb[0].mxu0 %v4888
  %v5147 = vpop.f32.mrb[0].mxu0
  %v5148 = vadd.f32 0.0, %v5147
  %v5149 = vpop.f32.mrb[0].mxu0
  %v5150 = vpop.f32.mrb[0].mxu0
  %v5151 = vadd.f32 0.0, %v5150
  %v5152 = vpop.f32.mrb[0].mxu0
  %5153 = vmatprep.mubr.bf16.mxu0 0
  %5154 = vmatmul.mubr.bf16.gmra.mrb[0].mxu0 %v4891
  %v5155 = vpop.f32.mrb[0].mxu0
  %v5156 = vadd.f32 0.0, %v5155
  %v5157 = vpop.f32.mrb[0].mxu0
  %v5158 = vpop.f32.mrb[0].mxu0
  %v5159 = vadd.f32 0.0, %v5158
  %v5160 = vpop.f32.mrb[0].mxu0
  %5161 = vmatprep.mubr.bf16.mxu0 0
  %5162 = vmatmul.mubr.bf16.gmra.mrb[0].mxu0 %v4894
  %v5163 = vpop.f32.mrb[0].mxu0
  %v5164 = vadd.f32 0.0, %v5163
  %v5165 = vpop.f32.mrb[0].mxu0
  %v5166 = vpop.f32.mrb[0].mxu0
  %v5167 = vadd.f32 0.0, %v5166
  %v5168 = vpop.f32.mrb[0].mxu0
  %5169 = vmatprep.mubr.bf16.mxu0 0
  %5170 = vmatmul.mubr.bf16.gmra.mrb[0].mxu0 %v4897
  %v5171 = vpop.f32.mrb[0].mxu0
  %v5172 = vadd.f32 0.0, %v5171
  %v5173 = vpop.f32.mrb[0].mxu0
  %v5174 = vpop.f32.mrb[0].mxu0
  %v5175 = vadd.f32 0.0, %v5174
  %v5176 = vpop.f32.mrb[0].mxu0
  %5177 = vmatprep.mubr.bf16.mxu0 0
  %5178 = vmatmul.mubr.bf16.gmra.mrb[0].mxu0 %v4900
  %v5179 = vpop.f32.mrb[0].mxu0
  %v5180 = vadd.f32 0.0, %v5179
  %v5181 = vpop.f32.mrb[0].mxu0
  %v5182 = vpop.f32.mrb[0].mxu0
  %v5183 = vadd.f32 0.0, %v5182
  %v5184 = vpop.f32.mrb[0].mxu0
  %5185 = vmatprep.mubr.bf16.mxu0 0
  %5186 = vmatmul.mubr.bf16.gmra.mrb[0].mxu0 %v4903
  %v5187 = vpop.f32.mrb[0].mxu0
  %v5188 = vadd.f32 0.0, %v5187
  %v5189 = vpop.f32.mrb[0].mxu0
  %v5190 = vpop.f32.mrb[0].mxu0
  %v5191 = vadd.f32 0.0, %v5190
  %v5192 = vpop.f32.mrb[0].mxu0
  %5193 = vmatprep.mubr.bf16.mxu0 0
  %5194 = vmatmul.mubr.bf16.gmra.mrb[0].mxu0 %v4906
  %v5195 = vpop.f32.mrb[0].mxu0
  %v5196 = vadd.f32 0.0, %v5195
  %v5197 = vpop.f32.mrb[0].mxu0
  %v5198 = vpop.f32.mrb[0].mxu0
  %v5199 = vadd.f32 0.0, %v5198
  %v5200 = vpop.f32.mrb[0].mxu0
  %5201 = vmatprep.mubr.bf16.mxu0 0
  %5202 = vmatmul.mubr.bf16.gmra.mrb[0].mxu0 %v4909
  %v5203 = vpop.f32.mrb[0].mxu0
  %v5204 = vadd.f32 0.0, %v5203
  %v5205 = vpop.f32.mrb[0].mxu0
  %v5206 = vpop.f32.mrb[0].mxu0
  %v5207 = vadd.f32 0.0, %v5206
  %v5208 = vpop.f32.mrb[0].mxu0
  %5209 = vmatprep.mubr.bf16.mxu0 0
  %5210 = vmatmul.mubr.bf16.gmra.mrb[0].mxu0 %v4912
  %v5211 = vpop.f32.mrb[0].mxu0
  %v5212 = vadd.f32 0.0, %v5211
  %v5213 = vpop.f32.mrb[0].mxu0
  %v5214 = vpop.f32.mrb[0].mxu0
  %v5215 = vadd.f32 0.0, %v5214
  %v5216 = vpop.f32.mrb[0].mxu0
  %5217 = vmatprep.mubr.bf16.mxu0 0
  %5218 = vmatmul.mubr.bf16.gmra.mrb[0].mxu0 %v4915
  %v5219 = vpop.f32.mrb[0].mxu0
  %v5220 = vadd.f32 0.0, %v5219
  %v5221 = vpop.f32.mrb[0].mxu0
  %v5222 = vpop.f32.mrb[0].mxu0
  %v5223 = vadd.f32 0.0, %v5222
  %v5224 = vpop.f32.mrb[0].mxu0
  %5225 = vmatprep.mubr.bf16.mxu0 0
  %5226 = vmatmul.mubr.bf16.gmra.mrb[0].mxu0 %v4918
  %v5227 = vpop.f32.mrb[0].mxu0
  %v5228 = vadd.f32 0.0, %v5227
  %v5229 = vpop.f32.mrb[0].mxu0
  %v5230 = vpop.f32.mrb[0].mxu0
  %v5231 = vadd.f32 0.0, %v5230
  %v5232 = vpop.f32.mrb[0].mxu0
  %5233 = vmatprep.mubr.bf16.mxu0 0
  %5234 = vmatmul.mubr.bf16.gmra.mrb[0].mxu0 %v4921
  %v5235 = vpop.f32.mrb[0].mxu0
  %v5236 = vadd.f32 0.0, %v5235
  %v5237 = vpop.f32.mrb[0].mxu0
  %v5238 = vpop.f32.mrb[0].mxu0
  %v5239 = vadd.f32 0.0, %v5238
  %v5240 = vpop.f32.mrb[0].mxu0
  %5241 = vmatprep.mubr.bf16.mxu0 0
  %5242 = vmatmul.mubr.bf16.gmra.mrb[0].mxu0 %v4924
  %v5243 = vpop.f32.mrb[0].mxu0
  %v5244 = vadd.f32 0.0, %v5243
  %v5245 = vpop.f32.mrb[0].mxu0
  %v5246 = vpop.f32.mrb[0].mxu0
  %v5247 = vadd.f32 0.0, %v5246
  %v5248 = vpop.f32.mrb[0].mxu0
  %5249 = vmatprep.mubr.bf16.mxu0 0
  %5250 = vmatmul.mubr.bf16.gmra.mrb[0].mxu0 %v4927
  %v5251 = vpop.f32.mrb[0].mxu0
  %v5252 = vadd.f32 0.0, %v5251
  %v5253 = vpop.f32.mrb[0].mxu0
  %v5254 = vpop.f32.mrb[0].mxu0
  %v5255 = vadd.f32 0.0, %v5254
  %v5256 = vpop.f32.mrb[0].mxu0
  %5257 = vmatprep.mubr.bf16.mxu0 0
  %5258 = vmatmul.mubr.bf16.gmra.mrb[0].mxu0 %v4930
  %v5259 = vpop.f32.mrb[0].mxu0
  %v5260 = vadd.f32 0.0, %v5259
  %v5261 = vpop.f32.mrb[0].mxu0
  %v5262 = vpop.f32.mrb[0].mxu0
  %v5263 = vadd.f32 0.0, %v5262
  %v5264 = vpop.f32.mrb[0].mxu0
  %5265 = vmatprep.mubr.bf16.mxu0 0
  %5266 = vmatmul.mubr.bf16.gmra.mrb[0].mxu0 %v4933
  %v5267 = vpop.f32.mrb[0].mxu0
  %v5268 = vadd.f32 0.0, %v5267
  %v5269 = vpop.f32.mrb[0].mxu0
  %v5270 = vpop.f32.mrb[0].mxu0
  %v5271 = vadd.f32 0.0, %v5270
  %v5272 = vpop.f32.mrb[0].mxu0
  %5273 = vmatprep.mubr.bf16.mxu0 0
  %5274 = vmatmul.mubr.bf16.gmra.mrb[0].mxu0 %v4936
  %v5275 = vpop.f32.mrb[0].mxu0
  %v5276 = vadd.f32 0.0, %v5275
  %v5277 = vpop.f32.mrb[0].mxu0
  %v5278 = vpop.f32.mrb[0].mxu0
  %v5279 = vadd.f32 0.0, %v5278
  %v5280 = vpop.f32.mrb[0].mxu0
  %5281 = vmatprep.mubr.bf16.mxu0 0
  %5282 = vmatmul.mubr.bf16.gmra.mrb[0].mxu0 %v4939
  %v5283 = vpop.f32.mrb[0].mxu0
  %v5284 = vadd.f32 0.0, %v5283
  %v5285 = vpop.f32.mrb[0].mxu0
  %v5286 = vpop.f32.mrb[0].mxu0
  %v5287 = vadd.f32 0.0, %v5286
  %v5288 = vpop.f32.mrb[0].mxu0
  %5289 = vmatprep.mubr.bf16.mxu0 0
  %5290 = vmatmul.mubr.bf16.gmra.mrb[0].mxu0 %v4942
  %v5291 = vpop.f32.mrb[0].mxu0
  %v5292 = vadd.f32 0.0, %v5291
  %v5293 = vpop.f32.mrb[0].mxu0
  %v5294 = vpop.f32.mrb[0].mxu0
  %v5295 = vadd.f32 0.0, %v5294
  %v5296 = vpop.f32.mrb[0].mxu0
  %5297 = vmatprep.mubr.bf16.mxu0 0
  %5298 = vmatmul.mubr.bf16.gmra.mrb[0].mxu0 %v4945
  %v5299 = vpop.f32.mrb[0].mxu0
  %v5300 = vadd.f32 0.0, %v5299
  %v5301 = vpop.f32.mrb[0].mxu0
  %v5302 = vpop.f32.mrb[0].mxu0
  %v5303 = vadd.f32 0.0, %v5302
  %v5304 = vpop.f32.mrb[0].mxu0
  %5305 = vmatprep.mubr.bf16.mxu0 0
  %5306 = vmatmul.mubr.bf16.gmra.mrb[0].mxu0 %v4948
  %v5307 = vpop.f32.mrb[0].mxu0
  %v5308 = vadd.f32 0.0, %v5307
  %v5309 = vpop.f32.mrb[0].mxu0
  %v5310 = vpop.f32.mrb[0].mxu0
  %v5311 = vpop.f32.mrb[0].mxu0
  %5312 = vdwg.mxu0
  %v5313 = vadd.f32 %v4622, %v4988
  %v5314 = vadd.f32 %v4623, %v4991
  %v5315 = vadd.f32 %v4624, %v4996
  %v5316 = vadd.f32 %v4625, %v4999
  %v5317 = vadd.f32 %v4626, %v5004
  %v5318 = vadd.f32 %v4627, %v5007
  %v5319 = vadd.f32 %v4628, %v5012
  %v5320 = vadd.f32 %v4629, %v5015
  %v5321 = vadd.f32 %v4630, %v5020
  %v5322 = vadd.f32 %v4631, %v5023
  %v5323 = vadd.f32 %v4632, %v5028
  %v5324 = vadd.f32 %v4633, %v5031
  %v5325 = vadd.f32 %v4634, %v5036
  %v5326 = vadd.f32 %v4635, %v5039
  %v5327 = vadd.f32 %v4636, %v5044
  %v5328 = vadd.f32 %v4637, %v5047
  %v5329 = vadd.f32 %v4638, %v5052
  %v5330 = vadd.f32 %v4639, %v5055
  %v5331 = vadd.f32 %v4640, %v5060
  %v5332 = vadd.f32 %v4641, %v5063
  %v5333 = vadd.f32 %v4642, %v5068
  %v5334 = vadd.f32 %v4643, %v5071
  %v5335 = vadd.f32 %v4644, %v5076
  %v5336 = vadd.f32 %v4645, %v5079
  %v5337 = vadd.f32 %v4646, %v5084
  %v5338 = vadd.f32 %v4647, %v5087
  %v5339 = vadd.f32 %v4648, %v5092
  %v5340 = vadd.f32 %v4649, %v5095
  %v5341 = vadd.f32 %v4650, %v5100
  %v5342 = vadd.f32 %v4651, %v5103
  %v5343 = vadd.f32 %v4652, %v5108
  %v5344 = vadd.f32 %v4653, %v5111
  %v5345 = vadd.f32 %v4654, %v5116
  %v5346 = vadd.f32 %v4655, %v5119
  %v5347 = vadd.f32 %v4656, %v5124
  %v5348 = vadd.f32 %v4657, %v5127
  %v5349 = vadd.f32 %v4658, %v5132
  %v5350 = vadd.f32 %v4659, %v5135
  %v5351 = vadd.f32 %v4660, %v5140
  %v5352 = vadd.f32 %v4661, %v5143
  %v5353 = vadd.f32 %v4662, %v5148
  %v5354 = vadd.f32 %v4663, %v5151
  %v5355 = vadd.f32 %v4664, %v5156
  %v5356 = vadd.f32 %v4665, %v5159
  %v5357 = vadd.f32 %v4666, %v5164
  %v5358 = vadd.f32 %v4667, %v5167
  %v5359 = vadd.f32 %v4668, %v5172
  %v5360 = vadd.f32 %v4669, %v5175
  %v5361 = vadd.f32 %v4670, %v5180
  %v5362 = vadd.f32 %v4671, %v5183
  %v5363 = vadd.f32 %v4672, %v5188
  %v5364 = vadd.f32 %v4673, %v5191
  %v5365 = vadd.f32 %v4674, %v5196
  %v5366 = vadd.f32 %v4675, %v5199
  %v5367 = vadd.f32 %v4676, %v5204
  %v5368 = vadd.f32 %v4677, %v5207
  %v5369 = vadd.f32 %v4678, %v5212
  %v5370 = vadd.f32 %v4679, %v5215
  %v5371 = vadd.f32 %v4680, %v5220
  %v5372 = vadd.f32 %v4681, %v5223
  %v5373 = vadd.f32 %v4682, %v5228
  %v5374 = vadd.f32 %v4683, %v5231
  %v5375 = vadd.f32 %v4684, %v5236
  %v5376 = vadd.f32 %v4685, %v5239
  %v5377 = vadd.f32 %v4686, %v5244
  %v5378 = vadd.f32 %v4687, %v5247
  %v5379 = vadd.f32 %v4688, %v5252
  %v5380 = vadd.f32 %v4689, %v5255
  %v5381 = vadd.f32 %v4690, %v5260
  %v5382 = vadd.f32 %v4691, %v5263
  %v5383 = vadd.f32 %v4692, %v5268
  %v5384 = vadd.f32 %v4693, %v5271
  %v5385 = vadd.f32 %v4694, %v5276
  %v5386 = vadd.f32 %v4695, %v5279
  %v5387 = vadd.f32 %v4696, %v5284
  %v5388 = vadd.f32 %v4697, %v5287
  %v5389 = vadd.f32 %v4698, %v5292
  %v5390 = vadd.f32 %v4699, %v5295
  %v5391 = vadd.f32 %v4700, %v5300
  %v5392 = vadd.f32 %v4701, %v5303
  %v5393 = vadd.f32 %v4702, %v5308
  %v5394 = vld [vmem:[%s0 + $0x26] sm:$0xff]
  %v5395 = vld [vmem:[%s0 + $0x2e] sm:$0xff]
  %v5396 = vld [vmem:[%s0 + $0x36] sm:$0xff]
  %v5397 = vld [vmem:[%s0 + $0x3e] sm:$0xff]
  %v5398 = vld [vmem:[%s0 + $0x46] sm:$0xff]
  %v5399 = vld [vmem:[%s0 + $0x4e] sm:$0xff]
  %v5400 = vld [vmem:[%s0 + $0x56] sm:$0xff]
  %v5401 = vld [vmem:[%s0 + $0x5e] sm:$0xff]
  %v5402 = vld [vmem:[%s0 + $0x66] sm:$0xff]
  %v5403 = vld [vmem:[%s0 + $0x6e] sm:$0xff]
  %v5404 = vld [vmem:[%s0 + $0x76] sm:$0xff]
  %v5405 = vld [vmem:[%s0 + $0x7e] sm:$0xff]
  %v5406 = vld [vmem:[%s0 + $0x86] sm:$0xff]
  %v5407 = vld [vmem:[%s0 + $0x8e] sm:$0xff]
  %v5408 = vld [vmem:[%s0 + $0x96] sm:$0xff]
  %v5409 = vld [vmem:[%s0 + $0x9e] sm:$0xff]
  %v5410 = vld [vmem:[%s0 + $0xa6] sm:$0xff]
  %v5411 = vld [vmem:[%s0 + $0xae] sm:$0xff]
  %v5412 = vld [vmem:[%s0 + $0xb6] sm:$0xff]
  %v5413 = vld [vmem:[%s0 + $0xbe] sm:$0xff]
  %v5414 = vld [vmem:[%s0 + $0xc6] sm:$0xff]
  %v5415 = vld [vmem:[%s0 + $0xce] sm:$0xff]
  %v5416 = vld [vmem:[%s0 + $0xd6] sm:$0xff]
  %v5417 = vld [vmem:[%s0 + $0xde] sm:$0xff]
  %v5418 = vld [vmem:[%s0 + $0xe6] sm:$0xff]
  %v5419 = vld [vmem:[%s0 + $0xee] sm:$0xff]
  %v5420 = vld [vmem:[%s0 + $0xf6] sm:$0xff]
  %v5421 = vld [vmem:[%s0 + $0xfe] sm:$0xff]
  %v5422 = vld [vmem:[%s0 + $0x106] sm:$0xff]
  %v5423 = vld [vmem:[%s0 + $0x10e] sm:$0xff]
  %v5424 = vld [vmem:[%s0 + $0x116] sm:$0xff]
  %v5425 = vld [vmem:[%s0 + $0x11e] sm:$0xff]
  %v5426 = vld [vmem:[%s0 + $0x126] sm:$0xff]
  %v5427 = vld [vmem:[%s0 + $0x12e] sm:$0xff]
  %v5428 = vld [vmem:[%s0 + $0x136] sm:$0xff]
  %v5429 = vld [vmem:[%s0 + $0x13e] sm:$0xff]
  %v5430 = vld [vmem:[%s0 + $0x146] sm:$0xff]
  %v5431 = vld [vmem:[%s0 + $0x14e] sm:$0xff]
  %v5432 = vld [vmem:[%s0 + $0x156] sm:$0xff]
  %v5433 = vld [vmem:[%s0 + $0x15e] sm:$0xff]
  %v5434 = vld [vmem:[%s0 + $0x166] sm:$0xff]
  %v5435 = vld [vmem:[%s0 + $0x16e] sm:$0xff]
  %v5436 = vld [vmem:[%s0 + $0x176] sm:$0xff]
  %v5437 = vld [vmem:[%s0 + $0x17e] sm:$0xff]
  %v5438 = vld [vmem:[%s0 + $0x186] sm:$0xff]
  %v5439 = vld [vmem:[%s0 + $0x18e] sm:$0xff]
  %v5440 = vld [vmem:[%s0 + $0x196] sm:$0xff]
  %v5441 = vld [vmem:[%s0 + $0x19e] sm:$0xff]
  %v5442 = vld [vmem:[%s0 + $0x1a6] sm:$0xff]
  %v5443 = vld [vmem:[%s0 + $0x1ae] sm:$0xff]
  %v5444 = vld [vmem:[%s0 + $0x1b6] sm:$0xff]
  %v5445 = vld [vmem:[%s0 + $0x1be] sm:$0xff]
  %v5446 = vld [vmem:[%s0 + $0x1c6] sm:$0xff]
  %v5447 = vld [vmem:[%s0 + $0x1ce] sm:$0xff]
  %v5448 = vld [vmem:[%s0 + $0x1d6] sm:$0xff]
  %v5449 = vld [vmem:[%s0 + $0x1de] sm:$0xff]
  %v5450 = vld [vmem:[%s0 + $0x1e6] sm:$0xff]
  %v5451 = vld [vmem:[%s0 + $0x1ee] sm:$0xff]
  %v5452 = vld [vmem:[%s0 + $0x1f6] sm:$0xff]
  %v5453 = vld [vmem:[%s0 + $0x1fe] sm:$0xff]
  %v5454 = vld [vmem:[%s0 + $0x206] sm:$0xff]
  %v5455 = vld [vmem:[%s0 + $0x20e] sm:$0xff]
  %v5456 = vld [vmem:[%s0 + $0x216] sm:$0xff]
  %v5457 = vld [vmem:[%s0 + $0x21e] sm:$0xff]
  %v5458 = vld [vmem:[%s0 + $0x226] sm:$0xff]
  %v5459 = vld [vmem:[%s0 + $0x22e] sm:$0xff]
  %v5460 = vld [vmem:[%s0 + $0x236] sm:$0xff]
  %v5461 = vld [vmem:[%s0 + $0x23e] sm:$0xff]
  %v5462 = vld [vmem:[%s0 + $0x246] sm:$0xff]
  %v5463 = vld [vmem:[%s0 + $0x24e] sm:$0xff]
  %v5464 = vld [vmem:[%s0 + $0x256] sm:$0xff]
  %v5465 = vld [vmem:[%s0 + $0x25e] sm:$0xff]
  %v5466 = vld [vmem:[%s0 + $0x266] sm:$0xff]
  %v5467 = vld [vmem:[%s0 + $0x26e] sm:$0xff]
  %v5468 = vld [vmem:[%s0 + $0x276] sm:$0xff]
  %v5469 = vld [vmem:[%s0 + $0x27e] sm:$0xff]
  %v5470 = vld [vmem:[%s0 + $0x286] sm:$0xff]
  %v5471 = vld [vmem:[%s0 + $0x28e] sm:$0xff]
  %v5472 = vld [vmem:[%s0 + $0x296] sm:$0xff]
  %v5473 = vld [vmem:[%s0 + $0x29e] sm:$0xff]
  %v5474 = vld [vmem:[%s0 + $0x2a6] sm:$0xff]
  %v5475 = vpack.c.bf16 %v5395, %v5394
  %v5476 = vpack.c.bf16 %v5397, %v5396
  %v5477 = vpack.c.bf16 %v5399, %v5398
  %v5478 = vpack.c.bf16 %v5401, %v5400
  %v5479 = vpack.c.bf16 %v5403, %v5402
  %v5480 = vpack.c.bf16 %v5405, %v5404
  %v5481 = vpack.c.bf16 %v5407, %v5406
  %v5482 = vpack.c.bf16 %v5409, %v5408
  %v5483 = vpack.c.bf16 %v5411, %v5410
  %v5484 = vpack.c.bf16 %v5413, %v5412
  %v5485 = vpack.c.bf16 %v5415, %v5414
  %v5486 = vpack.c.bf16 %v5417, %v5416
  %v5487 = vpack.c.bf16 %v5419, %v5418
  %v5488 = vpack.c.bf16 %v5421, %v5420
  %v5489 = vpack.c.bf16 %v5423, %v5422
  %v5490 = vpack.c.bf16 %v5425, %v5424
  %v5491 = vpack.c.bf16 %v5427, %v5426
  %v5492 = vpack.c.bf16 %v5429, %v5428
  %v5493 = vpack.c.bf16 %v5431, %v5430
  %v5494 = vpack.c.bf16 %v5433, %v5432
  %v5495 = vpack.c.bf16 %v5435, %v5434
  %v5496 = vpack.c.bf16 %v5437, %v5436
  %v5497 = vpack.c.bf16 %v5439, %v5438
  %v5498 = vpack.c.bf16 %v5441, %v5440
  %v5499 = vpack.c.bf16 %v5443, %v5442
  %v5500 = vpack.c.bf16 %v5445, %v5444
  %v5501 = vpack.c.bf16 %v5447, %v5446
  %v5502 = vpack.c.bf16 %v5449, %v5448
  %v5503 = vpack.c.bf16 %v5451, %v5450
  %v5504 = vpack.c.bf16 %v5453, %v5452
  %v5505 = vpack.c.bf16 %v5455, %v5454
  %v5506 = vpack.c.bf16 %v5457, %v5456
  %v5507 = vpack.c.bf16 %v5459, %v5458
  %v5508 = vpack.c.bf16 %v5461, %v5460
  %v5509 = vpack.c.bf16 %v5463, %v5462
  %v5510 = vpack.c.bf16 %v5465, %v5464
  %v5511 = vpack.c.bf16 %v5467, %v5466
  %v5512 = vpack.c.bf16 %v5469, %v5468
  %v5513 = vpack.c.bf16 %v5471, %v5470
  %v5514 = vpack.c.bf16 %v5473, %v5472
  %v5515 = vpack.c.bf16 %v5474, %v5474
  %s5516 = scalar_lea.vmem %s1, 16
  %v5517 = vld [vmem:[%s5516] sm:$0x3]
  %v5519 = vsel %vm274, %v5475, 0
  %v5522 = vsel %vm274, %v5476, 0
  %v5525 = vsel %vm274, %v5477, 0
  %v5528 = vsel %vm274, %v5478, 0
  %v5531 = vsel %vm274, %v5479, 0
  %v5534 = vsel %vm274, %v5480, 0
  %v5537 = vsel %vm274, %v5481, 0
  %v5540 = vsel %vm274, %v5482, 0
  %v5543 = vsel %vm274, %v5483, 0
  %v5546 = vsel %vm274, %v5484, 0
  %v5549 = vsel %vm274, %v5485, 0
  %v5552 = vsel %vm274, %v5486, 0
  %v5555 = vsel %vm274, %v5487, 0
  %v5558 = vsel %vm274, %v5488, 0
  %v5561 = vsel %vm274, %v5489, 0
  %v5564 = vsel %vm274, %v5490, 0
  %v5567 = vsel %vm274, %v5491, 0
  %v5570 = vsel %vm274, %v5492, 0
  %v5573 = vsel %vm274, %v5493, 0
  %v5576 = vsel %vm274, %v5494, 0
  %v5579 = vsel %vm274, %v5495, 0
  %v5582 = vsel %vm274, %v5496, 0
  %v5585 = vsel %vm274, %v5497, 0
  %v5588 = vsel %vm274, %v5498, 0
  %v5591 = vsel %vm274, %v5499, 0
  %v5594 = vsel %vm274, %v5500, 0
  %v5597 = vsel %vm274, %v5501, 0
  %v5600 = vsel %vm274, %v5502, 0
  %v5603 = vsel %vm274, %v5503, 0
  %v5606 = vsel %vm274, %v5504, 0
  %v5609 = vsel %vm274, %v5505, 0
  %v5612 = vsel %vm274, %v5506, 0
  %v5615 = vsel %vm274, %v5507, 0
  %v5618 = vsel %vm274, %v5508, 0
  %v5621 = vsel %vm274, %v5509, 0
  %v5624 = vsel %vm274, %v5510, 0
  %v5627 = vsel %vm274, %v5511, 0
  %v5630 = vsel %vm274, %v5512, 0
  %v5633 = vsel %vm274, %v5513, 0
  %v5636 = vsel %vm274, %v5514, 0
  %v5639 = vsel %vm274, %v5515, 0
  %v5642 = vsel %vm398, %v5517, 0
  %5644 = vmatprep.subr.bf16.mxu0 0
  %5645 = vmatpush1.bf16.msra.mxu0 %v5642
  %5646 = vmatprep.subr.bf16.mxu0 0
  %5647 = vmatpush1.bf16.msra.mxu0 0
  %5648 = vmatprep.subr.bf16.mxu0 0
  %5649 = vmatpush1.bf16.msra.mxu0 0
  %5650 = vmatprep.subr.bf16.mxu0 0
  %5651 = vmatpush1.bf16.msra.mxu0 0
  %5652 = vmatprep.subr.bf16.mxu0 0
  %5653 = vmatpush1.bf16.msra.mxu0 0
  %5654 = vmatprep.subr.bf16.mxu0 0
  %5655 = vmatpush1.bf16.msra.mxu0 0
  %5656 = vmatprep.subr.bf16.mxu0 0
  %5657 = vmatpush1.bf16.msra.mxu0 0
  %5658 = vmatprep.subr.bf16.mxu0 0
  %5659 = vmatpush1.bf16.msra.mxu0 0
  %5660 = vmatprep.subr.bf16.mxu0 0
  %5661 = vmatpush1.bf16.msra.mxu0 0
  %5662 = vmatprep.subr.bf16.mxu0 0
  %5663 = vmatpush1.bf16.msra.mxu0 0
  %5664 = vmatprep.subr.bf16.mxu0 0
  %5665 = vmatpush1.bf16.msra.mxu0 0
  %5666 = vmatprep.subr.bf16.mxu0 0
  %5667 = vmatpush1.bf16.msra.mxu0 0
  %5668 = vmatprep.subr.bf16.mxu0 0
  %5669 = vmatpush1.bf16.msra.mxu0 0
  %5670 = vmatprep.subr.bf16.mxu0 0
  %5671 = vmatpush1.bf16.msra.mxu0 0
  %5672 = vmatprep.subr.bf16.mxu0 0
  %5673 = vmatpush1.bf16.msra.mxu0 0
  %5674 = vmatprep.subr.bf16.mxu0 0
  %5675 = vmatpush1.bf16.msra.mxu0 0
  %5676 = vmatprep.mubr.bf16.mxu0 0
  %5677 = vmatmul.mubr.bf16.gmra.mrb[0].mxu0 %v5519
  %v5678 = vpop.f32.mrb[0].mxu0
  %v5679 = vadd.f32 0.0, %v5678
  %v5680 = vpop.f32.mrb[0].mxu0
  %v5681 = vpop.f32.mrb[0].mxu0
  %v5682 = vadd.f32 0.0, %v5681
  %v5683 = vpop.f32.mrb[0].mxu0
  %5684 = vmatprep.mubr.bf16.mxu0 0
  %5685 = vmatmul.mubr.bf16.gmra.mrb[0].mxu0 %v5522
  %v5686 = vpop.f32.mrb[0].mxu0
  %v5687 = vadd.f32 0.0, %v5686
  %v5688 = vpop.f32.mrb[0].mxu0
  %v5689 = vpop.f32.mrb[0].mxu0
  %v5690 = vadd.f32 0.0, %v5689
  %v5691 = vpop.f32.mrb[0].mxu0
  %5692 = vmatprep.mubr.bf16.mxu0 0
  %5693 = vmatmul.mubr.bf16.gmra.mrb[0].mxu0 %v5525
  %v5694 = vpop.f32.mrb[0].mxu0
  %v5695 = vadd.f32 0.0, %v5694
  %v5696 = vpop.f32.mrb[0].mxu0
  %v5697 = vpop.f32.mrb[0].mxu0
  %v5698 = vadd.f32 0.0, %v5697
  %v5699 = vpop.f32.mrb[0].mxu0
  %5700 = vmatprep.mubr.bf16.mxu0 0
  %5701 = vmatmul.mubr.bf16.gmra.mrb[0].mxu0 %v5528
  %v5702 = vpop.f32.mrb[0].mxu0
  %v5703 = vadd.f32 0.0, %v5702
  %v5704 = vpop.f32.mrb[0].mxu0
  %v5705 = vpop.f32.mrb[0].mxu0
  %v5706 = vadd.f32 0.0, %v5705
  %v5707 = vpop.f32.mrb[0].mxu0
  %5708 = vmatprep.mubr.bf16.mxu0 0
  %5709 = vmatmul.mubr.bf16.gmra.mrb[0].mxu0 %v5531
  %v5710 = vpop.f32.mrb[0].mxu0
  %v5711 = vadd.f32 0.0, %v5710
  %v5712 = vpop.f32.mrb[0].mxu0
  %v5713 = vpop.f32.mrb[0].mxu0
  %v5714 = vadd.f32 0.0, %v5713
  %v5715 = vpop.f32.mrb[0].mxu0
  %5716 = vmatprep.mubr.bf16.mxu0 0
  %5717 = vmatmul.mubr.bf16.gmra.mrb[0].mxu0 %v5534
  %v5718 = vpop.f32.mrb[0].mxu0
  %v5719 = vadd.f32 0.0, %v5718
  %v5720 = vpop.f32.mrb[0].mxu0
  %v5721 = vpop.f32.mrb[0].mxu0
  %v5722 = vadd.f32 0.0, %v5721
  %v5723 = vpop.f32.mrb[0].mxu0
  %5724 = vmatprep.mubr.bf16.mxu0 0
  %5725 = vmatmul.mubr.bf16.gmra.mrb[0].mxu0 %v5537
  %v5726 = vpop.f32.mrb[0].mxu0
  %v5727 = vadd.f32 0.0, %v5726
  %v5728 = vpop.f32.mrb[0].mxu0
  %v5729 = vpop.f32.mrb[0].mxu0
  %v5730 = vadd.f32 0.0, %v5729
  %v5731 = vpop.f32.mrb[0].mxu0
  %5732 = vmatprep.mubr.bf16.mxu0 0
  %5733 = vmatmul.mubr.bf16.gmra.mrb[0].mxu0 %v5540
  %v5734 = vpop.f32.mrb[0].mxu0
  %v5735 = vadd.f32 0.0, %v5734
  %v5736 = vpop.f32.mrb[0].mxu0
  %v5737 = vpop.f32.mrb[0].mxu0
  %v5738 = vadd.f32 0.0, %v5737
  %v5739 = vpop.f32.mrb[0].mxu0
  %5740 = vmatprep.mubr.bf16.mxu0 0
  %5741 = vmatmul.mubr.bf16.gmra.mrb[0].mxu0 %v5543
  %v5742 = vpop.f32.mrb[0].mxu0
  %v5743 = vadd.f32 0.0, %v5742
  %v5744 = vpop.f32.mrb[0].mxu0
  %v5745 = vpop.f32.mrb[0].mxu0
  %v5746 = vadd.f32 0.0, %v5745
  %v5747 = vpop.f32.mrb[0].mxu0
  %5748 = vmatprep.mubr.bf16.mxu0 0
  %5749 = vmatmul.mubr.bf16.gmra.mrb[0].mxu0 %v5546
  %v5750 = vpop.f32.mrb[0].mxu0
  %v5751 = vadd.f32 0.0, %v5750
  %v5752 = vpop.f32.mrb[0].mxu0
  %v5753 = vpop.f32.mrb[0].mxu0
  %v5754 = vadd.f32 0.0, %v5753
  %v5755 = vpop.f32.mrb[0].mxu0
  %5756 = vmatprep.mubr.bf16.mxu0 0
  %5757 = vmatmul.mubr.bf16.gmra.mrb[0].mxu0 %v5549
  %v5758 = vpop.f32.mrb[0].mxu0
  %v5759 = vadd.f32 0.0, %v5758
  %v5760 = vpop.f32.mrb[0].mxu0
  %v5761 = vpop.f32.mrb[0].mxu0
  %v5762 = vadd.f32 0.0, %v5761
  %v5763 = vpop.f32.mrb[0].mxu0
  %5764 = vmatprep.mubr.bf16.mxu0 0
  %5765 = vmatmul.mubr.bf16.gmra.mrb[0].mxu0 %v5552
  %v5766 = vpop.f32.mrb[0].mxu0
  %v5767 = vadd.f32 0.0, %v5766
  %v5768 = vpop.f32.mrb[0].mxu0
  %v5769 = vpop.f32.mrb[0].mxu0
  %v5770 = vadd.f32 0.0, %v5769
  %v5771 = vpop.f32.mrb[0].mxu0
  %5772 = vmatprep.mubr.bf16.mxu0 0
  %5773 = vmatmul.mubr.bf16.gmra.mrb[0].mxu0 %v5555
  %v5774 = vpop.f32.mrb[0].mxu0
  %v5775 = vadd.f32 0.0, %v5774
  %v5776 = vpop.f32.mrb[0].mxu0
  %v5777 = vpop.f32.mrb[0].mxu0
  %v5778 = vadd.f32 0.0, %v5777
  %v5779 = vpop.f32.mrb[0].mxu0
  %5780 = vmatprep.mubr.bf16.mxu0 0
  %5781 = vmatmul.mubr.bf16.gmra.mrb[0].mxu0 %v5558
  %v5782 = vpop.f32.mrb[0].mxu0
  %v5783 = vadd.f32 0.0, %v5782
  %v5784 = vpop.f32.mrb[0].mxu0
  %v5785 = vpop.f32.mrb[0].mxu0
  %v5786 = vadd.f32 0.0, %v5785
  %v5787 = vpop.f32.mrb[0].mxu0
  %5788 = vmatprep.mubr.bf16.mxu0 0
  %5789 = vmatmul.mubr.bf16.gmra.mrb[0].mxu0 %v5561
  %v5790 = vpop.f32.mrb[0].mxu0
  %v5791 = vadd.f32 0.0, %v5790
  %v5792 = vpop.f32.mrb[0].mxu0
  %v5793 = vpop.f32.mrb[0].mxu0
  %v5794 = vadd.f32 0.0, %v5793
  %v5795 = vpop.f32.mrb[0].mxu0
  %5796 = vmatprep.mubr.bf16.mxu0 0
  %5797 = vmatmul.mubr.bf16.gmra.mrb[0].mxu0 %v5564
  %v5798 = vpop.f32.mrb[0].mxu0
  %v5799 = vadd.f32 0.0, %v5798
  %v5800 = vpop.f32.mrb[0].mxu0
  %v5801 = vpop.f32.mrb[0].mxu0
  %v5802 = vadd.f32 0.0, %v5801
  %v5803 = vpop.f32.mrb[0].mxu0
  %5804 = vmatprep.mubr.bf16.mxu0 0
  %5805 = vmatmul.mubr.bf16.gmra.mrb[0].mxu0 %v5567
  %v5806 = vpop.f32.mrb[0].mxu0
  %v5807 = vadd.f32 0.0, %v5806
  %v5808 = vpop.f32.mrb[0].mxu0
  %v5809 = vpop.f32.mrb[0].mxu0
  %v5810 = vadd.f32 0.0, %v5809
  %v5811 = vpop.f32.mrb[0].mxu0
  %5812 = vmatprep.mubr.bf16.mxu0 0
  %5813 = vmatmul.mubr.bf16.gmra.mrb[0].mxu0 %v5570
  %v5814 = vpop.f32.mrb[0].mxu0
  %v5815 = vadd.f32 0.0, %v5814
  %v5816 = vpop.f32.mrb[0].mxu0
  %v5817 = vpop.f32.mrb[0].mxu0
  %v5818 = vadd.f32 0.0, %v5817
  %v5819 = vpop.f32.mrb[0].mxu0
  %5820 = vmatprep.mubr.bf16.mxu0 0
  %5821 = vmatmul.mubr.bf16.gmra.mrb[0].mxu0 %v5573
  %v5822 = vpop.f32.mrb[0].mxu0
  %v5823 = vadd.f32 0.0, %v5822
  %v5824 = vpop.f32.mrb[0].mxu0
  %v5825 = vpop.f32.mrb[0].mxu0
  %v5826 = vadd.f32 0.0, %v5825
  %v5827 = vpop.f32.mrb[0].mxu0
  %5828 = vmatprep.mubr.bf16.mxu0 0
  %5829 = vmatmul.mubr.bf16.gmra.mrb[0].mxu0 %v5576
  %v5830 = vpop.f32.mrb[0].mxu0
  %v5831 = vadd.f32 0.0, %v5830
  %v5832 = vpop.f32.mrb[0].mxu0
  %v5833 = vpop.f32.mrb[0].mxu0
  %v5834 = vadd.f32 0.0, %v5833
  %v5835 = vpop.f32.mrb[0].mxu0
  %5836 = vmatprep.mubr.bf16.mxu0 0
  %5837 = vmatmul.mubr.bf16.gmra.mrb[0].mxu0 %v5579
  %v5838 = vpop.f32.mrb[0].mxu0
  %v5839 = vadd.f32 0.0, %v5838
  %v5840 = vpop.f32.mrb[0].mxu0
  %v5841 = vpop.f32.mrb[0].mxu0
  %v5842 = vadd.f32 0.0, %v5841
  %v5843 = vpop.f32.mrb[0].mxu0
  %5844 = vmatprep.mubr.bf16.mxu0 0
  %5845 = vmatmul.mubr.bf16.gmra.mrb[0].mxu0 %v5582
  %v5846 = vpop.f32.mrb[0].mxu0
  %v5847 = vadd.f32 0.0, %v5846
  %v5848 = vpop.f32.mrb[0].mxu0
  %v5849 = vpop.f32.mrb[0].mxu0
  %v5850 = vadd.f32 0.0, %v5849
  %v5851 = vpop.f32.mrb[0].mxu0
  %5852 = vmatprep.mubr.bf16.mxu0 0
  %5853 = vmatmul.mubr.bf16.gmra.mrb[0].mxu0 %v5585
  %v5854 = vpop.f32.mrb[0].mxu0
  %v5855 = vadd.f32 0.0, %v5854
  %v5856 = vpop.f32.mrb[0].mxu0
  %v5857 = vpop.f32.mrb[0].mxu0
  %v5858 = vadd.f32 0.0, %v5857
  %v5859 = vpop.f32.mrb[0].mxu0
  %5860 = vmatprep.mubr.bf16.mxu0 0
  %5861 = vmatmul.mubr.bf16.gmra.mrb[0].mxu0 %v5588
  %v5862 = vpop.f32.mrb[0].mxu0
  %v5863 = vadd.f32 0.0, %v5862
  %v5864 = vpop.f32.mrb[0].mxu0
  %v5865 = vpop.f32.mrb[0].mxu0
  %v5866 = vadd.f32 0.0, %v5865
  %v5867 = vpop.f32.mrb[0].mxu0
  %5868 = vmatprep.mubr.bf16.mxu0 0
  %5869 = vmatmul.mubr.bf16.gmra.mrb[0].mxu0 %v5591
  %v5870 = vpop.f32.mrb[0].mxu0
  %v5871 = vadd.f32 0.0, %v5870
  %v5872 = vpop.f32.mrb[0].mxu0
  %v5873 = vpop.f32.mrb[0].mxu0
  %v5874 = vadd.f32 0.0, %v5873
  %v5875 = vpop.f32.mrb[0].mxu0
  %5876 = vmatprep.mubr.bf16.mxu0 0
  %5877 = vmatmul.mubr.bf16.gmra.mrb[0].mxu0 %v5594
  %v5878 = vpop.f32.mrb[0].mxu0
  %v5879 = vadd.f32 0.0, %v5878
  %v5880 = vpop.f32.mrb[0].mxu0
  %v5881 = vpop.f32.mrb[0].mxu0
  %v5882 = vadd.f32 0.0, %v5881
  %v5883 = vpop.f32.mrb[0].mxu0
  %5884 = vmatprep.mubr.bf16.mxu0 0
  %5885 = vmatmul.mubr.bf16.gmra.mrb[0].mxu0 %v5597
  %v5886 = vpop.f32.mrb[0].mxu0
  %v5887 = vadd.f32 0.0, %v5886
  %v5888 = vpop.f32.mrb[0].mxu0
  %v5889 = vpop.f32.mrb[0].mxu0
  %v5890 = vadd.f32 0.0, %v5889
  %v5891 = vpop.f32.mrb[0].mxu0
  %5892 = vmatprep.mubr.bf16.mxu0 0
  %5893 = vmatmul.mubr.bf16.gmra.mrb[0].mxu0 %v5600
  %v5894 = vpop.f32.mrb[0].mxu0
  %v5895 = vadd.f32 0.0, %v5894
  %v5896 = vpop.f32.mrb[0].mxu0
  %v5897 = vpop.f32.mrb[0].mxu0
  %v5898 = vadd.f32 0.0, %v5897
  %v5899 = vpop.f32.mrb[0].mxu0
  %5900 = vmatprep.mubr.bf16.mxu0 0
  %5901 = vmatmul.mubr.bf16.gmra.mrb[0].mxu0 %v5603
  %v5902 = vpop.f32.mrb[0].mxu0
  %v5903 = vadd.f32 0.0, %v5902
  %v5904 = vpop.f32.mrb[0].mxu0
  %v5905 = vpop.f32.mrb[0].mxu0
  %v5906 = vadd.f32 0.0, %v5905
  %v5907 = vpop.f32.mrb[0].mxu0
  %5908 = vmatprep.mubr.bf16.mxu0 0
  %5909 = vmatmul.mubr.bf16.gmra.mrb[0].mxu0 %v5606
  %v5910 = vpop.f32.mrb[0].mxu0
  %v5911 = vadd.f32 0.0, %v5910
  %v5912 = vpop.f32.mrb[0].mxu0
  %v5913 = vpop.f32.mrb[0].mxu0
  %v5914 = vadd.f32 0.0, %v5913
  %v5915 = vpop.f32.mrb[0].mxu0
  %5916 = vmatprep.mubr.bf16.mxu0 0
  %5917 = vmatmul.mubr.bf16.gmra.mrb[0].mxu0 %v5609
  %v5918 = vpop.f32.mrb[0].mxu0
  %v5919 = vadd.f32 0.0, %v5918
  %v5920 = vpop.f32.mrb[0].mxu0
  %v5921 = vpop.f32.mrb[0].mxu0
  %v5922 = vadd.f32 0.0, %v5921
  %v5923 = vpop.f32.mrb[0].mxu0
  %5924 = vmatprep.mubr.bf16.mxu0 0
  %5925 = vmatmul.mubr.bf16.gmra.mrb[0].mxu0 %v5612
  %v5926 = vpop.f32.mrb[0].mxu0
  %v5927 = vadd.f32 0.0, %v5926
  %v5928 = vpop.f32.mrb[0].mxu0
  %v5929 = vpop.f32.mrb[0].mxu0
  %v5930 = vadd.f32 0.0, %v5929
  %v5931 = vpop.f32.mrb[0].mxu0
  %5932 = vmatprep.mubr.bf16.mxu0 0
  %5933 = vmatmul.mubr.bf16.gmra.mrb[0].mxu0 %v5615
  %v5934 = vpop.f32.mrb[0].mxu0
  %v5935 = vadd.f32 0.0, %v5934
  %v5936 = vpop.f32.mrb[0].mxu0
  %v5937 = vpop.f32.mrb[0].mxu0
  %v5938 = vadd.f32 0.0, %v5937
  %v5939 = vpop.f32.mrb[0].mxu0
  %5940 = vmatprep.mubr.bf16.mxu0 0
  %5941 = vmatmul.mubr.bf16.gmra.mrb[0].mxu0 %v5618
  %v5942 = vpop.f32.mrb[0].mxu0
  %v5943 = vadd.f32 0.0, %v5942
  %v5944 = vpop.f32.mrb[0].mxu0
  %v5945 = vpop.f32.mrb[0].mxu0
  %v5946 = vadd.f32 0.0, %v5945
  %v5947 = vpop.f32.mrb[0].mxu0
  %5948 = vmatprep.mubr.bf16.mxu0 0
  %5949 = vmatmul.mubr.bf16.gmra.mrb[0].mxu0 %v5621
  %v5950 = vpop.f32.mrb[0].mxu0
  %v5951 = vadd.f32 0.0, %v5950
  %v5952 = vpop.f32.mrb[0].mxu0
  %v5953 = vpop.f32.mrb[0].mxu0
  %v5954 = vadd.f32 0.0, %v5953
  %v5955 = vpop.f32.mrb[0].mxu0
  %5956 = vmatprep.mubr.bf16.mxu0 0
  %5957 = vmatmul.mubr.bf16.gmra.mrb[0].mxu0 %v5624
  %v5958 = vpop.f32.mrb[0].mxu0
  %v5959 = vadd.f32 0.0, %v5958
  %v5960 = vpop.f32.mrb[0].mxu0
  %v5961 = vpop.f32.mrb[0].mxu0
  %v5962 = vadd.f32 0.0, %v5961
  %v5963 = vpop.f32.mrb[0].mxu0
  %5964 = vmatprep.mubr.bf16.mxu0 0
  %5965 = vmatmul.mubr.bf16.gmra.mrb[0].mxu0 %v5627
  %v5966 = vpop.f32.mrb[0].mxu0
  %v5967 = vadd.f32 0.0, %v5966
  %v5968 = vpop.f32.mrb[0].mxu0
  %v5969 = vpop.f32.mrb[0].mxu0
  %v5970 = vadd.f32 0.0, %v5969
  %v5971 = vpop.f32.mrb[0].mxu0
  %5972 = vmatprep.mubr.bf16.mxu0 0
  %5973 = vmatmul.mubr.bf16.gmra.mrb[0].mxu0 %v5630
  %v5974 = vpop.f32.mrb[0].mxu0
  %v5975 = vadd.f32 0.0, %v5974
  %v5976 = vpop.f32.mrb[0].mxu0
  %v5977 = vpop.f32.mrb[0].mxu0
  %v5978 = vadd.f32 0.0, %v5977
  %v5979 = vpop.f32.mrb[0].mxu0
  %5980 = vmatprep.mubr.bf16.mxu0 0
  %5981 = vmatmul.mubr.bf16.gmra.mrb[0].mxu0 %v5633
  %v5982 = vpop.f32.mrb[0].mxu0
  %v5983 = vadd.f32 0.0, %v5982
  %v5984 = vpop.f32.mrb[0].mxu0
  %v5985 = vpop.f32.mrb[0].mxu0
  %v5986 = vadd.f32 0.0, %v5985
  %v5987 = vpop.f32.mrb[0].mxu0
  %5988 = vmatprep.mubr.bf16.mxu0 0
  %5989 = vmatmul.mubr.bf16.gmra.mrb[0].mxu0 %v5636
  %v5990 = vpop.f32.mrb[0].mxu0
  %v5991 = vadd.f32 0.0, %v5990
  %v5992 = vpop.f32.mrb[0].mxu0
  %v5993 = vpop.f32.mrb[0].mxu0
  %v5994 = vadd.f32 0.0, %v5993
  %v5995 = vpop.f32.mrb[0].mxu0
  %5996 = vmatprep.mubr.bf16.mxu0 0
  %5997 = vmatmul.mubr.bf16.gmra.mrb[0].mxu0 %v5639
  %v5998 = vpop.f32.mrb[0].mxu0
  %v5999 = vadd.f32 0.0, %v5998
  %v6000 = vpop.f32.mrb[0].mxu0
  %v6001 = vpop.f32.mrb[0].mxu0
  %v6002 = vpop.f32.mrb[0].mxu0
  %6003 = vdwg.mxu0
  %v6004 = vadd.f32 %v5313, %v5679
  %v6005 = vadd.f32 %v5314, %v5682
  %v6006 = vadd.f32 %v5315, %v5687
  %v6007 = vadd.f32 %v5316, %v5690
  %v6008 = vadd.f32 %v5317, %v5695
  %v6009 = vadd.f32 %v5318, %v5698
  %v6010 = vadd.f32 %v5319, %v5703
  %v6011 = vadd.f32 %v5320, %v5706
  %v6012 = vadd.f32 %v5321, %v5711
  %v6013 = vadd.f32 %v5322, %v5714
  %v6014 = vadd.f32 %v5323, %v5719
  %v6015 = vadd.f32 %v5324, %v5722
  %v6016 = vadd.f32 %v5325, %v5727
  %v6017 = vadd.f32 %v5326, %v5730
  %v6018 = vadd.f32 %v5327, %v5735
  %v6019 = vadd.f32 %v5328, %v5738
  %v6020 = vadd.f32 %v5329, %v5743
  %v6021 = vadd.f32 %v5330, %v5746
  %v6022 = vadd.f32 %v5331, %v5751
  %v6023 = vadd.f32 %v5332, %v5754
  %v6024 = vadd.f32 %v5333, %v5759
  %v6025 = vadd.f32 %v5334, %v5762
  %v6026 = vadd.f32 %v5335, %v5767
  %v6027 = vadd.f32 %v5336, %v5770
  %v6028 = vadd.f32 %v5337, %v5775
  %v6029 = vadd.f32 %v5338, %v5778
  %v6030 = vadd.f32 %v5339, %v5783
  %v6031 = vadd.f32 %v5340, %v5786
  %v6032 = vadd.f32 %v5341, %v5791
  %v6033 = vadd.f32 %v5342, %v5794
  %v6034 = vadd.f32 %v5343, %v5799
  %v6035 = vadd.f32 %v5344, %v5802
  %v6036 = vadd.f32 %v5345, %v5807
  %v6037 = vadd.f32 %v5346, %v5810
  %v6038 = vadd.f32 %v5347, %v5815
  %v6039 = vadd.f32 %v5348, %v5818
  %v6040 = vadd.f32 %v5349, %v5823
  %v6041 = vadd.f32 %v5350, %v5826
  %v6042 = vadd.f32 %v5351, %v5831
  %v6043 = vadd.f32 %v5352, %v5834
  %v6044 = vadd.f32 %v5353, %v5839
  %v6045 = vadd.f32 %v5354, %v5842
  %v6046 = vadd.f32 %v5355, %v5847
  %v6047 = vadd.f32 %v5356, %v5850
  %v6048 = vadd.f32 %v5357, %v5855
  %v6049 = vadd.f32 %v5358, %v5858
  %v6050 = vadd.f32 %v5359, %v5863
  %v6051 = vadd.f32 %v5360, %v5866
  %v6052 = vadd.f32 %v5361, %v5871
  %v6053 = vadd.f32 %v5362, %v5874
  %v6054 = vadd.f32 %v5363, %v5879
  %v6055 = vadd.f32 %v5364, %v5882
  %v6056 = vadd.f32 %v5365, %v5887
  %v6057 = vadd.f32 %v5366, %v5890
  %v6058 = vadd.f32 %v5367, %v5895
  %v6059 = vadd.f32 %v5368, %v5898
  %v6060 = vadd.f32 %v5369, %v5903
  %v6061 = vadd.f32 %v5370, %v5906
  %v6062 = vadd.f32 %v5371, %v5911
  %v6063 = vadd.f32 %v5372, %v5914
  %v6064 = vadd.f32 %v5373, %v5919
  %v6065 = vadd.f32 %v5374, %v5922
  %v6066 = vadd.f32 %v5375, %v5927
  %v6067 = vadd.f32 %v5376, %v5930
  %v6068 = vadd.f32 %v5377, %v5935
  %v6069 = vadd.f32 %v5378, %v5938
  %v6070 = vadd.f32 %v5379, %v5943
  %v6071 = vadd.f32 %v5380, %v5946
  %v6072 = vadd.f32 %v5381, %v5951
  %v6073 = vadd.f32 %v5382, %v5954
  %v6074 = vadd.f32 %v5383, %v5959
  %v6075 = vadd.f32 %v5384, %v5962
  %v6076 = vadd.f32 %v5385, %v5967
  %v6077 = vadd.f32 %v5386, %v5970
  %v6078 = vadd.f32 %v5387, %v5975
  %v6079 = vadd.f32 %v5388, %v5978
  %v6080 = vadd.f32 %v5389, %v5983
  %v6081 = vadd.f32 %v5390, %v5986
  %v6082 = vadd.f32 %v5391, %v5991
  %v6083 = vadd.f32 %v5392, %v5994
  %v6084 = vadd.f32 %v5393, %v5999
  %v6085 = vld [vmem:[%s2] sm:$0x1]
  %v6087 = vlaneseq
  %v6088 = vshrl.u32 %v6087, 7
  %v6089 = vsub.s32 0, %v6088
  %v6090 = vrot.slane %v6085, %v6089
  %v6092 = vadd.f32 %v6004, %v6090
  %v6093 = vadd.f32 %v6005, %v6090
  %v6094 = vadd.f32 %v6006, %v6090
  %v6095 = vadd.f32 %v6007, %v6090
  %v6096 = vadd.f32 %v6008, %v6090
  %v6097 = vadd.f32 %v6009, %v6090
  %v6098 = vadd.f32 %v6010, %v6090
  %v6099 = vadd.f32 %v6011, %v6090
  %v6100 = vadd.f32 %v6012, %v6090
  %v6101 = vadd.f32 %v6013, %v6090
  %v6102 = vadd.f32 %v6014, %v6090
  %v6103 = vadd.f32 %v6015, %v6090
  %v6104 = vadd.f32 %v6016, %v6090
  %v6105 = vadd.f32 %v6017, %v6090
  %v6106 = vadd.f32 %v6018, %v6090
  %v6107 = vadd.f32 %v6019, %v6090
  %v6108 = vadd.f32 %v6020, %v6090
  %v6109 = vadd.f32 %v6021, %v6090
  %v6110 = vadd.f32 %v6022, %v6090
  %v6111 = vadd.f32 %v6023, %v6090
  %v6112 = vadd.f32 %v6024, %v6090
  %v6113 = vadd.f32 %v6025, %v6090
  %v6114 = vadd.f32 %v6026, %v6090
  %v6115 = vadd.f32 %v6027, %v6090
  %v6116 = vadd.f32 %v6028, %v6090
  %v6117 = vadd.f32 %v6029, %v6090
  %v6118 = vadd.f32 %v6030, %v6090
  %v6119 = vadd.f32 %v6031, %v6090
  %v6120 = vadd.f32 %v6032, %v6090
  %v6121 = vadd.f32 %v6033, %v6090
  %v6122 = vadd.f32 %v6034, %v6090
  %v6123 = vadd.f32 %v6035, %v6090
  %v6124 = vadd.f32 %v6036, %v6090
  %v6125 = vadd.f32 %v6037, %v6090
  %v6126 = vadd.f32 %v6038, %v6090
  %v6127 = vadd.f32 %v6039, %v6090
  %v6128 = vadd.f32 %v6040, %v6090
  %v6129 = vadd.f32 %v6041, %v6090
  %v6130 = vadd.f32 %v6042, %v6090
  %v6131 = vadd.f32 %v6043, %v6090
  %v6132 = vadd.f32 %v6044, %v6090
  %v6133 = vadd.f32 %v6045, %v6090
  %v6134 = vadd.f32 %v6046, %v6090
  %v6135 = vadd.f32 %v6047, %v6090
  %v6136 = vadd.f32 %v6048, %v6090
  %v6137 = vadd.f32 %v6049, %v6090
  %v6138 = vadd.f32 %v6050, %v6090
  %v6139 = vadd.f32 %v6051, %v6090
  %v6140 = vadd.f32 %v6052, %v6090
  %v6141 = vadd.f32 %v6053, %v6090
  %v6142 = vadd.f32 %v6054, %v6090
  %v6143 = vadd.f32 %v6055, %v6090
  %v6144 = vadd.f32 %v6056, %v6090
  %v6145 = vadd.f32 %v6057, %v6090
  %v6146 = vadd.f32 %v6058, %v6090
  %v6147 = vadd.f32 %v6059, %v6090
  %v6148 = vadd.f32 %v6060, %v6090
  %v6149 = vadd.f32 %v6061, %v6090
  %v6150 = vadd.f32 %v6062, %v6090
  %v6151 = vadd.f32 %v6063, %v6090
  %v6152 = vadd.f32 %v6064, %v6090
  %v6153 = vadd.f32 %v6065, %v6090
  %v6154 = vadd.f32 %v6066, %v6090
  %v6155 = vadd.f32 %v6067, %v6090
  %v6156 = vadd.f32 %v6068, %v6090
  %v6157 = vadd.f32 %v6069, %v6090
  %v6158 = vadd.f32 %v6070, %v6090
  %v6159 = vadd.f32 %v6071, %v6090
  %v6160 = vadd.f32 %v6072, %v6090
  %v6161 = vadd.f32 %v6073, %v6090
  %v6162 = vadd.f32 %v6074, %v6090
  %v6163 = vadd.f32 %v6075, %v6090
  %v6164 = vadd.f32 %v6076, %v6090
  %v6165 = vadd.f32 %v6077, %v6090
  %v6166 = vadd.f32 %v6078, %v6090
  %v6167 = vadd.f32 %v6079, %v6090
  %v6168 = vadd.f32 %v6080, %v6090
  %v6169 = vadd.f32 %v6081, %v6090
  %v6170 = vadd.f32 %v6082, %v6090
  %v6171 = vadd.f32 %v6083, %v6090
  %v6172 = vadd.f32 %v6084, %v6090
  %v6173 = vmax.f32 %v6092, 0.0
  %v6174 = vmax.f32 %v6093, 0.0
  %v6175 = vmax.f32 %v6094, 0.0
  %v6176 = vmax.f32 %v6095, 0.0
  %v6177 = vmax.f32 %v6096, 0.0
  %v6178 = vmax.f32 %v6097, 0.0
  %v6179 = vmax.f32 %v6098, 0.0
  %v6180 = vmax.f32 %v6099, 0.0
  %v6181 = vmax.f32 %v6100, 0.0
  %v6182 = vmax.f32 %v6101, 0.0
  %v6183 = vmax.f32 %v6102, 0.0
  %v6184 = vmax.f32 %v6103, 0.0
  %v6185 = vmax.f32 %v6104, 0.0
  %v6186 = vmax.f32 %v6105, 0.0
  %v6187 = vmax.f32 %v6106, 0.0
  %v6188 = vmax.f32 %v6107, 0.0
  %v6189 = vmax.f32 %v6108, 0.0
  %v6190 = vmax.f32 %v6109, 0.0
  %v6191 = vmax.f32 %v6110, 0.0
  %v6192 = vmax.f32 %v6111, 0.0
  %v6193 = vmax.f32 %v6112, 0.0
  %v6194 = vmax.f32 %v6113, 0.0
  %v6195 = vmax.f32 %v6114, 0.0
  %v6196 = vmax.f32 %v6115, 0.0
  %v6197 = vmax.f32 %v6116, 0.0
  %v6198 = vmax.f32 %v6117, 0.0
  %v6199 = vmax.f32 %v6118, 0.0
  %v6200 = vmax.f32 %v6119, 0.0
  %v6201 = vmax.f32 %v6120, 0.0
  %v6202 = vmax.f32 %v6121, 0.0
  %v6203 = vmax.f32 %v6122, 0.0
  %v6204 = vmax.f32 %v6123, 0.0
  %v6205 = vmax.f32 %v6124, 0.0
  %v6206 = vmax.f32 %v6125, 0.0
  %v6207 = vmax.f32 %v6126, 0.0
  %v6208 = vmax.f32 %v6127, 0.0
  %v6209 = vmax.f32 %v6128, 0.0
  %v6210 = vmax.f32 %v6129, 0.0
  %v6211 = vmax.f32 %v6130, 0.0
  %v6212 = vmax.f32 %v6131, 0.0
  %v6213 = vmax.f32 %v6132, 0.0
  %v6214 = vmax.f32 %v6133, 0.0
  %v6215 = vmax.f32 %v6134, 0.0
  %v6216 = vmax.f32 %v6135, 0.0
  %v6217 = vmax.f32 %v6136, 0.0
  %v6218 = vmax.f32 %v6137, 0.0
  %v6219 = vmax.f32 %v6138, 0.0
  %v6220 = vmax.f32 %v6139, 0.0
  %v6221 = vmax.f32 %v6140, 0.0
  %v6222 = vmax.f32 %v6141, 0.0
  %v6223 = vmax.f32 %v6142, 0.0
  %v6224 = vmax.f32 %v6143, 0.0
  %v6225 = vmax.f32 %v6144, 0.0
  %v6226 = vmax.f32 %v6145, 0.0
  %v6227 = vmax.f32 %v6146, 0.0
  %v6228 = vmax.f32 %v6147, 0.0
  %v6229 = vmax.f32 %v6148, 0.0
  %v6230 = vmax.f32 %v6149, 0.0
  %v6231 = vmax.f32 %v6150, 0.0
  %v6232 = vmax.f32 %v6151, 0.0
  %v6233 = vmax.f32 %v6152, 0.0
  %v6234 = vmax.f32 %v6153, 0.0
  %v6235 = vmax.f32 %v6154, 0.0
  %v6236 = vmax.f32 %v6155, 0.0
  %v6237 = vmax.f32 %v6156, 0.0
  %v6238 = vmax.f32 %v6157, 0.0
  %v6239 = vmax.f32 %v6158, 0.0
  %v6240 = vmax.f32 %v6159, 0.0
  %v6241 = vmax.f32 %v6160, 0.0
  %v6242 = vmax.f32 %v6161, 0.0
  %v6243 = vmax.f32 %v6162, 0.0
  %v6244 = vmax.f32 %v6163, 0.0
  %v6245 = vmax.f32 %v6164, 0.0
  %v6246 = vmax.f32 %v6165, 0.0
  %v6247 = vmax.f32 %v6166, 0.0
  %v6248 = vmax.f32 %v6167, 0.0
  %v6249 = vmax.f32 %v6168, 0.0
  %v6250 = vmax.f32 %v6169, 0.0
  %v6251 = vmax.f32 %v6170, 0.0
  %v6252 = vmax.f32 %v6171, 0.0
  %v6253 = vmax.f32 %v6172, 0.0
  %v6254 = vpack.c.bf16 %v6174, %v6173
  %v6255 = vpack.c.bf16 %v6176, %v6175
  %v6256 = vpack.c.bf16 %v6178, %v6177
  %v6257 = vpack.c.bf16 %v6180, %v6179
  %v6258 = vpack.c.bf16 %v6182, %v6181
  %v6259 = vpack.c.bf16 %v6184, %v6183
  %v6260 = vpack.c.bf16 %v6186, %v6185
  %v6261 = vpack.c.bf16 %v6188, %v6187
  %v6262 = vpack.c.bf16 %v6190, %v6189
  %v6263 = vpack.c.bf16 %v6192, %v6191
  %v6264 = vpack.c.bf16 %v6194, %v6193
  %v6265 = vpack.c.bf16 %v6196, %v6195
  %v6266 = vpack.c.bf16 %v6198, %v6197
  %v6267 = vpack.c.bf16 %v6200, %v6199
  %v6268 = vpack.c.bf16 %v6202, %v6201
  %v6269 = vpack.c.bf16 %v6204, %v6203
  %v6270 = vpack.c.bf16 %v6206, %v6205
  %v6271 = vpack.c.bf16 %v6208, %v6207
  %v6272 = vpack.c.bf16 %v6210, %v6209
  %v6273 = vpack.c.bf16 %v6212, %v6211
  %v6274 = vpack.c.bf16 %v6214, %v6213
  %v6275 = vpack.c.bf16 %v6216, %v6215
  %v6276 = vpack.c.bf16 %v6218, %v6217
  %v6277 = vpack.c.bf16 %v6220, %v6219
  %v6278 = vpack.c.bf16 %v6222, %v6221
  %v6279 = vpack.c.bf16 %v6224, %v6223
  %v6280 = vpack.c.bf16 %v6226, %v6225
  %v6281 = vpack.c.bf16 %v6228, %v6227
  %v6282 = vpack.c.bf16 %v6230, %v6229
  %v6283 = vpack.c.bf16 %v6232, %v6231
  %v6284 = vpack.c.bf16 %v6234, %v6233
  %v6285 = vpack.c.bf16 %v6236, %v6235
  %v6286 = vpack.c.bf16 %v6238, %v6237
  %v6287 = vpack.c.bf16 %v6240, %v6239
  %v6288 = vpack.c.bf16 %v6242, %v6241
  %v6289 = vpack.c.bf16 %v6244, %v6243
  %v6290 = vpack.c.bf16 %v6246, %v6245
  %v6291 = vpack.c.bf16 %v6248, %v6247
  %v6292 = vpack.c.bf16 %v6250, %v6249
  %v6293 = vpack.c.bf16 %v6252, %v6251
  %v6294 = vpack.c.bf16 %v6253, %v6253
  %v6295 = vld [vmem:[%s3] sm:$0xf]
  %v6296 = vld [vmem:[%s3 + $0x4] sm:$0xf]
  %v6297 = vld [vmem:[%s3 + $0x8] sm:$0xf]
  %v6298 = vld [vmem:[%s3 + $0xc] sm:$0xf]
  %v6299 = vld [vmem:[%s4] sm:$0x1]
  %v6301 = vlaneseq
  %v6302 = vshrl.u32 %v6301, 7
  %v6303 = vsub.s32 0, %v6302
  %v6304 = vrot.slane %v6299, %v6303
  %v6310 = vunpack.c.l.b16 %v6295
  %v6311 = vunpack.c.l.b16 %v6296
  %v6312 = vunpack.c.l.b16 %v6297
  %v6313 = vunpack.c.l.b16 %v6298
  %v6314 = vpack.c.b16 %v6311, %v6310
  %v6315 = vpack.c.b16 %v6313, %v6312
  %vm6318 = vcmask 261120
  %v6320 = vsel %vm6318, %v6254, 0
  %v6323 = vsel %vm6318, %v6255, 0
  %v6326 = vsel %vm6318, %v6256, 0
  %v6329 = vsel %vm6318, %v6257, 0
  %v6332 = vsel %vm6318, %v6258, 0
  %v6335 = vsel %vm6318, %v6259, 0
  %v6338 = vsel %vm6318, %v6260, 0
  %v6341 = vsel %vm6318, %v6261, 0
  %v6344 = vsel %vm6318, %v6262, 0
  %v6347 = vsel %vm6318, %v6263, 0
  %v6350 = vsel %vm6318, %v6264, 0
  %v6353 = vsel %vm6318, %v6265, 0
  %v6356 = vsel %vm6318, %v6266, 0
  %v6359 = vsel %vm6318, %v6267, 0
  %v6362 = vsel %vm6318, %v6268, 0
  %v6365 = vsel %vm6318, %v6269, 0
  %v6368 = vsel %vm6318, %v6270, 0
  %v6371 = vsel %vm6318, %v6271, 0
  %v6374 = vsel %vm6318, %v6272, 0
  %v6377 = vsel %vm6318, %v6273, 0
  %v6380 = vsel %vm6318, %v6274, 0
  %v6383 = vsel %vm6318, %v6275, 0
  %v6386 = vsel %vm6318, %v6276, 0
  %v6389 = vsel %vm6318, %v6277, 0
  %v6392 = vsel %vm6318, %v6278, 0
  %v6395 = vsel %vm6318, %v6279, 0
  %v6398 = vsel %vm6318, %v6280, 0
  %v6401 = vsel %vm6318, %v6281, 0
  %v6404 = vsel %vm6318, %v6282, 0
  %v6407 = vsel %vm6318, %v6283, 0
  %v6410 = vsel %vm6318, %v6284, 0
  %v6413 = vsel %vm6318, %v6285, 0
  %v6416 = vsel %vm6318, %v6286, 0
  %v6419 = vsel %vm6318, %v6287, 0
  %v6422 = vsel %vm6318, %v6288, 0
  %v6425 = vsel %vm6318, %v6289, 0
  %v6428 = vsel %vm6318, %v6290, 0
  %v6431 = vsel %vm6318, %v6291, 0
  %v6434 = vsel %vm6318, %v6292, 0
  %v6437 = vsel %vm6318, %v6293, 0
  %v6440 = vsel %vm6318, %v6294, 0
  %6442 = vmatprep.subr.bf16.mxu0 0
  %6443 = vmatpush1.bf16.msra.mxu0 %v6314
  %6444 = vmatprep.subr.bf16.mxu0 0
  %6445 = vmatpush1.bf16.msra.mxu0 %v6315
  %6446 = vmatprep.subr.bf16.mxu0 0
  %6447 = vmatpush1.bf16.msra.mxu0 0
  %6448 = vmatprep.subr.bf16.mxu0 0
  %6449 = vmatpush1.bf16.msra.mxu0 0
  %6450 = vmatprep.subr.bf16.mxu0 0
  %6451 = vmatpush1.bf16.msra.mxu0 0
  %6452 = vmatprep.subr.bf16.mxu0 0
  %6453 = vmatpush1.bf16.msra.mxu0 0
  %6454 = vmatprep.subr.bf16.mxu0 0
  %6455 = vmatpush1.bf16.msra.mxu0 0
  %6456 = vmatprep.subr.bf16.mxu0 0
  %6457 = vmatpush1.bf16.msra.mxu0 0
  %6458 = vmatprep.subr.bf16.mxu0 0
  %6459 = vmatpush1.bf16.msra.mxu0 0
  %6460 = vmatprep.subr.bf16.mxu0 0
  %6461 = vmatpush1.bf16.msra.mxu0 0
  %6462 = vmatprep.subr.bf16.mxu0 0
  %6463 = vmatpush1.bf16.msra.mxu0 0
  %6464 = vmatprep.subr.bf16.mxu0 0
  %6465 = vmatpush1.bf16.msra.mxu0 0
  %6466 = vmatprep.subr.bf16.mxu0 0
  %6467 = vmatpush1.bf16.msra.mxu0 0
  %6468 = vmatprep.subr.bf16.mxu0 0
  %6469 = vmatpush1.bf16.msra.mxu0 0
  %6470 = vmatprep.subr.bf16.mxu0 0
  %6471 = vmatpush1.bf16.msra.mxu0 0
  %6472 = vmatprep.subr.bf16.mxu0 0
  %6473 = vmatpush1.bf16.msra.mxu0 0
  %6474 = vmatprep.mubr.bf16.mxu0 0
  %6475 = vmatmul.mubr.bf16.gmra.mrb[0].mxu0 %v6320
  %v6476 = vpop.f32.mrb[0].mxu0
  %v6477 = vadd.f32 %v6304, %v6476
  %v6478 = vpop.f32.mrb[0].mxu0
  %v6479 = vpop.f32.mrb[0].mxu0
  %v6480 = vadd.f32 %v6304, %v6479
  %v6481 = vpop.f32.mrb[0].mxu0
  %6482 = vmatprep.mubr.bf16.mxu0 0
  %6483 = vmatmul.mubr.bf16.gmra.mrb[0].mxu0 %v6323
  %v6484 = vpop.f32.mrb[0].mxu0
  %v6485 = vadd.f32 %v6304, %v6484
  %v6486 = vpop.f32.mrb[0].mxu0
  %v6487 = vpop.f32.mrb[0].mxu0
  %v6488 = vadd.f32 %v6304, %v6487
  %v6489 = vpop.f32.mrb[0].mxu0
  %6490 = vmatprep.mubr.bf16.mxu0 0
  %6491 = vmatmul.mubr.bf16.gmra.mrb[0].mxu0 %v6326
  %v6492 = vpop.f32.mrb[0].mxu0
  %v6493 = vadd.f32 %v6304, %v6492
  %v6494 = vpop.f32.mrb[0].mxu0
  %v6495 = vpop.f32.mrb[0].mxu0
  %v6496 = vadd.f32 %v6304, %v6495
  %v6497 = vpop.f32.mrb[0].mxu0
  %6498 = vmatprep.mubr.bf16.mxu0 0
  %6499 = vmatmul.mubr.bf16.gmra.mrb[0].mxu0 %v6329
  %v6500 = vpop.f32.mrb[0].mxu0
  %v6501 = vadd.f32 %v6304, %v6500
  %v6502 = vpop.f32.mrb[0].mxu0
  %v6503 = vpop.f32.mrb[0].mxu0
  %v6504 = vadd.f32 %v6304, %v6503
  %v6505 = vpop.f32.mrb[0].mxu0
  %6506 = vmatprep.mubr.bf16.mxu0 0
  %6507 = vmatmul.mubr.bf16.gmra.mrb[0].mxu0 %v6332
  %v6508 = vpop.f32.mrb[0].mxu0
  %v6509 = vadd.f32 %v6304, %v6508
  %v6510 = vpop.f32.mrb[0].mxu0
  %v6511 = vpop.f32.mrb[0].mxu0
  %v6512 = vadd.f32 %v6304, %v6511
  %v6513 = vpop.f32.mrb[0].mxu0
  %6514 = vmatprep.mubr.bf16.mxu0 0
  %6515 = vmatmul.mubr.bf16.gmra.mrb[0].mxu0 %v6335
  %v6516 = vpop.f32.mrb[0].mxu0
  %v6517 = vadd.f32 %v6304, %v6516
  %v6518 = vpop.f32.mrb[0].mxu0
  %v6519 = vpop.f32.mrb[0].mxu0
  %v6520 = vadd.f32 %v6304, %v6519
  %v6521 = vpop.f32.mrb[0].mxu0
  %6522 = vmatprep.mubr.bf16.mxu0 0
  %6523 = vmatmul.mubr.bf16.gmra.mrb[0].mxu0 %v6338
  %v6524 = vpop.f32.mrb[0].mxu0
  %v6525 = vadd.f32 %v6304, %v6524
  %v6526 = vpop.f32.mrb[0].mxu0
  %v6527 = vpop.f32.mrb[0].mxu0
  %v6528 = vadd.f32 %v6304, %v6527
  %v6529 = vpop.f32.mrb[0].mxu0
  %6530 = vmatprep.mubr.bf16.mxu0 0
  %6531 = vmatmul.mubr.bf16.gmra.mrb[0].mxu0 %v6341
  %v6532 = vpop.f32.mrb[0].mxu0
  %v6533 = vadd.f32 %v6304, %v6532
  %v6534 = vpop.f32.mrb[0].mxu0
  %v6535 = vpop.f32.mrb[0].mxu0
  %v6536 = vadd.f32 %v6304, %v6535
  %v6537 = vpop.f32.mrb[0].mxu0
  %6538 = vmatprep.mubr.bf16.mxu0 0
  %6539 = vmatmul.mubr.bf16.gmra.mrb[0].mxu0 %v6344
  %v6540 = vpop.f32.mrb[0].mxu0
  %v6541 = vadd.f32 %v6304, %v6540
  %v6542 = vpop.f32.mrb[0].mxu0
  %v6543 = vpop.f32.mrb[0].mxu0
  %v6544 = vadd.f32 %v6304, %v6543
  %v6545 = vpop.f32.mrb[0].mxu0
  %6546 = vmatprep.mubr.bf16.mxu0 0
  %6547 = vmatmul.mubr.bf16.gmra.mrb[0].mxu0 %v6347
  %v6548 = vpop.f32.mrb[0].mxu0
  %v6549 = vadd.f32 %v6304, %v6548
  %v6550 = vpop.f32.mrb[0].mxu0
  %v6551 = vpop.f32.mrb[0].mxu0
  %v6552 = vadd.f32 %v6304, %v6551
  %v6553 = vpop.f32.mrb[0].mxu0
  %6554 = vmatprep.mubr.bf16.mxu0 0
  %6555 = vmatmul.mubr.bf16.gmra.mrb[0].mxu0 %v6350
  %v6556 = vpop.f32.mrb[0].mxu0
  %v6557 = vadd.f32 %v6304, %v6556
  %v6558 = vpop.f32.mrb[0].mxu0
  %v6559 = vpop.f32.mrb[0].mxu0
  %v6560 = vadd.f32 %v6304, %v6559
  %v6561 = vpop.f32.mrb[0].mxu0
  %6562 = vmatprep.mubr.bf16.mxu0 0
  %6563 = vmatmul.mubr.bf16.gmra.mrb[0].mxu0 %v6353
  %v6564 = vpop.f32.mrb[0].mxu0
  %v6565 = vadd.f32 %v6304, %v6564
  %v6566 = vpop.f32.mrb[0].mxu0
  %v6567 = vpop.f32.mrb[0].mxu0
  %v6568 = vadd.f32 %v6304, %v6567
  %v6569 = vpop.f32.mrb[0].mxu0
  %6570 = vmatprep.mubr.bf16.mxu0 0
  %6571 = vmatmul.mubr.bf16.gmra.mrb[0].mxu0 %v6356
  %v6572 = vpop.f32.mrb[0].mxu0
  %v6573 = vadd.f32 %v6304, %v6572
  %v6574 = vpop.f32.mrb[0].mxu0
  %v6575 = vpop.f32.mrb[0].mxu0
  %v6576 = vadd.f32 %v6304, %v6575
  %v6577 = vpop.f32.mrb[0].mxu0
  %6578 = vmatprep.mubr.bf16.mxu0 0
  %6579 = vmatmul.mubr.bf16.gmra.mrb[0].mxu0 %v6359
  %v6580 = vpop.f32.mrb[0].mxu0
  %v6581 = vadd.f32 %v6304, %v6580
  %v6582 = vpop.f32.mrb[0].mxu0
  %v6583 = vpop.f32.mrb[0].mxu0
  %v6584 = vadd.f32 %v6304, %v6583
  %v6585 = vpop.f32.mrb[0].mxu0
  %6586 = vmatprep.mubr.bf16.mxu0 0
  %6587 = vmatmul.mubr.bf16.gmra.mrb[0].mxu0 %v6362
  %v6588 = vpop.f32.mrb[0].mxu0
  %v6589 = vadd.f32 %v6304, %v6588
  %v6590 = vpop.f32.mrb[0].mxu0
  %v6591 = vpop.f32.mrb[0].mxu0
  %v6592 = vadd.f32 %v6304, %v6591
  %v6593 = vpop.f32.mrb[0].mxu0
  %6594 = vmatprep.mubr.bf16.mxu0 0
  %6595 = vmatmul.mubr.bf16.gmra.mrb[0].mxu0 %v6365
  %v6596 = vpop.f32.mrb[0].mxu0
  %v6597 = vadd.f32 %v6304, %v6596
  %v6598 = vpop.f32.mrb[0].mxu0
  %v6599 = vpop.f32.mrb[0].mxu0
  %v6600 = vadd.f32 %v6304, %v6599
  %v6601 = vpop.f32.mrb[0].mxu0
  %6602 = vmatprep.mubr.bf16.mxu0 0
  %6603 = vmatmul.mubr.bf16.gmra.mrb[0].mxu0 %v6368
  %v6604 = vpop.f32.mrb[0].mxu0
  %v6605 = vadd.f32 %v6304, %v6604
  %v6606 = vpop.f32.mrb[0].mxu0
  %v6607 = vpop.f32.mrb[0].mxu0
  %v6608 = vadd.f32 %v6304, %v6607
  %v6609 = vpop.f32.mrb[0].mxu0
  %6610 = vmatprep.mubr.bf16.mxu0 0
  %6611 = vmatmul.mubr.bf16.gmra.mrb[0].mxu0 %v6371
  %v6612 = vpop.f32.mrb[0].mxu0
  %v6613 = vadd.f32 %v6304, %v6612
  %v6614 = vpop.f32.mrb[0].mxu0
  %v6615 = vpop.f32.mrb[0].mxu0
  %v6616 = vadd.f32 %v6304, %v6615
  %v6617 = vpop.f32.mrb[0].mxu0
  %6618 = vmatprep.mubr.bf16.mxu0 0
  %6619 = vmatmul.mubr.bf16.gmra.mrb[0].mxu0 %v6374
  %v6620 = vpop.f32.mrb[0].mxu0
  %v6621 = vadd.f32 %v6304, %v6620
  %v6622 = vpop.f32.mrb[0].mxu0
  %v6623 = vpop.f32.mrb[0].mxu0
  %v6624 = vadd.f32 %v6304, %v6623
  %v6625 = vpop.f32.mrb[0].mxu0
  %6626 = vmatprep.mubr.bf16.mxu0 0
  %6627 = vmatmul.mubr.bf16.gmra.mrb[0].mxu0 %v6377
  %v6628 = vpop.f32.mrb[0].mxu0
  %v6629 = vadd.f32 %v6304, %v6628
  %v6630 = vpop.f32.mrb[0].mxu0
  %v6631 = vpop.f32.mrb[0].mxu0
  %v6632 = vadd.f32 %v6304, %v6631
  %v6633 = vpop.f32.mrb[0].mxu0
  %6634 = vmatprep.mubr.bf16.mxu0 0
  %6635 = vmatmul.mubr.bf16.gmra.mrb[0].mxu0 %v6380
  %v6636 = vpop.f32.mrb[0].mxu0
  %v6637 = vadd.f32 %v6304, %v6636
  %v6638 = vpop.f32.mrb[0].mxu0
  %v6639 = vpop.f32.mrb[0].mxu0
  %v6640 = vadd.f32 %v6304, %v6639
  %v6641 = vpop.f32.mrb[0].mxu0
  %6642 = vmatprep.mubr.bf16.mxu0 0
  %6643 = vmatmul.mubr.bf16.gmra.mrb[0].mxu0 %v6383
  %v6644 = vpop.f32.mrb[0].mxu0
  %v6645 = vadd.f32 %v6304, %v6644
  %v6646 = vpop.f32.mrb[0].mxu0
  %v6647 = vpop.f32.mrb[0].mxu0
  %v6648 = vadd.f32 %v6304, %v6647
  %v6649 = vpop.f32.mrb[0].mxu0
  %6650 = vmatprep.mubr.bf16.mxu0 0
  %6651 = vmatmul.mubr.bf16.gmra.mrb[0].mxu0 %v6386
  %v6652 = vpop.f32.mrb[0].mxu0
  %v6653 = vadd.f32 %v6304, %v6652
  %v6654 = vpop.f32.mrb[0].mxu0
  %v6655 = vpop.f32.mrb[0].mxu0
  %v6656 = vadd.f32 %v6304, %v6655
  %v6657 = vpop.f32.mrb[0].mxu0
  %6658 = vmatprep.mubr.bf16.mxu0 0
  %6659 = vmatmul.mubr.bf16.gmra.mrb[0].mxu0 %v6389
  %v6660 = vpop.f32.mrb[0].mxu0
  %v6661 = vadd.f32 %v6304, %v6660
  %v6662 = vpop.f32.mrb[0].mxu0
  %v6663 = vpop.f32.mrb[0].mxu0
  %v6664 = vadd.f32 %v6304, %v6663
  %v6665 = vpop.f32.mrb[0].mxu0
  %6666 = vmatprep.mubr.bf16.mxu0 0
  %6667 = vmatmul.mubr.bf16.gmra.mrb[0].mxu0 %v6392
  %v6668 = vpop.f32.mrb[0].mxu0
  %v6669 = vadd.f32 %v6304, %v6668
  %v6670 = vpop.f32.mrb[0].mxu0
  %v6671 = vpop.f32.mrb[0].mxu0
  %v6672 = vadd.f32 %v6304, %v6671
  %v6673 = vpop.f32.mrb[0].mxu0
  %6674 = vmatprep.mubr.bf16.mxu0 0
  %6675 = vmatmul.mubr.bf16.gmra.mrb[0].mxu0 %v6395
  %v6676 = vpop.f32.mrb[0].mxu0
  %v6677 = vadd.f32 %v6304, %v6676
  %v6678 = vpop.f32.mrb[0].mxu0
  %v6679 = vpop.f32.mrb[0].mxu0
  %v6680 = vadd.f32 %v6304, %v6679
  %v6681 = vpop.f32.mrb[0].mxu0
  %6682 = vmatprep.mubr.bf16.mxu0 0
  %6683 = vmatmul.mubr.bf16.gmra.mrb[0].mxu0 %v6398
  %v6684 = vpop.f32.mrb[0].mxu0
  %v6685 = vadd.f32 %v6304, %v6684
  %v6686 = vpop.f32.mrb[0].mxu0
  %v6687 = vpop.f32.mrb[0].mxu0
  %v6688 = vadd.f32 %v6304, %v6687
  %v6689 = vpop.f32.mrb[0].mxu0
  %6690 = vmatprep.mubr.bf16.mxu0 0
  %6691 = vmatmul.mubr.bf16.gmra.mrb[0].mxu0 %v6401
  %v6692 = vpop.f32.mrb[0].mxu0
  %v6693 = vadd.f32 %v6304, %v6692
  %v6694 = vpop.f32.mrb[0].mxu0
  %v6695 = vpop.f32.mrb[0].mxu0
  %v6696 = vadd.f32 %v6304, %v6695
  %v6697 = vpop.f32.mrb[0].mxu0
  %6698 = vmatprep.mubr.bf16.mxu0 0
  %6699 = vmatmul.mubr.bf16.gmra.mrb[0].mxu0 %v6404
  %v6700 = vpop.f32.mrb[0].mxu0
  %v6701 = vadd.f32 %v6304, %v6700
  %v6702 = vpop.f32.mrb[0].mxu0
  %v6703 = vpop.f32.mrb[0].mxu0
  %v6704 = vadd.f32 %v6304, %v6703
  %v6705 = vpop.f32.mrb[0].mxu0
  %6706 = vmatprep.mubr.bf16.mxu0 0
  %6707 = vmatmul.mubr.bf16.gmra.mrb[0].mxu0 %v6407
  %v6708 = vpop.f32.mrb[0].mxu0
  %v6709 = vadd.f32 %v6304, %v6708
  %v6710 = vpop.f32.mrb[0].mxu0
  %v6711 = vpop.f32.mrb[0].mxu0
  %v6712 = vadd.f32 %v6304, %v6711
  %v6713 = vpop.f32.mrb[0].mxu0
  %6714 = vmatprep.mubr.bf16.mxu0 0
  %6715 = vmatmul.mubr.bf16.gmra.mrb[0].mxu0 %v6410
  %v6716 = vpop.f32.mrb[0].mxu0
  %v6717 = vadd.f32 %v6304, %v6716
  %v6718 = vpop.f32.mrb[0].mxu0
  %v6719 = vpop.f32.mrb[0].mxu0
  %v6720 = vadd.f32 %v6304, %v6719
  %v6721 = vpop.f32.mrb[0].mxu0
  %6722 = vmatprep.mubr.bf16.mxu0 0
  %6723 = vmatmul.mubr.bf16.gmra.mrb[0].mxu0 %v6413
  %v6724 = vpop.f32.mrb[0].mxu0
  %v6725 = vadd.f32 %v6304, %v6724
  %v6726 = vpop.f32.mrb[0].mxu0
  %v6727 = vpop.f32.mrb[0].mxu0
  %v6728 = vadd.f32 %v6304, %v6727
  %v6729 = vpop.f32.mrb[0].mxu0
  %6730 = vmatprep.mubr.bf16.mxu0 0
  %6731 = vmatmul.mubr.bf16.gmra.mrb[0].mxu0 %v6416
  %v6732 = vpop.f32.mrb[0].mxu0
  %v6733 = vadd.f32 %v6304, %v6732
  %v6734 = vpop.f32.mrb[0].mxu0
  %v6735 = vpop.f32.mrb[0].mxu0
  %v6736 = vadd.f32 %v6304, %v6735
  %v6737 = vpop.f32.mrb[0].mxu0
  %6738 = vmatprep.mubr.bf16.mxu0 0
  %6739 = vmatmul.mubr.bf16.gmra.mrb[0].mxu0 %v6419
  %v6740 = vpop.f32.mrb[0].mxu0
  %v6741 = vadd.f32 %v6304, %v6740
  %v6742 = vpop.f32.mrb[0].mxu0
  %v6743 = vpop.f32.mrb[0].mxu0
  %v6744 = vadd.f32 %v6304, %v6743
  %v6745 = vpop.f32.mrb[0].mxu0
  %6746 = vmatprep.mubr.bf16.mxu0 0
  %6747 = vmatmul.mubr.bf16.gmra.mrb[0].mxu0 %v6422
  %v6748 = vpop.f32.mrb[0].mxu0
  %v6749 = vadd.f32 %v6304, %v6748
  %v6750 = vpop.f32.mrb[0].mxu0
  %v6751 = vpop.f32.mrb[0].mxu0
  %v6752 = vadd.f32 %v6304, %v6751
  %v6753 = vpop.f32.mrb[0].mxu0
  %6754 = vmatprep.mubr.bf16.mxu0 0
  %6755 = vmatmul.mubr.bf16.gmra.mrb[0].mxu0 %v6425
  %v6756 = vpop.f32.mrb[0].mxu0
  %v6757 = vadd.f32 %v6304, %v6756
  %v6758 = vpop.f32.mrb[0].mxu0
  %v6759 = vpop.f32.mrb[0].mxu0
  %v6760 = vadd.f32 %v6304, %v6759
  %v6761 = vpop.f32.mrb[0].mxu0
  %6762 = vmatprep.mubr.bf16.mxu0 0
  %6763 = vmatmul.mubr.bf16.gmra.mrb[0].mxu0 %v6428
  %v6764 = vpop.f32.mrb[0].mxu0
  %v6765 = vadd.f32 %v6304, %v6764
  %v6766 = vpop.f32.mrb[0].mxu0
  %v6767 = vpop.f32.mrb[0].mxu0
  %v6768 = vadd.f32 %v6304, %v6767
  %v6769 = vpop.f32.mrb[0].mxu0
  %6770 = vmatprep.mubr.bf16.mxu0 0
  %6771 = vmatmul.mubr.bf16.gmra.mrb[0].mxu0 %v6431
  %v6772 = vpop.f32.mrb[0].mxu0
  %v6773 = vadd.f32 %v6304, %v6772
  %v6774 = vpop.f32.mrb[0].mxu0
  %v6775 = vpop.f32.mrb[0].mxu0
  %v6776 = vadd.f32 %v6304, %v6775
  %v6777 = vpop.f32.mrb[0].mxu0
  %6778 = vmatprep.mubr.bf16.mxu0 0
  %6779 = vmatmul.mubr.bf16.gmra.mrb[0].mxu0 %v6434
  %v6780 = vpop.f32.mrb[0].mxu0
  %v6781 = vadd.f32 %v6304, %v6780
  %v6782 = vpop.f32.mrb[0].mxu0
  %v6783 = vpop.f32.mrb[0].mxu0
  %v6784 = vadd.f32 %v6304, %v6783
  %v6785 = vpop.f32.mrb[0].mxu0
  %6786 = vmatprep.mubr.bf16.mxu0 0
  %6787 = vmatmul.mubr.bf16.gmra.mrb[0].mxu0 %v6437
  %v6788 = vpop.f32.mrb[0].mxu0
  %v6789 = vadd.f32 %v6304, %v6788
  %v6790 = vpop.f32.mrb[0].mxu0
  %v6791 = vpop.f32.mrb[0].mxu0
  %v6792 = vadd.f32 %v6304, %v6791
  %v6793 = vpop.f32.mrb[0].mxu0
  %6794 = vmatprep.mubr.bf16.mxu0 0
  %6795 = vmatmul.mubr.bf16.gmra.mrb[0].mxu0 %v6440
  %v6796 = vpop.f32.mrb[0].mxu0
  %v6797 = vadd.f32 %v6304, %v6796
  %v6798 = vpop.f32.mrb[0].mxu0
  %v6799 = vpop.f32.mrb[0].mxu0
  %v6800 = vpop.f32.mrb[0].mxu0
  %6801 = vdwg.mxu0
  %v6802 = vmax.f32 %v6477, 0.0
  %v6803 = vmax.f32 %v6480, 0.0
  %v6804 = vmax.f32 %v6485, 0.0
  %v6805 = vmax.f32 %v6488, 0.0
  %v6806 = vmax.f32 %v6493, 0.0
  %v6807 = vmax.f32 %v6496, 0.0
  %v6808 = vmax.f32 %v6501, 0.0
  %v6809 = vmax.f32 %v6504, 0.0
  %v6810 = vmax.f32 %v6509, 0.0
  %v6811 = vmax.f32 %v6512, 0.0
  %v6812 = vmax.f32 %v6517, 0.0
  %v6813 = vmax.f32 %v6520, 0.0
  %v6814 = vmax.f32 %v6525, 0.0
  %v6815 = vmax.f32 %v6528, 0.0
  %v6816 = vmax.f32 %v6533, 0.0
  %v6817 = vmax.f32 %v6536, 0.0
  %v6818 = vmax.f32 %v6541, 0.0
  %v6819 = vmax.f32 %v6544, 0.0
  %v6820 = vmax.f32 %v6549, 0.0
  %v6821 = vmax.f32 %v6552, 0.0
  %v6822 = vmax.f32 %v6557, 0.0
  %v6823 = vmax.f32 %v6560, 0.0
  %v6824 = vmax.f32 %v6565, 0.0
  %v6825 = vmax.f32 %v6568, 0.0
  %v6826 = vmax.f32 %v6573, 0.0
  %v6827 = vmax.f32 %v6576, 0.0
  %v6828 = vmax.f32 %v6581, 0.0
  %v6829 = vmax.f32 %v6584, 0.0
  %v6830 = vmax.f32 %v6589, 0.0
  %v6831 = vmax.f32 %v6592, 0.0
  %v6832 = vmax.f32 %v6597, 0.0
  %v6833 = vmax.f32 %v6600, 0.0
  %v6834 = vmax.f32 %v6605, 0.0
  %v6835 = vmax.f32 %v6608, 0.0
  %v6836 = vmax.f32 %v6613, 0.0
  %v6837 = vmax.f32 %v6616, 0.0
  %v6838 = vmax.f32 %v6621, 0.0
  %v6839 = vmax.f32 %v6624, 0.0
  %v6840 = vmax.f32 %v6629, 0.0
  %v6841 = vmax.f32 %v6632, 0.0
  %v6842 = vmax.f32 %v6637, 0.0
  %v6843 = vmax.f32 %v6640, 0.0
  %v6844 = vmax.f32 %v6645, 0.0
  %v6845 = vmax.f32 %v6648, 0.0
  %v6846 = vmax.f32 %v6653, 0.0
  %v6847 = vmax.f32 %v6656, 0.0
  %v6848 = vmax.f32 %v6661, 0.0
  %v6849 = vmax.f32 %v6664, 0.0
  %v6850 = vmax.f32 %v6669, 0.0
  %v6851 = vmax.f32 %v6672, 0.0
  %v6852 = vmax.f32 %v6677, 0.0
  %v6853 = vmax.f32 %v6680, 0.0
  %v6854 = vmax.f32 %v6685, 0.0
  %v6855 = vmax.f32 %v6688, 0.0
  %v6856 = vmax.f32 %v6693, 0.0
  %v6857 = vmax.f32 %v6696, 0.0
  %v6858 = vmax.f32 %v6701, 0.0
  %v6859 = vmax.f32 %v6704, 0.0
  %v6860 = vmax.f32 %v6709, 0.0
  %v6861 = vmax.f32 %v6712, 0.0
  %v6862 = vmax.f32 %v6717, 0.0
  %v6863 = vmax.f32 %v6720, 0.0
  %v6864 = vmax.f32 %v6725, 0.0
  %v6865 = vmax.f32 %v6728, 0.0
  %v6866 = vmax.f32 %v6733, 0.0
  %v6867 = vmax.f32 %v6736, 0.0
  %v6868 = vmax.f32 %v6741, 0.0
  %v6869 = vmax.f32 %v6744, 0.0
  %v6870 = vmax.f32 %v6749, 0.0
  %v6871 = vmax.f32 %v6752, 0.0
  %v6872 = vmax.f32 %v6757, 0.0
  %v6873 = vmax.f32 %v6760, 0.0
  %v6874 = vmax.f32 %v6765, 0.0
  %v6875 = vmax.f32 %v6768, 0.0
  %v6876 = vmax.f32 %v6773, 0.0
  %v6877 = vmax.f32 %v6776, 0.0
  %v6878 = vmax.f32 %v6781, 0.0
  %v6879 = vmax.f32 %v6784, 0.0
  %v6880 = vmax.f32 %v6789, 0.0
  %v6881 = vmax.f32 %v6792, 0.0
  %v6882 = vmax.f32 %v6797, 0.0
  %v6883 = vpack.c.bf16 %v6803, %v6802
  %v6884 = vpack.c.bf16 %v6805, %v6804
  %v6885 = vpack.c.bf16 %v6807, %v6806
  %v6886 = vpack.c.bf16 %v6809, %v6808
  %v6887 = vpack.c.bf16 %v6811, %v6810
  %v6888 = vpack.c.bf16 %v6813, %v6812
  %v6889 = vpack.c.bf16 %v6815, %v6814
  %v6890 = vpack.c.bf16 %v6817, %v6816
  %v6891 = vpack.c.bf16 %v6819, %v6818
  %v6892 = vpack.c.bf16 %v6821, %v6820
  %v6893 = vpack.c.bf16 %v6823, %v6822
  %v6894 = vpack.c.bf16 %v6825, %v6824
  %v6895 = vpack.c.bf16 %v6827, %v6826
  %v6896 = vpack.c.bf16 %v6829, %v6828
  %v6897 = vpack.c.bf16 %v6831, %v6830
  %v6898 = vpack.c.bf16 %v6833, %v6832
  %v6899 = vpack.c.bf16 %v6835, %v6834
  %v6900 = vpack.c.bf16 %v6837, %v6836
  %v6901 = vpack.c.bf16 %v6839, %v6838
  %v6902 = vpack.c.bf16 %v6841, %v6840
  %v6903 = vpack.c.bf16 %v6843, %v6842
  %v6904 = vpack.c.bf16 %v6845, %v6844
  %v6905 = vpack.c.bf16 %v6847, %v6846
  %v6906 = vpack.c.bf16 %v6849, %v6848
  %v6907 = vpack.c.bf16 %v6851, %v6850
  %v6908 = vpack.c.bf16 %v6853, %v6852
  %v6909 = vpack.c.bf16 %v6855, %v6854
  %v6910 = vpack.c.bf16 %v6857, %v6856
  %v6911 = vpack.c.bf16 %v6859, %v6858
  %v6912 = vpack.c.bf16 %v6861, %v6860
  %v6913 = vpack.c.bf16 %v6863, %v6862
  %v6914 = vpack.c.bf16 %v6865, %v6864
  %v6915 = vpack.c.bf16 %v6867, %v6866
  %v6916 = vpack.c.bf16 %v6869, %v6868
  %v6917 = vpack.c.bf16 %v6871, %v6870
  %v6918 = vpack.c.bf16 %v6873, %v6872
  %v6919 = vpack.c.bf16 %v6875, %v6874
  %v6920 = vpack.c.bf16 %v6877, %v6876
  %v6921 = vpack.c.bf16 %v6879, %v6878
  %v6922 = vpack.c.bf16 %v6881, %v6880
  %v6923 = vpack.c.bf16 %v6882, %v6882
  %v6924 = vld [vmem:[%s5] sm:$0xf]
  %v6925 = vld [vmem:[%s5 + $0x4] sm:$0xf]
  %v6926 = vld [vmem:[%s5 + $0x8] sm:$0xf]
  %v6927 = vld [vmem:[%s5 + $0xc] sm:$0xf]
  %v6928 = vld [vmem:[%s5 + $0x10] sm:$0xf]
  %v6929 = vld [vmem:[%s5 + $0x14] sm:$0xf]
  %v6930 = vld [vmem:[%s5 + $0x18] sm:$0xf]
  %v6931 = vld [vmem:[%s5 + $0x1c] sm:$0xf]
  %v6932 = vld [vmem:[%s6] sm:$0x1]
  %v6934 = vlaneseq
  %v6935 = vshrl.u32 %v6934, 7
  %v6936 = vsub.s32 0, %v6935
  %v6937 = vrot.slane %v6932, %v6936
  %v6947 = vunpack.c.l.b16 %v6924
  %v6948 = vunpack.c.l.b16 %v6925
  %v6949 = vunpack.c.l.b16 %v6926
  %v6950 = vunpack.c.l.b16 %v6927
  %v6951 = vunpack.c.l.b16 %v6928
  %v6952 = vunpack.c.l.b16 %v6929
  %v6953 = vunpack.c.l.b16 %v6930
  %v6954 = vunpack.c.l.b16 %v6931
  %v6955 = vpack.c.b16 %v6948, %v6947
  %v6956 = vpack.c.b16 %v6950, %v6949
  %v6957 = vpack.c.b16 %v6952, %v6951
  %v6958 = vpack.c.b16 %v6954, %v6953
  %vm6963 = vcmask 523264
  %v6965 = vsel %vm6963, %v6883, 0
  %v6968 = vsel %vm6963, %v6884, 0
  %v6971 = vsel %vm6963, %v6885, 0
  %v6974 = vsel %vm6963, %v6886, 0
  %v6977 = vsel %vm6963, %v6887, 0
  %v6980 = vsel %vm6963, %v6888, 0
  %v6983 = vsel %vm6963, %v6889, 0
  %v6986 = vsel %vm6963, %v6890, 0
  %v6989 = vsel %vm6963, %v6891, 0
  %v6992 = vsel %vm6963, %v6892, 0
  %v6995 = vsel %vm6963, %v6893, 0
  %v6998 = vsel %vm6963, %v6894, 0
  %v7001 = vsel %vm6963, %v6895, 0
  %v7004 = vsel %vm6963, %v6896, 0
  %v7007 = vsel %vm6963, %v6897, 0
  %v7010 = vsel %vm6963, %v6898, 0
  %v7013 = vsel %vm6963, %v6899, 0
  %v7016 = vsel %vm6963, %v6900, 0
  %v7019 = vsel %vm6963, %v6901, 0
  %v7022 = vsel %vm6963, %v6902, 0
  %v7025 = vsel %vm6963, %v6903, 0
  %v7028 = vsel %vm6963, %v6904, 0
  %v7031 = vsel %vm6963, %v6905, 0
  %v7034 = vsel %vm6963, %v6906, 0
  %v7037 = vsel %vm6963, %v6907, 0
  %v7040 = vsel %vm6963, %v6908, 0
  %v7043 = vsel %vm6963, %v6909, 0
  %v7046 = vsel %vm6963, %v6910, 0
  %v7049 = vsel %vm6963, %v6911, 0
  %v7052 = vsel %vm6963, %v6912, 0
  %v7055 = vsel %vm6963, %v6913, 0
  %v7058 = vsel %vm6963, %v6914, 0
  %v7061 = vsel %vm6963, %v6915, 0
  %v7064 = vsel %vm6963, %v6916, 0
  %v7067 = vsel %vm6963, %v6917, 0
  %v7070 = vsel %vm6963, %v6918, 0
  %v7073 = vsel %vm6963, %v6919, 0
  %v7076 = vsel %vm6963, %v6920, 0
  %v7079 = vsel %vm6963, %v6921, 0
  %v7082 = vsel %vm6963, %v6922, 0
  %v7085 = vsel %vm6963, %v6923, 0
  %7087 = vmatprep.subr.bf16.mxu0 0
  %7088 = vmatpush1.bf16.msra.mxu0 %v6955
  %7089 = vmatprep.subr.bf16.mxu0 0
  %7090 = vmatpush1.bf16.msra.mxu0 %v6956
  %7091 = vmatprep.subr.bf16.mxu0 0
  %7092 = vmatpush1.bf16.msra.mxu0 %v6957
  %7093 = vmatprep.subr.bf16.mxu0 0
  %7094 = vmatpush1.bf16.msra.mxu0 %v6958
  %7095 = vmatprep.subr.bf16.mxu0 0
  %7096 = vmatpush1.bf16.msra.mxu0 0
  %7097 = vmatprep.subr.bf16.mxu0 0
  %7098 = vmatpush1.bf16.msra.mxu0 0
  %7099 = vmatprep.subr.bf16.mxu0 0
  %7100 = vmatpush1.bf16.msra.mxu0 0
  %7101 = vmatprep.subr.bf16.mxu0 0
  %7102 = vmatpush1.bf16.msra.mxu0 0
  %7103 = vmatprep.subr.bf16.mxu0 0
  %7104 = vmatpush1.bf16.msra.mxu0 0
  %7105 = vmatprep.subr.bf16.mxu0 0
  %7106 = vmatpush1.bf16.msra.mxu0 0
  %7107 = vmatprep.subr.bf16.mxu0 0
  %7108 = vmatpush1.bf16.msra.mxu0 0
  %7109 = vmatprep.subr.bf16.mxu0 0
  %7110 = vmatpush1.bf16.msra.mxu0 0
  %7111 = vmatprep.subr.bf16.mxu0 0
  %7112 = vmatpush1.bf16.msra.mxu0 0
  %7113 = vmatprep.subr.bf16.mxu0 0
  %7114 = vmatpush1.bf16.msra.mxu0 0
  %7115 = vmatprep.subr.bf16.mxu0 0
  %7116 = vmatpush1.bf16.msra.mxu0 0
  %7117 = vmatprep.subr.bf16.mxu0 0
  %7118 = vmatpush1.bf16.msra.mxu0 0
  %7119 = vmatprep.mubr.bf16.mxu0 0
  %7120 = vmatmul.mubr.bf16.gmra.mrb[0].mxu0 %v6965
  %v7121 = vpop.f32.mrb[0].mxu0
  %v7122 = vadd.f32 %v6937, %v7121
  %v7123 = vpop.f32.mrb[0].mxu0
  %v7124 = vpop.f32.mrb[0].mxu0
  %v7125 = vadd.f32 %v6937, %v7124
  %v7126 = vpop.f32.mrb[0].mxu0
  %7127 = vmatprep.mubr.bf16.mxu0 0
  %7128 = vmatmul.mubr.bf16.gmra.mrb[0].mxu0 %v6968
  %v7129 = vpop.f32.mrb[0].mxu0
  %v7130 = vadd.f32 %v6937, %v7129
  %v7131 = vpop.f32.mrb[0].mxu0
  %v7132 = vpop.f32.mrb[0].mxu0
  %v7133 = vadd.f32 %v6937, %v7132
  %v7134 = vpop.f32.mrb[0].mxu0
  %7135 = vmatprep.mubr.bf16.mxu0 0
  %7136 = vmatmul.mubr.bf16.gmra.mrb[0].mxu0 %v6971
  %v7137 = vpop.f32.mrb[0].mxu0
  %v7138 = vadd.f32 %v6937, %v7137
  %v7139 = vpop.f32.mrb[0].mxu0
  %v7140 = vpop.f32.mrb[0].mxu0
  %v7141 = vadd.f32 %v6937, %v7140
  %v7142 = vpop.f32.mrb[0].mxu0
  %7143 = vmatprep.mubr.bf16.mxu0 0
  %7144 = vmatmul.mubr.bf16.gmra.mrb[0].mxu0 %v6974
  %v7145 = vpop.f32.mrb[0].mxu0
  %v7146 = vadd.f32 %v6937, %v7145
  %v7147 = vpop.f32.mrb[0].mxu0
  %v7148 = vpop.f32.mrb[0].mxu0
  %v7149 = vadd.f32 %v6937, %v7148
  %v7150 = vpop.f32.mrb[0].mxu0
  %7151 = vmatprep.mubr.bf16.mxu0 0
  %7152 = vmatmul.mubr.bf16.gmra.mrb[0].mxu0 %v6977
  %v7153 = vpop.f32.mrb[0].mxu0
  %v7154 = vadd.f32 %v6937, %v7153
  %v7155 = vpop.f32.mrb[0].mxu0
  %v7156 = vpop.f32.mrb[0].mxu0
  %v7157 = vadd.f32 %v6937, %v7156
  %v7158 = vpop.f32.mrb[0].mxu0
  %7159 = vmatprep.mubr.bf16.mxu0 0
  %7160 = vmatmul.mubr.bf16.gmra.mrb[0].mxu0 %v6980
  %v7161 = vpop.f32.mrb[0].mxu0
  %v7162 = vadd.f32 %v6937, %v7161
  %v7163 = vpop.f32.mrb[0].mxu0
  %v7164 = vpop.f32.mrb[0].mxu0
  %v7165 = vadd.f32 %v6937, %v7164
  %v7166 = vpop.f32.mrb[0].mxu0
  %7167 = vmatprep.mubr.bf16.mxu0 0
  %7168 = vmatmul.mubr.bf16.gmra.mrb[0].mxu0 %v6983
  %v7169 = vpop.f32.mrb[0].mxu0
  %v7170 = vadd.f32 %v6937, %v7169
  %v7171 = vpop.f32.mrb[0].mxu0
  %v7172 = vpop.f32.mrb[0].mxu0
  %v7173 = vadd.f32 %v6937, %v7172
  %v7174 = vpop.f32.mrb[0].mxu0
  %7175 = vmatprep.mubr.bf16.mxu0 0
  %7176 = vmatmul.mubr.bf16.gmra.mrb[0].mxu0 %v6986
  %v7177 = vpop.f32.mrb[0].mxu0
  %v7178 = vadd.f32 %v6937, %v7177
  %v7179 = vpop.f32.mrb[0].mxu0
  %v7180 = vpop.f32.mrb[0].mxu0
  %v7181 = vadd.f32 %v6937, %v7180
  %v7182 = vpop.f32.mrb[0].mxu0
  %7183 = vmatprep.mubr.bf16.mxu0 0
  %7184 = vmatmul.mubr.bf16.gmra.mrb[0].mxu0 %v6989
  %v7185 = vpop.f32.mrb[0].mxu0
  %v7186 = vadd.f32 %v6937, %v7185
  %v7187 = vpop.f32.mrb[0].mxu0
  %v7188 = vpop.f32.mrb[0].mxu0
  %v7189 = vadd.f32 %v6937, %v7188
  %v7190 = vpop.f32.mrb[0].mxu0
  %7191 = vmatprep.mubr.bf16.mxu0 0
  %7192 = vmatmul.mubr.bf16.gmra.mrb[0].mxu0 %v6992
  %v7193 = vpop.f32.mrb[0].mxu0
  %v7194 = vadd.f32 %v6937, %v7193
  %v7195 = vpop.f32.mrb[0].mxu0
  %v7196 = vpop.f32.mrb[0].mxu0
  %v7197 = vadd.f32 %v6937, %v7196
  %v7198 = vpop.f32.mrb[0].mxu0
  %7199 = vmatprep.mubr.bf16.mxu0 0
  %7200 = vmatmul.mubr.bf16.gmra.mrb[0].mxu0 %v6995
  %v7201 = vpop.f32.mrb[0].mxu0
  %v7202 = vadd.f32 %v6937, %v7201
  %v7203 = vpop.f32.mrb[0].mxu0
  %v7204 = vpop.f32.mrb[0].mxu0
  %v7205 = vadd.f32 %v6937, %v7204
  %v7206 = vpop.f32.mrb[0].mxu0
  %7207 = vmatprep.mubr.bf16.mxu0 0
  %7208 = vmatmul.mubr.bf16.gmra.mrb[0].mxu0 %v6998
  %v7209 = vpop.f32.mrb[0].mxu0
  %v7210 = vadd.f32 %v6937, %v7209
  %v7211 = vpop.f32.mrb[0].mxu0
  %v7212 = vpop.f32.mrb[0].mxu0
  %v7213 = vadd.f32 %v6937, %v7212
  %v7214 = vpop.f32.mrb[0].mxu0
  %7215 = vmatprep.mubr.bf16.mxu0 0
  %7216 = vmatmul.mubr.bf16.gmra.mrb[0].mxu0 %v7001
  %v7217 = vpop.f32.mrb[0].mxu0
  %v7218 = vadd.f32 %v6937, %v7217
  %v7219 = vpop.f32.mrb[0].mxu0
  %v7220 = vpop.f32.mrb[0].mxu0
  %v7221 = vadd.f32 %v6937, %v7220
  %v7222 = vpop.f32.mrb[0].mxu0
  %7223 = vmatprep.mubr.bf16.mxu0 0
  %7224 = vmatmul.mubr.bf16.gmra.mrb[0].mxu0 %v7004
  %v7225 = vpop.f32.mrb[0].mxu0
  %v7226 = vadd.f32 %v6937, %v7225
  %v7227 = vpop.f32.mrb[0].mxu0
  %v7228 = vpop.f32.mrb[0].mxu0
  %v7229 = vadd.f32 %v6937, %v7228
  %v7230 = vpop.f32.mrb[0].mxu0
  %7231 = vmatprep.mubr.bf16.mxu0 0
  %7232 = vmatmul.mubr.bf16.gmra.mrb[0].mxu0 %v7007
  %v7233 = vpop.f32.mrb[0].mxu0
  %v7234 = vadd.f32 %v6937, %v7233
  %v7235 = vpop.f32.mrb[0].mxu0
  %v7236 = vpop.f32.mrb[0].mxu0
  %v7237 = vadd.f32 %v6937, %v7236
  %v7238 = vpop.f32.mrb[0].mxu0
  %7239 = vmatprep.mubr.bf16.mxu0 0
  %7240 = vmatmul.mubr.bf16.gmra.mrb[0].mxu0 %v7010
  %v7241 = vpop.f32.mrb[0].mxu0
  %v7242 = vadd.f32 %v6937, %v7241
  %v7243 = vpop.f32.mrb[0].mxu0
  %v7244 = vpop.f32.mrb[0].mxu0
  %v7245 = vadd.f32 %v6937, %v7244
  %v7246 = vpop.f32.mrb[0].mxu0
  %7247 = vmatprep.mubr.bf16.mxu0 0
  %7248 = vmatmul.mubr.bf16.gmra.mrb[0].mxu0 %v7013
  %v7249 = vpop.f32.mrb[0].mxu0
  %v7250 = vadd.f32 %v6937, %v7249
  %v7251 = vpop.f32.mrb[0].mxu0
  %v7252 = vpop.f32.mrb[0].mxu0
  %v7253 = vadd.f32 %v6937, %v7252
  %v7254 = vpop.f32.mrb[0].mxu0
  %7255 = vmatprep.mubr.bf16.mxu0 0
  %7256 = vmatmul.mubr.bf16.gmra.mrb[0].mxu0 %v7016
  %v7257 = vpop.f32.mrb[0].mxu0
  %v7258 = vadd.f32 %v6937, %v7257
  %v7259 = vpop.f32.mrb[0].mxu0
  %v7260 = vpop.f32.mrb[0].mxu0
  %v7261 = vadd.f32 %v6937, %v7260
  %v7262 = vpop.f32.mrb[0].mxu0
  %7263 = vmatprep.mubr.bf16.mxu0 0
  %7264 = vmatmul.mubr.bf16.gmra.mrb[0].mxu0 %v7019
  %v7265 = vpop.f32.mrb[0].mxu0
  %v7266 = vadd.f32 %v6937, %v7265
  %v7267 = vpop.f32.mrb[0].mxu0
  %v7268 = vpop.f32.mrb[0].mxu0
  %v7269 = vadd.f32 %v6937, %v7268
  %v7270 = vpop.f32.mrb[0].mxu0
  %7271 = vmatprep.mubr.bf16.mxu0 0
  %7272 = vmatmul.mubr.bf16.gmra.mrb[0].mxu0 %v7022
  %v7273 = vpop.f32.mrb[0].mxu0
  %v7274 = vadd.f32 %v6937, %v7273
  %v7275 = vpop.f32.mrb[0].mxu0
  %v7276 = vpop.f32.mrb[0].mxu0
  %v7277 = vadd.f32 %v6937, %v7276
  %v7278 = vpop.f32.mrb[0].mxu0
  %7279 = vmatprep.mubr.bf16.mxu0 0
  %7280 = vmatmul.mubr.bf16.gmra.mrb[0].mxu0 %v7025
  %v7281 = vpop.f32.mrb[0].mxu0
  %v7282 = vadd.f32 %v6937, %v7281
  %v7283 = vpop.f32.mrb[0].mxu0
  %v7284 = vpop.f32.mrb[0].mxu0
  %v7285 = vadd.f32 %v6937, %v7284
  %v7286 = vpop.f32.mrb[0].mxu0
  %7287 = vmatprep.mubr.bf16.mxu0 0
  %7288 = vmatmul.mubr.bf16.gmra.mrb[0].mxu0 %v7028
  %v7289 = vpop.f32.mrb[0].mxu0
  %v7290 = vadd.f32 %v6937, %v7289
  %v7291 = vpop.f32.mrb[0].mxu0
  %v7292 = vpop.f32.mrb[0].mxu0
  %v7293 = vadd.f32 %v6937, %v7292
  %v7294 = vpop.f32.mrb[0].mxu0
  %7295 = vmatprep.mubr.bf16.mxu0 0
  %7296 = vmatmul.mubr.bf16.gmra.mrb[0].mxu0 %v7031
  %v7297 = vpop.f32.mrb[0].mxu0
  %v7298 = vadd.f32 %v6937, %v7297
  %v7299 = vpop.f32.mrb[0].mxu0
  %v7300 = vpop.f32.mrb[0].mxu0
  %v7301 = vadd.f32 %v6937, %v7300
  %v7302 = vpop.f32.mrb[0].mxu0
  %7303 = vmatprep.mubr.bf16.mxu0 0
  %7304 = vmatmul.mubr.bf16.gmra.mrb[0].mxu0 %v7034
  %v7305 = vpop.f32.mrb[0].mxu0
  %v7306 = vadd.f32 %v6937, %v7305
  %v7307 = vpop.f32.mrb[0].mxu0
  %v7308 = vpop.f32.mrb[0].mxu0
  %v7309 = vadd.f32 %v6937, %v7308
  %v7310 = vpop.f32.mrb[0].mxu0
  %7311 = vmatprep.mubr.bf16.mxu0 0
  %7312 = vmatmul.mubr.bf16.gmra.mrb[0].mxu0 %v7037
  %v7313 = vpop.f32.mrb[0].mxu0
  %v7314 = vadd.f32 %v6937, %v7313
  %v7315 = vpop.f32.mrb[0].mxu0
  %v7316 = vpop.f32.mrb[0].mxu0
  %v7317 = vadd.f32 %v6937, %v7316
  %v7318 = vpop.f32.mrb[0].mxu0
  %7319 = vmatprep.mubr.bf16.mxu0 0
  %7320 = vmatmul.mubr.bf16.gmra.mrb[0].mxu0 %v7040
  %v7321 = vpop.f32.mrb[0].mxu0
  %v7322 = vadd.f32 %v6937, %v7321
  %v7323 = vpop.f32.mrb[0].mxu0
  %v7324 = vpop.f32.mrb[0].mxu0
  %v7325 = vadd.f32 %v6937, %v7324
  %v7326 = vpop.f32.mrb[0].mxu0
  %7327 = vmatprep.mubr.bf16.mxu0 0
  %7328 = vmatmul.mubr.bf16.gmra.mrb[0].mxu0 %v7043
  %v7329 = vpop.f32.mrb[0].mxu0
  %v7330 = vadd.f32 %v6937, %v7329
  %v7331 = vpop.f32.mrb[0].mxu0
  %v7332 = vpop.f32.mrb[0].mxu0
  %v7333 = vadd.f32 %v6937, %v7332
  %v7334 = vpop.f32.mrb[0].mxu0
  %7335 = vmatprep.mubr.bf16.mxu0 0
  %7336 = vmatmul.mubr.bf16.gmra.mrb[0].mxu0 %v7046
  %v7337 = vpop.f32.mrb[0].mxu0
  %v7338 = vadd.f32 %v6937, %v7337
  %v7339 = vpop.f32.mrb[0].mxu0
  %v7340 = vpop.f32.mrb[0].mxu0
  %v7341 = vadd.f32 %v6937, %v7340
  %v7342 = vpop.f32.mrb[0].mxu0
  %7343 = vmatprep.mubr.bf16.mxu0 0
  %7344 = vmatmul.mubr.bf16.gmra.mrb[0].mxu0 %v7049
  %v7345 = vpop.f32.mrb[0].mxu0
  %v7346 = vadd.f32 %v6937, %v7345
  %v7347 = vpop.f32.mrb[0].mxu0
  %v7348 = vpop.f32.mrb[0].mxu0
  %v7349 = vadd.f32 %v6937, %v7348
  %v7350 = vpop.f32.mrb[0].mxu0
  %7351 = vmatprep.mubr.bf16.mxu0 0
  %7352 = vmatmul.mubr.bf16.gmra.mrb[0].mxu0 %v7052
  %v7353 = vpop.f32.mrb[0].mxu0
  %v7354 = vadd.f32 %v6937, %v7353
  %v7355 = vpop.f32.mrb[0].mxu0
  %v7356 = vpop.f32.mrb[0].mxu0
  %v7357 = vadd.f32 %v6937, %v7356
  %v7358 = vpop.f32.mrb[0].mxu0
  %7359 = vmatprep.mubr.bf16.mxu0 0
  %7360 = vmatmul.mubr.bf16.gmra.mrb[0].mxu0 %v7055
  %v7361 = vpop.f32.mrb[0].mxu0
  %v7362 = vadd.f32 %v6937, %v7361
  %v7363 = vpop.f32.mrb[0].mxu0
  %v7364 = vpop.f32.mrb[0].mxu0
  %v7365 = vadd.f32 %v6937, %v7364
  %v7366 = vpop.f32.mrb[0].mxu0
  %7367 = vmatprep.mubr.bf16.mxu0 0
  %7368 = vmatmul.mubr.bf16.gmra.mrb[0].mxu0 %v7058
  %v7369 = vpop.f32.mrb[0].mxu0
  %v7370 = vadd.f32 %v6937, %v7369
  %v7371 = vpop.f32.mrb[0].mxu0
  %v7372 = vpop.f32.mrb[0].mxu0
  %v7373 = vadd.f32 %v6937, %v7372
  %v7374 = vpop.f32.mrb[0].mxu0
  %7375 = vmatprep.mubr.bf16.mxu0 0
  %7376 = vmatmul.mubr.bf16.gmra.mrb[0].mxu0 %v7061
  %v7377 = vpop.f32.mrb[0].mxu0
  %v7378 = vadd.f32 %v6937, %v7377
  %v7379 = vpop.f32.mrb[0].mxu0
  %v7380 = vpop.f32.mrb[0].mxu0
  %v7381 = vadd.f32 %v6937, %v7380
  %v7382 = vpop.f32.mrb[0].mxu0
  %7383 = vmatprep.mubr.bf16.mxu0 0
  %7384 = vmatmul.mubr.bf16.gmra.mrb[0].mxu0 %v7064
  %v7385 = vpop.f32.mrb[0].mxu0
  %v7386 = vadd.f32 %v6937, %v7385
  %v7387 = vpop.f32.mrb[0].mxu0
  %v7388 = vpop.f32.mrb[0].mxu0
  %v7389 = vadd.f32 %v6937, %v7388
  %v7390 = vpop.f32.mrb[0].mxu0
  %7391 = vmatprep.mubr.bf16.mxu0 0
  %7392 = vmatmul.mubr.bf16.gmra.mrb[0].mxu0 %v7067
  %v7393 = vpop.f32.mrb[0].mxu0
  %v7394 = vadd.f32 %v6937, %v7393
  %v7395 = vpop.f32.mrb[0].mxu0
  %v7396 = vpop.f32.mrb[0].mxu0
  %v7397 = vadd.f32 %v6937, %v7396
  %v7398 = vpop.f32.mrb[0].mxu0
  %7399 = vmatprep.mubr.bf16.mxu0 0
  %7400 = vmatmul.mubr.bf16.gmra.mrb[0].mxu0 %v7070
  %v7401 = vpop.f32.mrb[0].mxu0
  %v7402 = vadd.f32 %v6937, %v7401
  %v7403 = vpop.f32.mrb[0].mxu0
  %v7404 = vpop.f32.mrb[0].mxu0
  %v7405 = vadd.f32 %v6937, %v7404
  %v7406 = vpop.f32.mrb[0].mxu0
  %7407 = vmatprep.mubr.bf16.mxu0 0
  %7408 = vmatmul.mubr.bf16.gmra.mrb[0].mxu0 %v7073
  %v7409 = vpop.f32.mrb[0].mxu0
  %v7410 = vadd.f32 %v6937, %v7409
  %v7411 = vpop.f32.mrb[0].mxu0
  %v7412 = vpop.f32.mrb[0].mxu0
  %v7413 = vadd.f32 %v6937, %v7412
  %v7414 = vpop.f32.mrb[0].mxu0
  %7415 = vmatprep.mubr.bf16.mxu0 0
  %7416 = vmatmul.mubr.bf16.gmra.mrb[0].mxu0 %v7076
  %v7417 = vpop.f32.mrb[0].mxu0
  %v7418 = vadd.f32 %v6937, %v7417
  %v7419 = vpop.f32.mrb[0].mxu0
  %v7420 = vpop.f32.mrb[0].mxu0
  %v7421 = vadd.f32 %v6937, %v7420
  %v7422 = vpop.f32.mrb[0].mxu0
  %7423 = vmatprep.mubr.bf16.mxu0 0
  %7424 = vmatmul.mubr.bf16.gmra.mrb[0].mxu0 %v7079
  %v7425 = vpop.f32.mrb[0].mxu0
  %v7426 = vadd.f32 %v6937, %v7425
  %v7427 = vpop.f32.mrb[0].mxu0
  %v7428 = vpop.f32.mrb[0].mxu0
  %v7429 = vadd.f32 %v6937, %v7428
  %v7430 = vpop.f32.mrb[0].mxu0
  %7431 = vmatprep.mubr.bf16.mxu0 0
  %7432 = vmatmul.mubr.bf16.gmra.mrb[0].mxu0 %v7082
  %v7433 = vpop.f32.mrb[0].mxu0
  %v7434 = vadd.f32 %v6937, %v7433
  %v7435 = vpop.f32.mrb[0].mxu0
  %v7436 = vpop.f32.mrb[0].mxu0
  %v7437 = vadd.f32 %v6937, %v7436
  %v7438 = vpop.f32.mrb[0].mxu0
  %7439 = vmatprep.mubr.bf16.mxu0 0
  %7440 = vmatmul.mubr.bf16.gmra.mrb[0].mxu0 %v7085
  %v7441 = vpop.f32.mrb[0].mxu0
  %v7442 = vadd.f32 %v6937, %v7441
  %v7443 = vpop.f32.mrb[0].mxu0
  %v7444 = vpop.f32.mrb[0].mxu0
  %v7445 = vpop.f32.mrb[0].mxu0
  %7446 = vdwg.mxu0
  %vm7447 = vcmask 64512
  %7448 = vst.msk [vmem:[%s7] sm:$0xff] %vm7447, %v7122
  %7449 = vst.msk [vmem:[%s7 + $0x8] sm:$0xff] %vm7447, %v7125
  %7450 = vst.msk [vmem:[%s7 + $0x10] sm:$0xff] %vm7447, %v7130
  %7451 = vst.msk [vmem:[%s7 + $0x18] sm:$0xff] %vm7447, %v7133
  %7452 = vst.msk [vmem:[%s7 + $0x20] sm:$0xff] %vm7447, %v7138
  %7453 = vst.msk [vmem:[%s7 + $0x28] sm:$0xff] %vm7447, %v7141
  %7454 = vst.msk [vmem:[%s7 + $0x30] sm:$0xff] %vm7447, %v7146
  %7455 = vst.msk [vmem:[%s7 + $0x38] sm:$0xff] %vm7447, %v7149
  %7456 = vst.msk [vmem:[%s7 + $0x40] sm:$0xff] %vm7447, %v7154
  %7457 = vst.msk [vmem:[%s7 + $0x48] sm:$0xff] %vm7447, %v7157
  %7458 = vst.msk [vmem:[%s7 + $0x50] sm:$0xff] %vm7447, %v7162
  %7459 = vst.msk [vmem:[%s7 + $0x58] sm:$0xff] %vm7447, %v7165
  %7460 = vst.msk [vmem:[%s7 + $0x60] sm:$0xff] %vm7447, %v7170
  %7461 = vst.msk [vmem:[%s7 + $0x68] sm:$0xff] %vm7447, %v7173
  %7462 = vst.msk [vmem:[%s7 + $0x70] sm:$0xff] %vm7447, %v7178
  %7463 = vst.msk [vmem:[%s7 + $0x78] sm:$0xff] %vm7447, %v7181
  %7464 = vst.msk [vmem:[%s7 + $0x80] sm:$0xff] %vm7447, %v7186
  %7465 = vst.msk [vmem:[%s7 + $0x88] sm:$0xff] %vm7447, %v7189
  %7466 = vst.msk [vmem:[%s7 + $0x90] sm:$0xff] %vm7447, %v7194
  %7467 = vst.msk [vmem:[%s7 + $0x98] sm:$0xff] %vm7447, %v7197
  %7468 = vst.msk [vmem:[%s7 + $0xa0] sm:$0xff] %vm7447, %v7202
  %7469 = vst.msk [vmem:[%s7 + $0xa8] sm:$0xff] %vm7447, %v7205
  %7470 = vst.msk [vmem:[%s7 + $0xb0] sm:$0xff] %vm7447, %v7210
  %7471 = vst.msk [vmem:[%s7 + $0xb8] sm:$0xff] %vm7447, %v7213
  %7472 = vst.msk [vmem:[%s7 + $0xc0] sm:$0xff] %vm7447, %v7218
  %7473 = vst.msk [vmem:[%s7 + $0xc8] sm:$0xff] %vm7447, %v7221
  %7474 = vst.msk [vmem:[%s7 + $0xd0] sm:$0xff] %vm7447, %v7226
  %7475 = vst.msk [vmem:[%s7 + $0xd8] sm:$0xff] %vm7447, %v7229
  %7476 = vst.msk [vmem:[%s7 + $0xe0] sm:$0xff] %vm7447, %v7234
  %7477 = vst.msk [vmem:[%s7 + $0xe8] sm:$0xff] %vm7447, %v7237
  %7478 = vst.msk [vmem:[%s7 + $0xf0] sm:$0xff] %vm7447, %v7242
  %7479 = vst.msk [vmem:[%s7 + $0xf8] sm:$0xff] %vm7447, %v7245
  %7480 = vst.msk [vmem:[%s7 + $0x100] sm:$0xff] %vm7447, %v7250
  %7481 = vst.msk [vmem:[%s7 + $0x108] sm:$0xff] %vm7447, %v7253
  %7482 = vst.msk [vmem:[%s7 + $0x110] sm:$0xff] %vm7447, %v7258
  %7483 = vst.msk [vmem:[%s7 + $0x118] sm:$0xff] %vm7447, %v7261
  %7484 = vst.msk [vmem:[%s7 + $0x120] sm:$0xff] %vm7447, %v7266
  %7485 = vst.msk [vmem:[%s7 + $0x128] sm:$0xff] %vm7447, %v7269
  %7486 = vst.msk [vmem:[%s7 + $0x130] sm:$0xff] %vm7447, %v7274
  %7487 = vst.msk [vmem:[%s7 + $0x138] sm:$0xff] %vm7447, %v7277
  %7488 = vst.msk [vmem:[%s7 + $0x140] sm:$0xff] %vm7447, %v7282
  %7489 = vst.msk [vmem:[%s7 + $0x148] sm:$0xff] %vm7447, %v7285
  %7490 = vst.msk [vmem:[%s7 + $0x150] sm:$0xff] %vm7447, %v7290
  %7491 = vst.msk [vmem:[%s7 + $0x158] sm:$0xff] %vm7447, %v7293
  %7492 = vst.msk [vmem:[%s7 + $0x160] sm:$0xff] %vm7447, %v7298
  %7493 = vst.msk [vmem:[%s7 + $0x168] sm:$0xff] %vm7447, %v7301
  %7494 = vst.msk [vmem:[%s7 + $0x170] sm:$0xff] %vm7447, %v7306
  %7495 = vst.msk [vmem:[%s7 + $0x178] sm:$0xff] %vm7447, %v7309
  %7496 = vst.msk [vmem:[%s7 + $0x180] sm:$0xff] %vm7447, %v7314
  %7497 = vst.msk [vmem:[%s7 + $0x188] sm:$0xff] %vm7447, %v7317
  %7498 = vst.msk [vmem:[%s7 + $0x190] sm:$0xff] %vm7447, %v7322
  %7499 = vst.msk [vmem:[%s7 + $0x198] sm:$0xff] %vm7447, %v7325
  %7500 = vst.msk [vmem:[%s7 + $0x1a0] sm:$0xff] %vm7447, %v7330
  %7501 = vst.msk [vmem:[%s7 + $0x1a8] sm:$0xff] %vm7447, %v7333
  %7502 = vst.msk [vmem:[%s7 + $0x1b0] sm:$0xff] %vm7447, %v7338
  %7503 = vst.msk [vmem:[%s7 + $0x1b8] sm:$0xff] %vm7447, %v7341
  %7504 = vst.msk [vmem:[%s7 + $0x1c0] sm:$0xff] %vm7447, %v7346
  %7505 = vst.msk [vmem:[%s7 + $0x1c8] sm:$0xff] %vm7447, %v7349
  %7506 = vst.msk [vmem:[%s7 + $0x1d0] sm:$0xff] %vm7447, %v7354
  %7507 = vst.msk [vmem:[%s7 + $0x1d8] sm:$0xff] %vm7447, %v7357
  %7508 = vst.msk [vmem:[%s7 + $0x1e0] sm:$0xff] %vm7447, %v7362
  %7509 = vst.msk [vmem:[%s7 + $0x1e8] sm:$0xff] %vm7447, %v7365
  %7510 = vst.msk [vmem:[%s7 + $0x1f0] sm:$0xff] %vm7447, %v7370
  %7511 = vst.msk [vmem:[%s7 + $0x1f8] sm:$0xff] %vm7447, %v7373
  %7512 = vst.msk [vmem:[%s7 + $0x200] sm:$0xff] %vm7447, %v7378
  %7513 = vst.msk [vmem:[%s7 + $0x208] sm:$0xff] %vm7447, %v7381
  %7514 = vst.msk [vmem:[%s7 + $0x210] sm:$0xff] %vm7447, %v7386
  %7515 = vst.msk [vmem:[%s7 + $0x218] sm:$0xff] %vm7447, %v7389
  %7516 = vst.msk [vmem:[%s7 + $0x220] sm:$0xff] %vm7447, %v7394
  %7517 = vst.msk [vmem:[%s7 + $0x228] sm:$0xff] %vm7447, %v7397
  %7518 = vst.msk [vmem:[%s7 + $0x230] sm:$0xff] %vm7447, %v7402
  %7519 = vst.msk [vmem:[%s7 + $0x238] sm:$0xff] %vm7447, %v7405
  %7520 = vst.msk [vmem:[%s7 + $0x240] sm:$0xff] %vm7447, %v7410
  %7521 = vst.msk [vmem:[%s7 + $0x248] sm:$0xff] %vm7447, %v7413
  %7522 = vst.msk [vmem:[%s7 + $0x250] sm:$0xff] %vm7447, %v7418
  %7523 = vst.msk [vmem:[%s7 + $0x258] sm:$0xff] %vm7447, %v7421
  %7524 = vst.msk [vmem:[%s7 + $0x260] sm:$0xff] %vm7447, %v7426
  %7525 = vst.msk [vmem:[%s7 + $0x268] sm:$0xff] %vm7447, %v7429
  %7526 = vst.msk [vmem:[%s7 + $0x270] sm:$0xff] %vm7447, %v7434
  %7527 = vst.msk [vmem:[%s7 + $0x278] sm:$0xff] %vm7447, %v7437
  %7528 = vst.msk [vmem:[%s7 + $0x280] sm:$0xff] %vm7447, %v7442
  // Predicated region
  $region30: #{modu2_forward.1} parent=0 // pred_check
    _
  $region31: #{modu2_forward.1} parent=0 // pred_check_branch
    %7530 = sbr.rel (0) target = $region33
  $region32: #{modu2_forward.1} parent=0 // pred_region
    _
  $region33: #{modu2_forward.1} parent=0 // pred_fallthru
    _
  // Predicated region
  $region34: #{modu2_forward.1} parent=0 // pred_check
    _
  $region35: #{modu2_forward.1} parent=0 // pred_check_branch
    %7532 = sbr.rel (0) target = $region37
  $region36: #{modu2_forward.1} parent=0 // pred_region
    _
  $region37: #{modu2_forward.1} parent=0 // pred_fallthru
    _

</llo_original>
